<compile_context>
chip_gen: v7x
topology: tpu7x:2x2x1
jax: 0.10.0
libtpu: 0.0.40
codegen_flags: <defaults>
</compile_context>

<pallas_src>
import functools

import numpy as np

import jax
import jax.numpy as jnp
from jax import lax
from jax.experimental import pallas as pl
from jax.experimental.pallas import tpu as pltpu


_VMEM_LIMIT_BYTES = 32 * 1024 * 1024  # safe on v5e/v6e (128 MiB) and v7x (64 MiB)


def _conv_out(n, k, s, p):
    return (n + 2 * p - k) // s + 1


# ----------------------------------------------------------------------------
# Fused kernel: conv1 -> conv2 -> conv3 -> fc1 -> fc2, one image per grid step.
# ----------------------------------------------------------------------------
def _fused_cnn_kernel(x_ref,
                      rh1_ref, we1_ref, b1_ref,
                      rh2_ref, we2_ref, b2_ref,
                      rh3_ref, we3_ref, b3_ref,
                      sel_ref, wf1_ref, bf1_ref, wf2_ref, bf2_ref,
                      o_ref):
    """All activations stay in VMEM/vregs; only 2-D bf16 matmuls + VPU ops."""

    def conv_relu(a, rh_ref, we_ref, b_ref):
        # a: (H_in, W_in*C_in) bf16.  Per kernel row ki:
        #   rows = RH_ki @ a         (stride + zero-pad row selection, exact)
        #   acc += rows @ Wexp_ki    (W-axis stride/pad + all kj taps folded in)
        # Summing over ki, adding the Wo-tiled bias and ReLU reproduces
        # PyTorch Conv2d(...)+ReLU exactly, in the (Ho, Wo*Cout) layout the
        # next layer consumes directly.
        acc = b_ref[...]                                        # (1, Wo*Cout) f32
        for ki in range(rh_ref.shape[0]):
            rows = jnp.dot(rh_ref[ki], a, preferred_element_type=jnp.float32)
            acc = acc + jnp.dot(rows.astype(jnp.bfloat16), we_ref[ki],
                                preferred_element_type=jnp.float32)
        return jnp.maximum(acc, 0.0).astype(jnp.bfloat16)       # (Ho, Wo*Cout)

    a = x_ref[0]                                                # (32, 96)  HWC-flat
    a = conv_relu(a, rh1_ref, we1_ref, b1_ref)                  # (16, 256)
    a = conv_relu(a, rh2_ref, we2_ref, b2_ref)                  # (17, 544)
    a = conv_relu(a, rh3_ref, we3_ref, b3_ref)                  # (9, 576)

    # Head: hidden = sum_h a[h] @ Wf1[h]  (row h picked via a one-hot matmul so
    # the kernel never slices a traced value), then ReLU and the lane-dense
    # (classes padded to 128) fc2 matmul.
    hidden = bf1_ref[...]                                       # (1, 128) f32
    for h in range(wf1_ref.shape[0]):                           # 9 unrolled steps
        row = jnp.dot(sel_ref[h], a, preferred_element_type=jnp.float32)
        hidden = hidden + jnp.dot(row.astype(jnp.bfloat16), wf1_ref[h],
                                  preferred_element_type=jnp.float32)
    hidden = jnp.maximum(hidden, 0.0).astype(jnp.bfloat16)
    logits = jnp.dot(hidden, wf2_ref[...],
                     preferred_element_type=jnp.float32) + bf2_ref[...]
    o_ref[0] = logits.astype(o_ref.dtype)                       # (1, 128)


# ----------------------------------------------------------------------------
# pallas_call wrapper
# ----------------------------------------------------------------------------
def custom_cnn_forward(packed, x_nchw):
    # TODO(synk): the module's debug print() calls are omitted (pl.debug_print
    # under interpret mode could reproduce them if ever needed).
    B, C, H, W = x_nchw.shape
    x = jnp.transpose(x_nchw, (0, 2, 3, 1)).reshape(B, H, W * C)  # HWC-flat, once
    x = x.astype(jnp.bfloat16)

    names = ("rh1", "we1", "b1", "rh2", "we2", "b2", "rh3", "we3", "b3",
             "sel", "wf1", "bf1", "wf2", "bf2")
    weights = [packed[n] for n in names]
    ncp = packed["wf2"].shape[1]

    def full_spec(arr):
        zeros = (0,) * arr.ndim
        return pl.BlockSpec(arr.shape, lambda b: zeros)  # resident, DMA'd once

    wbytes = sum(int(np.prod(a.shape)) * a.dtype.itemsize for a in weights)
    cost = pl.CostEstimate(
        flops=B * packed["flops_per_image"],
        transcendentals=0,
        bytes_accessed=int(x.size) * 2 + wbytes + B * ncp * 4,
    )

    out = pl.pallas_call(
        _fused_cnn_kernel,
        out_shape=jax.ShapeDtypeStruct((B, 1, ncp), jnp.float32),
        grid=(B,),
        in_specs=[pl.BlockSpec((1, H, W * C), lambda b: (b, 0, 0))]
                 + [full_spec(a) for a in weights],
        out_specs=pl.BlockSpec((1, 1, ncp), lambda b: (b, 0, 0)),
        compiler_params=pltpu.CompilerParams(
            dimension_semantics=("parallel",),
            vmem_limit_bytes=_VMEM_LIMIT_BYTES),
        cost_estimate=cost,
    )(x, *weights)
    return out.reshape(B, ncp)[:, :packed["num_classes"]]


# ----------------------------------------------------------------------------
# Deterministic parameter init (PyTorch-like uniform fan-in scaling)
# ----------------------------------------------------------------------------
def _uniform(key, shape, fan_in):
    bound = 1.0 / np.sqrt(float(fan_in))
    return jax.random.uniform(key, shape, jnp.float32, -bound, bound)


def init_params(key, num_classes=10):
    ks = jax.random.split(key, 10)
    p = {}
    p["w1"] = _uniform(ks[0], (16, 3, 3, 3), 3 * 3 * 3)          # conv1
    p["b1"] = _uniform(ks[1], (16,), 3 * 3 * 3)
    p["w2"] = _uniform(ks[2], (32, 16, 2, 2), 16 * 2 * 2)        # conv2
    p["b2"] = _uniform(ks[3], (32,), 16 * 2 * 2)
    p["w3"] = _uniform(ks[4], (64, 32, 3, 3), 32 * 3 * 3)        # conv3
    p["b3"] = _uniform(ks[5], (64,), 32 * 3 * 3)
    p["wf1"] = _uniform(ks[6], (64 * 9 * 9, 128), 64 * 9 * 9)    # fc1 (K, H)
    p["bf1"] = _uniform(ks[7], (128,), 64 * 9 * 9)
    p["wf2"] = _uniform(ks[8], (128, num_classes), 128)          # fc2 (H, C)
    p["bf2"] = _uniform(ks[9], (num_classes,), 128)
    return p


# ----------------------------------------------------------------------------
# One-time parameter packing into the matmul-only fused-kernel format
# ----------------------------------------------------------------------------
def _pack_conv(w, b, h_in, w_in, stride, pad):
    w = np.asarray(w, np.float32)
    b = np.asarray(b, np.float32)
    cout, cin, kh, kw = w.shape
    ho = _conv_out(h_in, kh, stride, pad)
    wo = _conv_out(w_in, kw, stride, pad)
    # RH[ki, o, h] = 1 iff h == stride*o + ki - pad (zero row => padding row).
    rh = np.zeros((kh, ho, h_in), np.float32)
    for ki in range(kh):
        for o in range(ho):
            src = stride * o + ki - pad
            if 0 <= src < h_in:
                rh[ki, o, src] = 1.0
    # Wexp[ki, w*Cin+c, o*Cout+co]: W-axis stride + zero padding + kj taps folded.
    we = np.zeros((kh, w_in * cin, wo * cout), np.float32)
    for ki in range(kh):
        for kj in range(kw):
            for o in range(wo):
                src = stride * o + kj - pad
                if 0 <= src < w_in:
                    we[ki, src * cin:(src + 1) * cin, o * cout:(o + 1) * cout] \
                        += w[:, :, ki, kj].T
    bias = np.tile(b, wo).reshape(1, wo * cout)
    return (jnp.asarray(rh, jnp.bfloat16),
            jnp.asarray(we, jnp.bfloat16),
            jnp.asarray(bias, jnp.float32),
            (ho, wo, cout))


def pack_params(p, num_classes=10):
    packed = {"num_classes": num_classes}
    rh1, we1, b1, (h1, w1, _c1) = _pack_conv(p["w1"], p["b1"], 32, 32, 2, 1)
    rh2, we2, b2, (h2, w2, _c2) = _pack_conv(p["w2"], p["b2"], h1, w1, 1, 1)
    rh3, we3, b3, (h3, w3, c3) = _pack_conv(p["w3"], p["b3"], h2, w2, 2, 1)
    packed.update(rh1=rh1, we1=we1, b1=b1, rh2=rh2, we2=we2, b2=b2,
                  rh3=rh3, we3=we3, b3=b3)

    hidden = p["wf1"].shape[1]
    # PyTorch flattens the (B, 64, 9, 9) activation in (c, h, w) order; the
    # kernel's conv3 output is (h, w*64 + c).  Permute fc1 rows once here.
    wf1 = np.asarray(p["wf1"], np.float32).reshape(c3, h3, w3, hidden)
    wf1 = wf1.transpose(1, 2, 0, 3).reshape(h3, w3 * c3, hidden)
    packed["wf1"] = jnp.asarray(wf1, jnp.bfloat16)
    packed["bf1"] = jnp.asarray(np.asarray(p["bf1"], np.float32).reshape(1, hidden))

    # One-hot row selectors for the fc1 loop (no in-kernel value slicing).
    sel = np.zeros((h3, 1, h3), np.float32)
    sel[np.arange(h3), 0, np.arange(h3)] = 1.0
    packed["sel"] = jnp.asarray(sel, jnp.bfloat16)

    # fc2: classes zero-padded to a lane-dense 128 so the only HBM store is full.
    ncp = -(-num_classes // 128) * 128
    wf2 = np.zeros((hidden, ncp), np.float32)
    wf2[:, :num_classes] = np.asarray(p["wf2"], np.float32)
    bf2 = np.zeros((1, ncp), np.float32)
    bf2[0, :num_classes] = np.asarray(p["bf2"], np.float32)
    packed["wf2"] = jnp.asarray(wf2, jnp.bfloat16)
    packed["bf2"] = jnp.asarray(bf2, jnp.float32)

    # Advisory cost numbers for the XLA scheduler.
    flops = 0
    for rh, we in ((rh1, we1), (rh2, we2), (rh3, we3)):
        kh, ho, hin = rh.shape
        _, wcin, wocout = we.shape
        flops += kh * 2 * ho * (hin * wcin + wcin * wocout)
    flops += h3 * 2 * (h3 * (w3 * c3) + (w3 * c3) * hidden)    # head row-select + fc1
    flops += 2 * hidden * ncp                                  # fc2
    packed["flops_per_image"] = int(flops)
    return packed


# ----------------------------------------------------------------------------
# Pure-JAX f32 NCHW reference (mirrors the PyTorch module exactly)
# ----------------------------------------------------------------------------
def reference_forward(params, x_nchw):
    dn = ("NCHW", "OIHW", "NCHW")
    hp = lax.Precision.HIGHEST

    def conv(x, w, b, stride, pad):
        y = lax.conv_general_dilated(x, w, (stride, stride),
                                     ((pad, pad), (pad, pad)),
                                     dimension_numbers=dn, precision=hp)
        return jax.nn.relu(y + b.reshape(1, -1, 1, 1))

    x = conv(x_nchw, params["w1"], params["b1"], 2, 1)
    x = conv(x, params["w2"], params["b2"], 1, 1)
    x = conv(x, params["w3"], params["b3"], 2, 1)
    x = x.reshape(x.shape[0], -1)                                # (C, H, W) flatten
    x = jax.nn.relu(jnp.dot(x, params["wf1"], precision=hp) + params["bf1"])
    return jnp.dot(x, params["wf2"], precision=hp) + params["bf2"]


if __name__ == "__main__":
    key = jax.random.PRNGKey(0)
    pkey, xkey = jax.random.split(key)
    num_classes = 10
    params = init_params(pkey, num_classes=num_classes)
    packed = pack_params(params, num_classes=num_classes)

    # fc1 (64*9*9 inputs) pins the spatial size: input must be (B, 3, 32, 32).
    x = jax.random.normal(xkey, (2, 3, 32, 32), jnp.float32)

    fwd = jax.jit(functools.partial(custom_cnn_forward, packed))
    out = jax.block_until_ready(fwd(x))
    assert out.shape == (2, num_classes), out.shape
    assert out.dtype == jnp.float32, out.dtype

    ref = jax.block_until_ready(reference_forward(params, x))
    np.testing.assert_allclose(np.asarray(out), np.asarray(ref), rtol=5e-2, atol=2e-2)

    print("KERNEL_OK")
</pallas_src>

<mosaic_0001>
module attributes {stable_mosaic.version = 11 : i64} {
  func.func @_fused_cnn_kernel(%arg0: i32, %arg1: memref<1x32x96xbf16, #tpu.memory_space<vmem>>, %arg2: memref<3x16x32xbf16, #tpu.memory_space<vmem>>, %arg3: memref<3x96x256xbf16, #tpu.memory_space<vmem>>, %arg4: memref<1x256xf32, #tpu.memory_space<vmem>>, %arg5: memref<2x17x16xbf16, #tpu.memory_space<vmem>>, %arg6: memref<2x256x544xbf16, #tpu.memory_space<vmem>>, %arg7: memref<1x544xf32, #tpu.memory_space<vmem>>, %arg8: memref<3x9x17xbf16, #tpu.memory_space<vmem>>, %arg9: memref<3x544x576xbf16, #tpu.memory_space<vmem>>, %arg10: memref<1x576xf32, #tpu.memory_space<vmem>>, %arg11: memref<9x1x9xbf16, #tpu.memory_space<vmem>>, %arg12: memref<9x576x128xbf16, #tpu.memory_space<vmem>>, %arg13: memref<1x128xf32, #tpu.memory_space<vmem>>, %arg14: memref<128x128xbf16, #tpu.memory_space<vmem>>, %arg15: memref<1x128xf32, #tpu.memory_space<vmem>>, %arg16: memref<1x1x128xf32, #tpu.memory_space<vmem>>) attributes {dimension_semantics = [#tpu.dimension_semantics<parallel>], iteration_bounds = array<i64: 2>, scalar_prefetch = 0 : i64, scratch_operands = 0 : i64, tpu.core_type = #tpu.core_type<tc>, window_params = [{transform_indices = @transform_0, window_bounds = array<i64: 1, 32, 96>}, {pipeline_mode = #tpu.pipeline_mode<synchronous>, transform_indices = @transform_1, window_bounds = array<i64: 3, 16, 32>}, {pipeline_mode = #tpu.pipeline_mode<synchronous>, transform_indices = @transform_2, window_bounds = array<i64: 3, 96, 256>}, {pipeline_mode = #tpu.pipeline_mode<synchronous>, transform_indices = @transform_3, window_bounds = array<i64: 1, 256>}, {pipeline_mode = #tpu.pipeline_mode<synchronous>, transform_indices = @transform_4, window_bounds = array<i64: 2, 17, 16>}, {pipeline_mode = #tpu.pipeline_mode<synchronous>, transform_indices = @transform_5, window_bounds = array<i64: 2, 256, 544>}, {pipeline_mode = #tpu.pipeline_mode<synchronous>, transform_indices = @transform_6, window_bounds = array<i64: 1, 544>}, {pipeline_mode = #tpu.pipeline_mode<synchronous>, transform_indices = @transform_7, window_bounds = array<i64: 3, 9, 17>}, {pipeline_mode = #tpu.pipeline_mode<synchronous>, transform_indices = @transform_8, window_bounds = array<i64: 3, 544, 576>}, {pipeline_mode = #tpu.pipeline_mode<synchronous>, transform_indices = @transform_9, window_bounds = array<i64: 1, 576>}, {pipeline_mode = #tpu.pipeline_mode<synchronous>, transform_indices = @transform_10, window_bounds = array<i64: 9, 1, 9>}, {pipeline_mode = #tpu.pipeline_mode<synchronous>, transform_indices = @transform_11, window_bounds = array<i64: 9, 576, 128>}, {pipeline_mode = #tpu.pipeline_mode<synchronous>, transform_indices = @transform_12, window_bounds = array<i64: 1, 128>}, {pipeline_mode = #tpu.pipeline_mode<synchronous>, transform_indices = @transform_13, window_bounds = array<i64: 128, 128>}, {pipeline_mode = #tpu.pipeline_mode<synchronous>, transform_indices = @transform_14, window_bounds = array<i64: 1, 128>}, {transform_indices = @transform_15, window_bounds = array<i64: 1, 1, 128>}]} {
    %c0 = arith.constant 0 : index
    %c0_0 = arith.constant 0 : index
    %c0_1 = arith.constant 0 : index
    %0 = vector.load %arg1[%c0, %c0_0, %c0_1] : memref<1x32x96xbf16, #tpu.memory_space<vmem>>, vector<1x32x96xbf16>
    %1 = vector.shape_cast %0 : vector<1x32x96xbf16> to vector<32x96xbf16>
    %c0_2 = arith.constant 0 : index
    %c0_3 = arith.constant 0 : index
    %2 = vector.load %arg4[%c0_2, %c0_3] : memref<1x256xf32, #tpu.memory_space<vmem>>, vector<1x256xf32>
    %c0_4 = arith.constant 0 : index
    %c0_5 = arith.constant 0 : index
    %c0_6 = arith.constant 0 : index
    %3 = vector.load %arg2[%c0_4, %c0_5, %c0_6] : memref<3x16x32xbf16, #tpu.memory_space<vmem>>, vector<1x16x32xbf16>
    %4 = vector.shape_cast %3 : vector<1x16x32xbf16> to vector<16x32xbf16>
    %cst = arith.constant dense<0.000000e+00> : vector<16x96xf32>
    %5 = tpu.matmul %4, %1, %cst {dimension_numbers = #tpu.dot_dimension_numbers<[1], [0], [0], [1], [0, 0, 1, 1], [], []>} : vector<16x32xbf16>, vector<32x96xbf16>, vector<16x96xf32> -> vector<16x96xf32>
    %6 = arith.truncf %5 : vector<16x96xf32> to vector<16x96xbf16>
    %c0_7 = arith.constant 0 : index
    %c0_8 = arith.constant 0 : index
    %c0_9 = arith.constant 0 : index
    %7 = vector.load %arg3[%c0_7, %c0_8, %c0_9] : memref<3x96x256xbf16, #tpu.memory_space<vmem>>, vector<1x96x256xbf16>
    %8 = vector.shape_cast %7 : vector<1x96x256xbf16> to vector<96x256xbf16>
    %cst_10 = arith.constant dense<0.000000e+00> : vector<16x256xf32>
    %9 = tpu.matmul %6, %8, %cst_10 {dimension_numbers = #tpu.dot_dimension_numbers<[1], [0], [0], [1], [0, 0, 1, 1], [], []>} : vector<16x96xbf16>, vector<96x256xbf16>, vector<16x256xf32> -> vector<16x256xf32>
    %10 = vector.broadcast %2 : vector<1x256xf32> to vector<16x256xf32>
    %11 = arith.addf %10, %9 : vector<16x256xf32>
    %c1 = arith.constant 1 : index
    %c0_11 = arith.constant 0 : index
    %c0_12 = arith.constant 0 : index
    %12 = vector.load %arg2[%c1, %c0_11, %c0_12] : memref<3x16x32xbf16, #tpu.memory_space<vmem>>, vector<1x16x32xbf16>
    %13 = vector.shape_cast %12 : vector<1x16x32xbf16> to vector<16x32xbf16>
    %cst_13 = arith.constant dense<0.000000e+00> : vector<16x96xf32>
    %14 = tpu.matmul %13, %1, %cst_13 {dimension_numbers = #tpu.dot_dimension_numbers<[1], [0], [0], [1], [0, 0, 1, 1], [], []>} : vector<16x32xbf16>, vector<32x96xbf16>, vector<16x96xf32> -> vector<16x96xf32>
    %15 = arith.truncf %14 : vector<16x96xf32> to vector<16x96xbf16>
    %c1_14 = arith.constant 1 : index
    %c0_15 = arith.constant 0 : index
    %c0_16 = arith.constant 0 : index
    %16 = vector.load %arg3[%c1_14, %c0_15, %c0_16] : memref<3x96x256xbf16, #tpu.memory_space<vmem>>, vector<1x96x256xbf16>
    %17 = vector.shape_cast %16 : vector<1x96x256xbf16> to vector<96x256xbf16>
    %cst_17 = arith.constant dense<0.000000e+00> : vector<16x256xf32>
    %18 = tpu.matmul %15, %17, %cst_17 {dimension_numbers = #tpu.dot_dimension_numbers<[1], [0], [0], [1], [0, 0, 1, 1], [], []>} : vector<16x96xbf16>, vector<96x256xbf16>, vector<16x256xf32> -> vector<16x256xf32>
    %19 = arith.addf %11, %18 : vector<16x256xf32>
    %c2 = arith.constant 2 : index
    %c0_18 = arith.constant 0 : index
    %c0_19 = arith.constant 0 : index
    %20 = vector.load %arg2[%c2, %c0_18, %c0_19] : memref<3x16x32xbf16, #tpu.memory_space<vmem>>, vector<1x16x32xbf16>
    %21 = vector.shape_cast %20 : vector<1x16x32xbf16> to vector<16x32xbf16>
    %cst_20 = arith.constant dense<0.000000e+00> : vector<16x96xf32>
    %22 = tpu.matmul %21, %1, %cst_20 {dimension_numbers = #tpu.dot_dimension_numbers<[1], [0], [0], [1], [0, 0, 1, 1], [], []>} : vector<16x32xbf16>, vector<32x96xbf16>, vector<16x96xf32> -> vector<16x96xf32>
    %23 = arith.truncf %22 : vector<16x96xf32> to vector<16x96xbf16>
    %c2_21 = arith.constant 2 : index
    %c0_22 = arith.constant 0 : index
    %c0_23 = arith.constant 0 : index
    %24 = vector.load %arg3[%c2_21, %c0_22, %c0_23] : memref<3x96x256xbf16, #tpu.memory_space<vmem>>, vector<1x96x256xbf16>
    %25 = vector.shape_cast %24 : vector<1x96x256xbf16> to vector<96x256xbf16>
    %cst_24 = arith.constant dense<0.000000e+00> : vector<16x256xf32>
    %26 = tpu.matmul %23, %25, %cst_24 {dimension_numbers = #tpu.dot_dimension_numbers<[1], [0], [0], [1], [0, 0, 1, 1], [], []>} : vector<16x96xbf16>, vector<96x256xbf16>, vector<16x256xf32> -> vector<16x256xf32>
    %27 = arith.addf %19, %26 : vector<16x256xf32>
    %cst_25 = arith.constant 0.000000e+00 : f32
    %28 = vector.broadcast %cst_25 : f32 to vector<16x256xf32>
    %29 = arith.maximumf %27, %28 : vector<16x256xf32>
    %30 = arith.truncf %29 : vector<16x256xf32> to vector<16x256xbf16>
    %c0_26 = arith.constant 0 : index
    %c0_27 = arith.constant 0 : index
    %31 = vector.load %arg7[%c0_26, %c0_27] : memref<1x544xf32, #tpu.memory_space<vmem>>, vector<1x544xf32>
    %c0_28 = arith.constant 0 : index
    %c0_29 = arith.constant 0 : index
    %c0_30 = arith.constant 0 : index
    %32 = vector.load %arg5[%c0_28, %c0_29, %c0_30] : memref<2x17x16xbf16, #tpu.memory_space<vmem>>, vector<1x17x16xbf16>
    %33 = vector.shape_cast %32 : vector<1x17x16xbf16> to vector<17x16xbf16>
    %cst_31 = arith.constant dense<0.000000e+00> : vector<17x256xf32>
    %34 = tpu.matmul %33, %30, %cst_31 {dimension_numbers = #tpu.dot_dimension_numbers<[1], [0], [0], [1], [0, 0, 1, 1], [], []>} : vector<17x16xbf16>, vector<16x256xbf16>, vector<17x256xf32> -> vector<17x256xf32>
    %35 = arith.truncf %34 : vector<17x256xf32> to vector<17x256xbf16>
    %c0_32 = arith.constant 0 : index
    %c0_33 = arith.constant 0 : index
    %c0_34 = arith.constant 0 : index
    %36 = vector.load %arg6[%c0_32, %c0_33, %c0_34] : memref<2x256x544xbf16, #tpu.memory_space<vmem>>, vector<1x256x544xbf16>
    %37 = vector.shape_cast %36 : vector<1x256x544xbf16> to vector<256x544xbf16>
    %cst_35 = arith.constant dense<0.000000e+00> : vector<17x544xf32>
    %38 = tpu.matmul %35, %37, %cst_35 {dimension_numbers = #tpu.dot_dimension_numbers<[1], [0], [0], [1], [0, 0, 1, 1], [], []>} : vector<17x256xbf16>, vector<256x544xbf16>, vector<17x544xf32> -> vector<17x544xf32>
    %39 = vector.broadcast %31 : vector<1x544xf32> to vector<17x544xf32>
    %40 = arith.addf %39, %38 : vector<17x544xf32>
    %c1_36 = arith.constant 1 : index
    %c0_37 = arith.constant 0 : index
    %c0_38 = arith.constant 0 : index
    %41 = vector.load %arg5[%c1_36, %c0_37, %c0_38] : memref<2x17x16xbf16, #tpu.memory_space<vmem>>, vector<1x17x16xbf16>
    %42 = vector.shape_cast %41 : vector<1x17x16xbf16> to vector<17x16xbf16>
    %cst_39 = arith.constant dense<0.000000e+00> : vector<17x256xf32>
    %43 = tpu.matmul %42, %30, %cst_39 {dimension_numbers = #tpu.dot_dimension_numbers<[1], [0], [0], [1], [0, 0, 1, 1], [], []>} : vector<17x16xbf16>, vector<16x256xbf16>, vector<17x256xf32> -> vector<17x256xf32>
    %44 = arith.truncf %43 : vector<17x256xf32> to vector<17x256xbf16>
    %c1_40 = arith.constant 1 : index
    %c0_41 = arith.constant 0 : index
    %c0_42 = arith.constant 0 : index
    %45 = vector.load %arg6[%c1_40, %c0_41, %c0_42] : memref<2x256x544xbf16, #tpu.memory_space<vmem>>, vector<1x256x544xbf16>
    %46 = vector.shape_cast %45 : vector<1x256x544xbf16> to vector<256x544xbf16>
    %cst_43 = arith.constant dense<0.000000e+00> : vector<17x544xf32>
    %47 = tpu.matmul %44, %46, %cst_43 {dimension_numbers = #tpu.dot_dimension_numbers<[1], [0], [0], [1], [0, 0, 1, 1], [], []>} : vector<17x256xbf16>, vector<256x544xbf16>, vector<17x544xf32> -> vector<17x544xf32>
    %48 = arith.addf %40, %47 : vector<17x544xf32>
    %cst_44 = arith.constant 0.000000e+00 : f32
    %49 = vector.broadcast %cst_44 : f32 to vector<17x544xf32>
    %50 = arith.maximumf %48, %49 : vector<17x544xf32>
    %51 = arith.truncf %50 : vector<17x544xf32> to vector<17x544xbf16>
    %c0_45 = arith.constant 0 : index
    %c0_46 = arith.constant 0 : index
    %52 = vector.load %arg10[%c0_45, %c0_46] : memref<1x576xf32, #tpu.memory_space<vmem>>, vector<1x576xf32>
    %c0_47 = arith.constant 0 : index
    %c0_48 = arith.constant 0 : index
    %c0_49 = arith.constant 0 : index
    %53 = vector.load %arg8[%c0_47, %c0_48, %c0_49] : memref<3x9x17xbf16, #tpu.memory_space<vmem>>, vector<1x9x17xbf16>
    %54 = vector.shape_cast %53 : vector<1x9x17xbf16> to vector<9x17xbf16>
    %cst_50 = arith.constant dense<0.000000e+00> : vector<9x544xf32>
    %55 = tpu.matmul %54, %51, %cst_50 {dimension_numbers = #tpu.dot_dimension_numbers<[1], [0], [0], [1], [0, 0, 1, 1], [], []>} : vector<9x17xbf16>, vector<17x544xbf16>, vector<9x544xf32> -> vector<9x544xf32>
    %56 = arith.truncf %55 : vector<9x544xf32> to vector<9x544xbf16>
    %c0_51 = arith.constant 0 : index
    %c0_52 = arith.constant 0 : index
    %c0_53 = arith.constant 0 : index
    %57 = vector.load %arg9[%c0_51, %c0_52, %c0_53] : memref<3x544x576xbf16, #tpu.memory_space<vmem>>, vector<1x544x576xbf16>
    %58 = vector.shape_cast %57 : vector<1x544x576xbf16> to vector<544x576xbf16>
    %cst_54 = arith.constant dense<0.000000e+00> : vector<9x576xf32>
    %59 = tpu.matmul %56, %58, %cst_54 {dimension_numbers = #tpu.dot_dimension_numbers<[1], [0], [0], [1], [0, 0, 1, 1], [], []>} : vector<9x544xbf16>, vector<544x576xbf16>, vector<9x576xf32> -> vector<9x576xf32>
    %60 = vector.broadcast %52 : vector<1x576xf32> to vector<9x576xf32>
    %61 = arith.addf %60, %59 : vector<9x576xf32>
    %c1_55 = arith.constant 1 : index
    %c0_56 = arith.constant 0 : index
    %c0_57 = arith.constant 0 : index
    %62 = vector.load %arg8[%c1_55, %c0_56, %c0_57] : memref<3x9x17xbf16, #tpu.memory_space<vmem>>, vector<1x9x17xbf16>
    %63 = vector.shape_cast %62 : vector<1x9x17xbf16> to vector<9x17xbf16>
    %cst_58 = arith.constant dense<0.000000e+00> : vector<9x544xf32>
    %64 = tpu.matmul %63, %51, %cst_58 {dimension_numbers = #tpu.dot_dimension_numbers<[1], [0], [0], [1], [0, 0, 1, 1], [], []>} : vector<9x17xbf16>, vector<17x544xbf16>, vector<9x544xf32> -> vector<9x544xf32>
    %65 = arith.truncf %64 : vector<9x544xf32> to vector<9x544xbf16>
    %c1_59 = arith.constant 1 : index
    %c0_60 = arith.constant 0 : index
    %c0_61 = arith.constant 0 : index
    %66 = vector.load %arg9[%c1_59, %c0_60, %c0_61] : memref<3x544x576xbf16, #tpu.memory_space<vmem>>, vector<1x544x576xbf16>
    %67 = vector.shape_cast %66 : vector<1x544x576xbf16> to vector<544x576xbf16>
    %cst_62 = arith.constant dense<0.000000e+00> : vector<9x576xf32>
    %68 = tpu.matmul %65, %67, %cst_62 {dimension_numbers = #tpu.dot_dimension_numbers<[1], [0], [0], [1], [0, 0, 1, 1], [], []>} : vector<9x544xbf16>, vector<544x576xbf16>, vector<9x576xf32> -> vector<9x576xf32>
    %69 = arith.addf %61, %68 : vector<9x576xf32>
    %c2_63 = arith.constant 2 : index
    %c0_64 = arith.constant 0 : index
    %c0_65 = arith.constant 0 : index
    %70 = vector.load %arg8[%c2_63, %c0_64, %c0_65] : memref<3x9x17xbf16, #tpu.memory_space<vmem>>, vector<1x9x17xbf16>
    %71 = vector.shape_cast %70 : vector<1x9x17xbf16> to vector<9x17xbf16>
    %cst_66 = arith.constant dense<0.000000e+00> : vector<9x544xf32>
    %72 = tpu.matmul %71, %51, %cst_66 {dimension_numbers = #tpu.dot_dimension_numbers<[1], [0], [0], [1], [0, 0, 1, 1], [], []>} : vector<9x17xbf16>, vector<17x544xbf16>, vector<9x544xf32> -> vector<9x544xf32>
    %73 = arith.truncf %72 : vector<9x544xf32> to vector<9x544xbf16>
    %c2_67 = arith.constant 2 : index
    %c0_68 = arith.constant 0 : index
    %c0_69 = arith.constant 0 : index
    %74 = vector.load %arg9[%c2_67, %c0_68, %c0_69] : memref<3x544x576xbf16, #tpu.memory_space<vmem>>, vector<1x544x576xbf16>
    %75 = vector.shape_cast %74 : vector<1x544x576xbf16> to vector<544x576xbf16>
    %cst_70 = arith.constant dense<0.000000e+00> : vector<9x576xf32>
    %76 = tpu.matmul %73, %75, %cst_70 {dimension_numbers = #tpu.dot_dimension_numbers<[1], [0], [0], [1], [0, 0, 1, 1], [], []>} : vector<9x544xbf16>, vector<544x576xbf16>, vector<9x576xf32> -> vector<9x576xf32>
    %77 = arith.addf %69, %76 : vector<9x576xf32>
    %cst_71 = arith.constant 0.000000e+00 : f32
    %78 = vector.broadcast %cst_71 : f32 to vector<9x576xf32>
    %79 = arith.maximumf %77, %78 : vector<9x576xf32>
    %80 = arith.truncf %79 : vector<9x576xf32> to vector<9x576xbf16>
    %c0_72 = arith.constant 0 : index
    %c0_73 = arith.constant 0 : index
    %81 = vector.load %arg13[%c0_72, %c0_73] : memref<1x128xf32, #tpu.memory_space<vmem>>, vector<1x128xf32>
    %c0_74 = arith.constant 0 : index
    %c0_75 = arith.constant 0 : index
    %c0_76 = arith.constant 0 : index
    %82 = vector.load %arg11[%c0_74, %c0_75, %c0_76] : memref<9x1x9xbf16, #tpu.memory_space<vmem>>, vector<1x1x9xbf16>
    %83 = vector.shape_cast %82 : vector<1x1x9xbf16> to vector<1x9xbf16>
    %cst_77 = arith.constant dense<0.000000e+00> : vector<1x576xf32>
    %84 = tpu.matmul %83, %80, %cst_77 {dimension_numbers = #tpu.dot_dimension_numbers<[1], [0], [0], [1], [0, 0, 1, 1], [], []>} : vector<1x9xbf16>, vector<9x576xbf16>, vector<1x576xf32> -> vector<1x576xf32>
    %85 = arith.truncf %84 : vector<1x576xf32> to vector<1x576xbf16>
    %c0_78 = arith.constant 0 : index
    %c0_79 = arith.constant 0 : index
    %c0_80 = arith.constant 0 : index
    %86 = vector.load %arg12[%c0_78, %c0_79, %c0_80] : memref<9x576x128xbf16, #tpu.memory_space<vmem>>, vector<1x576x128xbf16>
    %87 = vector.shape_cast %86 : vector<1x576x128xbf16> to vector<576x128xbf16>
    %cst_81 = arith.constant dense<0.000000e+00> : vector<1x128xf32>
    %88 = tpu.matmul %85, %87, %cst_81 {dimension_numbers = #tpu.dot_dimension_numbers<[1], [0], [0], [1], [0, 0, 1, 1], [], []>} : vector<1x576xbf16>, vector<576x128xbf16>, vector<1x128xf32> -> vector<1x128xf32>
    %89 = arith.addf %81, %88 : vector<1x128xf32>
    %c1_82 = arith.constant 1 : index
    %c0_83 = arith.constant 0 : index
    %c0_84 = arith.constant 0 : index
    %90 = vector.load %arg11[%c1_82, %c0_83, %c0_84] : memref<9x1x9xbf16, #tpu.memory_space<vmem>>, vector<1x1x9xbf16>
    %91 = vector.shape_cast %90 : vector<1x1x9xbf16> to vector<1x9xbf16>
    %cst_85 = arith.constant dense<0.000000e+00> : vector<1x576xf32>
    %92 = tpu.matmul %91, %80, %cst_85 {dimension_numbers = #tpu.dot_dimension_numbers<[1], [0], [0], [1], [0, 0, 1, 1], [], []>} : vector<1x9xbf16>, vector<9x576xbf16>, vector<1x576xf32> -> vector<1x576xf32>
    %93 = arith.truncf %92 : vector<1x576xf32> to vector<1x576xbf16>
    %c1_86 = arith.constant 1 : index
    %c0_87 = arith.constant 0 : index
    %c0_88 = arith.constant 0 : index
    %94 = vector.load %arg12[%c1_86, %c0_87, %c0_88] : memref<9x576x128xbf16, #tpu.memory_space<vmem>>, vector<1x576x128xbf16>
    %95 = vector.shape_cast %94 : vector<1x576x128xbf16> to vector<576x128xbf16>
    %cst_89 = arith.constant dense<0.000000e+00> : vector<1x128xf32>
    %96 = tpu.matmul %93, %95, %cst_89 {dimension_numbers = #tpu.dot_dimension_numbers<[1], [0], [0], [1], [0, 0, 1, 1], [], []>} : vector<1x576xbf16>, vector<576x128xbf16>, vector<1x128xf32> -> vector<1x128xf32>
    %97 = arith.addf %89, %96 : vector<1x128xf32>
    %c2_90 = arith.constant 2 : index
    %c0_91 = arith.constant 0 : index
    %c0_92 = arith.constant 0 : index
    %98 = vector.load %arg11[%c2_90, %c0_91, %c0_92] : memref<9x1x9xbf16, #tpu.memory_space<vmem>>, vector<1x1x9xbf16>
    %99 = vector.shape_cast %98 : vector<1x1x9xbf16> to vector<1x9xbf16>
    %cst_93 = arith.constant dense<0.000000e+00> : vector<1x576xf32>
    %100 = tpu.matmul %99, %80, %cst_93 {dimension_numbers = #tpu.dot_dimension_numbers<[1], [0], [0], [1], [0, 0, 1, 1], [], []>} : vector<1x9xbf16>, vector<9x576xbf16>, vector<1x576xf32> -> vector<1x576xf32>
    %101 = arith.truncf %100 : vector<1x576xf32> to vector<1x576xbf16>
    %c2_94 = arith.constant 2 : index
    %c0_95 = arith.constant 0 : index
    %c0_96 = arith.constant 0 : index
    %102 = vector.load %arg12[%c2_94, %c0_95, %c0_96] : memref<9x576x128xbf16, #tpu.memory_space<vmem>>, vector<1x576x128xbf16>
    %103 = vector.shape_cast %102 : vector<1x576x128xbf16> to vector<576x128xbf16>
    %cst_97 = arith.constant dense<0.000000e+00> : vector<1x128xf32>
    %104 = tpu.matmul %101, %103, %cst_97 {dimension_numbers = #tpu.dot_dimension_numbers<[1], [0], [0], [1], [0, 0, 1, 1], [], []>} : vector<1x576xbf16>, vector<576x128xbf16>, vector<1x128xf32> -> vector<1x128xf32>
    %105 = arith.addf %97, %104 : vector<1x128xf32>
    %c3 = arith.constant 3 : index
    %c0_98 = arith.constant 0 : index
    %c0_99 = arith.constant 0 : index
    %106 = vector.load %arg11[%c3, %c0_98, %c0_99] : memref<9x1x9xbf16, #tpu.memory_space<vmem>>, vector<1x1x9xbf16>
    %107 = vector.shape_cast %106 : vector<1x1x9xbf16> to vector<1x9xbf16>
    %cst_100 = arith.constant dense<0.000000e+00> : vector<1x576xf32>
    %108 = tpu.matmul %107, %80, %cst_100 {dimension_numbers = #tpu.dot_dimension_numbers<[1], [0], [0], [1], [0, 0, 1, 1], [], []>} : vector<1x9xbf16>, vector<9x576xbf16>, vector<1x576xf32> -> vector<1x576xf32>
    %109 = arith.truncf %108 : vector<1x576xf32> to vector<1x576xbf16>
    %c3_101 = arith.constant 3 : index
    %c0_102 = arith.constant 0 : index
    %c0_103 = arith.constant 0 : index
    %110 = vector.load %arg12[%c3_101, %c0_102, %c0_103] : memref<9x576x128xbf16, #tpu.memory_space<vmem>>, vector<1x576x128xbf16>
    %111 = vector.shape_cast %110 : vector<1x576x128xbf16> to vector<576x128xbf16>
    %cst_104 = arith.constant dense<0.000000e+00> : vector<1x128xf32>
    %112 = tpu.matmul %109, %111, %cst_104 {dimension_numbers = #tpu.dot_dimension_numbers<[1], [0], [0], [1], [0, 0, 1, 1], [], []>} : vector<1x576xbf16>, vector<576x128xbf16>, vector<1x128xf32> -> vector<1x128xf32>
    %113 = arith.addf %105, %112 : vector<1x128xf32>
    %c4 = arith.constant 4 : index
    %c0_105 = arith.constant 0 : index
    %c0_106 = arith.constant 0 : index
    %114 = vector.load %arg11[%c4, %c0_105, %c0_106] : memref<9x1x9xbf16, #tpu.memory_space<vmem>>, vector<1x1x9xbf16>
    %115 = vector.shape_cast %114 : vector<1x1x9xbf16> to vector<1x9xbf16>
    %cst_107 = arith.constant dense<0.000000e+00> : vector<1x576xf32>
    %116 = tpu.matmul %115, %80, %cst_107 {dimension_numbers = #tpu.dot_dimension_numbers<[1], [0], [0], [1], [0, 0, 1, 1], [], []>} : vector<1x9xbf16>, vector<9x576xbf16>, vector<1x576xf32> -> vector<1x576xf32>
    %117 = arith.truncf %116 : vector<1x576xf32> to vector<1x576xbf16>
    %c4_108 = arith.constant 4 : index
    %c0_109 = arith.constant 0 : index
    %c0_110 = arith.constant 0 : index
    %118 = vector.load %arg12[%c4_108, %c0_109, %c0_110] : memref<9x576x128xbf16, #tpu.memory_space<vmem>>, vector<1x576x128xbf16>
    %119 = vector.shape_cast %118 : vector<1x576x128xbf16> to vector<576x128xbf16>
    %cst_111 = arith.constant dense<0.000000e+00> : vector<1x128xf32>
    %120 = tpu.matmul %117, %119, %cst_111 {dimension_numbers = #tpu.dot_dimension_numbers<[1], [0], [0], [1], [0, 0, 1, 1], [], []>} : vector<1x576xbf16>, vector<576x128xbf16>, vector<1x128xf32> -> vector<1x128xf32>
    %121 = arith.addf %113, %120 : vector<1x128xf32>
    %c5 = arith.constant 5 : index
    %c0_112 = arith.constant 0 : index
    %c0_113 = arith.constant 0 : index
    %122 = vector.load %arg11[%c5, %c0_112, %c0_113] : memref<9x1x9xbf16, #tpu.memory_space<vmem>>, vector<1x1x9xbf16>
    %123 = vector.shape_cast %122 : vector<1x1x9xbf16> to vector<1x9xbf16>
    %cst_114 = arith.constant dense<0.000000e+00> : vector<1x576xf32>
    %124 = tpu.matmul %123, %80, %cst_114 {dimension_numbers = #tpu.dot_dimension_numbers<[1], [0], [0], [1], [0, 0, 1, 1], [], []>} : vector<1x9xbf16>, vector<9x576xbf16>, vector<1x576xf32> -> vector<1x576xf32>
    %125 = arith.truncf %124 : vector<1x576xf32> to vector<1x576xbf16>
    %c5_115 = arith.constant 5 : index
    %c0_116 = arith.constant 0 : index
    %c0_117 = arith.constant 0 : index
    %126 = vector.load %arg12[%c5_115, %c0_116, %c0_117] : memref<9x576x128xbf16, #tpu.memory_space<vmem>>, vector<1x576x128xbf16>
    %127 = vector.shape_cast %126 : vector<1x576x128xbf16> to vector<576x128xbf16>
    %cst_118 = arith.constant dense<0.000000e+00> : vector<1x128xf32>
    %128 = tpu.matmul %125, %127, %cst_118 {dimension_numbers = #tpu.dot_dimension_numbers<[1], [0], [0], [1], [0, 0, 1, 1], [], []>} : vector<1x576xbf16>, vector<576x128xbf16>, vector<1x128xf32> -> vector<1x128xf32>
    %129 = arith.addf %121, %128 : vector<1x128xf32>
    %c6 = arith.constant 6 : index
    %c0_119 = arith.constant 0 : index
    %c0_120 = arith.constant 0 : index
    %130 = vector.load %arg11[%c6, %c0_119, %c0_120] : memref<9x1x9xbf16, #tpu.memory_space<vmem>>, vector<1x1x9xbf16>
    %131 = vector.shape_cast %130 : vector<1x1x9xbf16> to vector<1x9xbf16>
    %cst_121 = arith.constant dense<0.000000e+00> : vector<1x576xf32>
    %132 = tpu.matmul %131, %80, %cst_121 {dimension_numbers = #tpu.dot_dimension_numbers<[1], [0], [0], [1], [0, 0, 1, 1], [], []>} : vector<1x9xbf16>, vector<9x576xbf16>, vector<1x576xf32> -> vector<1x576xf32>
    %133 = arith.truncf %132 : vector<1x576xf32> to vector<1x576xbf16>
    %c6_122 = arith.constant 6 : index
    %c0_123 = arith.constant 0 : index
    %c0_124 = arith.constant 0 : index
    %134 = vector.load %arg12[%c6_122, %c0_123, %c0_124] : memref<9x576x128xbf16, #tpu.memory_space<vmem>>, vector<1x576x128xbf16>
    %135 = vector.shape_cast %134 : vector<1x576x128xbf16> to vector<576x128xbf16>
    %cst_125 = arith.constant dense<0.000000e+00> : vector<1x128xf32>
    %136 = tpu.matmul %133, %135, %cst_125 {dimension_numbers = #tpu.dot_dimension_numbers<[1], [0], [0], [1], [0, 0, 1, 1], [], []>} : vector<1x576xbf16>, vector<576x128xbf16>, vector<1x128xf32> -> vector<1x128xf32>
    %137 = arith.addf %129, %136 : vector<1x128xf32>
    %c7 = arith.constant 7 : index
    %c0_126 = arith.constant 0 : index
    %c0_127 = arith.constant 0 : index
    %138 = vector.load %arg11[%c7, %c0_126, %c0_127] : memref<9x1x9xbf16, #tpu.memory_space<vmem>>, vector<1x1x9xbf16>
    %139 = vector.shape_cast %138 : vector<1x1x9xbf16> to vector<1x9xbf16>
    %cst_128 = arith.constant dense<0.000000e+00> : vector<1x576xf32>
    %140 = tpu.matmul %139, %80, %cst_128 {dimension_numbers = #tpu.dot_dimension_numbers<[1], [0], [0], [1], [0, 0, 1, 1], [], []>} : vector<1x9xbf16>, vector<9x576xbf16>, vector<1x576xf32> -> vector<1x576xf32>
    %141 = arith.truncf %140 : vector<1x576xf32> to vector<1x576xbf16>
    %c7_129 = arith.constant 7 : index
    %c0_130 = arith.constant 0 : index
    %c0_131 = arith.constant 0 : index
    %142 = vector.load %arg12[%c7_129, %c0_130, %c0_131] : memref<9x576x128xbf16, #tpu.memory_space<vmem>>, vector<1x576x128xbf16>
    %143 = vector.shape_cast %142 : vector<1x576x128xbf16> to vector<576x128xbf16>
    %cst_132 = arith.constant dense<0.000000e+00> : vector<1x128xf32>
    %144 = tpu.matmul %141, %143, %cst_132 {dimension_numbers = #tpu.dot_dimension_numbers<[1], [0], [0], [1], [0, 0, 1, 1], [], []>} : vector<1x576xbf16>, vector<576x128xbf16>, vector<1x128xf32> -> vector<1x128xf32>
    %145 = arith.addf %137, %144 : vector<1x128xf32>
    %c8 = arith.constant 8 : index
    %c0_133 = arith.constant 0 : index
    %c0_134 = arith.constant 0 : index
    %146 = vector.load %arg11[%c8, %c0_133, %c0_134] : memref<9x1x9xbf16, #tpu.memory_space<vmem>>, vector<1x1x9xbf16>
    %147 = vector.shape_cast %146 : vector<1x1x9xbf16> to vector<1x9xbf16>
    %cst_135 = arith.constant dense<0.000000e+00> : vector<1x576xf32>
    %148 = tpu.matmul %147, %80, %cst_135 {dimension_numbers = #tpu.dot_dimension_numbers<[1], [0], [0], [1], [0, 0, 1, 1], [], []>} : vector<1x9xbf16>, vector<9x576xbf16>, vector<1x576xf32> -> vector<1x576xf32>
    %149 = arith.truncf %148 : vector<1x576xf32> to vector<1x576xbf16>
    %c8_136 = arith.constant 8 : index
    %c0_137 = arith.constant 0 : index
    %c0_138 = arith.constant 0 : index
    %150 = vector.load %arg12[%c8_136, %c0_137, %c0_138] : memref<9x576x128xbf16, #tpu.memory_space<vmem>>, vector<1x576x128xbf16>
    %151 = vector.shape_cast %150 : vector<1x576x128xbf16> to vector<576x128xbf16>
    %cst_139 = arith.constant dense<0.000000e+00> : vector<1x128xf32>
    %152 = tpu.matmul %149, %151, %cst_139 {dimension_numbers = #tpu.dot_dimension_numbers<[1], [0], [0], [1], [0, 0, 1, 1], [], []>} : vector<1x576xbf16>, vector<576x128xbf16>, vector<1x128xf32> -> vector<1x128xf32>
    %153 = arith.addf %145, %152 : vector<1x128xf32>
    %cst_140 = arith.constant 0.000000e+00 : f32
    %154 = vector.broadcast %cst_140 : f32 to vector<1x128xf32>
    %155 = arith.maximumf %153, %154 : vector<1x128xf32>
    %156 = arith.truncf %155 : vector<1x128xf32> to vector<1x128xbf16>
    %c0_141 = arith.constant 0 : index
    %c0_142 = arith.constant 0 : index
    %157 = vector.load %arg14[%c0_141, %c0_142] : memref<128x128xbf16, #tpu.memory_space<vmem>>, vector<128x128xbf16>
    %cst_143 = arith.constant dense<0.000000e+00> : vector<1x128xf32>
    %158 = tpu.matmul %156, %157, %cst_143 {dimension_numbers = #tpu.dot_dimension_numbers<[1], [0], [0], [1], [0, 0, 1, 1], [], []>} : vector<1x128xbf16>, vector<128x128xbf16>, vector<1x128xf32> -> vector<1x128xf32>
    %c0_144 = arith.constant 0 : index
    %c0_145 = arith.constant 0 : index
    %159 = vector.load %arg15[%c0_144, %c0_145] : memref<1x128xf32, #tpu.memory_space<vmem>>, vector<1x128xf32>
    %160 = arith.addf %158, %159 : vector<1x128xf32>
    %c0_146 = arith.constant 0 : index
    %c0_147 = arith.constant 0 : index
    %c0_148 = arith.constant 0 : index
    %161 = vector.load %arg16[%c0_146, %c0_147, %c0_148] : memref<1x1x128xf32, #tpu.memory_space<vmem>>, vector<1x1x128xf32>
    %162 = vector.shape_cast %161 : vector<1x1x128xf32> to vector<1x128xf32>
    %163 = vector.shape_cast %160 : vector<1x128xf32> to vector<1x1x128xf32>
    tpu.vector_store %arg16[%c0_146, %c0_147, %c0_148], %163 {strides = array<i32>} : memref<1x1x128xf32, #tpu.memory_space<vmem>>, vector<1x1x128xf32>,
    return
  }
  func.func @transform_0(%arg0: i32) -> (i32, i32, i32) {
    %c0_i32 = arith.constant 0 : i32
    %c0_i32_0 = arith.constant 0 : i32
    %c0_i32_1 = arith.constant 0 : i32
    return %arg0, %c0_i32, %c0_i32_0 : i32, i32, i32
  }
  func.func @transform_1(%arg0: i32) -> (i32, i32, i32) {
    %c0_i32 = arith.constant 0 : i32
    %c0_i32_0 = arith.constant 0 : i32
    %c0_i32_1 = arith.constant 0 : i32
    %c0_i32_2 = arith.constant 0 : i32
    return %c0_i32, %c0_i32_0, %c0_i32_1 : i32, i32, i32
  }
  func.func @transform_2(%arg0: i32) -> (i32, i32, i32) {
    %c0_i32 = arith.constant 0 : i32
    %c0_i32_0 = arith.constant 0 : i32
    %c0_i32_1 = arith.constant 0 : i32
    %c0_i32_2 = arith.constant 0 : i32
    return %c0_i32, %c0_i32_0, %c0_i32_1 : i32, i32, i32
  }
  func.func @transform_3(%arg0: i32) -> (i32, i32) {
    %c0_i32 = arith.constant 0 : i32
    %c0_i32_0 = arith.constant 0 : i32
    %c0_i32_1 = arith.constant 0 : i32
    return %c0_i32, %c0_i32_0 : i32, i32
  }
  func.func @transform_4(%arg0: i32) -> (i32, i32, i32) {
    %c0_i32 = arith.constant 0 : i32
    %c0_i32_0 = arith.constant 0 : i32
    %c0_i32_1 = arith.constant 0 : i32
    %c0_i32_2 = arith.constant 0 : i32
    return %c0_i32, %c0_i32_0, %c0_i32_1 : i32, i32, i32
  }
  func.func @transform_5(%arg0: i32) -> (i32, i32, i32) {
    %c0_i32 = arith.constant 0 : i32
    %c0_i32_0 = arith.constant 0 : i32
    %c0_i32_1 = arith.constant 0 : i32
    %c0_i32_2 = arith.constant 0 : i32
    return %c0_i32, %c0_i32_0, %c0_i32_1 : i32, i32, i32
  }
  func.func @transform_6(%arg0: i32) -> (i32, i32) {
    %c0_i32 = arith.constant 0 : i32
    %c0_i32_0 = arith.constant 0 : i32
    %c0_i32_1 = arith.constant 0 : i32
    return %c0_i32, %c0_i32_0 : i32, i32
  }
  func.func @transform_7(%arg0: i32) -> (i32, i32, i32) {
    %c0_i32 = arith.constant 0 : i32
    %c0_i32_0 = arith.constant 0 : i32
    %c0_i32_1 = arith.constant 0 : i32
    %c0_i32_2 = arith.constant 0 : i32
    return %c0_i32, %c0_i32_0, %c0_i32_1 : i32, i32, i32
  }
  func.func @transform_8(%arg0: i32) -> (i32, i32, i32) {
    %c0_i32 = arith.constant 0 : i32
    %c0_i32_0 = arith.constant 0 : i32
    %c0_i32_1 = arith.constant 0 : i32
    %c0_i32_2 = arith.constant 0 : i32
    return %c0_i32, %c0_i32_0, %c0_i32_1 : i32, i32, i32
  }
  func.func @transform_9(%arg0: i32) -> (i32, i32) {
    %c0_i32 = arith.constant 0 : i32
    %c0_i32_0 = arith.constant 0 : i32
    %c0_i32_1 = arith.constant 0 : i32
    return %c0_i32, %c0_i32_0 : i32, i32
  }
  func.func @transform_10(%arg0: i32) -> (i32, i32, i32) {
    %c0_i32 = arith.constant 0 : i32
    %c0_i32_0 = arith.constant 0 : i32
    %c0_i32_1 = arith.constant 0 : i32
    %c0_i32_2 = arith.constant 0 : i32
    return %c0_i32, %c0_i32_0, %c0_i32_1 : i32, i32, i32
  }
  func.func @transform_11(%arg0: i32) -> (i32, i32, i32) {
    %c0_i32 = arith.constant 0 : i32
    %c0_i32_0 = arith.constant 0 : i32
    %c0_i32_1 = arith.constant 0 : i32
    %c0_i32_2 = arith.constant 0 : i32
    return %c0_i32, %c0_i32_0, %c0_i32_1 : i32, i32, i32
  }
  func.func @transform_12(%arg0: i32) -> (i32, i32) {
    %c0_i32 = arith.constant 0 : i32
    %c0_i32_0 = arith.constant 0 : i32
    %c0_i32_1 = arith.constant 0 : i32
    return %c0_i32, %c0_i32_0 : i32, i32
  }
  func.func @transform_13(%arg0: i32) -> (i32, i32) {
    %c0_i32 = arith.constant 0 : i32
    %c0_i32_0 = arith.constant 0 : i32
    %c0_i32_1 = arith.constant 0 : i32
    return %c0_i32, %c0_i32_0 : i32, i32
  }
  func.func @transform_14(%arg0: i32) -> (i32, i32) {
    %c0_i32 = arith.constant 0 : i32
    %c0_i32_0 = arith.constant 0 : i32
    %c0_i32_1 = arith.constant 0 : i32
    return %c0_i32, %c0_i32_0 : i32, i32
  }
  func.func @transform_15(%arg0: i32) -> (i32, i32, i32) {
    %c0_i32 = arith.constant 0 : i32
    %c0_i32_0 = arith.constant 0 : i32
    %c0_i32_1 = arith.constant 0 : i32
    return %arg0, %c0_i32, %c0_i32_0 : i32, i32, i32
  }
}

</mosaic_0001>

<llo_original>
// kernel: custom_cnn_forward.1
$region0: #{custom_cnn_forward.1}
  #allocation0 [shape = 'u32[]', space=smem, size = 0x4, offset = 0x4, fixed_abs, tag = 'smem constant byte address 0x4 - core index']
  #allocation1 [shape = 'u32[144,128]{1,0:T(1,128)}', space=vmem, size = 0x12000, scoped, tag = 'internal scratch']
  %s0 = inlined_call_operand.vmem [shape: bf16[2,32,96], index: 0, kind: input, shape index: {}]
  %s1 = inlined_call_operand.vmem [shape: bf16[3,16,32], index: 1, kind: input, shape index: {}]
  %s2 = inlined_call_operand.vmem [shape: bf16[3,96,256], index: 2, kind: input, shape index: {}]
  %s3 = inlined_call_operand.vmem [shape: f32[1,256], index: 3, kind: input, shape index: {}]
  %s4 = inlined_call_operand.vmem [shape: bf16[2,17,16], index: 4, kind: input, shape index: {}]
  %s5 = inlined_call_operand.vmem [shape: bf16[2,256,544], index: 5, kind: input, shape index: {}]
  %s6 = inlined_call_operand.vmem [shape: f32[1,544], index: 6, kind: input, shape index: {}]
  %s7 = inlined_call_operand.vmem [shape: bf16[3,9,17], index: 7, kind: input, shape index: {}]
  %s8 = inlined_call_operand.vmem [shape: bf16[3,544,576], index: 8, kind: input, shape index: {}]
  %s9 = inlined_call_operand.vmem [shape: f32[1,576], index: 9, kind: input, shape index: {}]
  %s10 = inlined_call_operand.vmem [shape: bf16[9,1,9], index: 10, kind: input, shape index: {}]
  %s11 = inlined_call_operand.vmem [shape: bf16[9,576,128], index: 11, kind: input, shape index: {}]
  %s12 = inlined_call_operand.vmem [shape: f32[1,128], index: 12, kind: input, shape index: {}]
  %s13 = inlined_call_operand.vmem [shape: bf16[128,128], index: 13, kind: input, shape index: {}]
  %s14 = inlined_call_operand.vmem [shape: f32[1,128], index: 14, kind: input, shape index: {}]
  %s15 = inlined_call_operand.hbm [shape: f32[2,1,128], index: 15, kind: output, shape index: {}]
  %s16 = sld [smem:[#allocation0]]
  $region93: #{custom_cnn_forward.1} parent=0
    _
  %s18 = ssub.s32 1, %s16
  %s19 = scalar_select 0, %s18, %s16
  $region1: #{custom_cnn_forward.1} parent=0
    #allocation2 [shape = 'u8[1024]{0}', space=vmem, size = 0x400, scoped, tag = 'output window, operand 0']
    #allocation3 [shape = 's32[2]{0}', space=sflag, size = 0x8, scoped, tag = 'scoped memory for custom_cnn_forward.1']
    %20 = vsyncpa [#allocation3], 0
    %s21 = scalar_lea.sflag [#allocation3], 1
    %22 = vsyncpa %s21, 0
    loop: start=0, step=1, limit=4
    $region2: #{custom_cnn_forward.1} parent=1 // loop_pre_header
      _
    $region3: #{custom_cnn_forward.1} parent=1 // loop_header
      %s24 = sphi 0, %s28
      %p25 = scmp.ge.s32.totalorder %s24, 4
      %s34 = sphi 0, %s36
      %s37 = sphi 0, %s34
      %s38 = sphi 0, %s37
      %s54 = sphi 0, %s38
      %s58 = sphi 0, %s58
      %s60 = sphi 0, %s58
      %s61 = sphi 0, %s60
      %s75 = sphi 0, %s61
      %s79 = sphi 0, %s79
      %s81 = sphi 0, %s79
      %s82 = sphi 0, %s81
      %s96 = sphi 0, %s82
      %s100 = sphi 0, %s100
      %s102 = sphi 0, %s100
      %s103 = sphi 0, %s102
      %s117 = sphi 0, %s103
      %s121 = sphi 0, %s121
      %s123 = sphi 0, %s121
      %s124 = sphi 0, %s123
      %s138 = sphi 0, %s124
      %s142 = sphi 0, %s142
      %s144 = sphi 0, %s142
      %s145 = sphi 0, %s144
      %s159 = sphi 0, %s145
      %s163 = sphi 0, %s163
      %s165 = sphi 0, %s163
      %s166 = sphi 0, %s165
      %s180 = sphi 0, %s166
      %s184 = sphi 0, %s184
      %s186 = sphi 0, %s184
      %s187 = sphi 0, %s186
      %s201 = sphi 0, %s187
      %s205 = sphi 0, %s205
      %s207 = sphi 0, %s205
      %s208 = sphi 0, %s207
      %s222 = sphi 0, %s208
      %s226 = sphi 0, %s226
      %s228 = sphi 0, %s226
      %s229 = sphi 0, %s228
      %s243 = sphi 0, %s229
      %s247 = sphi 0, %s247
      %s249 = sphi 0, %s247
      %s250 = sphi 0, %s249
      %s264 = sphi 0, %s250
      %s268 = sphi 0, %s268
      %s270 = sphi 0, %s268
      %s271 = sphi 0, %s270
      %s285 = sphi 0, %s271
      %s289 = sphi 0, %s289
      %s291 = sphi 0, %s289
      %s292 = sphi 0, %s291
      %s306 = sphi 0, %s292
      %s310 = sphi 0, %s310
      %s312 = sphi 0, %s310
      %s313 = sphi 0, %s312
      %s327 = sphi 0, %s313
      %s331 = sphi 0, %s331
      %s333 = sphi 0, %s331
      %s334 = sphi 0, %s333
      %s348 = sphi 0, %s334
      %s354 = sphi 0, %s356
      %s357 = sphi 0, %s354
      %s358 = sphi 0, %s357
      %s374 = sphi 0, %s358
    $region4: #{custom_cnn_forward.1} parent=1 // loop_header_branch
      %27 = sbr.rel (%p25) target = $region8
    $region5: #{custom_cnn_forward.1} parent=1 // loop_body
      %s29 = ssub.s32 %s24, 1
      %s30 = ssub.s32 %s24, 2
      %s31 = sadd.s32 %s24, 1
      %s32 = ssub.s32 %s24, %s31
      %p33 = scmp.eq.s32.totalorder %s32, 0
      %s35 = sadd.s32 %s34, 1
      %s36 = scalar_select %p33, %s34, %s35
      %p39 = pneg %p33
      %p40 = scmp.eq.s32.totalorder %s24, 1
      %p41 = por %p39, %p40
      %p42 = scmp.ne.s32.totalorder %s34, %s37
      %p43 = scmp.eq.s32.totalorder %s24, 0
      %p44 = por %p42, %p43
      %p45 = scmp.ne.s32.totalorder %s34, %s37
      %p46 = scmp.eq.s32.totalorder %s29, 1
      %p47 = por %p45, %p46
      %p48 = scmp.ne.s32.totalorder %s37, %s38
      %p49 = scmp.eq.s32.totalorder %s29, 0
      %p50 = por %p48, %p49
      %p51 = scmp.ne.s32.totalorder %s37, %s38
      %p52 = scmp.eq.s32.totalorder %s30, 1
      %p53 = por %p51, %p52
      %p55 = scmp.ne.s32.totalorder %s38, %s54
      %p56 = scmp.eq.s32.totalorder %s30, 0
      %p57 = por %p55, %p56
      %s59 = sadd.s32 %s58, 1
      %p62 = scmp.eq.s32.totalorder %s24, 1
      %p63 = scmp.ne.s32.totalorder %s58, %s60
      %p64 = scmp.eq.s32.totalorder %s24, 0
      %p65 = por %p63, %p64
      %p66 = scmp.ne.s32.totalorder %s58, %s60
      %p67 = scmp.eq.s32.totalorder %s29, 1
      %p68 = por %p66, %p67
      %p69 = scmp.ne.s32.totalorder %s60, %s61
      %p70 = scmp.eq.s32.totalorder %s29, 0
      %p71 = por %p69, %p70
      %p72 = scmp.ne.s32.totalorder %s60, %s61
      %p73 = scmp.eq.s32.totalorder %s30, 1
      %p74 = por %p72, %p73
      %p76 = scmp.ne.s32.totalorder %s61, %s75
      %p77 = scmp.eq.s32.totalorder %s30, 0
      %p78 = por %p76, %p77
      %s80 = sadd.s32 %s79, 1
      %p83 = scmp.eq.s32.totalorder %s24, 1
      %p84 = scmp.ne.s32.totalorder %s79, %s81
      %p85 = scmp.eq.s32.totalorder %s24, 0
      %p86 = por %p84, %p85
      %p87 = scmp.ne.s32.totalorder %s79, %s81
      %p88 = scmp.eq.s32.totalorder %s29, 1
      %p89 = por %p87, %p88
      %p90 = scmp.ne.s32.totalorder %s81, %s82
      %p91 = scmp.eq.s32.totalorder %s29, 0
      %p92 = por %p90, %p91
      %p93 = scmp.ne.s32.totalorder %s81, %s82
      %p94 = scmp.eq.s32.totalorder %s30, 1
      %p95 = por %p93, %p94
      %p97 = scmp.ne.s32.totalorder %s82, %s96
      %p98 = scmp.eq.s32.totalorder %s30, 0
      %p99 = por %p97, %p98
      %s101 = sadd.s32 %s100, 1
      %p104 = scmp.eq.s32.totalorder %s24, 1
      %p105 = scmp.ne.s32.totalorder %s100, %s102
      %p106 = scmp.eq.s32.totalorder %s24, 0
      %p107 = por %p105, %p106
      %p108 = scmp.ne.s32.totalorder %s100, %s102
      %p109 = scmp.eq.s32.totalorder %s29, 1
      %p110 = por %p108, %p109
      %p111 = scmp.ne.s32.totalorder %s102, %s103
      %p112 = scmp.eq.s32.totalorder %s29, 0
      %p113 = por %p111, %p112
      %p114 = scmp.ne.s32.totalorder %s102, %s103
      %p115 = scmp.eq.s32.totalorder %s30, 1
      %p116 = por %p114, %p115
      %p118 = scmp.ne.s32.totalorder %s103, %s117
      %p119 = scmp.eq.s32.totalorder %s30, 0
      %p120 = por %p118, %p119
      %s122 = sadd.s32 %s121, 1
      %p125 = scmp.eq.s32.totalorder %s24, 1
      %p126 = scmp.ne.s32.totalorder %s121, %s123
      %p127 = scmp.eq.s32.totalorder %s24, 0
      %p128 = por %p126, %p127
      %p129 = scmp.ne.s32.totalorder %s121, %s123
      %p130 = scmp.eq.s32.totalorder %s29, 1
      %p131 = por %p129, %p130
      %p132 = scmp.ne.s32.totalorder %s123, %s124
      %p133 = scmp.eq.s32.totalorder %s29, 0
      %p134 = por %p132, %p133
      %p135 = scmp.ne.s32.totalorder %s123, %s124
      %p136 = scmp.eq.s32.totalorder %s30, 1
      %p137 = por %p135, %p136
      %p139 = scmp.ne.s32.totalorder %s124, %s138
      %p140 = scmp.eq.s32.totalorder %s30, 0
      %p141 = por %p139, %p140
      %s143 = sadd.s32 %s142, 1
      %p146 = scmp.eq.s32.totalorder %s24, 1
      %p147 = scmp.ne.s32.totalorder %s142, %s144
      %p148 = scmp.eq.s32.totalorder %s24, 0
      %p149 = por %p147, %p148
      %p150 = scmp.ne.s32.totalorder %s142, %s144
      %p151 = scmp.eq.s32.totalorder %s29, 1
      %p152 = por %p150, %p151
      %p153 = scmp.ne.s32.totalorder %s144, %s145
      %p154 = scmp.eq.s32.totalorder %s29, 0
      %p155 = por %p153, %p154
      %p156 = scmp.ne.s32.totalorder %s144, %s145
      %p157 = scmp.eq.s32.totalorder %s30, 1
      %p158 = por %p156, %p157
      %p160 = scmp.ne.s32.totalorder %s145, %s159
      %p161 = scmp.eq.s32.totalorder %s30, 0
      %p162 = por %p160, %p161
      %s164 = sadd.s32 %s163, 1
      %p167 = scmp.eq.s32.totalorder %s24, 1
      %p168 = scmp.ne.s32.totalorder %s163, %s165
      %p169 = scmp.eq.s32.totalorder %s24, 0
      %p170 = por %p168, %p169
      %p171 = scmp.ne.s32.totalorder %s163, %s165
      %p172 = scmp.eq.s32.totalorder %s29, 1
      %p173 = por %p171, %p172
      %p174 = scmp.ne.s32.totalorder %s165, %s166
      %p175 = scmp.eq.s32.totalorder %s29, 0
      %p176 = por %p174, %p175
      %p177 = scmp.ne.s32.totalorder %s165, %s166
      %p178 = scmp.eq.s32.totalorder %s30, 1
      %p179 = por %p177, %p178
      %p181 = scmp.ne.s32.totalorder %s166, %s180
      %p182 = scmp.eq.s32.totalorder %s30, 0
      %p183 = por %p181, %p182
      %s185 = sadd.s32 %s184, 1
      %p188 = scmp.eq.s32.totalorder %s24, 1
      %p189 = scmp.ne.s32.totalorder %s184, %s186
      %p190 = scmp.eq.s32.totalorder %s24, 0
      %p191 = por %p189, %p190
      %p192 = scmp.ne.s32.totalorder %s184, %s186
      %p193 = scmp.eq.s32.totalorder %s29, 1
      %p194 = por %p192, %p193
      %p195 = scmp.ne.s32.totalorder %s186, %s187
      %p196 = scmp.eq.s32.totalorder %s29, 0
      %p197 = por %p195, %p196
      %p198 = scmp.ne.s32.totalorder %s186, %s187
      %p199 = scmp.eq.s32.totalorder %s30, 1
      %p200 = por %p198, %p199
      %p202 = scmp.ne.s32.totalorder %s187, %s201
      %p203 = scmp.eq.s32.totalorder %s30, 0
      %p204 = por %p202, %p203
      %s206 = sadd.s32 %s205, 1
      %p209 = scmp.eq.s32.totalorder %s24, 1
      %p210 = scmp.ne.s32.totalorder %s205, %s207
      %p211 = scmp.eq.s32.totalorder %s24, 0
      %p212 = por %p210, %p211
      %p213 = scmp.ne.s32.totalorder %s205, %s207
      %p214 = scmp.eq.s32.totalorder %s29, 1
      %p215 = por %p213, %p214
      %p216 = scmp.ne.s32.totalorder %s207, %s208
      %p217 = scmp.eq.s32.totalorder %s29, 0
      %p218 = por %p216, %p217
      %p219 = scmp.ne.s32.totalorder %s207, %s208
      %p220 = scmp.eq.s32.totalorder %s30, 1
      %p221 = por %p219, %p220
      %p223 = scmp.ne.s32.totalorder %s208, %s222
      %p224 = scmp.eq.s32.totalorder %s30, 0
      %p225 = por %p223, %p224
      %s227 = sadd.s32 %s226, 1
      %p230 = scmp.eq.s32.totalorder %s24, 1
      %p231 = scmp.ne.s32.totalorder %s226, %s228
      %p232 = scmp.eq.s32.totalorder %s24, 0
      %p233 = por %p231, %p232
      %p234 = scmp.ne.s32.totalorder %s226, %s228
      %p235 = scmp.eq.s32.totalorder %s29, 1
      %p236 = por %p234, %p235
      %p237 = scmp.ne.s32.totalorder %s228, %s229
      %p238 = scmp.eq.s32.totalorder %s29, 0
      %p239 = por %p237, %p238
      %p240 = scmp.ne.s32.totalorder %s228, %s229
      %p241 = scmp.eq.s32.totalorder %s30, 1
      %p242 = por %p240, %p241
      %p244 = scmp.ne.s32.totalorder %s229, %s243
      %p245 = scmp.eq.s32.totalorder %s30, 0
      %p246 = por %p244, %p245
      %s248 = sadd.s32 %s247, 1
      %p251 = scmp.eq.s32.totalorder %s24, 1
      %p252 = scmp.ne.s32.totalorder %s247, %s249
      %p253 = scmp.eq.s32.totalorder %s24, 0
      %p254 = por %p252, %p253
      %p255 = scmp.ne.s32.totalorder %s247, %s249
      %p256 = scmp.eq.s32.totalorder %s29, 1
      %p257 = por %p255, %p256
      %p258 = scmp.ne.s32.totalorder %s249, %s250
      %p259 = scmp.eq.s32.totalorder %s29, 0
      %p260 = por %p258, %p259
      %p261 = scmp.ne.s32.totalorder %s249, %s250
      %p262 = scmp.eq.s32.totalorder %s30, 1
      %p263 = por %p261, %p262
      %p265 = scmp.ne.s32.totalorder %s250, %s264
      %p266 = scmp.eq.s32.totalorder %s30, 0
      %p267 = por %p265, %p266
      %s269 = sadd.s32 %s268, 1
      %p272 = scmp.eq.s32.totalorder %s24, 1
      %p273 = scmp.ne.s32.totalorder %s268, %s270
      %p274 = scmp.eq.s32.totalorder %s24, 0
      %p275 = por %p273, %p274
      %p276 = scmp.ne.s32.totalorder %s268, %s270
      %p277 = scmp.eq.s32.totalorder %s29, 1
      %p278 = por %p276, %p277
      %p279 = scmp.ne.s32.totalorder %s270, %s271
      %p280 = scmp.eq.s32.totalorder %s29, 0
      %p281 = por %p279, %p280
      %p282 = scmp.ne.s32.totalorder %s270, %s271
      %p283 = scmp.eq.s32.totalorder %s30, 1
      %p284 = por %p282, %p283
      %p286 = scmp.ne.s32.totalorder %s271, %s285
      %p287 = scmp.eq.s32.totalorder %s30, 0
      %p288 = por %p286, %p287
      %s290 = sadd.s32 %s289, 1
      %p293 = scmp.eq.s32.totalorder %s24, 1
      %p294 = scmp.ne.s32.totalorder %s289, %s291
      %p295 = scmp.eq.s32.totalorder %s24, 0
      %p296 = por %p294, %p295
      %p297 = scmp.ne.s32.totalorder %s289, %s291
      %p298 = scmp.eq.s32.totalorder %s29, 1
      %p299 = por %p297, %p298
      %p300 = scmp.ne.s32.totalorder %s291, %s292
      %p301 = scmp.eq.s32.totalorder %s29, 0
      %p302 = por %p300, %p301
      %p303 = scmp.ne.s32.totalorder %s291, %s292
      %p304 = scmp.eq.s32.totalorder %s30, 1
      %p305 = por %p303, %p304
      %p307 = scmp.ne.s32.totalorder %s292, %s306
      %p308 = scmp.eq.s32.totalorder %s30, 0
      %p309 = por %p307, %p308
      %s311 = sadd.s32 %s310, 1
      %p314 = scmp.eq.s32.totalorder %s24, 1
      %p315 = scmp.ne.s32.totalorder %s310, %s312
      %p316 = scmp.eq.s32.totalorder %s24, 0
      %p317 = por %p315, %p316
      %p318 = scmp.ne.s32.totalorder %s310, %s312
      %p319 = scmp.eq.s32.totalorder %s29, 1
      %p320 = por %p318, %p319
      %p321 = scmp.ne.s32.totalorder %s312, %s313
      %p322 = scmp.eq.s32.totalorder %s29, 0
      %p323 = por %p321, %p322
      %p324 = scmp.ne.s32.totalorder %s312, %s313
      %p325 = scmp.eq.s32.totalorder %s30, 1
      %p326 = por %p324, %p325
      %p328 = scmp.ne.s32.totalorder %s313, %s327
      %p329 = scmp.eq.s32.totalorder %s30, 0
      %p330 = por %p328, %p329
      %s332 = sadd.s32 %s331, 1
      %p335 = scmp.eq.s32.totalorder %s24, 1
      %p336 = scmp.ne.s32.totalorder %s331, %s333
      %p337 = scmp.eq.s32.totalorder %s24, 0
      %p338 = por %p336, %p337
      %p339 = scmp.ne.s32.totalorder %s331, %s333
      %p340 = scmp.eq.s32.totalorder %s29, 1
      %p341 = por %p339, %p340
      %p342 = scmp.ne.s32.totalorder %s333, %s334
      %p343 = scmp.eq.s32.totalorder %s29, 0
      %p344 = por %p342, %p343
      %p345 = scmp.ne.s32.totalorder %s333, %s334
      %p346 = scmp.eq.s32.totalorder %s30, 1
      %p347 = por %p345, %p346
      %p349 = scmp.ne.s32.totalorder %s334, %s348
      %p350 = scmp.eq.s32.totalorder %s30, 0
      %p351 = por %p349, %p350
      %s352 = ssub.s32 %s24, %s31
      %p353 = scmp.eq.s32.totalorder %s352, 0
      %s355 = sadd.s32 %s354, 1
      %s356 = scalar_select %p353, %s354, %s355
      %p359 = pneg %p353
      %p360 = scmp.eq.s32.totalorder %s24, 1
      %p361 = por %p359, %p360
      %p362 = scmp.ne.s32.totalorder %s354, %s357
      %p363 = scmp.eq.s32.totalorder %s24, 0
      %p364 = por %p362, %p363
      %p365 = scmp.ne.s32.totalorder %s354, %s357
      %p366 = scmp.eq.s32.totalorder %s29, 1
      %p367 = por %p365, %p366
      %p368 = scmp.ne.s32.totalorder %s357, %s358
      %p369 = scmp.eq.s32.totalorder %s29, 0
      %p370 = por %p368, %p369
      %p371 = scmp.ne.s32.totalorder %s357, %s358
      %p372 = scmp.eq.s32.totalorder %s30, 1
      %p373 = por %p371, %p372
      %p375 = scmp.ne.s32.totalorder %s358, %s374
      %p376 = scmp.eq.s32.totalorder %s30, 0
      %p377 = por %p375, %p376
      %p378 = scmp.le.s32.totalorder 1, %s24
      %p379 = scmp.lt.s32.totalorder %s24, 3
      %p380 = pnand %p378, %p379
      %p381 = pneg %p380
      // Predicated region
      $region9: #{custom_cnn_forward.1} parent=5 // pred_check
        _
      $region10: #{custom_cnn_forward.1} parent=5 // pred_check_branch
        %383 = sbr.rel (%p380) target = $region12
      $region11: #{custom_cnn_forward.1} parent=5 // pred_region
        %s384 = ssub.s32 %s24, 1
        // Predicated region
        $region13: #{custom_cnn_forward.1} parent=11 // pred_check
          %p385 = pneg %p71
        $region14: #{custom_cnn_forward.1} parent=11 // pred_check_branch
          %387 = sbr.rel (%p385) target = $region16
        $region15: #{custom_cnn_forward.1} parent=11 // pred_region
          _
        $region16: #{custom_cnn_forward.1} parent=11 // pred_fallthru
          _
        // Predicated region
        $region17: #{custom_cnn_forward.1} parent=11 // pred_check
          %p388 = pneg %p92
        $region18: #{custom_cnn_forward.1} parent=11 // pred_check_branch
          %390 = sbr.rel (%p388) target = $region20
        $region19: #{custom_cnn_forward.1} parent=11 // pred_region
          _
        $region20: #{custom_cnn_forward.1} parent=11 // pred_fallthru
          _
        // Predicated region
        $region21: #{custom_cnn_forward.1} parent=11 // pred_check
          %p391 = pneg %p113
        $region22: #{custom_cnn_forward.1} parent=11 // pred_check_branch
          %393 = sbr.rel (%p391) target = $region24
        $region23: #{custom_cnn_forward.1} parent=11 // pred_region
          _
        $region24: #{custom_cnn_forward.1} parent=11 // pred_fallthru
          _
        // Predicated region
        $region25: #{custom_cnn_forward.1} parent=11 // pred_check
          %p394 = pneg %p134
        $region26: #{custom_cnn_forward.1} parent=11 // pred_check_branch
          %396 = sbr.rel (%p394) target = $region28
        $region27: #{custom_cnn_forward.1} parent=11 // pred_region
          _
        $region28: #{custom_cnn_forward.1} parent=11 // pred_fallthru
          _
        // Predicated region
        $region29: #{custom_cnn_forward.1} parent=11 // pred_check
          %p397 = pneg %p155
        $region30: #{custom_cnn_forward.1} parent=11 // pred_check_branch
          %399 = sbr.rel (%p397) target = $region32
        $region31: #{custom_cnn_forward.1} parent=11 // pred_region
          _
        $region32: #{custom_cnn_forward.1} parent=11 // pred_fallthru
          _
        // Predicated region
        $region33: #{custom_cnn_forward.1} parent=11 // pred_check
          %p400 = pneg %p176
        $region34: #{custom_cnn_forward.1} parent=11 // pred_check_branch
          %402 = sbr.rel (%p400) target = $region36
        $region35: #{custom_cnn_forward.1} parent=11 // pred_region
          _
        $region36: #{custom_cnn_forward.1} parent=11 // pred_fallthru
          _
        // Predicated region
        $region37: #{custom_cnn_forward.1} parent=11 // pred_check
          %p403 = pneg %p197
        $region38: #{custom_cnn_forward.1} parent=11 // pred_check_branch
          %405 = sbr.rel (%p403) target = $region40
        $region39: #{custom_cnn_forward.1} parent=11 // pred_region
          _
        $region40: #{custom_cnn_forward.1} parent=11 // pred_fallthru
          _
        // Predicated region
        $region41: #{custom_cnn_forward.1} parent=11 // pred_check
          %p406 = pneg %p218
        $region42: #{custom_cnn_forward.1} parent=11 // pred_check_branch
          %408 = sbr.rel (%p406) target = $region44
        $region43: #{custom_cnn_forward.1} parent=11 // pred_region
          _
        $region44: #{custom_cnn_forward.1} parent=11 // pred_fallthru
          _
        // Predicated region
        $region45: #{custom_cnn_forward.1} parent=11 // pred_check
          %p409 = pneg %p239
        $region46: #{custom_cnn_forward.1} parent=11 // pred_check_branch
          %411 = sbr.rel (%p409) target = $region48
        $region47: #{custom_cnn_forward.1} parent=11 // pred_region
          _
        $region48: #{custom_cnn_forward.1} parent=11 // pred_fallthru
          _
        // Predicated region
        $region49: #{custom_cnn_forward.1} parent=11 // pred_check
          %p412 = pneg %p260
        $region50: #{custom_cnn_forward.1} parent=11 // pred_check_branch
          %414 = sbr.rel (%p412) target = $region52
        $region51: #{custom_cnn_forward.1} parent=11 // pred_region
          _
        $region52: #{custom_cnn_forward.1} parent=11 // pred_fallthru
          _
        // Predicated region
        $region53: #{custom_cnn_forward.1} parent=11 // pred_check
          %p415 = pneg %p281
        $region54: #{custom_cnn_forward.1} parent=11 // pred_check_branch
          %417 = sbr.rel (%p415) target = $region56
        $region55: #{custom_cnn_forward.1} parent=11 // pred_region
          _
        $region56: #{custom_cnn_forward.1} parent=11 // pred_fallthru
          _
        // Predicated region
        $region57: #{custom_cnn_forward.1} parent=11 // pred_check
          %p418 = pneg %p302
        $region58: #{custom_cnn_forward.1} parent=11 // pred_check_branch
          %420 = sbr.rel (%p418) target = $region60
        $region59: #{custom_cnn_forward.1} parent=11 // pred_region
          _
        $region60: #{custom_cnn_forward.1} parent=11 // pred_fallthru
          _
        // Predicated region
        $region61: #{custom_cnn_forward.1} parent=11 // pred_check
          %p421 = pneg %p323
        $region62: #{custom_cnn_forward.1} parent=11 // pred_check_branch
          %423 = sbr.rel (%p421) target = $region64
        $region63: #{custom_cnn_forward.1} parent=11 // pred_region
          _
        $region64: #{custom_cnn_forward.1} parent=11 // pred_fallthru
          _
        // Predicated region
        $region65: #{custom_cnn_forward.1} parent=11 // pred_check
          %p424 = pneg %p344
        $region66: #{custom_cnn_forward.1} parent=11 // pred_check_branch
          %426 = sbr.rel (%p424) target = $region68
        $region67: #{custom_cnn_forward.1} parent=11 // pred_region
          _
        $region68: #{custom_cnn_forward.1} parent=11 // pred_fallthru
          _
      $region12: #{custom_cnn_forward.1} parent=5 // pred_fallthru
        _
      %p427 = scmp.lt.s32.totalorder %s24, 2
      // Predicated region
      $region69: #{custom_cnn_forward.1} parent=5 // pred_check
        %p428 = pneg %p427
      $region70: #{custom_cnn_forward.1} parent=5 // pred_check_branch
        %430 = sbr.rel (%p428) target = $region72
      $region71: #{custom_cnn_forward.1} parent=5 // pred_region
        // Predicated region
        $region73: #{custom_cnn_forward.1} parent=71 // pred_check
          %p431 = pneg %p44
        $region74: #{custom_cnn_forward.1} parent=71 // pred_check_branch
          %433 = sbr.rel (%p431) target = $region76
        $region75: #{custom_cnn_forward.1} parent=71 // pred_region
          %p434 = scmp.lt.s32.totalorder %s24, 1
          %s435 = scalar_select %p434, %s24, 1
          %s436 = smul.addr %s435, 4
          %s437 = smul.addr %s436, 4
          %s438 = scalar_lea.vmem %s0, %s437
        $region76: #{custom_cnn_forward.1} parent=71 // pred_fallthru
          _
      $region72: #{custom_cnn_forward.1} parent=5 // pred_fallthru
        _
      %p439 = scmp.le.s32.totalorder 1, %s24
      %p440 = scmp.lt.s32.totalorder %s24, 3
      %p441 = pnand %p439, %p440
      %p442 = pneg %p441
      // Predicated region
      $region77: #{custom_cnn_forward.1} parent=5 // pred_check
        _
      $region78: #{custom_cnn_forward.1} parent=5 // pred_check_branch
        %444 = sbr.rel (%p441) target = $region80
      $region79: #{custom_cnn_forward.1} parent=5 // pred_region
        %s445 = ssub.s32 %s24, 1
        %p446 = scmp.lt.s32.totalorder %s29, 1
        %s447 = scalar_select %p446, %s29, 1
        %s448 = smul.addr %s447, 4
        %s449 = smul.addr %s448, 4
        %s450 = scalar_lea.vmem %s0, %s449
        %p451 = pneg %p50
        %p452 = pneg %p47
        %p453 = pneg %p71
        %p454 = pneg %p68
        %p455 = pneg %p92
        %p456 = pneg %p89
        %p457 = pneg %p113
        %p458 = pneg %p110
        %p459 = pneg %p134
        %p460 = pneg %p131
        %p461 = pneg %p155
        %p462 = pneg %p152
        %p463 = pneg %p176
        %p464 = pneg %p173
        %p465 = pneg %p197
        %p466 = pneg %p194
        %p467 = pneg %p218
        %p468 = pneg %p215
        %p469 = pneg %p239
        %p470 = pneg %p236
        %p471 = pneg %p260
        %p472 = pneg %p257
        %p473 = pneg %p281
        %p474 = pneg %p278
        %p475 = pneg %p302
        %p476 = pneg %p299
        %p477 = pneg %p323
        %p478 = pneg %p320
        %p479 = pneg %p344
        %p480 = pneg %p341
        %p481 = pneg %p370
        %p482 = pneg %p367
        %s483 = sand.u32 %s357, 1
        %s484 = scalar_lea.sflag [#allocation3], %s483
        %s485 = sand.u32 %s357, 1
        %s486 = scalar_lea.vmem [#allocation2], %s485
        %p487 = scmp.lt.s32.totalorder %s29, 1
        %s488 = scalar_select %p487, %s29, 1
        %s489 = smul.addr %s488, 4
        %s490 = smul.addr %s489, 4
        %s491 = scalar_lea.vmem %s0, %s490
        %v493 = vld [vmem:[%s491] sm:$0xf]
        %v494 = vld [vmem:[%s491 + $0x4] sm:$0xf]
        %v495 = vld [vmem:[%s491 + $0x8] sm:$0xf]
        %v496 = vld [vmem:[%s491 + $0xc] sm:$0xf]
        %v497 = vld [vmem:[%s3] sm:$0x3]
        %v498 = vld [vmem:[%s1] sm:$0xf]
        %v499 = vld [vmem:[%s1 + $0x4] sm:$0xf]
        %v502 = vunpack.c.l.b16 %v498
        %v503 = vunpack.c.l.b16 %v499
        %v504 = vpack.c.b16 %v503, %v502
        %v509 = vunpack.c.l.b16 %v493
        %v510 = vunpack.c.l.b16 %v494
        %v511 = vunpack.c.l.b16 %v495
        %v512 = vunpack.c.l.b16 %v496
        %v513 = vpack.c.b16 %v510, %v509
        %v514 = vpack.c.b16 %v512, %v511
        %vm517 = vcmask 261120
        %v519 = vsel %vm517, %v504, 0
        %521 = vmatprep.subr.bf16.mxu0 0
        %522 = vmatpush1.bf16.msra.mxu0 %v513
        %523 = vmatprep.subr.bf16.mxu0 0
        %524 = vmatpush1.bf16.msra.mxu0 %v514
        %525 = vmatprep.subr.bf16.mxu0 0
        %526 = vmatpush1.bf16.msra.mxu0 0
        %527 = vmatprep.subr.bf16.mxu0 0
        %528 = vmatpush1.bf16.msra.mxu0 0
        %529 = vmatprep.subr.bf16.mxu0 0
        %530 = vmatpush1.bf16.msra.mxu0 0
        %531 = vmatprep.subr.bf16.mxu0 0
        %532 = vmatpush1.bf16.msra.mxu0 0
        %533 = vmatprep.subr.bf16.mxu0 0
        %534 = vmatpush1.bf16.msra.mxu0 0
        %535 = vmatprep.subr.bf16.mxu0 0
        %536 = vmatpush1.bf16.msra.mxu0 0
        %537 = vmatprep.subr.bf16.mxu0 0
        %538 = vmatpush1.bf16.msra.mxu0 0
        %539 = vmatprep.subr.bf16.mxu0 0
        %540 = vmatpush1.bf16.msra.mxu0 0
        %541 = vmatprep.subr.bf16.mxu0 0
        %542 = vmatpush1.bf16.msra.mxu0 0
        %543 = vmatprep.subr.bf16.mxu0 0
        %544 = vmatpush1.bf16.msra.mxu0 0
        %545 = vmatprep.subr.bf16.mxu0 0
        %546 = vmatpush1.bf16.msra.mxu0 0
        %547 = vmatprep.subr.bf16.mxu0 0
        %548 = vmatpush1.bf16.msra.mxu0 0
        %549 = vmatprep.subr.bf16.mxu0 0
        %550 = vmatpush1.bf16.msra.mxu0 0
        %551 = vmatprep.subr.bf16.mxu0 0
        %552 = vmatpush1.bf16.msra.mxu0 0
        %553 = vmatprep.mubr.bf16.mxu0 0
        %554 = vmatmul.mubr.bf16.gmra.mrb[0].mxu0 %v519
        %v555 = vpop.f32.mrb[0].mxu0
        %v556 = vadd.f32 0.0, %v555
        %v557 = vpop.f32.mrb[0].mxu0
        %v558 = vpop.f32.mrb[0].mxu0
        %v559 = vadd.f32 0.0, %v558
        %v560 = vpop.f32.mrb[0].mxu0
        %561 = vdwg.mxu0
        %v562 = vpack.c.bf16 %v559, %v556
        %v563 = vld [vmem:[%s2] sm:$0xff]
        %v564 = vld [vmem:[%s2 + $0x8] sm:$0xff]
        %v565 = vld [vmem:[%s2 + $0x10] sm:$0xff]
        %v566 = vld [vmem:[%s2 + $0x18] sm:$0xff]
        %v567 = vld [vmem:[%s2 + $0x20] sm:$0xff]
        %v568 = vld [vmem:[%s2 + $0x28] sm:$0xff]
        %v569 = vld [vmem:[%s2 + $0x30] sm:$0xff]
        %v570 = vld [vmem:[%s2 + $0x38] sm:$0xff]
        %v571 = vld [vmem:[%s2 + $0x40] sm:$0xff]
        %v572 = vld [vmem:[%s2 + $0x48] sm:$0xff]
        %v573 = vld [vmem:[%s2 + $0x50] sm:$0xff]
        %v574 = vld [vmem:[%s2 + $0x58] sm:$0xff]
        %v587 = vunpack.c.l.b16 %v563
        %v588 = vunpack.c.h.b16 %v563
        %v589 = vunpack.c.l.b16 %v564
        %v590 = vunpack.c.h.b16 %v564
        %v591 = vunpack.c.l.b16 %v565
        %v592 = vunpack.c.h.b16 %v565
        %v593 = vunpack.c.l.b16 %v566
        %v594 = vunpack.c.h.b16 %v566
        %v595 = vunpack.c.l.b16 %v567
        %v596 = vunpack.c.h.b16 %v567
        %v597 = vunpack.c.l.b16 %v568
        %v598 = vunpack.c.h.b16 %v568
        %v599 = vunpack.c.l.b16 %v569
        %v600 = vunpack.c.h.b16 %v569
        %v601 = vunpack.c.l.b16 %v570
        %v602 = vunpack.c.h.b16 %v570
        %v603 = vunpack.c.l.b16 %v571
        %v604 = vunpack.c.h.b16 %v571
        %v605 = vunpack.c.l.b16 %v572
        %v606 = vunpack.c.h.b16 %v572
        %v607 = vunpack.c.l.b16 %v573
        %v608 = vunpack.c.h.b16 %v573
        %v609 = vunpack.c.l.b16 %v574
        %v610 = vunpack.c.h.b16 %v574
        %v611 = vpack.c.b16 %v589, %v587
        %v612 = vpack.c.b16 %v590, %v588
        %v613 = vpack.c.b16 %v593, %v591
        %v614 = vpack.c.b16 %v594, %v592
        %v615 = vpack.c.b16 %v597, %v595
        %v616 = vpack.c.b16 %v598, %v596
        %v617 = vpack.c.b16 %v601, %v599
        %v618 = vpack.c.b16 %v602, %v600
        %v619 = vpack.c.b16 %v605, %v603
        %v620 = vpack.c.b16 %v606, %v604
        %v621 = vpack.c.b16 %v609, %v607
        %v622 = vpack.c.b16 %v610, %v608
        %vm635 = vcmask 785408
        %v637 = vsel %vm635, %v562, 0
        %639 = vmatprep.subr.bf16.mxu0 %v612
        %640 = vmatpush1.bf16.msra.mxu0 %v611
        %641 = vmatprep.subr.bf16.mxu0 %v614
        %642 = vmatpush1.bf16.msra.mxu0 %v613
        %643 = vmatprep.subr.bf16.mxu0 %v616
        %644 = vmatpush1.bf16.msra.mxu0 %v615
        %645 = vmatprep.subr.bf16.mxu0 %v618
        %646 = vmatpush1.bf16.msra.mxu0 %v617
        %647 = vmatprep.subr.bf16.mxu0 %v620
        %648 = vmatpush1.bf16.msra.mxu0 %v619
        %649 = vmatprep.subr.bf16.mxu0 %v622
        %650 = vmatpush1.bf16.msra.mxu0 %v621
        %651 = vmatprep.subr.bf16.mxu0 0
        %652 = vmatpush1.bf16.msra.mxu0 0
        %653 = vmatprep.subr.bf16.mxu0 0
        %654 = vmatpush1.bf16.msra.mxu0 0
        %655 = vmatprep.subr.bf16.mxu0 0
        %656 = vmatpush1.bf16.msra.mxu0 0
        %657 = vmatprep.subr.bf16.mxu0 0
        %658 = vmatpush1.bf16.msra.mxu0 0
        %659 = vmatprep.subr.bf16.mxu0 0
        %660 = vmatpush1.bf16.msra.mxu0 0
        %661 = vmatprep.subr.bf16.mxu0 0
        %662 = vmatpush1.bf16.msra.mxu0 0
        %663 = vmatprep.subr.bf16.mxu0 0
        %664 = vmatpush1.bf16.msra.mxu0 0
        %665 = vmatprep.subr.bf16.mxu0 0
        %666 = vmatpush1.bf16.msra.mxu0 0
        %667 = vmatprep.subr.bf16.mxu0 0
        %668 = vmatpush1.bf16.msra.mxu0 0
        %669 = vmatprep.subr.bf16.mxu0 0
        %670 = vmatpush1.bf16.msra.mxu0 0
        %671 = vmatprep.mubr.bf16.mxu0 0
        %672 = vmatmul.mubr.bf16.gmra.mrb[0].mxu0 %v637
        %v673 = vpop.f32.mrb[0].mxu0
        %v674 = vadd.f32 0.0, %v673
        %v675 = vpop.f32.mrb[0].mxu0
        %v676 = vadd.f32 0.0, %v675
        %v677 = vpop.f32.mrb[0].mxu0
        %v678 = vadd.f32 0.0, %v677
        %v679 = vpop.f32.mrb[0].mxu0
        %v680 = vadd.f32 0.0, %v679
        %681 = vdwg.mxu0
        %v683 = vlaneseq
        %v684 = vshrl.u32 %v683, 7
        %v685 = vsub.s32 0, %v684
        %v686 = vrot.slane %v497, %v685
        %v687 = vlaneseq
        %v688 = vshrl.u32 %v687, 7
        %v689 = vsub.s32 1, %v688
        %v690 = vrot.slane %v497, %v689
        %v693 = vadd.f32 %v686, %v674
        %v694 = vadd.f32 %v690, %v676
        %v695 = vadd.f32 %v686, %v678
        %v696 = vadd.f32 %v690, %v680
        %s697 = scalar_lea.vmem %s1, 8
        %v698 = vld [vmem:[%s697] sm:$0xf]
        %v699 = vld [vmem:[%s697 + $0x4] sm:$0xf]
        %v702 = vunpack.c.l.b16 %v698
        %v703 = vunpack.c.l.b16 %v699
        %v704 = vpack.c.b16 %v703, %v702
        %v706 = vsel %vm517, %v704, 0
        %708 = vmatprep.subr.bf16.mxu0 0
        %709 = vmatpush1.bf16.msra.mxu0 %v513
        %710 = vmatprep.subr.bf16.mxu0 0
        %711 = vmatpush1.bf16.msra.mxu0 %v514
        %712 = vmatprep.subr.bf16.mxu0 0
        %713 = vmatpush1.bf16.msra.mxu0 0
        %714 = vmatprep.subr.bf16.mxu0 0
        %715 = vmatpush1.bf16.msra.mxu0 0
        %716 = vmatprep.subr.bf16.mxu0 0
        %717 = vmatpush1.bf16.msra.mxu0 0
        %718 = vmatprep.subr.bf16.mxu0 0
        %719 = vmatpush1.bf16.msra.mxu0 0
        %720 = vmatprep.subr.bf16.mxu0 0
        %721 = vmatpush1.bf16.msra.mxu0 0
        %722 = vmatprep.subr.bf16.mxu0 0
        %723 = vmatpush1.bf16.msra.mxu0 0
        %724 = vmatprep.subr.bf16.mxu0 0
        %725 = vmatpush1.bf16.msra.mxu0 0
        %726 = vmatprep.subr.bf16.mxu0 0
        %727 = vmatpush1.bf16.msra.mxu0 0
        %728 = vmatprep.subr.bf16.mxu0 0
        %729 = vmatpush1.bf16.msra.mxu0 0
        %730 = vmatprep.subr.bf16.mxu0 0
        %731 = vmatpush1.bf16.msra.mxu0 0
        %732 = vmatprep.subr.bf16.mxu0 0
        %733 = vmatpush1.bf16.msra.mxu0 0
        %734 = vmatprep.subr.bf16.mxu0 0
        %735 = vmatpush1.bf16.msra.mxu0 0
        %736 = vmatprep.subr.bf16.mxu0 0
        %737 = vmatpush1.bf16.msra.mxu0 0
        %738 = vmatprep.subr.bf16.mxu0 0
        %739 = vmatpush1.bf16.msra.mxu0 0
        %740 = vmatprep.mubr.bf16.mxu0 0
        %741 = vmatmul.mubr.bf16.gmra.mrb[0].mxu0 %v706
        %v742 = vpop.f32.mrb[0].mxu0
        %v743 = vadd.f32 0.0, %v742
        %v744 = vpop.f32.mrb[0].mxu0
        %v745 = vpop.f32.mrb[0].mxu0
        %v746 = vadd.f32 0.0, %v745
        %v747 = vpop.f32.mrb[0].mxu0
        %748 = vdwg.mxu0
        %v749 = vpack.c.bf16 %v746, %v743
        %s750 = scalar_lea.vmem %s2, 96
        %v751 = vld [vmem:[%s750] sm:$0xff]
        %v752 = vld [vmem:[%s750 + $0x8] sm:$0xff]
        %v753 = vld [vmem:[%s750 + $0x10] sm:$0xff]
        %v754 = vld [vmem:[%s750 + $0x18] sm:$0xff]
        %v755 = vld [vmem:[%s750 + $0x20] sm:$0xff]
        %v756 = vld [vmem:[%s750 + $0x28] sm:$0xff]
        %v757 = vld [vmem:[%s750 + $0x30] sm:$0xff]
        %v758 = vld [vmem:[%s750 + $0x38] sm:$0xff]
        %v759 = vld [vmem:[%s750 + $0x40] sm:$0xff]
        %v760 = vld [vmem:[%s750 + $0x48] sm:$0xff]
        %v761 = vld [vmem:[%s750 + $0x50] sm:$0xff]
        %v762 = vld [vmem:[%s750 + $0x58] sm:$0xff]
        %v775 = vunpack.c.l.b16 %v751
        %v776 = vunpack.c.h.b16 %v751
        %v777 = vunpack.c.l.b16 %v752
        %v778 = vunpack.c.h.b16 %v752
        %v779 = vunpack.c.l.b16 %v753
        %v780 = vunpack.c.h.b16 %v753
        %v781 = vunpack.c.l.b16 %v754
        %v782 = vunpack.c.h.b16 %v754
        %v783 = vunpack.c.l.b16 %v755
        %v784 = vunpack.c.h.b16 %v755
        %v785 = vunpack.c.l.b16 %v756
        %v786 = vunpack.c.h.b16 %v756
        %v787 = vunpack.c.l.b16 %v757
        %v788 = vunpack.c.h.b16 %v757
        %v789 = vunpack.c.l.b16 %v758
        %v790 = vunpack.c.h.b16 %v758
        %v791 = vunpack.c.l.b16 %v759
        %v792 = vunpack.c.h.b16 %v759
        %v793 = vunpack.c.l.b16 %v760
        %v794 = vunpack.c.h.b16 %v760
        %v795 = vunpack.c.l.b16 %v761
        %v796 = vunpack.c.h.b16 %v761
        %v797 = vunpack.c.l.b16 %v762
        %v798 = vunpack.c.h.b16 %v762
        %v799 = vpack.c.b16 %v777, %v775
        %v800 = vpack.c.b16 %v778, %v776
        %v801 = vpack.c.b16 %v781, %v779
        %v802 = vpack.c.b16 %v782, %v780
        %v803 = vpack.c.b16 %v785, %v783
        %v804 = vpack.c.b16 %v786, %v784
        %v805 = vpack.c.b16 %v789, %v787
        %v806 = vpack.c.b16 %v790, %v788
        %v807 = vpack.c.b16 %v793, %v791
        %v808 = vpack.c.b16 %v794, %v792
        %v809 = vpack.c.b16 %v797, %v795
        %v810 = vpack.c.b16 %v798, %v796
        %v824 = vsel %vm635, %v749, 0
        %826 = vmatprep.subr.bf16.mxu0 %v800
        %827 = vmatpush1.bf16.msra.mxu0 %v799
        %828 = vmatprep.subr.bf16.mxu0 %v802
        %829 = vmatpush1.bf16.msra.mxu0 %v801
        %830 = vmatprep.subr.bf16.mxu0 %v804
        %831 = vmatpush1.bf16.msra.mxu0 %v803
        %832 = vmatprep.subr.bf16.mxu0 %v806
        %833 = vmatpush1.bf16.msra.mxu0 %v805
        %834 = vmatprep.subr.bf16.mxu0 %v808
        %835 = vmatpush1.bf16.msra.mxu0 %v807
        %836 = vmatprep.subr.bf16.mxu0 %v810
        %837 = vmatpush1.bf16.msra.mxu0 %v809
        %838 = vmatprep.subr.bf16.mxu0 0
        %839 = vmatpush1.bf16.msra.mxu0 0
        %840 = vmatprep.subr.bf16.mxu0 0
        %841 = vmatpush1.bf16.msra.mxu0 0
        %842 = vmatprep.subr.bf16.mxu0 0
        %843 = vmatpush1.bf16.msra.mxu0 0
        %844 = vmatprep.subr.bf16.mxu0 0
        %845 = vmatpush1.bf16.msra.mxu0 0
        %846 = vmatprep.subr.bf16.mxu0 0
        %847 = vmatpush1.bf16.msra.mxu0 0
        %848 = vmatprep.subr.bf16.mxu0 0
        %849 = vmatpush1.bf16.msra.mxu0 0
        %850 = vmatprep.subr.bf16.mxu0 0
        %851 = vmatpush1.bf16.msra.mxu0 0
        %852 = vmatprep.subr.bf16.mxu0 0
        %853 = vmatpush1.bf16.msra.mxu0 0
        %854 = vmatprep.subr.bf16.mxu0 0
        %855 = vmatpush1.bf16.msra.mxu0 0
        %856 = vmatprep.subr.bf16.mxu0 0
        %857 = vmatpush1.bf16.msra.mxu0 0
        %858 = vmatprep.mubr.bf16.mxu0 0
        %859 = vmatmul.mubr.bf16.gmra.mrb[0].mxu0 %v824
        %v860 = vpop.f32.mrb[0].mxu0
        %v861 = vadd.f32 0.0, %v860
        %v862 = vpop.f32.mrb[0].mxu0
        %v863 = vadd.f32 0.0, %v862
        %v864 = vpop.f32.mrb[0].mxu0
        %v865 = vadd.f32 0.0, %v864
        %v866 = vpop.f32.mrb[0].mxu0
        %v867 = vadd.f32 0.0, %v866
        %868 = vdwg.mxu0
        %v869 = vadd.f32 %v693, %v861
        %v870 = vadd.f32 %v694, %v863
        %v871 = vadd.f32 %v695, %v865
        %v872 = vadd.f32 %v696, %v867
        %s873 = scalar_lea.vmem %s1, 16
        %v874 = vld [vmem:[%s873] sm:$0xf]
        %v875 = vld [vmem:[%s873 + $0x4] sm:$0xf]
        %v878 = vunpack.c.l.b16 %v874
        %v879 = vunpack.c.l.b16 %v875
        %v880 = vpack.c.b16 %v879, %v878
        %v882 = vsel %vm517, %v880, 0
        %884 = vmatprep.subr.bf16.mxu0 0
        %885 = vmatpush1.bf16.msra.mxu0 %v513
        %886 = vmatprep.subr.bf16.mxu0 0
        %887 = vmatpush1.bf16.msra.mxu0 %v514
        %888 = vmatprep.subr.bf16.mxu0 0
        %889 = vmatpush1.bf16.msra.mxu0 0
        %890 = vmatprep.subr.bf16.mxu0 0
        %891 = vmatpush1.bf16.msra.mxu0 0
        %892 = vmatprep.subr.bf16.mxu0 0
        %893 = vmatpush1.bf16.msra.mxu0 0
        %894 = vmatprep.subr.bf16.mxu0 0
        %895 = vmatpush1.bf16.msra.mxu0 0
        %896 = vmatprep.subr.bf16.mxu0 0
        %897 = vmatpush1.bf16.msra.mxu0 0
        %898 = vmatprep.subr.bf16.mxu0 0
        %899 = vmatpush1.bf16.msra.mxu0 0
        %900 = vmatprep.subr.bf16.mxu0 0
        %901 = vmatpush1.bf16.msra.mxu0 0
        %902 = vmatprep.subr.bf16.mxu0 0
        %903 = vmatpush1.bf16.msra.mxu0 0
        %904 = vmatprep.subr.bf16.mxu0 0
        %905 = vmatpush1.bf16.msra.mxu0 0
        %906 = vmatprep.subr.bf16.mxu0 0
        %907 = vmatpush1.bf16.msra.mxu0 0
        %908 = vmatprep.subr.bf16.mxu0 0
        %909 = vmatpush1.bf16.msra.mxu0 0
        %910 = vmatprep.subr.bf16.mxu0 0
        %911 = vmatpush1.bf16.msra.mxu0 0
        %912 = vmatprep.subr.bf16.mxu0 0
        %913 = vmatpush1.bf16.msra.mxu0 0
        %914 = vmatprep.subr.bf16.mxu0 0
        %915 = vmatpush1.bf16.msra.mxu0 0
        %916 = vmatprep.mubr.bf16.mxu0 0
        %917 = vmatmul.mubr.bf16.gmra.mrb[0].mxu0 %v882
        %v918 = vpop.f32.mrb[0].mxu0
        %v919 = vadd.f32 0.0, %v918
        %v920 = vpop.f32.mrb[0].mxu0
        %v921 = vpop.f32.mrb[0].mxu0
        %v922 = vadd.f32 0.0, %v921
        %v923 = vpop.f32.mrb[0].mxu0
        %924 = vdwg.mxu0
        %v925 = vpack.c.bf16 %v922, %v919
        %s926 = scalar_lea.vmem %s2, 192
        %v927 = vld [vmem:[%s926] sm:$0xff]
        %v928 = vld [vmem:[%s926 + $0x8] sm:$0xff]
        %v929 = vld [vmem:[%s926 + $0x10] sm:$0xff]
        %v930 = vld [vmem:[%s926 + $0x18] sm:$0xff]
        %v931 = vld [vmem:[%s926 + $0x20] sm:$0xff]
        %v932 = vld [vmem:[%s926 + $0x28] sm:$0xff]
        %v933 = vld [vmem:[%s926 + $0x30] sm:$0xff]
        %v934 = vld [vmem:[%s926 + $0x38] sm:$0xff]
        %v935 = vld [vmem:[%s926 + $0x40] sm:$0xff]
        %v936 = vld [vmem:[%s926 + $0x48] sm:$0xff]
        %v937 = vld [vmem:[%s926 + $0x50] sm:$0xff]
        %v938 = vld [vmem:[%s926 + $0x58] sm:$0xff]
        %v951 = vunpack.c.l.b16 %v927
        %v952 = vunpack.c.h.b16 %v927
        %v953 = vunpack.c.l.b16 %v928
        %v954 = vunpack.c.h.b16 %v928
        %v955 = vunpack.c.l.b16 %v929
        %v956 = vunpack.c.h.b16 %v929
        %v957 = vunpack.c.l.b16 %v930
        %v958 = vunpack.c.h.b16 %v930
        %v959 = vunpack.c.l.b16 %v931
        %v960 = vunpack.c.h.b16 %v931
        %v961 = vunpack.c.l.b16 %v932
        %v962 = vunpack.c.h.b16 %v932
        %v963 = vunpack.c.l.b16 %v933
        %v964 = vunpack.c.h.b16 %v933
        %v965 = vunpack.c.l.b16 %v934
        %v966 = vunpack.c.h.b16 %v934
        %v967 = vunpack.c.l.b16 %v935
        %v968 = vunpack.c.h.b16 %v935
        %v969 = vunpack.c.l.b16 %v936
        %v970 = vunpack.c.h.b16 %v936
        %v971 = vunpack.c.l.b16 %v937
        %v972 = vunpack.c.h.b16 %v937
        %v973 = vunpack.c.l.b16 %v938
        %v974 = vunpack.c.h.b16 %v938
        %v975 = vpack.c.b16 %v953, %v951
        %v976 = vpack.c.b16 %v954, %v952
        %v977 = vpack.c.b16 %v957, %v955
        %v978 = vpack.c.b16 %v958, %v956
        %v979 = vpack.c.b16 %v961, %v959
        %v980 = vpack.c.b16 %v962, %v960
        %v981 = vpack.c.b16 %v965, %v963
        %v982 = vpack.c.b16 %v966, %v964
        %v983 = vpack.c.b16 %v969, %v967
        %v984 = vpack.c.b16 %v970, %v968
        %v985 = vpack.c.b16 %v973, %v971
        %v986 = vpack.c.b16 %v974, %v972
        %v1000 = vsel %vm635, %v925, 0
        %1002 = vmatprep.subr.bf16.mxu0 %v976
        %1003 = vmatpush1.bf16.msra.mxu0 %v975
        %1004 = vmatprep.subr.bf16.mxu0 %v978
        %1005 = vmatpush1.bf16.msra.mxu0 %v977
        %1006 = vmatprep.subr.bf16.mxu0 %v980
        %1007 = vmatpush1.bf16.msra.mxu0 %v979
        %1008 = vmatprep.subr.bf16.mxu0 %v982
        %1009 = vmatpush1.bf16.msra.mxu0 %v981
        %1010 = vmatprep.subr.bf16.mxu0 %v984
        %1011 = vmatpush1.bf16.msra.mxu0 %v983
        %1012 = vmatprep.subr.bf16.mxu0 %v986
        %1013 = vmatpush1.bf16.msra.mxu0 %v985
        %1014 = vmatprep.subr.bf16.mxu0 0
        %1015 = vmatpush1.bf16.msra.mxu0 0
        %1016 = vmatprep.subr.bf16.mxu0 0
        %1017 = vmatpush1.bf16.msra.mxu0 0
        %1018 = vmatprep.subr.bf16.mxu0 0
        %1019 = vmatpush1.bf16.msra.mxu0 0
        %1020 = vmatprep.subr.bf16.mxu0 0
        %1021 = vmatpush1.bf16.msra.mxu0 0
        %1022 = vmatprep.subr.bf16.mxu0 0
        %1023 = vmatpush1.bf16.msra.mxu0 0
        %1024 = vmatprep.subr.bf16.mxu0 0
        %1025 = vmatpush1.bf16.msra.mxu0 0
        %1026 = vmatprep.subr.bf16.mxu0 0
        %1027 = vmatpush1.bf16.msra.mxu0 0
        %1028 = vmatprep.subr.bf16.mxu0 0
        %1029 = vmatpush1.bf16.msra.mxu0 0
        %1030 = vmatprep.subr.bf16.mxu0 0
        %1031 = vmatpush1.bf16.msra.mxu0 0
        %1032 = vmatprep.subr.bf16.mxu0 0
        %1033 = vmatpush1.bf16.msra.mxu0 0
        %1034 = vmatprep.mubr.bf16.mxu0 0
        %1035 = vmatmul.mubr.bf16.gmra.mrb[0].mxu0 %v1000
        %v1036 = vpop.f32.mrb[0].mxu0
        %v1037 = vadd.f32 0.0, %v1036
        %v1038 = vpop.f32.mrb[0].mxu0
        %v1039 = vadd.f32 0.0, %v1038
        %v1040 = vpop.f32.mrb[0].mxu0
        %v1041 = vadd.f32 0.0, %v1040
        %v1042 = vpop.f32.mrb[0].mxu0
        %v1043 = vadd.f32 0.0, %v1042
        %1044 = vdwg.mxu0
        %v1045 = vadd.f32 %v869, %v1037
        %v1046 = vadd.f32 %v870, %v1039
        %v1047 = vadd.f32 %v871, %v1041
        %v1048 = vadd.f32 %v872, %v1043
        %v1049 = vmax.f32 %v1045, 0.0
        %v1050 = vmax.f32 %v1046, 0.0
        %v1051 = vmax.f32 %v1047, 0.0
        %v1052 = vmax.f32 %v1048, 0.0
        %v1053 = vpack.c.bf16 %v1051, %v1049
        %v1054 = vpack.c.bf16 %v1052, %v1050
        %v1055 = vld [vmem:[%s6] sm:$0x1f]
        %v1056 = vld [vmem:[%s4] sm:$0xf]
        %v1057 = vld [vmem:[%s4 + $0x4] sm:$0xf]
        %v1058 = vld [vmem:[%s4 + $0x8] sm:$0x1]
        %v1062 = vunpack.c.l.b16 %v1056
        %v1063 = vunpack.c.l.b16 %v1057
        %v1064 = vunpack.c.l.b16 %v1058
        %v1065 = vpack.c.b16 %v1063, %v1062
        %v1066 = vpack.c.b16 %v1064, %v1064
        %vm1067 = vcmask 130048
        %v1069 = vsel %vm1067, %v1065, 0
        %v1072 = vsel %vm1067, %v1066, 0
        %1074 = vmatprep.subr.bf16.mxu0 %v1054
        %1075 = vmatpush1.bf16.msra.mxu0 %v1053
        %1076 = vmatprep.subr.bf16.mxu0 0
        %1077 = vmatpush1.bf16.msra.mxu0 0
        %1078 = vmatprep.subr.bf16.mxu0 0
        %1079 = vmatpush1.bf16.msra.mxu0 0
        %1080 = vmatprep.subr.bf16.mxu0 0
        %1081 = vmatpush1.bf16.msra.mxu0 0
        %1082 = vmatprep.subr.bf16.mxu0 0
        %1083 = vmatpush1.bf16.msra.mxu0 0
        %1084 = vmatprep.subr.bf16.mxu0 0
        %1085 = vmatpush1.bf16.msra.mxu0 0
        %1086 = vmatprep.subr.bf16.mxu0 0
        %1087 = vmatpush1.bf16.msra.mxu0 0
        %1088 = vmatprep.subr.bf16.mxu0 0
        %1089 = vmatpush1.bf16.msra.mxu0 0
        %1090 = vmatprep.subr.bf16.mxu0 0
        %1091 = vmatpush1.bf16.msra.mxu0 0
        %1092 = vmatprep.subr.bf16.mxu0 0
        %1093 = vmatpush1.bf16.msra.mxu0 0
        %1094 = vmatprep.subr.bf16.mxu0 0
        %1095 = vmatpush1.bf16.msra.mxu0 0
        %1096 = vmatprep.subr.bf16.mxu0 0
        %1097 = vmatpush1.bf16.msra.mxu0 0
        %1098 = vmatprep.subr.bf16.mxu0 0
        %1099 = vmatpush1.bf16.msra.mxu0 0
        %1100 = vmatprep.subr.bf16.mxu0 0
        %1101 = vmatpush1.bf16.msra.mxu0 0
        %1102 = vmatprep.subr.bf16.mxu0 0
        %1103 = vmatpush1.bf16.msra.mxu0 0
        %1104 = vmatprep.subr.bf16.mxu0 0
        %1105 = vmatpush1.bf16.msra.mxu0 0
        %1106 = vmatprep.mubr.bf16.mxu0 0
        %1107 = vmatmul.mubr.bf16.gmra.mrb[0].mxu0 %v1069
        %v1108 = vpop.f32.mrb[0].mxu0
        %v1109 = vadd.f32 0.0, %v1108
        %v1110 = vpop.f32.mrb[0].mxu0
        %v1111 = vadd.f32 0.0, %v1110
        %v1112 = vpop.f32.mrb[0].mxu0
        %v1113 = vadd.f32 0.0, %v1112
        %v1114 = vpop.f32.mrb[0].mxu0
        %v1115 = vadd.f32 0.0, %v1114
        %1116 = vmatprep.mubr.bf16.mxu0 0
        %1117 = vmatmul.mubr.bf16.gmra.mrb[0].mxu0 %v1072
        %v1118 = vpop.f32.mrb[0].mxu0
        %v1119 = vadd.f32 0.0, %v1118
        %v1120 = vpop.f32.mrb[0].mxu0
        %v1121 = vadd.f32 0.0, %v1120
        %v1122 = vpop.f32.mrb[0].mxu0
        %v1123 = vpop.f32.mrb[0].mxu0
        %1124 = vdwg.mxu0
        %v1125 = vpack.c.bf16 %v1113, %v1109
        %v1126 = vpack.c.bf16 %v1115, %v1111
        %v1127 = vpack.c.bf16 %v1119, %v1119
        %v1128 = vpack.c.bf16 %v1121, %v1121
        %v1129 = vld [vmem:[%s5] sm:$0xff]
        %v1130 = vld [vmem:[%s5 + $0x8] sm:$0xff]
        %v1131 = vld [vmem:[%s5 + $0x10] sm:$0xf]
        %v1132 = vld [vmem:[%s5 + $0x14] sm:$0xff]
        %v1133 = vld [vmem:[%s5 + $0x1c] sm:$0xff]
        %v1134 = vld [vmem:[%s5 + $0x24] sm:$0xf]
        %v1135 = vld [vmem:[%s5 + $0x28] sm:$0xff]
        %v1136 = vld [vmem:[%s5 + $0x30] sm:$0xff]
        %v1137 = vld [vmem:[%s5 + $0x38] sm:$0xf]
        %v1138 = vld [vmem:[%s5 + $0x3c] sm:$0xff]
        %v1139 = vld [vmem:[%s5 + $0x44] sm:$0xff]
        %v1140 = vld [vmem:[%s5 + $0x4c] sm:$0xf]
        %v1141 = vld [vmem:[%s5 + $0x50] sm:$0xff]
        %v1142 = vld [vmem:[%s5 + $0x58] sm:$0xff]
        %v1143 = vld [vmem:[%s5 + $0x60] sm:$0xf]
        %v1144 = vld [vmem:[%s5 + $0x64] sm:$0xff]
        %v1145 = vld [vmem:[%s5 + $0x6c] sm:$0xff]
        %v1146 = vld [vmem:[%s5 + $0x74] sm:$0xf]
        %v1147 = vld [vmem:[%s5 + $0x78] sm:$0xff]
        %v1148 = vld [vmem:[%s5 + $0x80] sm:$0xff]
        %v1149 = vld [vmem:[%s5 + $0x88] sm:$0xf]
        %v1150 = vld [vmem:[%s5 + $0x8c] sm:$0xff]
        %v1151 = vld [vmem:[%s5 + $0x94] sm:$0xff]
        %v1152 = vld [vmem:[%s5 + $0x9c] sm:$0xf]
        %v1153 = vld [vmem:[%s5 + $0xa0] sm:$0xff]
        %v1154 = vld [vmem:[%s5 + $0xa8] sm:$0xff]
        %v1155 = vld [vmem:[%s5 + $0xb0] sm:$0xf]
        %v1156 = vld [vmem:[%s5 + $0xb4] sm:$0xff]
        %v1157 = vld [vmem:[%s5 + $0xbc] sm:$0xff]
        %v1158 = vld [vmem:[%s5 + $0xc4] sm:$0xf]
        %v1159 = vld [vmem:[%s5 + $0xc8] sm:$0xff]
        %v1160 = vld [vmem:[%s5 + $0xd0] sm:$0xff]
        %v1161 = vld [vmem:[%s5 + $0xd8] sm:$0xf]
        %v1162 = vld [vmem:[%s5 + $0xdc] sm:$0xff]
        %v1163 = vld [vmem:[%s5 + $0xe4] sm:$0xff]
        %v1164 = vld [vmem:[%s5 + $0xec] sm:$0xf]
        %v1165 = vld [vmem:[%s5 + $0xf0] sm:$0xff]
        %v1166 = vld [vmem:[%s5 + $0xf8] sm:$0xff]
        %v1167 = vld [vmem:[%s5 + $0x100] sm:$0xf]
        %v1168 = vld [vmem:[%s5 + $0x104] sm:$0xff]
        %v1169 = vld [vmem:[%s5 + $0x10c] sm:$0xff]
        %v1170 = vld [vmem:[%s5 + $0x114] sm:$0xf]
        %v1171 = vld [vmem:[%s5 + $0x118] sm:$0xff]
        %v1172 = vld [vmem:[%s5 + $0x120] sm:$0xff]
        %v1173 = vld [vmem:[%s5 + $0x128] sm:$0xf]
        %v1174 = vld [vmem:[%s5 + $0x12c] sm:$0xff]
        %v1175 = vld [vmem:[%s5 + $0x134] sm:$0xff]
        %v1176 = vld [vmem:[%s5 + $0x13c] sm:$0xf]
        %v1177 = vld [vmem:[%s5 + $0x140] sm:$0xff]
        %v1178 = vld [vmem:[%s5 + $0x148] sm:$0xff]
        %v1179 = vld [vmem:[%s5 + $0x150] sm:$0xf]
        %v1180 = vld [vmem:[%s5 + $0x154] sm:$0xff]
        %v1181 = vld [vmem:[%s5 + $0x15c] sm:$0xff]
        %v1182 = vld [vmem:[%s5 + $0x164] sm:$0xf]
        %v1183 = vld [vmem:[%s5 + $0x168] sm:$0xff]
        %v1184 = vld [vmem:[%s5 + $0x170] sm:$0xff]
        %v1185 = vld [vmem:[%s5 + $0x178] sm:$0xf]
        %v1186 = vld [vmem:[%s5 + $0x17c] sm:$0xff]
        %v1187 = vld [vmem:[%s5 + $0x184] sm:$0xff]
        %v1188 = vld [vmem:[%s5 + $0x18c] sm:$0xf]
        %v1189 = vld [vmem:[%s5 + $0x190] sm:$0xff]
        %v1190 = vld [vmem:[%s5 + $0x198] sm:$0xff]
        %v1191 = vld [vmem:[%s5 + $0x1a0] sm:$0xf]
        %v1192 = vld [vmem:[%s5 + $0x1a4] sm:$0xff]
        %v1193 = vld [vmem:[%s5 + $0x1ac] sm:$0xff]
        %v1194 = vld [vmem:[%s5 + $0x1b4] sm:$0xf]
        %v1195 = vld [vmem:[%s5 + $0x1b8] sm:$0xff]
        %v1196 = vld [vmem:[%s5 + $0x1c0] sm:$0xff]
        %v1197 = vld [vmem:[%s5 + $0x1c8] sm:$0xf]
        %v1198 = vld [vmem:[%s5 + $0x1cc] sm:$0xff]
        %v1199 = vld [vmem:[%s5 + $0x1d4] sm:$0xff]
        %v1200 = vld [vmem:[%s5 + $0x1dc] sm:$0xf]
        %v1201 = vld [vmem:[%s5 + $0x1e0] sm:$0xff]
        %v1202 = vld [vmem:[%s5 + $0x1e8] sm:$0xff]
        %v1203 = vld [vmem:[%s5 + $0x1f0] sm:$0xf]
        %v1204 = vld [vmem:[%s5 + $0x1f4] sm:$0xff]
        %v1205 = vld [vmem:[%s5 + $0x1fc] sm:$0xff]
        %v1206 = vld [vmem:[%s5 + $0x204] sm:$0xf]
        %v1207 = vld [vmem:[%s5 + $0x208] sm:$0xff]
        %v1208 = vld [vmem:[%s5 + $0x210] sm:$0xff]
        %v1209 = vld [vmem:[%s5 + $0x218] sm:$0xf]
        %v1210 = vld [vmem:[%s5 + $0x21c] sm:$0xff]
        %v1211 = vld [vmem:[%s5 + $0x224] sm:$0xff]
        %v1212 = vld [vmem:[%s5 + $0x22c] sm:$0xf]
        %v1213 = vld [vmem:[%s5 + $0x230] sm:$0xff]
        %v1214 = vld [vmem:[%s5 + $0x238] sm:$0xff]
        %v1215 = vld [vmem:[%s5 + $0x240] sm:$0xf]
        %v1216 = vld [vmem:[%s5 + $0x244] sm:$0xff]
        %v1217 = vld [vmem:[%s5 + $0x24c] sm:$0xff]
        %v1218 = vld [vmem:[%s5 + $0x254] sm:$0xf]
        %v1219 = vld [vmem:[%s5 + $0x258] sm:$0xff]
        %v1220 = vld [vmem:[%s5 + $0x260] sm:$0xff]
        %v1221 = vld [vmem:[%s5 + $0x268] sm:$0xf]
        %v1222 = vld [vmem:[%s5 + $0x26c] sm:$0xff]
        %v1223 = vld [vmem:[%s5 + $0x274] sm:$0xff]
        %v1224 = vld [vmem:[%s5 + $0x27c] sm:$0xf]
        %v1321 = vunpack.c.l.b16 %v1129
        %v1322 = vunpack.c.h.b16 %v1129
        %v1323 = vunpack.c.l.b16 %v1130
        %v1324 = vunpack.c.h.b16 %v1130
        %v1325 = vunpack.c.l.b16 %v1131
        %v1326 = vunpack.c.l.b16 %v1132
        %v1327 = vunpack.c.h.b16 %v1132
        %v1328 = vunpack.c.l.b16 %v1133
        %v1329 = vunpack.c.h.b16 %v1133
        %v1330 = vunpack.c.l.b16 %v1134
        %v1331 = vunpack.c.l.b16 %v1135
        %v1332 = vunpack.c.h.b16 %v1135
        %v1333 = vunpack.c.l.b16 %v1136
        %v1334 = vunpack.c.h.b16 %v1136
        %v1335 = vunpack.c.l.b16 %v1137
        %v1336 = vunpack.c.l.b16 %v1138
        %v1337 = vunpack.c.h.b16 %v1138
        %v1338 = vunpack.c.l.b16 %v1139
        %v1339 = vunpack.c.h.b16 %v1139
        %v1340 = vunpack.c.l.b16 %v1140
        %v1341 = vunpack.c.l.b16 %v1141
        %v1342 = vunpack.c.h.b16 %v1141
        %v1343 = vunpack.c.l.b16 %v1142
        %v1344 = vunpack.c.h.b16 %v1142
        %v1345 = vunpack.c.l.b16 %v1143
        %v1346 = vunpack.c.l.b16 %v1144
        %v1347 = vunpack.c.h.b16 %v1144
        %v1348 = vunpack.c.l.b16 %v1145
        %v1349 = vunpack.c.h.b16 %v1145
        %v1350 = vunpack.c.l.b16 %v1146
        %v1351 = vunpack.c.l.b16 %v1147
        %v1352 = vunpack.c.h.b16 %v1147
        %v1353 = vunpack.c.l.b16 %v1148
        %v1354 = vunpack.c.h.b16 %v1148
        %v1355 = vunpack.c.l.b16 %v1149
        %v1356 = vunpack.c.l.b16 %v1150
        %v1357 = vunpack.c.h.b16 %v1150
        %v1358 = vunpack.c.l.b16 %v1151
        %v1359 = vunpack.c.h.b16 %v1151
        %v1360 = vunpack.c.l.b16 %v1152
        %v1361 = vunpack.c.l.b16 %v1153
        %v1362 = vunpack.c.h.b16 %v1153
        %v1363 = vunpack.c.l.b16 %v1154
        %v1364 = vunpack.c.h.b16 %v1154
        %v1365 = vunpack.c.l.b16 %v1155
        %v1366 = vunpack.c.l.b16 %v1156
        %v1367 = vunpack.c.h.b16 %v1156
        %v1368 = vunpack.c.l.b16 %v1157
        %v1369 = vunpack.c.h.b16 %v1157
        %v1370 = vunpack.c.l.b16 %v1158
        %v1371 = vunpack.c.l.b16 %v1159
        %v1372 = vunpack.c.h.b16 %v1159
        %v1373 = vunpack.c.l.b16 %v1160
        %v1374 = vunpack.c.h.b16 %v1160
        %v1375 = vunpack.c.l.b16 %v1161
        %v1376 = vunpack.c.l.b16 %v1162
        %v1377 = vunpack.c.h.b16 %v1162
        %v1378 = vunpack.c.l.b16 %v1163
        %v1379 = vunpack.c.h.b16 %v1163
        %v1380 = vunpack.c.l.b16 %v1164
        %v1381 = vunpack.c.l.b16 %v1165
        %v1382 = vunpack.c.h.b16 %v1165
        %v1383 = vunpack.c.l.b16 %v1166
        %v1384 = vunpack.c.h.b16 %v1166
        %v1385 = vunpack.c.l.b16 %v1167
        %v1386 = vunpack.c.l.b16 %v1168
        %v1387 = vunpack.c.h.b16 %v1168
        %v1388 = vunpack.c.l.b16 %v1169
        %v1389 = vunpack.c.h.b16 %v1169
        %v1390 = vunpack.c.l.b16 %v1170
        %v1391 = vunpack.c.l.b16 %v1171
        %v1392 = vunpack.c.h.b16 %v1171
        %v1393 = vunpack.c.l.b16 %v1172
        %v1394 = vunpack.c.h.b16 %v1172
        %v1395 = vunpack.c.l.b16 %v1173
        %v1396 = vunpack.c.l.b16 %v1174
        %v1397 = vunpack.c.h.b16 %v1174
        %v1398 = vunpack.c.l.b16 %v1175
        %v1399 = vunpack.c.h.b16 %v1175
        %v1400 = vunpack.c.l.b16 %v1176
        %v1401 = vunpack.c.l.b16 %v1177
        %v1402 = vunpack.c.h.b16 %v1177
        %v1403 = vunpack.c.l.b16 %v1178
        %v1404 = vunpack.c.h.b16 %v1178
        %v1405 = vunpack.c.l.b16 %v1179
        %v1406 = vunpack.c.l.b16 %v1180
        %v1407 = vunpack.c.h.b16 %v1180
        %v1408 = vunpack.c.l.b16 %v1181
        %v1409 = vunpack.c.h.b16 %v1181
        %v1410 = vunpack.c.l.b16 %v1182
        %v1411 = vunpack.c.l.b16 %v1183
        %v1412 = vunpack.c.h.b16 %v1183
        %v1413 = vunpack.c.l.b16 %v1184
        %v1414 = vunpack.c.h.b16 %v1184
        %v1415 = vunpack.c.l.b16 %v1185
        %v1416 = vunpack.c.l.b16 %v1186
        %v1417 = vunpack.c.h.b16 %v1186
        %v1418 = vunpack.c.l.b16 %v1187
        %v1419 = vunpack.c.h.b16 %v1187
        %v1420 = vunpack.c.l.b16 %v1188
        %v1421 = vunpack.c.l.b16 %v1189
        %v1422 = vunpack.c.h.b16 %v1189
        %v1423 = vunpack.c.l.b16 %v1190
        %v1424 = vunpack.c.h.b16 %v1190
        %v1425 = vunpack.c.l.b16 %v1191
        %v1426 = vunpack.c.l.b16 %v1192
        %v1427 = vunpack.c.h.b16 %v1192
        %v1428 = vunpack.c.l.b16 %v1193
        %v1429 = vunpack.c.h.b16 %v1193
        %v1430 = vunpack.c.l.b16 %v1194
        %v1431 = vunpack.c.l.b16 %v1195
        %v1432 = vunpack.c.h.b16 %v1195
        %v1433 = vunpack.c.l.b16 %v1196
        %v1434 = vunpack.c.h.b16 %v1196
        %v1435 = vunpack.c.l.b16 %v1197
        %v1436 = vunpack.c.l.b16 %v1198
        %v1437 = vunpack.c.h.b16 %v1198
        %v1438 = vunpack.c.l.b16 %v1199
        %v1439 = vunpack.c.h.b16 %v1199
        %v1440 = vunpack.c.l.b16 %v1200
        %v1441 = vunpack.c.l.b16 %v1201
        %v1442 = vunpack.c.h.b16 %v1201
        %v1443 = vunpack.c.l.b16 %v1202
        %v1444 = vunpack.c.h.b16 %v1202
        %v1445 = vunpack.c.l.b16 %v1203
        %v1446 = vunpack.c.l.b16 %v1204
        %v1447 = vunpack.c.h.b16 %v1204
        %v1448 = vunpack.c.l.b16 %v1205
        %v1449 = vunpack.c.h.b16 %v1205
        %v1450 = vunpack.c.l.b16 %v1206
        %v1451 = vunpack.c.l.b16 %v1207
        %v1452 = vunpack.c.h.b16 %v1207
        %v1453 = vunpack.c.l.b16 %v1208
        %v1454 = vunpack.c.h.b16 %v1208
        %v1455 = vunpack.c.l.b16 %v1209
        %v1456 = vunpack.c.l.b16 %v1210
        %v1457 = vunpack.c.h.b16 %v1210
        %v1458 = vunpack.c.l.b16 %v1211
        %v1459 = vunpack.c.h.b16 %v1211
        %v1460 = vunpack.c.l.b16 %v1212
        %v1461 = vunpack.c.l.b16 %v1213
        %v1462 = vunpack.c.h.b16 %v1213
        %v1463 = vunpack.c.l.b16 %v1214
        %v1464 = vunpack.c.h.b16 %v1214
        %v1465 = vunpack.c.l.b16 %v1215
        %v1466 = vunpack.c.l.b16 %v1216
        %v1467 = vunpack.c.h.b16 %v1216
        %v1468 = vunpack.c.l.b16 %v1217
        %v1469 = vunpack.c.h.b16 %v1217
        %v1470 = vunpack.c.l.b16 %v1218
        %v1471 = vunpack.c.l.b16 %v1219
        %v1472 = vunpack.c.h.b16 %v1219
        %v1473 = vunpack.c.l.b16 %v1220
        %v1474 = vunpack.c.h.b16 %v1220
        %v1475 = vunpack.c.l.b16 %v1221
        %v1476 = vunpack.c.l.b16 %v1222
        %v1477 = vunpack.c.h.b16 %v1222
        %v1478 = vunpack.c.l.b16 %v1223
        %v1479 = vunpack.c.h.b16 %v1223
        %v1480 = vunpack.c.l.b16 %v1224
        %v1481 = vpack.c.b16 %v1326, %v1321
        %v1482 = vpack.c.b16 %v1327, %v1322
        %v1483 = vpack.c.b16 %v1328, %v1323
        %v1484 = vpack.c.b16 %v1329, %v1324
        %v1485 = vpack.c.b16 %v1330, %v1325
        %v1486 = vpack.c.b16 %v1336, %v1331
        %v1487 = vpack.c.b16 %v1337, %v1332
        %v1488 = vpack.c.b16 %v1338, %v1333
        %v1489 = vpack.c.b16 %v1339, %v1334
        %v1490 = vpack.c.b16 %v1340, %v1335
        %v1491 = vpack.c.b16 %v1346, %v1341
        %v1492 = vpack.c.b16 %v1347, %v1342
        %v1493 = vpack.c.b16 %v1348, %v1343
        %v1494 = vpack.c.b16 %v1349, %v1344
        %v1495 = vpack.c.b16 %v1350, %v1345
        %v1496 = vpack.c.b16 %v1356, %v1351
        %v1497 = vpack.c.b16 %v1357, %v1352
        %v1498 = vpack.c.b16 %v1358, %v1353
        %v1499 = vpack.c.b16 %v1359, %v1354
        %v1500 = vpack.c.b16 %v1360, %v1355
        %v1501 = vpack.c.b16 %v1366, %v1361
        %v1502 = vpack.c.b16 %v1367, %v1362
        %v1503 = vpack.c.b16 %v1368, %v1363
        %v1504 = vpack.c.b16 %v1369, %v1364
        %v1505 = vpack.c.b16 %v1370, %v1365
        %v1506 = vpack.c.b16 %v1376, %v1371
        %v1507 = vpack.c.b16 %v1377, %v1372
        %v1508 = vpack.c.b16 %v1378, %v1373
        %v1509 = vpack.c.b16 %v1379, %v1374
        %v1510 = vpack.c.b16 %v1380, %v1375
        %v1511 = vpack.c.b16 %v1386, %v1381
        %v1512 = vpack.c.b16 %v1387, %v1382
        %v1513 = vpack.c.b16 %v1388, %v1383
        %v1514 = vpack.c.b16 %v1389, %v1384
        %v1515 = vpack.c.b16 %v1390, %v1385
        %v1516 = vpack.c.b16 %v1396, %v1391
        %v1517 = vpack.c.b16 %v1397, %v1392
        %v1518 = vpack.c.b16 %v1398, %v1393
        %v1519 = vpack.c.b16 %v1399, %v1394
        %v1520 = vpack.c.b16 %v1400, %v1395
        %v1521 = vpack.c.b16 %v1406, %v1401
        %v1522 = vpack.c.b16 %v1407, %v1402
        %v1523 = vpack.c.b16 %v1408, %v1403
        %v1524 = vpack.c.b16 %v1409, %v1404
        %v1525 = vpack.c.b16 %v1410, %v1405
        %v1526 = vpack.c.b16 %v1416, %v1411
        %v1527 = vpack.c.b16 %v1417, %v1412
        %v1528 = vpack.c.b16 %v1418, %v1413
        %v1529 = vpack.c.b16 %v1419, %v1414
        %v1530 = vpack.c.b16 %v1420, %v1415
        %v1531 = vpack.c.b16 %v1426, %v1421
        %v1532 = vpack.c.b16 %v1427, %v1422
        %v1533 = vpack.c.b16 %v1428, %v1423
        %v1534 = vpack.c.b16 %v1429, %v1424
        %v1535 = vpack.c.b16 %v1430, %v1425
        %v1536 = vpack.c.b16 %v1436, %v1431
        %v1537 = vpack.c.b16 %v1437, %v1432
        %v1538 = vpack.c.b16 %v1438, %v1433
        %v1539 = vpack.c.b16 %v1439, %v1434
        %v1540 = vpack.c.b16 %v1440, %v1435
        %v1541 = vpack.c.b16 %v1446, %v1441
        %v1542 = vpack.c.b16 %v1447, %v1442
        %v1543 = vpack.c.b16 %v1448, %v1443
        %v1544 = vpack.c.b16 %v1449, %v1444
        %v1545 = vpack.c.b16 %v1450, %v1445
        %v1546 = vpack.c.b16 %v1456, %v1451
        %v1547 = vpack.c.b16 %v1457, %v1452
        %v1548 = vpack.c.b16 %v1458, %v1453
        %v1549 = vpack.c.b16 %v1459, %v1454
        %v1550 = vpack.c.b16 %v1460, %v1455
        %v1551 = vpack.c.b16 %v1466, %v1461
        %v1552 = vpack.c.b16 %v1467, %v1462
        %v1553 = vpack.c.b16 %v1468, %v1463
        %v1554 = vpack.c.b16 %v1469, %v1464
        %v1555 = vpack.c.b16 %v1470, %v1465
        %v1556 = vpack.c.b16 %v1476, %v1471
        %v1557 = vpack.c.b16 %v1477, %v1472
        %v1558 = vpack.c.b16 %v1478, %v1473
        %v1559 = vpack.c.b16 %v1479, %v1474
        %v1560 = vpack.c.b16 %v1480, %v1475
        %1641 = vmatprep.subr.bf16.mxu0 %v1482
        %1642 = vmatpush1.bf16.msra.mxu0 %v1481
        %1643 = vmatprep.subr.bf16.mxu0 %v1487
        %1644 = vmatpush1.bf16.msra.mxu0 %v1486
        %1645 = vmatprep.subr.bf16.mxu0 %v1492
        %1646 = vmatpush1.bf16.msra.mxu0 %v1491
        %1647 = vmatprep.subr.bf16.mxu0 %v1497
        %1648 = vmatpush1.bf16.msra.mxu0 %v1496
        %1649 = vmatprep.subr.bf16.mxu0 %v1502
        %1650 = vmatpush1.bf16.msra.mxu0 %v1501
        %1651 = vmatprep.subr.bf16.mxu0 %v1507
        %1652 = vmatpush1.bf16.msra.mxu0 %v1506
        %1653 = vmatprep.subr.bf16.mxu0 %v1512
        %1654 = vmatpush1.bf16.msra.mxu0 %v1511
        %1655 = vmatprep.subr.bf16.mxu0 %v1517
        %1656 = vmatpush1.bf16.msra.mxu0 %v1516
        %1657 = vmatprep.subr.bf16.mxu0 %v1522
        %1658 = vmatpush1.bf16.msra.mxu0 %v1521
        %1659 = vmatprep.subr.bf16.mxu0 %v1527
        %1660 = vmatpush1.bf16.msra.mxu0 %v1526
        %1661 = vmatprep.subr.bf16.mxu0 %v1532
        %1662 = vmatpush1.bf16.msra.mxu0 %v1531
        %1663 = vmatprep.subr.bf16.mxu0 %v1537
        %1664 = vmatpush1.bf16.msra.mxu0 %v1536
        %1665 = vmatprep.subr.bf16.mxu0 %v1542
        %1666 = vmatpush1.bf16.msra.mxu0 %v1541
        %1667 = vmatprep.subr.bf16.mxu0 %v1547
        %1668 = vmatpush1.bf16.msra.mxu0 %v1546
        %1669 = vmatprep.subr.bf16.mxu0 %v1552
        %1670 = vmatpush1.bf16.msra.mxu0 %v1551
        %1671 = vmatprep.subr.bf16.mxu0 %v1557
        %1672 = vmatpush1.bf16.msra.mxu0 %v1556
        %1673 = vmatprep.mubr.bf16.mxu0 %v1126
        %1674 = vmatmul.mubr.bf16.gmra.mrb[0].mxu0 %v1125
        %v1675 = vpop.f32.mrb[0].mxu0
        %v1676 = vadd.f32 0.0, %v1675
        %v1677 = vpop.f32.mrb[0].mxu0
        %v1678 = vadd.f32 0.0, %v1677
        %v1679 = vpop.f32.mrb[0].mxu0
        %v1680 = vadd.f32 0.0, %v1679
        %v1681 = vpop.f32.mrb[0].mxu0
        %v1682 = vadd.f32 0.0, %v1681
        %1683 = vmatprep.mubr.bf16.mxu0 %v1128
        %1684 = vmatmul.mubr.bf16.gmra.mrb[0].mxu0 %v1127
        %v1685 = vpop.f32.mrb[0].mxu0
        %v1686 = vadd.f32 0.0, %v1685
        %v1687 = vpop.f32.mrb[0].mxu0
        %v1688 = vadd.f32 0.0, %v1687
        %v1689 = vpop.f32.mrb[0].mxu0
        %v1690 = vpop.f32.mrb[0].mxu0
        %1691 = vdwg.mxu0
        %1692 = vmatprep.subr.bf16.mxu0 %v1484
        %1693 = vmatpush1.bf16.msra.mxu0 %v1483
        %1694 = vmatprep.subr.bf16.mxu0 %v1489
        %1695 = vmatpush1.bf16.msra.mxu0 %v1488
        %1696 = vmatprep.subr.bf16.mxu0 %v1494
        %1697 = vmatpush1.bf16.msra.mxu0 %v1493
        %1698 = vmatprep.subr.bf16.mxu0 %v1499
        %1699 = vmatpush1.bf16.msra.mxu0 %v1498
        %1700 = vmatprep.subr.bf16.mxu0 %v1504
        %1701 = vmatpush1.bf16.msra.mxu0 %v1503
        %1702 = vmatprep.subr.bf16.mxu0 %v1509
        %1703 = vmatpush1.bf16.msra.mxu0 %v1508
        %1704 = vmatprep.subr.bf16.mxu0 %v1514
        %1705 = vmatpush1.bf16.msra.mxu0 %v1513
        %1706 = vmatprep.subr.bf16.mxu0 %v1519
        %1707 = vmatpush1.bf16.msra.mxu0 %v1518
        %1708 = vmatprep.subr.bf16.mxu0 %v1524
        %1709 = vmatpush1.bf16.msra.mxu0 %v1523
        %1710 = vmatprep.subr.bf16.mxu0 %v1529
        %1711 = vmatpush1.bf16.msra.mxu0 %v1528
        %1712 = vmatprep.subr.bf16.mxu0 %v1534
        %1713 = vmatpush1.bf16.msra.mxu0 %v1533
        %1714 = vmatprep.subr.bf16.mxu0 %v1539
        %1715 = vmatpush1.bf16.msra.mxu0 %v1538
        %1716 = vmatprep.subr.bf16.mxu0 %v1544
        %1717 = vmatpush1.bf16.msra.mxu0 %v1543
        %1718 = vmatprep.subr.bf16.mxu0 %v1549
        %1719 = vmatpush1.bf16.msra.mxu0 %v1548
        %1720 = vmatprep.subr.bf16.mxu0 %v1554
        %1721 = vmatpush1.bf16.msra.mxu0 %v1553
        %1722 = vmatprep.subr.bf16.mxu0 %v1559
        %1723 = vmatpush1.bf16.msra.mxu0 %v1558
        %1724 = vmatprep.mubr.bf16.mxu0 %v1126
        %1725 = vmatmul.mubr.bf16.gmra.mrb[0].mxu0 %v1125
        %v1726 = vpop.f32.mrb[0].mxu0
        %v1727 = vadd.f32 0.0, %v1726
        %v1728 = vpop.f32.mrb[0].mxu0
        %v1729 = vadd.f32 0.0, %v1728
        %v1730 = vpop.f32.mrb[0].mxu0
        %v1731 = vadd.f32 0.0, %v1730
        %v1732 = vpop.f32.mrb[0].mxu0
        %v1733 = vadd.f32 0.0, %v1732
        %1734 = vmatprep.mubr.bf16.mxu0 %v1128
        %1735 = vmatmul.mubr.bf16.gmra.mrb[0].mxu0 %v1127
        %v1736 = vpop.f32.mrb[0].mxu0
        %v1737 = vadd.f32 0.0, %v1736
        %v1738 = vpop.f32.mrb[0].mxu0
        %v1739 = vadd.f32 0.0, %v1738
        %v1740 = vpop.f32.mrb[0].mxu0
        %v1741 = vpop.f32.mrb[0].mxu0
        %1742 = vdwg.mxu0
        %1743 = vmatprep.subr.bf16.mxu0 0
        %1744 = vmatpush1.bf16.msra.mxu0 %v1485
        %1745 = vmatprep.subr.bf16.mxu0 0
        %1746 = vmatpush1.bf16.msra.mxu0 %v1490
        %1747 = vmatprep.subr.bf16.mxu0 0
        %1748 = vmatpush1.bf16.msra.mxu0 %v1495
        %1749 = vmatprep.subr.bf16.mxu0 0
        %1750 = vmatpush1.bf16.msra.mxu0 %v1500
        %1751 = vmatprep.subr.bf16.mxu0 0
        %1752 = vmatpush1.bf16.msra.mxu0 %v1505
        %1753 = vmatprep.subr.bf16.mxu0 0
        %1754 = vmatpush1.bf16.msra.mxu0 %v1510
        %1755 = vmatprep.subr.bf16.mxu0 0
        %1756 = vmatpush1.bf16.msra.mxu0 %v1515
        %1757 = vmatprep.subr.bf16.mxu0 0
        %1758 = vmatpush1.bf16.msra.mxu0 %v1520
        %1759 = vmatprep.subr.bf16.mxu0 0
        %1760 = vmatpush1.bf16.msra.mxu0 %v1525
        %1761 = vmatprep.subr.bf16.mxu0 0
        %1762 = vmatpush1.bf16.msra.mxu0 %v1530
        %1763 = vmatprep.subr.bf16.mxu0 0
        %1764 = vmatpush1.bf16.msra.mxu0 %v1535
        %1765 = vmatprep.subr.bf16.mxu0 0
        %1766 = vmatpush1.bf16.msra.mxu0 %v1540
        %1767 = vmatprep.subr.bf16.mxu0 0
        %1768 = vmatpush1.bf16.msra.mxu0 %v1545
        %1769 = vmatprep.subr.bf16.mxu0 0
        %1770 = vmatpush1.bf16.msra.mxu0 %v1550
        %1771 = vmatprep.subr.bf16.mxu0 0
        %1772 = vmatpush1.bf16.msra.mxu0 %v1555
        %1773 = vmatprep.subr.bf16.mxu0 0
        %1774 = vmatpush1.bf16.msra.mxu0 %v1560
        %1775 = vmatprep.mubr.bf16.mxu0 %v1126
        %1776 = vmatmul.mubr.bf16.gmra.mrb[0].mxu0 %v1125
        %v1777 = vpop.f32.mrb[0].mxu0
        %v1778 = vadd.f32 0.0, %v1777
        %v1779 = vpop.f32.mrb[0].mxu0
        %v1780 = vpop.f32.mrb[0].mxu0
        %v1781 = vadd.f32 0.0, %v1780
        %v1782 = vpop.f32.mrb[0].mxu0
        %1783 = vmatprep.mubr.bf16.mxu0 %v1128
        %1784 = vmatmul.mubr.bf16.gmra.mrb[0].mxu0 %v1127
        %v1785 = vpop.f32.mrb[0].mxu0
        %v1786 = vadd.f32 0.0, %v1785
        %v1787 = vpop.f32.mrb[0].mxu0
        %v1788 = vpop.f32.mrb[0].mxu0
        %v1789 = vpop.f32.mrb[0].mxu0
        %1790 = vdwg.mxu0
        %v1792 = vlaneseq
        %v1793 = vshrl.u32 %v1792, 7
        %v1794 = vsub.s32 0, %v1793
        %v1795 = vrot.slane %v1055, %v1794
        %v1796 = vlaneseq
        %v1797 = vshrl.u32 %v1796, 7
        %v1798 = vsub.s32 1, %v1797
        %v1799 = vrot.slane %v1055, %v1798
        %v1800 = vlaneseq
        %v1801 = vshrl.u32 %v1800, 7
        %v1802 = vsub.s32 2, %v1801
        %v1803 = vrot.slane %v1055, %v1802
        %v1804 = vlaneseq
        %v1805 = vshrl.u32 %v1804, 7
        %v1806 = vsub.s32 3, %v1805
        %v1807 = vrot.slane %v1055, %v1806
        %v1808 = vlaneseq
        %v1809 = vshrl.u32 %v1808, 7
        %v1810 = vsub.s32 4, %v1809
        %v1811 = vrot.slane %v1055, %v1810
        %v1817 = vadd.f32 %v1795, %v1676
        %v1818 = vadd.f32 %v1799, %v1678
        %v1819 = vadd.f32 %v1803, %v1727
        %v1820 = vadd.f32 %v1807, %v1729
        %v1821 = vadd.f32 %v1811, %v1778
        %v1822 = vadd.f32 %v1795, %v1680
        %v1823 = vadd.f32 %v1799, %v1682
        %v1824 = vadd.f32 %v1803, %v1731
        %v1825 = vadd.f32 %v1807, %v1733
        %v1826 = vadd.f32 %v1811, %v1781
        %v1827 = vadd.f32 %v1795, %v1686
        %v1828 = vadd.f32 %v1799, %v1688
        %v1829 = vadd.f32 %v1803, %v1737
        %v1830 = vadd.f32 %v1807, %v1739
        %v1831 = vadd.f32 %v1811, %v1786
        %s1832 = scalar_lea.vmem %s4, 12
        %v1833 = vld [vmem:[%s1832] sm:$0xf]
        %v1834 = vld [vmem:[%s1832 + $0x4] sm:$0xf]
        %v1835 = vld [vmem:[%s1832 + $0x8] sm:$0x1]
        %v1839 = vunpack.c.l.b16 %v1833
        %v1840 = vunpack.c.l.b16 %v1834
        %v1841 = vunpack.c.l.b16 %v1835
        %v1842 = vpack.c.b16 %v1840, %v1839
        %v1843 = vpack.c.b16 %v1841, %v1841
        %v1845 = vsel %vm1067, %v1842, 0
        %v1848 = vsel %vm1067, %v1843, 0
        %1850 = vmatprep.subr.bf16.mxu0 %v1054
        %1851 = vmatpush1.bf16.msra.mxu0 %v1053
        %1852 = vmatprep.subr.bf16.mxu0 0
        %1853 = vmatpush1.bf16.msra.mxu0 0
        %1854 = vmatprep.subr.bf16.mxu0 0
        %1855 = vmatpush1.bf16.msra.mxu0 0
        %1856 = vmatprep.subr.bf16.mxu0 0
        %1857 = vmatpush1.bf16.msra.mxu0 0
        %1858 = vmatprep.subr.bf16.mxu0 0
        %1859 = vmatpush1.bf16.msra.mxu0 0
        %1860 = vmatprep.subr.bf16.mxu0 0
        %1861 = vmatpush1.bf16.msra.mxu0 0
        %1862 = vmatprep.subr.bf16.mxu0 0
        %1863 = vmatpush1.bf16.msra.mxu0 0
        %1864 = vmatprep.subr.bf16.mxu0 0
        %1865 = vmatpush1.bf16.msra.mxu0 0
        %1866 = vmatprep.subr.bf16.mxu0 0
        %1867 = vmatpush1.bf16.msra.mxu0 0
        %1868 = vmatprep.subr.bf16.mxu0 0
        %1869 = vmatpush1.bf16.msra.mxu0 0
        %1870 = vmatprep.subr.bf16.mxu0 0
        %1871 = vmatpush1.bf16.msra.mxu0 0
        %1872 = vmatprep.subr.bf16.mxu0 0
        %1873 = vmatpush1.bf16.msra.mxu0 0
        %1874 = vmatprep.subr.bf16.mxu0 0
        %1875 = vmatpush1.bf16.msra.mxu0 0
        %1876 = vmatprep.subr.bf16.mxu0 0
        %1877 = vmatpush1.bf16.msra.mxu0 0
        %1878 = vmatprep.subr.bf16.mxu0 0
        %1879 = vmatpush1.bf16.msra.mxu0 0
        %1880 = vmatprep.subr.bf16.mxu0 0
        %1881 = vmatpush1.bf16.msra.mxu0 0
        %1882 = vmatprep.mubr.bf16.mxu0 0
        %1883 = vmatmul.mubr.bf16.gmra.mrb[0].mxu0 %v1845
        %v1884 = vpop.f32.mrb[0].mxu0
        %v1885 = vadd.f32 0.0, %v1884
        %v1886 = vpop.f32.mrb[0].mxu0
        %v1887 = vadd.f32 0.0, %v1886
        %v1888 = vpop.f32.mrb[0].mxu0
        %v1889 = vadd.f32 0.0, %v1888
        %v1890 = vpop.f32.mrb[0].mxu0
        %v1891 = vadd.f32 0.0, %v1890
        %1892 = vmatprep.mubr.bf16.mxu0 0
        %1893 = vmatmul.mubr.bf16.gmra.mrb[0].mxu0 %v1848
        %v1894 = vpop.f32.mrb[0].mxu0
        %v1895 = vadd.f32 0.0, %v1894
        %v1896 = vpop.f32.mrb[0].mxu0
        %v1897 = vadd.f32 0.0, %v1896
        %v1898 = vpop.f32.mrb[0].mxu0
        %v1899 = vpop.f32.mrb[0].mxu0
        %1900 = vdwg.mxu0
        %v1901 = vpack.c.bf16 %v1889, %v1885
        %v1902 = vpack.c.bf16 %v1891, %v1887
        %v1903 = vpack.c.bf16 %v1895, %v1895
        %v1904 = vpack.c.bf16 %v1897, %v1897
        %s1905 = scalar_lea.vmem %s5, 640
        %v1906 = vld [vmem:[%s1905] sm:$0xff]
        %v1907 = vld [vmem:[%s1905 + $0x8] sm:$0xff]
        %v1908 = vld [vmem:[%s1905 + $0x10] sm:$0xf]
        %v1909 = vld [vmem:[%s1905 + $0x14] sm:$0xff]
        %v1910 = vld [vmem:[%s1905 + $0x1c] sm:$0xff]
        %v1911 = vld [vmem:[%s1905 + $0x24] sm:$0xf]
        %v1912 = vld [vmem:[%s1905 + $0x28] sm:$0xff]
        %v1913 = vld [vmem:[%s1905 + $0x30] sm:$0xff]
        %v1914 = vld [vmem:[%s1905 + $0x38] sm:$0xf]
        %v1915 = vld [vmem:[%s1905 + $0x3c] sm:$0xff]
        %v1916 = vld [vmem:[%s1905 + $0x44] sm:$0xff]
        %v1917 = vld [vmem:[%s1905 + $0x4c] sm:$0xf]
        %v1918 = vld [vmem:[%s1905 + $0x50] sm:$0xff]
        %v1919 = vld [vmem:[%s1905 + $0x58] sm:$0xff]
        %v1920 = vld [vmem:[%s1905 + $0x60] sm:$0xf]
        %v1921 = vld [vmem:[%s1905 + $0x64] sm:$0xff]
        %v1922 = vld [vmem:[%s1905 + $0x6c] sm:$0xff]
        %v1923 = vld [vmem:[%s1905 + $0x74] sm:$0xf]
        %v1924 = vld [vmem:[%s1905 + $0x78] sm:$0xff]
        %v1925 = vld [vmem:[%s1905 + $0x80] sm:$0xff]
        %v1926 = vld [vmem:[%s1905 + $0x88] sm:$0xf]
        %v1927 = vld [vmem:[%s1905 + $0x8c] sm:$0xff]
        %v1928 = vld [vmem:[%s1905 + $0x94] sm:$0xff]
        %v1929 = vld [vmem:[%s1905 + $0x9c] sm:$0xf]
        %v1930 = vld [vmem:[%s1905 + $0xa0] sm:$0xff]
        %v1931 = vld [vmem:[%s1905 + $0xa8] sm:$0xff]
        %v1932 = vld [vmem:[%s1905 + $0xb0] sm:$0xf]
        %v1933 = vld [vmem:[%s1905 + $0xb4] sm:$0xff]
        %v1934 = vld [vmem:[%s1905 + $0xbc] sm:$0xff]
        %v1935 = vld [vmem:[%s1905 + $0xc4] sm:$0xf]
        %v1936 = vld [vmem:[%s1905 + $0xc8] sm:$0xff]
        %v1937 = vld [vmem:[%s1905 + $0xd0] sm:$0xff]
        %v1938 = vld [vmem:[%s1905 + $0xd8] sm:$0xf]
        %v1939 = vld [vmem:[%s1905 + $0xdc] sm:$0xff]
        %v1940 = vld [vmem:[%s1905 + $0xe4] sm:$0xff]
        %v1941 = vld [vmem:[%s1905 + $0xec] sm:$0xf]
        %v1942 = vld [vmem:[%s1905 + $0xf0] sm:$0xff]
        %v1943 = vld [vmem:[%s1905 + $0xf8] sm:$0xff]
        %v1944 = vld [vmem:[%s1905 + $0x100] sm:$0xf]
        %v1945 = vld [vmem:[%s1905 + $0x104] sm:$0xff]
        %v1946 = vld [vmem:[%s1905 + $0x10c] sm:$0xff]
        %v1947 = vld [vmem:[%s1905 + $0x114] sm:$0xf]
        %v1948 = vld [vmem:[%s1905 + $0x118] sm:$0xff]
        %v1949 = vld [vmem:[%s1905 + $0x120] sm:$0xff]
        %v1950 = vld [vmem:[%s1905 + $0x128] sm:$0xf]
        %v1951 = vld [vmem:[%s1905 + $0x12c] sm:$0xff]
        %v1952 = vld [vmem:[%s1905 + $0x134] sm:$0xff]
        %v1953 = vld [vmem:[%s1905 + $0x13c] sm:$0xf]
        %v1954 = vld [vmem:[%s1905 + $0x140] sm:$0xff]
        %v1955 = vld [vmem:[%s1905 + $0x148] sm:$0xff]
        %v1956 = vld [vmem:[%s1905 + $0x150] sm:$0xf]
        %v1957 = vld [vmem:[%s1905 + $0x154] sm:$0xff]
        %v1958 = vld [vmem:[%s1905 + $0x15c] sm:$0xff]
        %v1959 = vld [vmem:[%s1905 + $0x164] sm:$0xf]
        %v1960 = vld [vmem:[%s1905 + $0x168] sm:$0xff]
        %v1961 = vld [vmem:[%s1905 + $0x170] sm:$0xff]
        %v1962 = vld [vmem:[%s1905 + $0x178] sm:$0xf]
        %v1963 = vld [vmem:[%s1905 + $0x17c] sm:$0xff]
        %v1964 = vld [vmem:[%s1905 + $0x184] sm:$0xff]
        %v1965 = vld [vmem:[%s1905 + $0x18c] sm:$0xf]
        %v1966 = vld [vmem:[%s1905 + $0x190] sm:$0xff]
        %v1967 = vld [vmem:[%s1905 + $0x198] sm:$0xff]
        %v1968 = vld [vmem:[%s1905 + $0x1a0] sm:$0xf]
        %v1969 = vld [vmem:[%s1905 + $0x1a4] sm:$0xff]
        %v1970 = vld [vmem:[%s1905 + $0x1ac] sm:$0xff]
        %v1971 = vld [vmem:[%s1905 + $0x1b4] sm:$0xf]
        %v1972 = vld [vmem:[%s1905 + $0x1b8] sm:$0xff]
        %v1973 = vld [vmem:[%s1905 + $0x1c0] sm:$0xff]
        %v1974 = vld [vmem:[%s1905 + $0x1c8] sm:$0xf]
        %v1975 = vld [vmem:[%s1905 + $0x1cc] sm:$0xff]
        %v1976 = vld [vmem:[%s1905 + $0x1d4] sm:$0xff]
        %v1977 = vld [vmem:[%s1905 + $0x1dc] sm:$0xf]
        %v1978 = vld [vmem:[%s1905 + $0x1e0] sm:$0xff]
        %v1979 = vld [vmem:[%s1905 + $0x1e8] sm:$0xff]
        %v1980 = vld [vmem:[%s1905 + $0x1f0] sm:$0xf]
        %v1981 = vld [vmem:[%s1905 + $0x1f4] sm:$0xff]
        %v1982 = vld [vmem:[%s1905 + $0x1fc] sm:$0xff]
        %v1983 = vld [vmem:[%s1905 + $0x204] sm:$0xf]
        %v1984 = vld [vmem:[%s1905 + $0x208] sm:$0xff]
        %v1985 = vld [vmem:[%s1905 + $0x210] sm:$0xff]
        %v1986 = vld [vmem:[%s1905 + $0x218] sm:$0xf]
        %v1987 = vld [vmem:[%s1905 + $0x21c] sm:$0xff]
        %v1988 = vld [vmem:[%s1905 + $0x224] sm:$0xff]
        %v1989 = vld [vmem:[%s1905 + $0x22c] sm:$0xf]
        %v1990 = vld [vmem:[%s1905 + $0x230] sm:$0xff]
        %v1991 = vld [vmem:[%s1905 + $0x238] sm:$0xff]
        %v1992 = vld [vmem:[%s1905 + $0x240] sm:$0xf]
        %v1993 = vld [vmem:[%s1905 + $0x244] sm:$0xff]
        %v1994 = vld [vmem:[%s1905 + $0x24c] sm:$0xff]
        %v1995 = vld [vmem:[%s1905 + $0x254] sm:$0xf]
        %v1996 = vld [vmem:[%s1905 + $0x258] sm:$0xff]
        %v1997 = vld [vmem:[%s1905 + $0x260] sm:$0xff]
        %v1998 = vld [vmem:[%s1905 + $0x268] sm:$0xf]
        %v1999 = vld [vmem:[%s1905 + $0x26c] sm:$0xff]
        %v2000 = vld [vmem:[%s1905 + $0x274] sm:$0xff]
        %v2001 = vld [vmem:[%s1905 + $0x27c] sm:$0xf]
        %v2098 = vunpack.c.l.b16 %v1906
        %v2099 = vunpack.c.h.b16 %v1906
        %v2100 = vunpack.c.l.b16 %v1907
        %v2101 = vunpack.c.h.b16 %v1907
        %v2102 = vunpack.c.l.b16 %v1908
        %v2103 = vunpack.c.l.b16 %v1909
        %v2104 = vunpack.c.h.b16 %v1909
        %v2105 = vunpack.c.l.b16 %v1910
        %v2106 = vunpack.c.h.b16 %v1910
        %v2107 = vunpack.c.l.b16 %v1911
        %v2108 = vunpack.c.l.b16 %v1912
        %v2109 = vunpack.c.h.b16 %v1912
        %v2110 = vunpack.c.l.b16 %v1913
        %v2111 = vunpack.c.h.b16 %v1913
        %v2112 = vunpack.c.l.b16 %v1914
        %v2113 = vunpack.c.l.b16 %v1915
        %v2114 = vunpack.c.h.b16 %v1915
        %v2115 = vunpack.c.l.b16 %v1916
        %v2116 = vunpack.c.h.b16 %v1916
        %v2117 = vunpack.c.l.b16 %v1917
        %v2118 = vunpack.c.l.b16 %v1918
        %v2119 = vunpack.c.h.b16 %v1918
        %v2120 = vunpack.c.l.b16 %v1919
        %v2121 = vunpack.c.h.b16 %v1919
        %v2122 = vunpack.c.l.b16 %v1920
        %v2123 = vunpack.c.l.b16 %v1921
        %v2124 = vunpack.c.h.b16 %v1921
        %v2125 = vunpack.c.l.b16 %v1922
        %v2126 = vunpack.c.h.b16 %v1922
        %v2127 = vunpack.c.l.b16 %v1923
        %v2128 = vunpack.c.l.b16 %v1924
        %v2129 = vunpack.c.h.b16 %v1924
        %v2130 = vunpack.c.l.b16 %v1925
        %v2131 = vunpack.c.h.b16 %v1925
        %v2132 = vunpack.c.l.b16 %v1926
        %v2133 = vunpack.c.l.b16 %v1927
        %v2134 = vunpack.c.h.b16 %v1927
        %v2135 = vunpack.c.l.b16 %v1928
        %v2136 = vunpack.c.h.b16 %v1928
        %v2137 = vunpack.c.l.b16 %v1929
        %v2138 = vunpack.c.l.b16 %v1930
        %v2139 = vunpack.c.h.b16 %v1930
        %v2140 = vunpack.c.l.b16 %v1931
        %v2141 = vunpack.c.h.b16 %v1931
        %v2142 = vunpack.c.l.b16 %v1932
        %v2143 = vunpack.c.l.b16 %v1933
        %v2144 = vunpack.c.h.b16 %v1933
        %v2145 = vunpack.c.l.b16 %v1934
        %v2146 = vunpack.c.h.b16 %v1934
        %v2147 = vunpack.c.l.b16 %v1935
        %v2148 = vunpack.c.l.b16 %v1936
        %v2149 = vunpack.c.h.b16 %v1936
        %v2150 = vunpack.c.l.b16 %v1937
        %v2151 = vunpack.c.h.b16 %v1937
        %v2152 = vunpack.c.l.b16 %v1938
        %v2153 = vunpack.c.l.b16 %v1939
        %v2154 = vunpack.c.h.b16 %v1939
        %v2155 = vunpack.c.l.b16 %v1940
        %v2156 = vunpack.c.h.b16 %v1940
        %v2157 = vunpack.c.l.b16 %v1941
        %v2158 = vunpack.c.l.b16 %v1942
        %v2159 = vunpack.c.h.b16 %v1942
        %v2160 = vunpack.c.l.b16 %v1943
        %v2161 = vunpack.c.h.b16 %v1943
        %v2162 = vunpack.c.l.b16 %v1944
        %v2163 = vunpack.c.l.b16 %v1945
        %v2164 = vunpack.c.h.b16 %v1945
        %v2165 = vunpack.c.l.b16 %v1946
        %v2166 = vunpack.c.h.b16 %v1946
        %v2167 = vunpack.c.l.b16 %v1947
        %v2168 = vunpack.c.l.b16 %v1948
        %v2169 = vunpack.c.h.b16 %v1948
        %v2170 = vunpack.c.l.b16 %v1949
        %v2171 = vunpack.c.h.b16 %v1949
        %v2172 = vunpack.c.l.b16 %v1950
        %v2173 = vunpack.c.l.b16 %v1951
        %v2174 = vunpack.c.h.b16 %v1951
        %v2175 = vunpack.c.l.b16 %v1952
        %v2176 = vunpack.c.h.b16 %v1952
        %v2177 = vunpack.c.l.b16 %v1953
        %v2178 = vunpack.c.l.b16 %v1954
        %v2179 = vunpack.c.h.b16 %v1954
        %v2180 = vunpack.c.l.b16 %v1955
        %v2181 = vunpack.c.h.b16 %v1955
        %v2182 = vunpack.c.l.b16 %v1956
        %v2183 = vunpack.c.l.b16 %v1957
        %v2184 = vunpack.c.h.b16 %v1957
        %v2185 = vunpack.c.l.b16 %v1958
        %v2186 = vunpack.c.h.b16 %v1958
        %v2187 = vunpack.c.l.b16 %v1959
        %v2188 = vunpack.c.l.b16 %v1960
        %v2189 = vunpack.c.h.b16 %v1960
        %v2190 = vunpack.c.l.b16 %v1961
        %v2191 = vunpack.c.h.b16 %v1961
        %v2192 = vunpack.c.l.b16 %v1962
        %v2193 = vunpack.c.l.b16 %v1963
        %v2194 = vunpack.c.h.b16 %v1963
        %v2195 = vunpack.c.l.b16 %v1964
        %v2196 = vunpack.c.h.b16 %v1964
        %v2197 = vunpack.c.l.b16 %v1965
        %v2198 = vunpack.c.l.b16 %v1966
        %v2199 = vunpack.c.h.b16 %v1966
        %v2200 = vunpack.c.l.b16 %v1967
        %v2201 = vunpack.c.h.b16 %v1967
        %v2202 = vunpack.c.l.b16 %v1968
        %v2203 = vunpack.c.l.b16 %v1969
        %v2204 = vunpack.c.h.b16 %v1969
        %v2205 = vunpack.c.l.b16 %v1970
        %v2206 = vunpack.c.h.b16 %v1970
        %v2207 = vunpack.c.l.b16 %v1971
        %v2208 = vunpack.c.l.b16 %v1972
        %v2209 = vunpack.c.h.b16 %v1972
        %v2210 = vunpack.c.l.b16 %v1973
        %v2211 = vunpack.c.h.b16 %v1973
        %v2212 = vunpack.c.l.b16 %v1974
        %v2213 = vunpack.c.l.b16 %v1975
        %v2214 = vunpack.c.h.b16 %v1975
        %v2215 = vunpack.c.l.b16 %v1976
        %v2216 = vunpack.c.h.b16 %v1976
        %v2217 = vunpack.c.l.b16 %v1977
        %v2218 = vunpack.c.l.b16 %v1978
        %v2219 = vunpack.c.h.b16 %v1978
        %v2220 = vunpack.c.l.b16 %v1979
        %v2221 = vunpack.c.h.b16 %v1979
        %v2222 = vunpack.c.l.b16 %v1980
        %v2223 = vunpack.c.l.b16 %v1981
        %v2224 = vunpack.c.h.b16 %v1981
        %v2225 = vunpack.c.l.b16 %v1982
        %v2226 = vunpack.c.h.b16 %v1982
        %v2227 = vunpack.c.l.b16 %v1983
        %v2228 = vunpack.c.l.b16 %v1984
        %v2229 = vunpack.c.h.b16 %v1984
        %v2230 = vunpack.c.l.b16 %v1985
        %v2231 = vunpack.c.h.b16 %v1985
        %v2232 = vunpack.c.l.b16 %v1986
        %v2233 = vunpack.c.l.b16 %v1987
        %v2234 = vunpack.c.h.b16 %v1987
        %v2235 = vunpack.c.l.b16 %v1988
        %v2236 = vunpack.c.h.b16 %v1988
        %v2237 = vunpack.c.l.b16 %v1989
        %v2238 = vunpack.c.l.b16 %v1990
        %v2239 = vunpack.c.h.b16 %v1990
        %v2240 = vunpack.c.l.b16 %v1991
        %v2241 = vunpack.c.h.b16 %v1991
        %v2242 = vunpack.c.l.b16 %v1992
        %v2243 = vunpack.c.l.b16 %v1993
        %v2244 = vunpack.c.h.b16 %v1993
        %v2245 = vunpack.c.l.b16 %v1994
        %v2246 = vunpack.c.h.b16 %v1994
        %v2247 = vunpack.c.l.b16 %v1995
        %v2248 = vunpack.c.l.b16 %v1996
        %v2249 = vunpack.c.h.b16 %v1996
        %v2250 = vunpack.c.l.b16 %v1997
        %v2251 = vunpack.c.h.b16 %v1997
        %v2252 = vunpack.c.l.b16 %v1998
        %v2253 = vunpack.c.l.b16 %v1999
        %v2254 = vunpack.c.h.b16 %v1999
        %v2255 = vunpack.c.l.b16 %v2000
        %v2256 = vunpack.c.h.b16 %v2000
        %v2257 = vunpack.c.l.b16 %v2001
        %v2258 = vpack.c.b16 %v2103, %v2098
        %v2259 = vpack.c.b16 %v2104, %v2099
        %v2260 = vpack.c.b16 %v2105, %v2100
        %v2261 = vpack.c.b16 %v2106, %v2101
        %v2262 = vpack.c.b16 %v2107, %v2102
        %v2263 = vpack.c.b16 %v2113, %v2108
        %v2264 = vpack.c.b16 %v2114, %v2109
        %v2265 = vpack.c.b16 %v2115, %v2110
        %v2266 = vpack.c.b16 %v2116, %v2111
        %v2267 = vpack.c.b16 %v2117, %v2112
        %v2268 = vpack.c.b16 %v2123, %v2118
        %v2269 = vpack.c.b16 %v2124, %v2119
        %v2270 = vpack.c.b16 %v2125, %v2120
        %v2271 = vpack.c.b16 %v2126, %v2121
        %v2272 = vpack.c.b16 %v2127, %v2122
        %v2273 = vpack.c.b16 %v2133, %v2128
        %v2274 = vpack.c.b16 %v2134, %v2129
        %v2275 = vpack.c.b16 %v2135, %v2130
        %v2276 = vpack.c.b16 %v2136, %v2131
        %v2277 = vpack.c.b16 %v2137, %v2132
        %v2278 = vpack.c.b16 %v2143, %v2138
        %v2279 = vpack.c.b16 %v2144, %v2139
        %v2280 = vpack.c.b16 %v2145, %v2140
        %v2281 = vpack.c.b16 %v2146, %v2141
        %v2282 = vpack.c.b16 %v2147, %v2142
        %v2283 = vpack.c.b16 %v2153, %v2148
        %v2284 = vpack.c.b16 %v2154, %v2149
        %v2285 = vpack.c.b16 %v2155, %v2150
        %v2286 = vpack.c.b16 %v2156, %v2151
        %v2287 = vpack.c.b16 %v2157, %v2152
        %v2288 = vpack.c.b16 %v2163, %v2158
        %v2289 = vpack.c.b16 %v2164, %v2159
        %v2290 = vpack.c.b16 %v2165, %v2160
        %v2291 = vpack.c.b16 %v2166, %v2161
        %v2292 = vpack.c.b16 %v2167, %v2162
        %v2293 = vpack.c.b16 %v2173, %v2168
        %v2294 = vpack.c.b16 %v2174, %v2169
        %v2295 = vpack.c.b16 %v2175, %v2170
        %v2296 = vpack.c.b16 %v2176, %v2171
        %v2297 = vpack.c.b16 %v2177, %v2172
        %v2298 = vpack.c.b16 %v2183, %v2178
        %v2299 = vpack.c.b16 %v2184, %v2179
        %v2300 = vpack.c.b16 %v2185, %v2180
        %v2301 = vpack.c.b16 %v2186, %v2181
        %v2302 = vpack.c.b16 %v2187, %v2182
        %v2303 = vpack.c.b16 %v2193, %v2188
        %v2304 = vpack.c.b16 %v2194, %v2189
        %v2305 = vpack.c.b16 %v2195, %v2190
        %v2306 = vpack.c.b16 %v2196, %v2191
        %v2307 = vpack.c.b16 %v2197, %v2192
        %v2308 = vpack.c.b16 %v2203, %v2198
        %v2309 = vpack.c.b16 %v2204, %v2199
        %v2310 = vpack.c.b16 %v2205, %v2200
        %v2311 = vpack.c.b16 %v2206, %v2201
        %v2312 = vpack.c.b16 %v2207, %v2202
        %v2313 = vpack.c.b16 %v2213, %v2208
        %v2314 = vpack.c.b16 %v2214, %v2209
        %v2315 = vpack.c.b16 %v2215, %v2210
        %v2316 = vpack.c.b16 %v2216, %v2211
        %v2317 = vpack.c.b16 %v2217, %v2212
        %v2318 = vpack.c.b16 %v2223, %v2218
        %v2319 = vpack.c.b16 %v2224, %v2219
        %v2320 = vpack.c.b16 %v2225, %v2220
        %v2321 = vpack.c.b16 %v2226, %v2221
        %v2322 = vpack.c.b16 %v2227, %v2222
        %v2323 = vpack.c.b16 %v2233, %v2228
        %v2324 = vpack.c.b16 %v2234, %v2229
        %v2325 = vpack.c.b16 %v2235, %v2230
        %v2326 = vpack.c.b16 %v2236, %v2231
        %v2327 = vpack.c.b16 %v2237, %v2232
        %v2328 = vpack.c.b16 %v2243, %v2238
        %v2329 = vpack.c.b16 %v2244, %v2239
        %v2330 = vpack.c.b16 %v2245, %v2240
        %v2331 = vpack.c.b16 %v2246, %v2241
        %v2332 = vpack.c.b16 %v2247, %v2242
        %v2333 = vpack.c.b16 %v2253, %v2248
        %v2334 = vpack.c.b16 %v2254, %v2249
        %v2335 = vpack.c.b16 %v2255, %v2250
        %v2336 = vpack.c.b16 %v2256, %v2251
        %v2337 = vpack.c.b16 %v2257, %v2252
        %2418 = vmatprep.subr.bf16.mxu0 %v2259
        %2419 = vmatpush1.bf16.msra.mxu0 %v2258
        %2420 = vmatprep.subr.bf16.mxu0 %v2264
        %2421 = vmatpush1.bf16.msra.mxu0 %v2263
        %2422 = vmatprep.subr.bf16.mxu0 %v2269
        %2423 = vmatpush1.bf16.msra.mxu0 %v2268
        %2424 = vmatprep.subr.bf16.mxu0 %v2274
        %2425 = vmatpush1.bf16.msra.mxu0 %v2273
        %2426 = vmatprep.subr.bf16.mxu0 %v2279
        %2427 = vmatpush1.bf16.msra.mxu0 %v2278
        %2428 = vmatprep.subr.bf16.mxu0 %v2284
        %2429 = vmatpush1.bf16.msra.mxu0 %v2283
        %2430 = vmatprep.subr.bf16.mxu0 %v2289
        %2431 = vmatpush1.bf16.msra.mxu0 %v2288
        %2432 = vmatprep.subr.bf16.mxu0 %v2294
        %2433 = vmatpush1.bf16.msra.mxu0 %v2293
        %2434 = vmatprep.subr.bf16.mxu0 %v2299
        %2435 = vmatpush1.bf16.msra.mxu0 %v2298
        %2436 = vmatprep.subr.bf16.mxu0 %v2304
        %2437 = vmatpush1.bf16.msra.mxu0 %v2303
        %2438 = vmatprep.subr.bf16.mxu0 %v2309
        %2439 = vmatpush1.bf16.msra.mxu0 %v2308
        %2440 = vmatprep.subr.bf16.mxu0 %v2314
        %2441 = vmatpush1.bf16.msra.mxu0 %v2313
        %2442 = vmatprep.subr.bf16.mxu0 %v2319
        %2443 = vmatpush1.bf16.msra.mxu0 %v2318
        %2444 = vmatprep.subr.bf16.mxu0 %v2324
        %2445 = vmatpush1.bf16.msra.mxu0 %v2323
        %2446 = vmatprep.subr.bf16.mxu0 %v2329
        %2447 = vmatpush1.bf16.msra.mxu0 %v2328
        %2448 = vmatprep.subr.bf16.mxu0 %v2334
        %2449 = vmatpush1.bf16.msra.mxu0 %v2333
        %2450 = vmatprep.mubr.bf16.mxu0 %v1902
        %2451 = vmatmul.mubr.bf16.gmra.mrb[0].mxu0 %v1901
        %v2452 = vpop.f32.mrb[0].mxu0
        %v2453 = vadd.f32 0.0, %v2452
        %v2454 = vpop.f32.mrb[0].mxu0
        %v2455 = vadd.f32 0.0, %v2454
        %v2456 = vpop.f32.mrb[0].mxu0
        %v2457 = vadd.f32 0.0, %v2456
        %v2458 = vpop.f32.mrb[0].mxu0
        %v2459 = vadd.f32 0.0, %v2458
        %2460 = vmatprep.mubr.bf16.mxu0 %v1904
        %2461 = vmatmul.mubr.bf16.gmra.mrb[0].mxu0 %v1903
        %v2462 = vpop.f32.mrb[0].mxu0
        %v2463 = vadd.f32 0.0, %v2462
        %v2464 = vpop.f32.mrb[0].mxu0
        %v2465 = vadd.f32 0.0, %v2464
        %v2466 = vpop.f32.mrb[0].mxu0
        %v2467 = vpop.f32.mrb[0].mxu0
        %2468 = vdwg.mxu0
        %2469 = vmatprep.subr.bf16.mxu0 %v2261
        %2470 = vmatpush1.bf16.msra.mxu0 %v2260
        %2471 = vmatprep.subr.bf16.mxu0 %v2266
        %2472 = vmatpush1.bf16.msra.mxu0 %v2265
        %2473 = vmatprep.subr.bf16.mxu0 %v2271
        %2474 = vmatpush1.bf16.msra.mxu0 %v2270
        %2475 = vmatprep.subr.bf16.mxu0 %v2276
        %2476 = vmatpush1.bf16.msra.mxu0 %v2275
        %2477 = vmatprep.subr.bf16.mxu0 %v2281
        %2478 = vmatpush1.bf16.msra.mxu0 %v2280
        %2479 = vmatprep.subr.bf16.mxu0 %v2286
        %2480 = vmatpush1.bf16.msra.mxu0 %v2285
        %2481 = vmatprep.subr.bf16.mxu0 %v2291
        %2482 = vmatpush1.bf16.msra.mxu0 %v2290
        %2483 = vmatprep.subr.bf16.mxu0 %v2296
        %2484 = vmatpush1.bf16.msra.mxu0 %v2295
        %2485 = vmatprep.subr.bf16.mxu0 %v2301
        %2486 = vmatpush1.bf16.msra.mxu0 %v2300
        %2487 = vmatprep.subr.bf16.mxu0 %v2306
        %2488 = vmatpush1.bf16.msra.mxu0 %v2305
        %2489 = vmatprep.subr.bf16.mxu0 %v2311
        %2490 = vmatpush1.bf16.msra.mxu0 %v2310
        %2491 = vmatprep.subr.bf16.mxu0 %v2316
        %2492 = vmatpush1.bf16.msra.mxu0 %v2315
        %2493 = vmatprep.subr.bf16.mxu0 %v2321
        %2494 = vmatpush1.bf16.msra.mxu0 %v2320
        %2495 = vmatprep.subr.bf16.mxu0 %v2326
        %2496 = vmatpush1.bf16.msra.mxu0 %v2325
        %2497 = vmatprep.subr.bf16.mxu0 %v2331
        %2498 = vmatpush1.bf16.msra.mxu0 %v2330
        %2499 = vmatprep.subr.bf16.mxu0 %v2336
        %2500 = vmatpush1.bf16.msra.mxu0 %v2335
        %2501 = vmatprep.mubr.bf16.mxu0 %v1902
        %2502 = vmatmul.mubr.bf16.gmra.mrb[0].mxu0 %v1901
        %v2503 = vpop.f32.mrb[0].mxu0
        %v2504 = vadd.f32 0.0, %v2503
        %v2505 = vpop.f32.mrb[0].mxu0
        %v2506 = vadd.f32 0.0, %v2505
        %v2507 = vpop.f32.mrb[0].mxu0
        %v2508 = vadd.f32 0.0, %v2507
        %v2509 = vpop.f32.mrb[0].mxu0
        %v2510 = vadd.f32 0.0, %v2509
        %2511 = vmatprep.mubr.bf16.mxu0 %v1904
        %2512 = vmatmul.mubr.bf16.gmra.mrb[0].mxu0 %v1903
        %v2513 = vpop.f32.mrb[0].mxu0
        %v2514 = vadd.f32 0.0, %v2513
        %v2515 = vpop.f32.mrb[0].mxu0
        %v2516 = vadd.f32 0.0, %v2515
        %v2517 = vpop.f32.mrb[0].mxu0
        %v2518 = vpop.f32.mrb[0].mxu0
        %2519 = vdwg.mxu0
        %2520 = vmatprep.subr.bf16.mxu0 0
        %2521 = vmatpush1.bf16.msra.mxu0 %v2262
        %2522 = vmatprep.subr.bf16.mxu0 0
        %2523 = vmatpush1.bf16.msra.mxu0 %v2267
        %2524 = vmatprep.subr.bf16.mxu0 0
        %2525 = vmatpush1.bf16.msra.mxu0 %v2272
        %2526 = vmatprep.subr.bf16.mxu0 0
        %2527 = vmatpush1.bf16.msra.mxu0 %v2277
        %2528 = vmatprep.subr.bf16.mxu0 0
        %2529 = vmatpush1.bf16.msra.mxu0 %v2282
        %2530 = vmatprep.subr.bf16.mxu0 0
        %2531 = vmatpush1.bf16.msra.mxu0 %v2287
        %2532 = vmatprep.subr.bf16.mxu0 0
        %2533 = vmatpush1.bf16.msra.mxu0 %v2292
        %2534 = vmatprep.subr.bf16.mxu0 0
        %2535 = vmatpush1.bf16.msra.mxu0 %v2297
        %2536 = vmatprep.subr.bf16.mxu0 0
        %2537 = vmatpush1.bf16.msra.mxu0 %v2302
        %2538 = vmatprep.subr.bf16.mxu0 0
        %2539 = vmatpush1.bf16.msra.mxu0 %v2307
        %2540 = vmatprep.subr.bf16.mxu0 0
        %2541 = vmatpush1.bf16.msra.mxu0 %v2312
        %2542 = vmatprep.subr.bf16.mxu0 0
        %2543 = vmatpush1.bf16.msra.mxu0 %v2317
        %2544 = vmatprep.subr.bf16.mxu0 0
        %2545 = vmatpush1.bf16.msra.mxu0 %v2322
        %2546 = vmatprep.subr.bf16.mxu0 0
        %2547 = vmatpush1.bf16.msra.mxu0 %v2327
        %2548 = vmatprep.subr.bf16.mxu0 0
        %2549 = vmatpush1.bf16.msra.mxu0 %v2332
        %2550 = vmatprep.subr.bf16.mxu0 0
        %2551 = vmatpush1.bf16.msra.mxu0 %v2337
        %2552 = vmatprep.mubr.bf16.mxu0 %v1902
        %2553 = vmatmul.mubr.bf16.gmra.mrb[0].mxu0 %v1901
        %v2554 = vpop.f32.mrb[0].mxu0
        %v2555 = vadd.f32 0.0, %v2554
        %v2556 = vpop.f32.mrb[0].mxu0
        %v2557 = vpop.f32.mrb[0].mxu0
        %v2558 = vadd.f32 0.0, %v2557
        %v2559 = vpop.f32.mrb[0].mxu0
        %2560 = vmatprep.mubr.bf16.mxu0 %v1904
        %2561 = vmatmul.mubr.bf16.gmra.mrb[0].mxu0 %v1903
        %v2562 = vpop.f32.mrb[0].mxu0
        %v2563 = vadd.f32 0.0, %v2562
        %v2564 = vpop.f32.mrb[0].mxu0
        %v2565 = vpop.f32.mrb[0].mxu0
        %v2566 = vpop.f32.mrb[0].mxu0
        %2567 = vdwg.mxu0
        %v2568 = vadd.f32 %v1817, %v2453
        %v2569 = vadd.f32 %v1818, %v2455
        %v2570 = vadd.f32 %v1819, %v2504
        %v2571 = vadd.f32 %v1820, %v2506
        %v2572 = vadd.f32 %v1821, %v2555
        %v2573 = vadd.f32 %v1822, %v2457
        %v2574 = vadd.f32 %v1823, %v2459
        %v2575 = vadd.f32 %v1824, %v2508
        %v2576 = vadd.f32 %v1825, %v2510
        %v2577 = vadd.f32 %v1826, %v2558
        %v2578 = vadd.f32 %v1827, %v2463
        %v2579 = vadd.f32 %v1828, %v2465
        %v2580 = vadd.f32 %v1829, %v2514
        %v2581 = vadd.f32 %v1830, %v2516
        %v2582 = vadd.f32 %v1831, %v2563
        %v2583 = vmax.f32 %v2568, 0.0
        %v2584 = vmax.f32 %v2569, 0.0
        %v2585 = vmax.f32 %v2570, 0.0
        %v2586 = vmax.f32 %v2571, 0.0
        %v2587 = vmax.f32 %v2572, 0.0
        %v2588 = vmax.f32 %v2573, 0.0
        %v2589 = vmax.f32 %v2574, 0.0
        %v2590 = vmax.f32 %v2575, 0.0
        %v2591 = vmax.f32 %v2576, 0.0
        %v2592 = vmax.f32 %v2577, 0.0
        %v2593 = vmax.f32 %v2578, 0.0
        %v2594 = vmax.f32 %v2579, 0.0
        %v2595 = vmax.f32 %v2580, 0.0
        %v2596 = vmax.f32 %v2581, 0.0
        %v2597 = vmax.f32 %v2582, 0.0
        %v2598 = vpack.c.bf16 %v2588, %v2583
        %v2599 = vpack.c.bf16 %v2589, %v2584
        %v2600 = vpack.c.bf16 %v2590, %v2585
        %v2601 = vpack.c.bf16 %v2591, %v2586
        %v2602 = vpack.c.bf16 %v2592, %v2587
        %v2603 = vpack.c.bf16 %v2593, %v2593
        %v2604 = vpack.c.bf16 %v2594, %v2594
        %v2605 = vpack.c.bf16 %v2595, %v2595
        %v2606 = vpack.c.bf16 %v2596, %v2596
        %v2607 = vpack.c.bf16 %v2597, %v2597
        %v2608 = vld [vmem:[%s9] sm:$0x1f]
        %v2609 = vld [vmem:[%s7] sm:$0xf]
        %v2610 = vld [vmem:[%s7 + $0x4] sm:$0x1]
        %v2613 = vunpack.c.l.b16 %v2609
        %v2614 = vunpack.c.l.b16 %v2610
        %v2615 = vpack.c.b16 %v2614, %v2613
        %vm2616 = vcmask 138240
        %v2618 = vsel %vm2616, %v2615, 0
        %vm2620 = vcmask 1040384
        %v2621 = vsel 0, 4294967295, 65535
        %v2622 = vsel %vm2620, %v2621, 0
        %v2624 = vand.u32 %v2603, %v2622
        %v2627 = vand.u32 %v2604, %v2622
        %v2630 = vand.u32 %v2605, %v2622
        %v2633 = vand.u32 %v2606, %v2622
        %v2636 = vand.u32 %v2607, %v2622
        %2638 = vmatprep.subr.bf16.mxu0 %v2599
        %2639 = vmatpush1.bf16.msra.mxu0 %v2598
        %2640 = vmatprep.subr.bf16.mxu0 %v2627
        %2641 = vmatpush1.bf16.msra.mxu0 %v2624
        %2642 = vmatprep.subr.bf16.mxu0 0
        %2643 = vmatpush1.bf16.msra.mxu0 0
        %2644 = vmatprep.subr.bf16.mxu0 0
        %2645 = vmatpush1.bf16.msra.mxu0 0
        %2646 = vmatprep.subr.bf16.mxu0 0
        %2647 = vmatpush1.bf16.msra.mxu0 0
        %2648 = vmatprep.subr.bf16.mxu0 0
        %2649 = vmatpush1.bf16.msra.mxu0 0
        %2650 = vmatprep.subr.bf16.mxu0 0
        %2651 = vmatpush1.bf16.msra.mxu0 0
        %2652 = vmatprep.subr.bf16.mxu0 0
        %2653 = vmatpush1.bf16.msra.mxu0 0
        %2654 = vmatprep.subr.bf16.mxu0 0
        %2655 = vmatpush1.bf16.msra.mxu0 0
        %2656 = vmatprep.subr.bf16.mxu0 0
        %2657 = vmatpush1.bf16.msra.mxu0 0
        %2658 = vmatprep.subr.bf16.mxu0 0
        %2659 = vmatpush1.bf16.msra.mxu0 0
        %2660 = vmatprep.subr.bf16.mxu0 0
        %2661 = vmatpush1.bf16.msra.mxu0 0
        %2662 = vmatprep.subr.bf16.mxu0 0
        %2663 = vmatpush1.bf16.msra.mxu0 0
        %2664 = vmatprep.subr.bf16.mxu0 0
        %2665 = vmatpush1.bf16.msra.mxu0 0
        %2666 = vmatprep.subr.bf16.mxu0 0
        %2667 = vmatpush1.bf16.msra.mxu0 0
        %2668 = vmatprep.subr.bf16.mxu0 0
        %2669 = vmatpush1.bf16.msra.mxu0 0
        %2670 = vmatprep.mubr.bf16.mxu0 0
        %2671 = vmatmul.mubr.bf16.gmra.mrb[0].mxu0 %v2618
        %v2672 = vpop.f32.mrb[0].mxu0
        %v2673 = vadd.f32 0.0, %v2672
        %v2674 = vpop.f32.mrb[0].mxu0
        %v2675 = vadd.f32 0.0, %v2674
        %v2676 = vpop.f32.mrb[0].mxu0
        %v2677 = vadd.f32 0.0, %v2676
        %v2678 = vpop.f32.mrb[0].mxu0
        %v2679 = vadd.f32 0.0, %v2678
        %2680 = vdwg.mxu0
        %2681 = vmatprep.subr.bf16.mxu0 %v2601
        %2682 = vmatpush1.bf16.msra.mxu0 %v2600
        %2683 = vmatprep.subr.bf16.mxu0 %v2633
        %2684 = vmatpush1.bf16.msra.mxu0 %v2630
        %2685 = vmatprep.subr.bf16.mxu0 0
        %2686 = vmatpush1.bf16.msra.mxu0 0
        %2687 = vmatprep.subr.bf16.mxu0 0
        %2688 = vmatpush1.bf16.msra.mxu0 0
        %2689 = vmatprep.subr.bf16.mxu0 0
        %2690 = vmatpush1.bf16.msra.mxu0 0
        %2691 = vmatprep.subr.bf16.mxu0 0
        %2692 = vmatpush1.bf16.msra.mxu0 0
        %2693 = vmatprep.subr.bf16.mxu0 0
        %2694 = vmatpush1.bf16.msra.mxu0 0
        %2695 = vmatprep.subr.bf16.mxu0 0
        %2696 = vmatpush1.bf16.msra.mxu0 0
        %2697 = vmatprep.subr.bf16.mxu0 0
        %2698 = vmatpush1.bf16.msra.mxu0 0
        %2699 = vmatprep.subr.bf16.mxu0 0
        %2700 = vmatpush1.bf16.msra.mxu0 0
        %2701 = vmatprep.subr.bf16.mxu0 0
        %2702 = vmatpush1.bf16.msra.mxu0 0
        %2703 = vmatprep.subr.bf16.mxu0 0
        %2704 = vmatpush1.bf16.msra.mxu0 0
        %2705 = vmatprep.subr.bf16.mxu0 0
        %2706 = vmatpush1.bf16.msra.mxu0 0
        %2707 = vmatprep.subr.bf16.mxu0 0
        %2708 = vmatpush1.bf16.msra.mxu0 0
        %2709 = vmatprep.subr.bf16.mxu0 0
        %2710 = vmatpush1.bf16.msra.mxu0 0
        %2711 = vmatprep.subr.bf16.mxu0 0
        %2712 = vmatpush1.bf16.msra.mxu0 0
        %2713 = vmatprep.mubr.bf16.mxu0 0
        %2714 = vmatmul.mubr.bf16.gmra.mrb[0].mxu0 %v2618
        %v2715 = vpop.f32.mrb[0].mxu0
        %v2716 = vadd.f32 0.0, %v2715
        %v2717 = vpop.f32.mrb[0].mxu0
        %v2718 = vadd.f32 0.0, %v2717
        %v2719 = vpop.f32.mrb[0].mxu0
        %v2720 = vadd.f32 0.0, %v2719
        %v2721 = vpop.f32.mrb[0].mxu0
        %v2722 = vadd.f32 0.0, %v2721
        %2723 = vdwg.mxu0
        %2724 = vmatprep.subr.bf16.mxu0 0
        %2725 = vmatpush1.bf16.msra.mxu0 %v2602
        %2726 = vmatprep.subr.bf16.mxu0 0
        %2727 = vmatpush1.bf16.msra.mxu0 %v2636
        %2728 = vmatprep.subr.bf16.mxu0 0
        %2729 = vmatpush1.bf16.msra.mxu0 0
        %2730 = vmatprep.subr.bf16.mxu0 0
        %2731 = vmatpush1.bf16.msra.mxu0 0
        %2732 = vmatprep.subr.bf16.mxu0 0
        %2733 = vmatpush1.bf16.msra.mxu0 0
        %2734 = vmatprep.subr.bf16.mxu0 0
        %2735 = vmatpush1.bf16.msra.mxu0 0
        %2736 = vmatprep.subr.bf16.mxu0 0
        %2737 = vmatpush1.bf16.msra.mxu0 0
        %2738 = vmatprep.subr.bf16.mxu0 0
        %2739 = vmatpush1.bf16.msra.mxu0 0
        %2740 = vmatprep.subr.bf16.mxu0 0
        %2741 = vmatpush1.bf16.msra.mxu0 0
        %2742 = vmatprep.subr.bf16.mxu0 0
        %2743 = vmatpush1.bf16.msra.mxu0 0
        %2744 = vmatprep.subr.bf16.mxu0 0
        %2745 = vmatpush1.bf16.msra.mxu0 0
        %2746 = vmatprep.subr.bf16.mxu0 0
        %2747 = vmatpush1.bf16.msra.mxu0 0
        %2748 = vmatprep.subr.bf16.mxu0 0
        %2749 = vmatpush1.bf16.msra.mxu0 0
        %2750 = vmatprep.subr.bf16.mxu0 0
        %2751 = vmatpush1.bf16.msra.mxu0 0
        %2752 = vmatprep.subr.bf16.mxu0 0
        %2753 = vmatpush1.bf16.msra.mxu0 0
        %2754 = vmatprep.subr.bf16.mxu0 0
        %2755 = vmatpush1.bf16.msra.mxu0 0
        %2756 = vmatprep.mubr.bf16.mxu0 0
        %2757 = vmatmul.mubr.bf16.gmra.mrb[0].mxu0 %v2618
        %v2758 = vpop.f32.mrb[0].mxu0
        %v2759 = vadd.f32 0.0, %v2758
        %v2760 = vpop.f32.mrb[0].mxu0
        %v2761 = vpop.f32.mrb[0].mxu0
        %v2762 = vadd.f32 0.0, %v2761
        %v2763 = vpop.f32.mrb[0].mxu0
        %2764 = vdwg.mxu0
        %v2765 = vpack.c.bf16 %v2677, %v2673
        %v2766 = vpack.c.bf16 %v2679, %v2675
        %v2767 = vpack.c.bf16 %v2720, %v2716
        %v2768 = vpack.c.bf16 %v2722, %v2718
        %v2769 = vpack.c.bf16 %v2762, %v2759
        %v2770 = vld [vmem:[%s8] sm:$0xff]
        %v2771 = vld [vmem:[%s8 + $0x8] sm:$0xff]
        %v2772 = vld [vmem:[%s8 + $0x10] sm:$0xf]
        %v2773 = vld [vmem:[%s8 + $0x14] sm:$0xff]
        %v2774 = vld [vmem:[%s8 + $0x1c] sm:$0xff]
        %v2775 = vld [vmem:[%s8 + $0x24] sm:$0xf]
        %v2776 = vld [vmem:[%s8 + $0x28] sm:$0xff]
        %v2777 = vld [vmem:[%s8 + $0x30] sm:$0xff]
        %v2778 = vld [vmem:[%s8 + $0x38] sm:$0xf]
        %v2779 = vld [vmem:[%s8 + $0x3c] sm:$0xff]
        %v2780 = vld [vmem:[%s8 + $0x44] sm:$0xff]
        %v2781 = vld [vmem:[%s8 + $0x4c] sm:$0xf]
        %v2782 = vld [vmem:[%s8 + $0x50] sm:$0xff]
        %v2783 = vld [vmem:[%s8 + $0x58] sm:$0xff]
        %v2784 = vld [vmem:[%s8 + $0x60] sm:$0xf]
        %v2785 = vld [vmem:[%s8 + $0x64] sm:$0xff]
        %v2786 = vld [vmem:[%s8 + $0x6c] sm:$0xff]
        %v2787 = vld [vmem:[%s8 + $0x74] sm:$0xf]
        %v2788 = vld [vmem:[%s8 + $0x78] sm:$0xff]
        %v2789 = vld [vmem:[%s8 + $0x80] sm:$0xff]
        %v2790 = vld [vmem:[%s8 + $0x88] sm:$0xf]
        %v2791 = vld [vmem:[%s8 + $0x8c] sm:$0xff]
        %v2792 = vld [vmem:[%s8 + $0x94] sm:$0xff]
        %v2793 = vld [vmem:[%s8 + $0x9c] sm:$0xf]
        %v2794 = vld [vmem:[%s8 + $0xa0] sm:$0xff]
        %v2795 = vld [vmem:[%s8 + $0xa8] sm:$0xff]
        %v2796 = vld [vmem:[%s8 + $0xb0] sm:$0xf]
        %v2797 = vld [vmem:[%s8 + $0xb4] sm:$0xff]
        %v2798 = vld [vmem:[%s8 + $0xbc] sm:$0xff]
        %v2799 = vld [vmem:[%s8 + $0xc4] sm:$0xf]
        %v2800 = vld [vmem:[%s8 + $0xc8] sm:$0xff]
        %v2801 = vld [vmem:[%s8 + $0xd0] sm:$0xff]
        %v2802 = vld [vmem:[%s8 + $0xd8] sm:$0xf]
        %v2803 = vld [vmem:[%s8 + $0xdc] sm:$0xff]
        %v2804 = vld [vmem:[%s8 + $0xe4] sm:$0xff]
        %v2805 = vld [vmem:[%s8 + $0xec] sm:$0xf]
        %v2806 = vld [vmem:[%s8 + $0xf0] sm:$0xff]
        %v2807 = vld [vmem:[%s8 + $0xf8] sm:$0xff]
        %v2808 = vld [vmem:[%s8 + $0x100] sm:$0xf]
        %v2809 = vld [vmem:[%s8 + $0x104] sm:$0xff]
        %v2810 = vld [vmem:[%s8 + $0x10c] sm:$0xff]
        %v2811 = vld [vmem:[%s8 + $0x114] sm:$0xf]
        %v2812 = vld [vmem:[%s8 + $0x118] sm:$0xff]
        %v2813 = vld [vmem:[%s8 + $0x120] sm:$0xff]
        %v2814 = vld [vmem:[%s8 + $0x128] sm:$0xf]
        %v2815 = vld [vmem:[%s8 + $0x12c] sm:$0xff]
        %v2816 = vld [vmem:[%s8 + $0x134] sm:$0xff]
        %v2817 = vld [vmem:[%s8 + $0x13c] sm:$0xf]
        %v2818 = vld [vmem:[%s8 + $0x140] sm:$0xff]
        %v2819 = vld [vmem:[%s8 + $0x148] sm:$0xff]
        %v2820 = vld [vmem:[%s8 + $0x150] sm:$0xf]
        %v2821 = vld [vmem:[%s8 + $0x154] sm:$0xff]
        %v2822 = vld [vmem:[%s8 + $0x15c] sm:$0xff]
        %v2823 = vld [vmem:[%s8 + $0x164] sm:$0xf]
        %v2824 = vld [vmem:[%s8 + $0x168] sm:$0xff]
        %v2825 = vld [vmem:[%s8 + $0x170] sm:$0xff]
        %v2826 = vld [vmem:[%s8 + $0x178] sm:$0xf]
        %v2827 = vld [vmem:[%s8 + $0x17c] sm:$0xff]
        %v2828 = vld [vmem:[%s8 + $0x184] sm:$0xff]
        %v2829 = vld [vmem:[%s8 + $0x18c] sm:$0xf]
        %v2830 = vld [vmem:[%s8 + $0x190] sm:$0xff]
        %v2831 = vld [vmem:[%s8 + $0x198] sm:$0xff]
        %v2832 = vld [vmem:[%s8 + $0x1a0] sm:$0xf]
        %v2833 = vld [vmem:[%s8 + $0x1a4] sm:$0xff]
        %v2834 = vld [vmem:[%s8 + $0x1ac] sm:$0xff]
        %v2835 = vld [vmem:[%s8 + $0x1b4] sm:$0xf]
        %v2836 = vld [vmem:[%s8 + $0x1b8] sm:$0xff]
        %v2837 = vld [vmem:[%s8 + $0x1c0] sm:$0xff]
        %v2838 = vld [vmem:[%s8 + $0x1c8] sm:$0xf]
        %v2839 = vld [vmem:[%s8 + $0x1cc] sm:$0xff]
        %v2840 = vld [vmem:[%s8 + $0x1d4] sm:$0xff]
        %v2841 = vld [vmem:[%s8 + $0x1dc] sm:$0xf]
        %v2842 = vld [vmem:[%s8 + $0x1e0] sm:$0xff]
        %v2843 = vld [vmem:[%s8 + $0x1e8] sm:$0xff]
        %v2844 = vld [vmem:[%s8 + $0x1f0] sm:$0xf]
        %v2845 = vld [vmem:[%s8 + $0x1f4] sm:$0xff]
        %v2846 = vld [vmem:[%s8 + $0x1fc] sm:$0xff]
        %v2847 = vld [vmem:[%s8 + $0x204] sm:$0xf]
        %v2848 = vld [vmem:[%s8 + $0x208] sm:$0xff]
        %v2849 = vld [vmem:[%s8 + $0x210] sm:$0xff]
        %v2850 = vld [vmem:[%s8 + $0x218] sm:$0xf]
        %v2851 = vld [vmem:[%s8 + $0x21c] sm:$0xff]
        %v2852 = vld [vmem:[%s8 + $0x224] sm:$0xff]
        %v2853 = vld [vmem:[%s8 + $0x22c] sm:$0xf]
        %v2854 = vld [vmem:[%s8 + $0x230] sm:$0xff]
        %v2855 = vld [vmem:[%s8 + $0x238] sm:$0xff]
        %v2856 = vld [vmem:[%s8 + $0x240] sm:$0xf]
        %v2857 = vld [vmem:[%s8 + $0x244] sm:$0xff]
        %v2858 = vld [vmem:[%s8 + $0x24c] sm:$0xff]
        %v2859 = vld [vmem:[%s8 + $0x254] sm:$0xf]
        %v2860 = vld [vmem:[%s8 + $0x258] sm:$0xff]
        %v2861 = vld [vmem:[%s8 + $0x260] sm:$0xff]
        %v2862 = vld [vmem:[%s8 + $0x268] sm:$0xf]
        %v2863 = vld [vmem:[%s8 + $0x26c] sm:$0xff]
        %v2864 = vld [vmem:[%s8 + $0x274] sm:$0xff]
        %v2865 = vld [vmem:[%s8 + $0x27c] sm:$0xf]
        %v2866 = vld [vmem:[%s8 + $0x280] sm:$0xff]
        %v2867 = vld [vmem:[%s8 + $0x288] sm:$0xff]
        %v2868 = vld [vmem:[%s8 + $0x290] sm:$0xf]
        %v2869 = vld [vmem:[%s8 + $0x294] sm:$0xff]
        %v2870 = vld [vmem:[%s8 + $0x29c] sm:$0xff]
        %v2871 = vld [vmem:[%s8 + $0x2a4] sm:$0xf]
        %v2872 = vld [vmem:[%s8 + $0x2a8] sm:$0xff]
        %v2873 = vld [vmem:[%s8 + $0x2b0] sm:$0xff]
        %v2874 = vld [vmem:[%s8 + $0x2b8] sm:$0xf]
        %v2875 = vld [vmem:[%s8 + $0x2bc] sm:$0xff]
        %v2876 = vld [vmem:[%s8 + $0x2c4] sm:$0xff]
        %v2877 = vld [vmem:[%s8 + $0x2cc] sm:$0xf]
        %v2878 = vld [vmem:[%s8 + $0x2d0] sm:$0xff]
        %v2879 = vld [vmem:[%s8 + $0x2d8] sm:$0xff]
        %v2880 = vld [vmem:[%s8 + $0x2e0] sm:$0xf]
        %v2881 = vld [vmem:[%s8 + $0x2e4] sm:$0xff]
        %v2882 = vld [vmem:[%s8 + $0x2ec] sm:$0xff]
        %v2883 = vld [vmem:[%s8 + $0x2f4] sm:$0xf]
        %v2884 = vld [vmem:[%s8 + $0x2f8] sm:$0xff]
        %v2885 = vld [vmem:[%s8 + $0x300] sm:$0xff]
        %v2886 = vld [vmem:[%s8 + $0x308] sm:$0xf]
        %v2887 = vld [vmem:[%s8 + $0x30c] sm:$0xff]
        %v2888 = vld [vmem:[%s8 + $0x314] sm:$0xff]
        %v2889 = vld [vmem:[%s8 + $0x31c] sm:$0xf]
        %v2890 = vld [vmem:[%s8 + $0x320] sm:$0xff]
        %v2891 = vld [vmem:[%s8 + $0x328] sm:$0xff]
        %v2892 = vld [vmem:[%s8 + $0x330] sm:$0xf]
        %v2893 = vld [vmem:[%s8 + $0x334] sm:$0xff]
        %v2894 = vld [vmem:[%s8 + $0x33c] sm:$0xff]
        %v2895 = vld [vmem:[%s8 + $0x344] sm:$0xf]
        %v2896 = vld [vmem:[%s8 + $0x348] sm:$0xff]
        %v2897 = vld [vmem:[%s8 + $0x350] sm:$0xff]
        %v2898 = vld [vmem:[%s8 + $0x358] sm:$0xf]
        %v2899 = vld [vmem:[%s8 + $0x35c] sm:$0xff]
        %v2900 = vld [vmem:[%s8 + $0x364] sm:$0xff]
        %v2901 = vld [vmem:[%s8 + $0x36c] sm:$0xf]
        %v2902 = vld [vmem:[%s8 + $0x370] sm:$0xff]
        %v2903 = vld [vmem:[%s8 + $0x378] sm:$0xff]
        %v2904 = vld [vmem:[%s8 + $0x380] sm:$0xf]
        %v2905 = vld [vmem:[%s8 + $0x384] sm:$0xff]
        %v2906 = vld [vmem:[%s8 + $0x38c] sm:$0xff]
        %v2907 = vld [vmem:[%s8 + $0x394] sm:$0xf]
        %v2908 = vld [vmem:[%s8 + $0x398] sm:$0xff]
        %v2909 = vld [vmem:[%s8 + $0x3a0] sm:$0xff]
        %v2910 = vld [vmem:[%s8 + $0x3a8] sm:$0xf]
        %v2911 = vld [vmem:[%s8 + $0x3ac] sm:$0xff]
        %v2912 = vld [vmem:[%s8 + $0x3b4] sm:$0xff]
        %v2913 = vld [vmem:[%s8 + $0x3bc] sm:$0xf]
        %v2914 = vld [vmem:[%s8 + $0x3c0] sm:$0xff]
        %v2915 = vld [vmem:[%s8 + $0x3c8] sm:$0xff]
        %v2916 = vld [vmem:[%s8 + $0x3d0] sm:$0xf]
        %v2917 = vld [vmem:[%s8 + $0x3d4] sm:$0xff]
        %v2918 = vld [vmem:[%s8 + $0x3dc] sm:$0xff]
        %v2919 = vld [vmem:[%s8 + $0x3e4] sm:$0xf]
        %v2920 = vld [vmem:[%s8 + $0x3e8] sm:$0xff]
        %v2921 = vld [vmem:[%s8 + $0x3f0] sm:$0xff]
        %v2922 = vld [vmem:[%s8 + $0x3f8] sm:$0xf]
        %v2923 = vld [vmem:[%s8 + $0x3fc] sm:$0xff]
        %v2924 = vld [vmem:[%s8 + $0x404] sm:$0xff]
        %v2925 = vld [vmem:[%s8 + $0x40c] sm:$0xf]
        %v2926 = vld [vmem:[%s8 + $0x410] sm:$0xff]
        %v2927 = vld [vmem:[%s8 + $0x418] sm:$0xff]
        %v2928 = vld [vmem:[%s8 + $0x420] sm:$0xf]
        %v2929 = vld [vmem:[%s8 + $0x424] sm:$0xff]
        %v2930 = vld [vmem:[%s8 + $0x42c] sm:$0xff]
        %v2931 = vld [vmem:[%s8 + $0x434] sm:$0xf]
        %v2932 = vld [vmem:[%s8 + $0x438] sm:$0xff]
        %v2933 = vld [vmem:[%s8 + $0x440] sm:$0xff]
        %v2934 = vld [vmem:[%s8 + $0x448] sm:$0xf]
        %v2935 = vld [vmem:[%s8 + $0x44c] sm:$0xff]
        %v2936 = vld [vmem:[%s8 + $0x454] sm:$0xff]
        %v2937 = vld [vmem:[%s8 + $0x45c] sm:$0xf]
        %v2938 = vld [vmem:[%s8 + $0x460] sm:$0xff]
        %v2939 = vld [vmem:[%s8 + $0x468] sm:$0xff]
        %v2940 = vld [vmem:[%s8 + $0x470] sm:$0xf]
        %v2941 = vld [vmem:[%s8 + $0x474] sm:$0xff]
        %v2942 = vld [vmem:[%s8 + $0x47c] sm:$0xff]
        %v2943 = vld [vmem:[%s8 + $0x484] sm:$0xf]
        %v2944 = vld [vmem:[%s8 + $0x488] sm:$0xff]
        %v2945 = vld [vmem:[%s8 + $0x490] sm:$0xff]
        %v2946 = vld [vmem:[%s8 + $0x498] sm:$0xf]
        %v2947 = vld [vmem:[%s8 + $0x49c] sm:$0xff]
        %v2948 = vld [vmem:[%s8 + $0x4a4] sm:$0xff]
        %v2949 = vld [vmem:[%s8 + $0x4ac] sm:$0xf]
        %v2950 = vld [vmem:[%s8 + $0x4b0] sm:$0xff]
        %v2951 = vld [vmem:[%s8 + $0x4b8] sm:$0xff]
        %v2952 = vld [vmem:[%s8 + $0x4c0] sm:$0xf]
        %v2953 = vld [vmem:[%s8 + $0x4c4] sm:$0xff]
        %v2954 = vld [vmem:[%s8 + $0x4cc] sm:$0xff]
        %v2955 = vld [vmem:[%s8 + $0x4d4] sm:$0xf]
        %v2956 = vld [vmem:[%s8 + $0x4d8] sm:$0xff]
        %v2957 = vld [vmem:[%s8 + $0x4e0] sm:$0xff]
        %v2958 = vld [vmem:[%s8 + $0x4e8] sm:$0xf]
        %v2959 = vld [vmem:[%s8 + $0x4ec] sm:$0xff]
        %v2960 = vld [vmem:[%s8 + $0x4f4] sm:$0xff]
        %v2961 = vld [vmem:[%s8 + $0x4fc] sm:$0xf]
        %v2962 = vld [vmem:[%s8 + $0x500] sm:$0xff]
        %v2963 = vld [vmem:[%s8 + $0x508] sm:$0xff]
        %v2964 = vld [vmem:[%s8 + $0x510] sm:$0xf]
        %v2965 = vld [vmem:[%s8 + $0x514] sm:$0xff]
        %v2966 = vld [vmem:[%s8 + $0x51c] sm:$0xff]
        %v2967 = vld [vmem:[%s8 + $0x524] sm:$0xf]
        %v2968 = vld [vmem:[%s8 + $0x528] sm:$0xff]
        %v2969 = vld [vmem:[%s8 + $0x530] sm:$0xff]
        %v2970 = vld [vmem:[%s8 + $0x538] sm:$0xf]
        %v2971 = vld [vmem:[%s8 + $0x53c] sm:$0xff]
        %v2972 = vld [vmem:[%s8 + $0x544] sm:$0xff]
        %v2973 = vld [vmem:[%s8 + $0x54c] sm:$0xf]
        %v3178 = vunpack.c.l.b16 %v2770
        %v3179 = vunpack.c.h.b16 %v2770
        %v3180 = vunpack.c.l.b16 %v2771
        %v3181 = vunpack.c.h.b16 %v2771
        %v3182 = vunpack.c.l.b16 %v2772
        %v3183 = vunpack.c.l.b16 %v2773
        %v3184 = vunpack.c.h.b16 %v2773
        %v3185 = vunpack.c.l.b16 %v2774
        %v3186 = vunpack.c.h.b16 %v2774
        %v3187 = vunpack.c.l.b16 %v2775
        %v3188 = vunpack.c.l.b16 %v2776
        %v3189 = vunpack.c.h.b16 %v2776
        %v3190 = vunpack.c.l.b16 %v2777
        %v3191 = vunpack.c.h.b16 %v2777
        %v3192 = vunpack.c.l.b16 %v2778
        %v3193 = vunpack.c.l.b16 %v2779
        %v3194 = vunpack.c.h.b16 %v2779
        %v3195 = vunpack.c.l.b16 %v2780
        %v3196 = vunpack.c.h.b16 %v2780
        %v3197 = vunpack.c.l.b16 %v2781
        %v3198 = vunpack.c.l.b16 %v2782
        %v3199 = vunpack.c.h.b16 %v2782
        %v3200 = vunpack.c.l.b16 %v2783
        %v3201 = vunpack.c.h.b16 %v2783
        %v3202 = vunpack.c.l.b16 %v2784
        %v3203 = vunpack.c.l.b16 %v2785
        %v3204 = vunpack.c.h.b16 %v2785
        %v3205 = vunpack.c.l.b16 %v2786
        %v3206 = vunpack.c.h.b16 %v2786
        %v3207 = vunpack.c.l.b16 %v2787
        %v3208 = vunpack.c.l.b16 %v2788
        %v3209 = vunpack.c.h.b16 %v2788
        %v3210 = vunpack.c.l.b16 %v2789
        %v3211 = vunpack.c.h.b16 %v2789
        %v3212 = vunpack.c.l.b16 %v2790
        %v3213 = vunpack.c.l.b16 %v2791
        %v3214 = vunpack.c.h.b16 %v2791
        %v3215 = vunpack.c.l.b16 %v2792
        %v3216 = vunpack.c.h.b16 %v2792
        %v3217 = vunpack.c.l.b16 %v2793
        %v3218 = vunpack.c.l.b16 %v2794
        %v3219 = vunpack.c.h.b16 %v2794
        %v3220 = vunpack.c.l.b16 %v2795
        %v3221 = vunpack.c.h.b16 %v2795
        %v3222 = vunpack.c.l.b16 %v2796
        %v3223 = vunpack.c.l.b16 %v2797
        %v3224 = vunpack.c.h.b16 %v2797
        %v3225 = vunpack.c.l.b16 %v2798
        %v3226 = vunpack.c.h.b16 %v2798
        %v3227 = vunpack.c.l.b16 %v2799
        %v3228 = vunpack.c.l.b16 %v2800
        %v3229 = vunpack.c.h.b16 %v2800
        %v3230 = vunpack.c.l.b16 %v2801
        %v3231 = vunpack.c.h.b16 %v2801
        %v3232 = vunpack.c.l.b16 %v2802
        %v3233 = vunpack.c.l.b16 %v2803
        %v3234 = vunpack.c.h.b16 %v2803
        %v3235 = vunpack.c.l.b16 %v2804
        %v3236 = vunpack.c.h.b16 %v2804
        %v3237 = vunpack.c.l.b16 %v2805
        %v3238 = vunpack.c.l.b16 %v2806
        %v3239 = vunpack.c.h.b16 %v2806
        %v3240 = vunpack.c.l.b16 %v2807
        %v3241 = vunpack.c.h.b16 %v2807
        %v3242 = vunpack.c.l.b16 %v2808
        %v3243 = vunpack.c.l.b16 %v2809
        %v3244 = vunpack.c.h.b16 %v2809
        %v3245 = vunpack.c.l.b16 %v2810
        %v3246 = vunpack.c.h.b16 %v2810
        %v3247 = vunpack.c.l.b16 %v2811
        %v3248 = vunpack.c.l.b16 %v2812
        %v3249 = vunpack.c.h.b16 %v2812
        %v3250 = vunpack.c.l.b16 %v2813
        %v3251 = vunpack.c.h.b16 %v2813
        %v3252 = vunpack.c.l.b16 %v2814
        %v3253 = vunpack.c.l.b16 %v2815
        %v3254 = vunpack.c.h.b16 %v2815
        %v3255 = vunpack.c.l.b16 %v2816
        %v3256 = vunpack.c.h.b16 %v2816
        %v3257 = vunpack.c.l.b16 %v2817
        %v3258 = vunpack.c.l.b16 %v2818
        %v3259 = vunpack.c.h.b16 %v2818
        %v3260 = vunpack.c.l.b16 %v2819
        %v3261 = vunpack.c.h.b16 %v2819
        %v3262 = vunpack.c.l.b16 %v2820
        %v3263 = vunpack.c.l.b16 %v2821
        %v3264 = vunpack.c.h.b16 %v2821
        %v3265 = vunpack.c.l.b16 %v2822
        %v3266 = vunpack.c.h.b16 %v2822
        %v3267 = vunpack.c.l.b16 %v2823
        %v3268 = vunpack.c.l.b16 %v2824
        %v3269 = vunpack.c.h.b16 %v2824
        %v3270 = vunpack.c.l.b16 %v2825
        %v3271 = vunpack.c.h.b16 %v2825
        %v3272 = vunpack.c.l.b16 %v2826
        %v3273 = vunpack.c.l.b16 %v2827
        %v3274 = vunpack.c.h.b16 %v2827
        %v3275 = vunpack.c.l.b16 %v2828
        %v3276 = vunpack.c.h.b16 %v2828
        %v3277 = vunpack.c.l.b16 %v2829
        %v3278 = vunpack.c.l.b16 %v2830
        %v3279 = vunpack.c.h.b16 %v2830
        %v3280 = vunpack.c.l.b16 %v2831
        %v3281 = vunpack.c.h.b16 %v2831
        %v3282 = vunpack.c.l.b16 %v2832
        %v3283 = vunpack.c.l.b16 %v2833
        %v3284 = vunpack.c.h.b16 %v2833
        %v3285 = vunpack.c.l.b16 %v2834
        %v3286 = vunpack.c.h.b16 %v2834
        %v3287 = vunpack.c.l.b16 %v2835
        %v3288 = vunpack.c.l.b16 %v2836
        %v3289 = vunpack.c.h.b16 %v2836
        %v3290 = vunpack.c.l.b16 %v2837
        %v3291 = vunpack.c.h.b16 %v2837
        %v3292 = vunpack.c.l.b16 %v2838
        %v3293 = vunpack.c.l.b16 %v2839
        %v3294 = vunpack.c.h.b16 %v2839
        %v3295 = vunpack.c.l.b16 %v2840
        %v3296 = vunpack.c.h.b16 %v2840
        %v3297 = vunpack.c.l.b16 %v2841
        %v3298 = vunpack.c.l.b16 %v2842
        %v3299 = vunpack.c.h.b16 %v2842
        %v3300 = vunpack.c.l.b16 %v2843
        %v3301 = vunpack.c.h.b16 %v2843
        %v3302 = vunpack.c.l.b16 %v2844
        %v3303 = vunpack.c.l.b16 %v2845
        %v3304 = vunpack.c.h.b16 %v2845
        %v3305 = vunpack.c.l.b16 %v2846
        %v3306 = vunpack.c.h.b16 %v2846
        %v3307 = vunpack.c.l.b16 %v2847
        %v3308 = vunpack.c.l.b16 %v2848
        %v3309 = vunpack.c.h.b16 %v2848
        %v3310 = vunpack.c.l.b16 %v2849
        %v3311 = vunpack.c.h.b16 %v2849
        %v3312 = vunpack.c.l.b16 %v2850
        %v3313 = vunpack.c.l.b16 %v2851
        %v3314 = vunpack.c.h.b16 %v2851
        %v3315 = vunpack.c.l.b16 %v2852
        %v3316 = vunpack.c.h.b16 %v2852
        %v3317 = vunpack.c.l.b16 %v2853
        %v3318 = vunpack.c.l.b16 %v2854
        %v3319 = vunpack.c.h.b16 %v2854
        %v3320 = vunpack.c.l.b16 %v2855
        %v3321 = vunpack.c.h.b16 %v2855
        %v3322 = vunpack.c.l.b16 %v2856
        %v3323 = vunpack.c.l.b16 %v2857
        %v3324 = vunpack.c.h.b16 %v2857
        %v3325 = vunpack.c.l.b16 %v2858
        %v3326 = vunpack.c.h.b16 %v2858
        %v3327 = vunpack.c.l.b16 %v2859
        %v3328 = vunpack.c.l.b16 %v2860
        %v3329 = vunpack.c.h.b16 %v2860
        %v3330 = vunpack.c.l.b16 %v2861
        %v3331 = vunpack.c.h.b16 %v2861
        %v3332 = vunpack.c.l.b16 %v2862
        %v3333 = vunpack.c.l.b16 %v2863
        %v3334 = vunpack.c.h.b16 %v2863
        %v3335 = vunpack.c.l.b16 %v2864
        %v3336 = vunpack.c.h.b16 %v2864
        %v3337 = vunpack.c.l.b16 %v2865
        %v3338 = vunpack.c.l.b16 %v2866
        %v3339 = vunpack.c.h.b16 %v2866
        %v3340 = vunpack.c.l.b16 %v2867
        %v3341 = vunpack.c.h.b16 %v2867
        %v3342 = vunpack.c.l.b16 %v2868
        %v3343 = vunpack.c.l.b16 %v2869
        %v3344 = vunpack.c.h.b16 %v2869
        %v3345 = vunpack.c.l.b16 %v2870
        %v3346 = vunpack.c.h.b16 %v2870
        %v3347 = vunpack.c.l.b16 %v2871
        %v3348 = vunpack.c.l.b16 %v2872
        %v3349 = vunpack.c.h.b16 %v2872
        %v3350 = vunpack.c.l.b16 %v2873
        %v3351 = vunpack.c.h.b16 %v2873
        %v3352 = vunpack.c.l.b16 %v2874
        %v3353 = vunpack.c.l.b16 %v2875
        %v3354 = vunpack.c.h.b16 %v2875
        %v3355 = vunpack.c.l.b16 %v2876
        %v3356 = vunpack.c.h.b16 %v2876
        %v3357 = vunpack.c.l.b16 %v2877
        %v3358 = vunpack.c.l.b16 %v2878
        %v3359 = vunpack.c.h.b16 %v2878
        %v3360 = vunpack.c.l.b16 %v2879
        %v3361 = vunpack.c.h.b16 %v2879
        %v3362 = vunpack.c.l.b16 %v2880
        %v3363 = vunpack.c.l.b16 %v2881
        %v3364 = vunpack.c.h.b16 %v2881
        %v3365 = vunpack.c.l.b16 %v2882
        %v3366 = vunpack.c.h.b16 %v2882
        %v3367 = vunpack.c.l.b16 %v2883
        %v3368 = vunpack.c.l.b16 %v2884
        %v3369 = vunpack.c.h.b16 %v2884
        %v3370 = vunpack.c.l.b16 %v2885
        %v3371 = vunpack.c.h.b16 %v2885
        %v3372 = vunpack.c.l.b16 %v2886
        %v3373 = vunpack.c.l.b16 %v2887
        %v3374 = vunpack.c.h.b16 %v2887
        %v3375 = vunpack.c.l.b16 %v2888
        %v3376 = vunpack.c.h.b16 %v2888
        %v3377 = vunpack.c.l.b16 %v2889
        %v3378 = vunpack.c.l.b16 %v2890
        %v3379 = vunpack.c.h.b16 %v2890
        %v3380 = vunpack.c.l.b16 %v2891
        %v3381 = vunpack.c.h.b16 %v2891
        %v3382 = vunpack.c.l.b16 %v2892
        %v3383 = vunpack.c.l.b16 %v2893
        %v3384 = vunpack.c.h.b16 %v2893
        %v3385 = vunpack.c.l.b16 %v2894
        %v3386 = vunpack.c.h.b16 %v2894
        %v3387 = vunpack.c.l.b16 %v2895
        %v3388 = vunpack.c.l.b16 %v2896
        %v3389 = vunpack.c.h.b16 %v2896
        %v3390 = vunpack.c.l.b16 %v2897
        %v3391 = vunpack.c.h.b16 %v2897
        %v3392 = vunpack.c.l.b16 %v2898
        %v3393 = vunpack.c.l.b16 %v2899
        %v3394 = vunpack.c.h.b16 %v2899
        %v3395 = vunpack.c.l.b16 %v2900
        %v3396 = vunpack.c.h.b16 %v2900
        %v3397 = vunpack.c.l.b16 %v2901
        %v3398 = vunpack.c.l.b16 %v2902
        %v3399 = vunpack.c.h.b16 %v2902
        %v3400 = vunpack.c.l.b16 %v2903
        %v3401 = vunpack.c.h.b16 %v2903
        %v3402 = vunpack.c.l.b16 %v2904
        %v3403 = vunpack.c.l.b16 %v2905
        %v3404 = vunpack.c.h.b16 %v2905
        %v3405 = vunpack.c.l.b16 %v2906
        %v3406 = vunpack.c.h.b16 %v2906
        %v3407 = vunpack.c.l.b16 %v2907
        %v3408 = vunpack.c.l.b16 %v2908
        %v3409 = vunpack.c.h.b16 %v2908
        %v3410 = vunpack.c.l.b16 %v2909
        %v3411 = vunpack.c.h.b16 %v2909
        %v3412 = vunpack.c.l.b16 %v2910
        %v3413 = vunpack.c.l.b16 %v2911
        %v3414 = vunpack.c.h.b16 %v2911
        %v3415 = vunpack.c.l.b16 %v2912
        %v3416 = vunpack.c.h.b16 %v2912
        %v3417 = vunpack.c.l.b16 %v2913
        %v3418 = vunpack.c.l.b16 %v2914
        %v3419 = vunpack.c.h.b16 %v2914
        %v3420 = vunpack.c.l.b16 %v2915
        %v3421 = vunpack.c.h.b16 %v2915
        %v3422 = vunpack.c.l.b16 %v2916
        %v3423 = vunpack.c.l.b16 %v2917
        %v3424 = vunpack.c.h.b16 %v2917
        %v3425 = vunpack.c.l.b16 %v2918
        %v3426 = vunpack.c.h.b16 %v2918
        %v3427 = vunpack.c.l.b16 %v2919
        %v3428 = vunpack.c.l.b16 %v2920
        %v3429 = vunpack.c.h.b16 %v2920
        %v3430 = vunpack.c.l.b16 %v2921
        %v3431 = vunpack.c.h.b16 %v2921
        %v3432 = vunpack.c.l.b16 %v2922
        %v3433 = vunpack.c.l.b16 %v2923
        %v3434 = vunpack.c.h.b16 %v2923
        %v3435 = vunpack.c.l.b16 %v2924
        %v3436 = vunpack.c.h.b16 %v2924
        %v3437 = vunpack.c.l.b16 %v2925
        %v3438 = vunpack.c.l.b16 %v2926
        %v3439 = vunpack.c.h.b16 %v2926
        %v3440 = vunpack.c.l.b16 %v2927
        %v3441 = vunpack.c.h.b16 %v2927
        %v3442 = vunpack.c.l.b16 %v2928
        %v3443 = vunpack.c.l.b16 %v2929
        %v3444 = vunpack.c.h.b16 %v2929
        %v3445 = vunpack.c.l.b16 %v2930
        %v3446 = vunpack.c.h.b16 %v2930
        %v3447 = vunpack.c.l.b16 %v2931
        %v3448 = vunpack.c.l.b16 %v2932
        %v3449 = vunpack.c.h.b16 %v2932
        %v3450 = vunpack.c.l.b16 %v2933
        %v3451 = vunpack.c.h.b16 %v2933
        %v3452 = vunpack.c.l.b16 %v2934
        %v3453 = vunpack.c.l.b16 %v2935
        %v3454 = vunpack.c.h.b16 %v2935
        %v3455 = vunpack.c.l.b16 %v2936
        %v3456 = vunpack.c.h.b16 %v2936
        %v3457 = vunpack.c.l.b16 %v2937
        %v3458 = vunpack.c.l.b16 %v2938
        %v3459 = vunpack.c.h.b16 %v2938
        %v3460 = vunpack.c.l.b16 %v2939
        %v3461 = vunpack.c.h.b16 %v2939
        %v3462 = vunpack.c.l.b16 %v2940
        %v3463 = vunpack.c.l.b16 %v2941
        %v3464 = vunpack.c.h.b16 %v2941
        %v3465 = vunpack.c.l.b16 %v2942
        %v3466 = vunpack.c.h.b16 %v2942
        %v3467 = vunpack.c.l.b16 %v2943
        %v3468 = vunpack.c.l.b16 %v2944
        %v3469 = vunpack.c.h.b16 %v2944
        %v3470 = vunpack.c.l.b16 %v2945
        %v3471 = vunpack.c.h.b16 %v2945
        %v3472 = vunpack.c.l.b16 %v2946
        %v3473 = vunpack.c.l.b16 %v2947
        %v3474 = vunpack.c.h.b16 %v2947
        %v3475 = vunpack.c.l.b16 %v2948
        %v3476 = vunpack.c.h.b16 %v2948
        %v3477 = vunpack.c.l.b16 %v2949
        %v3478 = vunpack.c.l.b16 %v2950
        %v3479 = vunpack.c.h.b16 %v2950
        %v3480 = vunpack.c.l.b16 %v2951
        %v3481 = vunpack.c.h.b16 %v2951
        %v3482 = vunpack.c.l.b16 %v2952
        %v3483 = vunpack.c.l.b16 %v2953
        %v3484 = vunpack.c.h.b16 %v2953
        %v3485 = vunpack.c.l.b16 %v2954
        %v3486 = vunpack.c.h.b16 %v2954
        %v3487 = vunpack.c.l.b16 %v2955
        %v3488 = vunpack.c.l.b16 %v2956
        %v3489 = vunpack.c.h.b16 %v2956
        %v3490 = vunpack.c.l.b16 %v2957
        %v3491 = vunpack.c.h.b16 %v2957
        %v3492 = vunpack.c.l.b16 %v2958
        %v3493 = vunpack.c.l.b16 %v2959
        %v3494 = vunpack.c.h.b16 %v2959
        %v3495 = vunpack.c.l.b16 %v2960
        %v3496 = vunpack.c.h.b16 %v2960
        %v3497 = vunpack.c.l.b16 %v2961
        %v3498 = vunpack.c.l.b16 %v2962
        %v3499 = vunpack.c.h.b16 %v2962
        %v3500 = vunpack.c.l.b16 %v2963
        %v3501 = vunpack.c.h.b16 %v2963
        %v3502 = vunpack.c.l.b16 %v2964
        %v3503 = vunpack.c.l.b16 %v2965
        %v3504 = vunpack.c.h.b16 %v2965
        %v3505 = vunpack.c.l.b16 %v2966
        %v3506 = vunpack.c.h.b16 %v2966
        %v3507 = vunpack.c.l.b16 %v2967
        %v3508 = vunpack.c.l.b16 %v2968
        %v3509 = vunpack.c.h.b16 %v2968
        %v3510 = vunpack.c.l.b16 %v2969
        %v3511 = vunpack.c.h.b16 %v2969
        %v3512 = vunpack.c.l.b16 %v2970
        %v3513 = vunpack.c.l.b16 %v2971
        %v3514 = vunpack.c.h.b16 %v2971
        %v3515 = vunpack.c.l.b16 %v2972
        %v3516 = vunpack.c.h.b16 %v2972
        %v3517 = vunpack.c.l.b16 %v2973
        %v3518 = vpack.c.b16 %v3183, %v3178
        %v3519 = vpack.c.b16 %v3184, %v3179
        %v3520 = vpack.c.b16 %v3185, %v3180
        %v3521 = vpack.c.b16 %v3186, %v3181
        %v3522 = vpack.c.b16 %v3187, %v3182
        %v3523 = vpack.c.b16 %v3193, %v3188
        %v3524 = vpack.c.b16 %v3194, %v3189
        %v3525 = vpack.c.b16 %v3195, %v3190
        %v3526 = vpack.c.b16 %v3196, %v3191
        %v3527 = vpack.c.b16 %v3197, %v3192
        %v3528 = vpack.c.b16 %v3203, %v3198
        %v3529 = vpack.c.b16 %v3204, %v3199
        %v3530 = vpack.c.b16 %v3205, %v3200
        %v3531 = vpack.c.b16 %v3206, %v3201
        %v3532 = vpack.c.b16 %v3207, %v3202
        %v3533 = vpack.c.b16 %v3213, %v3208
        %v3534 = vpack.c.b16 %v3214, %v3209
        %v3535 = vpack.c.b16 %v3215, %v3210
        %v3536 = vpack.c.b16 %v3216, %v3211
        %v3537 = vpack.c.b16 %v3217, %v3212
        %v3538 = vpack.c.b16 %v3223, %v3218
        %v3539 = vpack.c.b16 %v3224, %v3219
        %v3540 = vpack.c.b16 %v3225, %v3220
        %v3541 = vpack.c.b16 %v3226, %v3221
        %v3542 = vpack.c.b16 %v3227, %v3222
        %v3543 = vpack.c.b16 %v3233, %v3228
        %v3544 = vpack.c.b16 %v3234, %v3229
        %v3545 = vpack.c.b16 %v3235, %v3230
        %v3546 = vpack.c.b16 %v3236, %v3231
        %v3547 = vpack.c.b16 %v3237, %v3232
        %v3548 = vpack.c.b16 %v3243, %v3238
        %v3549 = vpack.c.b16 %v3244, %v3239
        %v3550 = vpack.c.b16 %v3245, %v3240
        %v3551 = vpack.c.b16 %v3246, %v3241
        %v3552 = vpack.c.b16 %v3247, %v3242
        %v3553 = vpack.c.b16 %v3253, %v3248
        %v3554 = vpack.c.b16 %v3254, %v3249
        %v3555 = vpack.c.b16 %v3255, %v3250
        %v3556 = vpack.c.b16 %v3256, %v3251
        %v3557 = vpack.c.b16 %v3257, %v3252
        %v3558 = vpack.c.b16 %v3263, %v3258
        %v3559 = vpack.c.b16 %v3264, %v3259
        %v3560 = vpack.c.b16 %v3265, %v3260
        %v3561 = vpack.c.b16 %v3266, %v3261
        %v3562 = vpack.c.b16 %v3267, %v3262
        %v3563 = vpack.c.b16 %v3273, %v3268
        %v3564 = vpack.c.b16 %v3274, %v3269
        %v3565 = vpack.c.b16 %v3275, %v3270
        %v3566 = vpack.c.b16 %v3276, %v3271
        %v3567 = vpack.c.b16 %v3277, %v3272
        %v3568 = vpack.c.b16 %v3283, %v3278
        %v3569 = vpack.c.b16 %v3284, %v3279
        %v3570 = vpack.c.b16 %v3285, %v3280
        %v3571 = vpack.c.b16 %v3286, %v3281
        %v3572 = vpack.c.b16 %v3287, %v3282
        %v3573 = vpack.c.b16 %v3293, %v3288
        %v3574 = vpack.c.b16 %v3294, %v3289
        %v3575 = vpack.c.b16 %v3295, %v3290
        %v3576 = vpack.c.b16 %v3296, %v3291
        %v3577 = vpack.c.b16 %v3297, %v3292
        %v3578 = vpack.c.b16 %v3303, %v3298
        %v3579 = vpack.c.b16 %v3304, %v3299
        %v3580 = vpack.c.b16 %v3305, %v3300
        %v3581 = vpack.c.b16 %v3306, %v3301
        %v3582 = vpack.c.b16 %v3307, %v3302
        %v3583 = vpack.c.b16 %v3313, %v3308
        %v3584 = vpack.c.b16 %v3314, %v3309
        %v3585 = vpack.c.b16 %v3315, %v3310
        %v3586 = vpack.c.b16 %v3316, %v3311
        %v3587 = vpack.c.b16 %v3317, %v3312
        %v3588 = vpack.c.b16 %v3323, %v3318
        %v3589 = vpack.c.b16 %v3324, %v3319
        %v3590 = vpack.c.b16 %v3325, %v3320
        %v3591 = vpack.c.b16 %v3326, %v3321
        %v3592 = vpack.c.b16 %v3327, %v3322
        %v3593 = vpack.c.b16 %v3333, %v3328
        %v3594 = vpack.c.b16 %v3334, %v3329
        %v3595 = vpack.c.b16 %v3335, %v3330
        %v3596 = vpack.c.b16 %v3336, %v3331
        %v3597 = vpack.c.b16 %v3337, %v3332
        %v3598 = vpack.c.b16 %v3343, %v3338
        %v3599 = vpack.c.b16 %v3344, %v3339
        %v3600 = vpack.c.b16 %v3345, %v3340
        %v3601 = vpack.c.b16 %v3346, %v3341
        %v3602 = vpack.c.b16 %v3347, %v3342
        %v3603 = vpack.c.b16 %v3353, %v3348
        %v3604 = vpack.c.b16 %v3354, %v3349
        %v3605 = vpack.c.b16 %v3355, %v3350
        %v3606 = vpack.c.b16 %v3356, %v3351
        %v3607 = vpack.c.b16 %v3357, %v3352
        %v3608 = vpack.c.b16 %v3363, %v3358
        %v3609 = vpack.c.b16 %v3364, %v3359
        %v3610 = vpack.c.b16 %v3365, %v3360
        %v3611 = vpack.c.b16 %v3366, %v3361
        %v3612 = vpack.c.b16 %v3367, %v3362
        %v3613 = vpack.c.b16 %v3373, %v3368
        %v3614 = vpack.c.b16 %v3374, %v3369
        %v3615 = vpack.c.b16 %v3375, %v3370
        %v3616 = vpack.c.b16 %v3376, %v3371
        %v3617 = vpack.c.b16 %v3377, %v3372
        %v3618 = vpack.c.b16 %v3383, %v3378
        %v3619 = vpack.c.b16 %v3384, %v3379
        %v3620 = vpack.c.b16 %v3385, %v3380
        %v3621 = vpack.c.b16 %v3386, %v3381
        %v3622 = vpack.c.b16 %v3387, %v3382
        %v3623 = vpack.c.b16 %v3393, %v3388
        %v3624 = vpack.c.b16 %v3394, %v3389
        %v3625 = vpack.c.b16 %v3395, %v3390
        %v3626 = vpack.c.b16 %v3396, %v3391
        %v3627 = vpack.c.b16 %v3397, %v3392
        %v3628 = vpack.c.b16 %v3403, %v3398
        %v3629 = vpack.c.b16 %v3404, %v3399
        %v3630 = vpack.c.b16 %v3405, %v3400
        %v3631 = vpack.c.b16 %v3406, %v3401
        %v3632 = vpack.c.b16 %v3407, %v3402
        %v3633 = vpack.c.b16 %v3413, %v3408
        %v3634 = vpack.c.b16 %v3414, %v3409
        %v3635 = vpack.c.b16 %v3415, %v3410
        %v3636 = vpack.c.b16 %v3416, %v3411
        %v3637 = vpack.c.b16 %v3417, %v3412
        %v3638 = vpack.c.b16 %v3423, %v3418
        %v3639 = vpack.c.b16 %v3424, %v3419
        %v3640 = vpack.c.b16 %v3425, %v3420
        %v3641 = vpack.c.b16 %v3426, %v3421
        %v3642 = vpack.c.b16 %v3427, %v3422
        %v3643 = vpack.c.b16 %v3433, %v3428
        %v3644 = vpack.c.b16 %v3434, %v3429
        %v3645 = vpack.c.b16 %v3435, %v3430
        %v3646 = vpack.c.b16 %v3436, %v3431
        %v3647 = vpack.c.b16 %v3437, %v3432
        %v3648 = vpack.c.b16 %v3443, %v3438
        %v3649 = vpack.c.b16 %v3444, %v3439
        %v3650 = vpack.c.b16 %v3445, %v3440
        %v3651 = vpack.c.b16 %v3446, %v3441
        %v3652 = vpack.c.b16 %v3447, %v3442
        %v3653 = vpack.c.b16 %v3453, %v3448
        %v3654 = vpack.c.b16 %v3454, %v3449
        %v3655 = vpack.c.b16 %v3455, %v3450
        %v3656 = vpack.c.b16 %v3456, %v3451
        %v3657 = vpack.c.b16 %v3457, %v3452
        %v3658 = vpack.c.b16 %v3463, %v3458
        %v3659 = vpack.c.b16 %v3464, %v3459
        %v3660 = vpack.c.b16 %v3465, %v3460
        %v3661 = vpack.c.b16 %v3466, %v3461
        %v3662 = vpack.c.b16 %v3467, %v3462
        %v3663 = vpack.c.b16 %v3473, %v3468
        %v3664 = vpack.c.b16 %v3474, %v3469
        %v3665 = vpack.c.b16 %v3475, %v3470
        %v3666 = vpack.c.b16 %v3476, %v3471
        %v3667 = vpack.c.b16 %v3477, %v3472
        %v3668 = vpack.c.b16 %v3483, %v3478
        %v3669 = vpack.c.b16 %v3484, %v3479
        %v3670 = vpack.c.b16 %v3485, %v3480
        %v3671 = vpack.c.b16 %v3486, %v3481
        %v3672 = vpack.c.b16 %v3487, %v3482
        %v3673 = vpack.c.b16 %v3493, %v3488
        %v3674 = vpack.c.b16 %v3494, %v3489
        %v3675 = vpack.c.b16 %v3495, %v3490
        %v3676 = vpack.c.b16 %v3496, %v3491
        %v3677 = vpack.c.b16 %v3497, %v3492
        %v3678 = vpack.c.b16 %v3503, %v3498
        %v3679 = vpack.c.b16 %v3504, %v3499
        %v3680 = vpack.c.b16 %v3505, %v3500
        %v3681 = vpack.c.b16 %v3506, %v3501
        %v3682 = vpack.c.b16 %v3507, %v3502
        %v3683 = vpack.c.b16 %v3513, %v3508
        %v3684 = vpack.c.b16 %v3514, %v3509
        %v3685 = vpack.c.b16 %v3515, %v3510
        %v3686 = vpack.c.b16 %v3516, %v3511
        %v3687 = vpack.c.b16 %v3517, %v3512
        %v3859 = vsel %vm517, %v2769, 0
        %3861 = vmatprep.subr.bf16.mxu0 %v3519
        %3862 = vmatpush1.bf16.msra.mxu0 %v3518
        %3863 = vmatprep.subr.bf16.mxu0 %v3524
        %3864 = vmatpush1.bf16.msra.mxu0 %v3523
        %3865 = vmatprep.subr.bf16.mxu0 %v3529
        %3866 = vmatpush1.bf16.msra.mxu0 %v3528
        %3867 = vmatprep.subr.bf16.mxu0 %v3534
        %3868 = vmatpush1.bf16.msra.mxu0 %v3533
        %3869 = vmatprep.subr.bf16.mxu0 %v3539
        %3870 = vmatpush1.bf16.msra.mxu0 %v3538
        %3871 = vmatprep.subr.bf16.mxu0 %v3544
        %3872 = vmatpush1.bf16.msra.mxu0 %v3543
        %3873 = vmatprep.subr.bf16.mxu0 %v3549
        %3874 = vmatpush1.bf16.msra.mxu0 %v3548
        %3875 = vmatprep.subr.bf16.mxu0 %v3554
        %3876 = vmatpush1.bf16.msra.mxu0 %v3553
        %3877 = vmatprep.subr.bf16.mxu0 %v3559
        %3878 = vmatpush1.bf16.msra.mxu0 %v3558
        %3879 = vmatprep.subr.bf16.mxu0 %v3564
        %3880 = vmatpush1.bf16.msra.mxu0 %v3563
        %3881 = vmatprep.subr.bf16.mxu0 %v3569
        %3882 = vmatpush1.bf16.msra.mxu0 %v3568
        %3883 = vmatprep.subr.bf16.mxu0 %v3574
        %3884 = vmatpush1.bf16.msra.mxu0 %v3573
        %3885 = vmatprep.subr.bf16.mxu0 %v3579
        %3886 = vmatpush1.bf16.msra.mxu0 %v3578
        %3887 = vmatprep.subr.bf16.mxu0 %v3584
        %3888 = vmatpush1.bf16.msra.mxu0 %v3583
        %3889 = vmatprep.subr.bf16.mxu0 %v3589
        %3890 = vmatpush1.bf16.msra.mxu0 %v3588
        %3891 = vmatprep.subr.bf16.mxu0 %v3594
        %3892 = vmatpush1.bf16.msra.mxu0 %v3593
        %3893 = vmatprep.mubr.bf16.mxu0 %v2766
        %3894 = vmatmul.mubr.bf16.gmra.mrb[0].mxu0 %v2765
        %v3895 = vpop.f32.mrb[0].mxu0
        %v3896 = vadd.f32 0.0, %v3895
        %v3897 = vpop.f32.mrb[0].mxu0
        %v3898 = vadd.f32 0.0, %v3897
        %v3899 = vpop.f32.mrb[0].mxu0
        %v3900 = vadd.f32 0.0, %v3899
        %v3901 = vpop.f32.mrb[0].mxu0
        %v3902 = vadd.f32 0.0, %v3901
        %3903 = vdwg.mxu0
        %3904 = vmatprep.subr.bf16.mxu0 %v3599
        %3905 = vmatpush1.bf16.msra.mxu0 %v3598
        %3906 = vmatprep.subr.bf16.mxu0 %v3604
        %3907 = vmatpush1.bf16.msra.mxu0 %v3603
        %3908 = vmatprep.subr.bf16.mxu0 %v3609
        %3909 = vmatpush1.bf16.msra.mxu0 %v3608
        %3910 = vmatprep.subr.bf16.mxu0 %v3614
        %3911 = vmatpush1.bf16.msra.mxu0 %v3613
        %3912 = vmatprep.subr.bf16.mxu0 %v3619
        %3913 = vmatpush1.bf16.msra.mxu0 %v3618
        %3914 = vmatprep.subr.bf16.mxu0 %v3624
        %3915 = vmatpush1.bf16.msra.mxu0 %v3623
        %3916 = vmatprep.subr.bf16.mxu0 %v3629
        %3917 = vmatpush1.bf16.msra.mxu0 %v3628
        %3918 = vmatprep.subr.bf16.mxu0 %v3634
        %3919 = vmatpush1.bf16.msra.mxu0 %v3633
        %3920 = vmatprep.subr.bf16.mxu0 %v3639
        %3921 = vmatpush1.bf16.msra.mxu0 %v3638
        %3922 = vmatprep.subr.bf16.mxu0 %v3644
        %3923 = vmatpush1.bf16.msra.mxu0 %v3643
        %3924 = vmatprep.subr.bf16.mxu0 %v3649
        %3925 = vmatpush1.bf16.msra.mxu0 %v3648
        %3926 = vmatprep.subr.bf16.mxu0 %v3654
        %3927 = vmatpush1.bf16.msra.mxu0 %v3653
        %3928 = vmatprep.subr.bf16.mxu0 %v3659
        %3929 = vmatpush1.bf16.msra.mxu0 %v3658
        %3930 = vmatprep.subr.bf16.mxu0 %v3664
        %3931 = vmatpush1.bf16.msra.mxu0 %v3663
        %3932 = vmatprep.subr.bf16.mxu0 %v3669
        %3933 = vmatpush1.bf16.msra.mxu0 %v3668
        %3934 = vmatprep.subr.bf16.mxu0 %v3674
        %3935 = vmatpush1.bf16.msra.mxu0 %v3673
        %3936 = vmatprep.mubr.bf16.mxu0 %v2768
        %3937 = vmatmul.mubr.bf16.gmra.mrb[0].mxu0 %v2767
        %v3938 = vpop.f32.mrb[0].mxu0
        %v3939 = vadd.f32 %v3896, %v3938
        %v3940 = vpop.f32.mrb[0].mxu0
        %v3941 = vadd.f32 %v3898, %v3940
        %v3942 = vpop.f32.mrb[0].mxu0
        %v3943 = vadd.f32 %v3900, %v3942
        %v3944 = vpop.f32.mrb[0].mxu0
        %v3945 = vadd.f32 %v3902, %v3944
        %3946 = vdwg.mxu0
        %3947 = vmatprep.subr.bf16.mxu0 %v3679
        %3948 = vmatpush1.bf16.msra.mxu0 %v3678
        %3949 = vmatprep.subr.bf16.mxu0 %v3684
        %3950 = vmatpush1.bf16.msra.mxu0 %v3683
        %3951 = vmatprep.subr.bf16.mxu0 0
        %3952 = vmatpush1.bf16.msra.mxu0 0
        %3953 = vmatprep.subr.bf16.mxu0 0
        %3954 = vmatpush1.bf16.msra.mxu0 0
        %3955 = vmatprep.subr.bf16.mxu0 0
        %3956 = vmatpush1.bf16.msra.mxu0 0
        %3957 = vmatprep.subr.bf16.mxu0 0
        %3958 = vmatpush1.bf16.msra.mxu0 0
        %3959 = vmatprep.subr.bf16.mxu0 0
        %3960 = vmatpush1.bf16.msra.mxu0 0
        %3961 = vmatprep.subr.bf16.mxu0 0
        %3962 = vmatpush1.bf16.msra.mxu0 0
        %3963 = vmatprep.subr.bf16.mxu0 0
        %3964 = vmatpush1.bf16.msra.mxu0 0
        %3965 = vmatprep.subr.bf16.mxu0 0
        %3966 = vmatpush1.bf16.msra.mxu0 0
        %3967 = vmatprep.subr.bf16.mxu0 0
        %3968 = vmatpush1.bf16.msra.mxu0 0
        %3969 = vmatprep.subr.bf16.mxu0 0
        %3970 = vmatpush1.bf16.msra.mxu0 0
        %3971 = vmatprep.subr.bf16.mxu0 0
        %3972 = vmatpush1.bf16.msra.mxu0 0
        %3973 = vmatprep.subr.bf16.mxu0 0
        %3974 = vmatpush1.bf16.msra.mxu0 0
        %3975 = vmatprep.subr.bf16.mxu0 0
        %3976 = vmatpush1.bf16.msra.mxu0 0
        %3977 = vmatprep.subr.bf16.mxu0 0
        %3978 = vmatpush1.bf16.msra.mxu0 0
        %3979 = vmatprep.mubr.bf16.mxu0 0
        %3980 = vmatmul.mubr.bf16.gmra.mrb[0].mxu0 %v3859
        %v3981 = vpop.f32.mrb[0].mxu0
        %v3982 = vadd.f32 %v3939, %v3981
        %v3983 = vpop.f32.mrb[0].mxu0
        %v3984 = vadd.f32 %v3941, %v3983
        %v3985 = vpop.f32.mrb[0].mxu0
        %v3986 = vadd.f32 %v3943, %v3985
        %v3987 = vpop.f32.mrb[0].mxu0
        %v3988 = vadd.f32 %v3945, %v3987
        %3989 = vdwg.mxu0
        %3990 = vmatprep.subr.bf16.mxu0 %v3521
        %3991 = vmatpush1.bf16.msra.mxu0 %v3520
        %3992 = vmatprep.subr.bf16.mxu0 %v3526
        %3993 = vmatpush1.bf16.msra.mxu0 %v3525
        %3994 = vmatprep.subr.bf16.mxu0 %v3531
        %3995 = vmatpush1.bf16.msra.mxu0 %v3530
        %3996 = vmatprep.subr.bf16.mxu0 %v3536
        %3997 = vmatpush1.bf16.msra.mxu0 %v3535
        %3998 = vmatprep.subr.bf16.mxu0 %v3541
        %3999 = vmatpush1.bf16.msra.mxu0 %v3540
        %4000 = vmatprep.subr.bf16.mxu0 %v3546
        %4001 = vmatpush1.bf16.msra.mxu0 %v3545
        %4002 = vmatprep.subr.bf16.mxu0 %v3551
        %4003 = vmatpush1.bf16.msra.mxu0 %v3550
        %4004 = vmatprep.subr.bf16.mxu0 %v3556
        %4005 = vmatpush1.bf16.msra.mxu0 %v3555
        %4006 = vmatprep.subr.bf16.mxu0 %v3561
        %4007 = vmatpush1.bf16.msra.mxu0 %v3560
        %4008 = vmatprep.subr.bf16.mxu0 %v3566
        %4009 = vmatpush1.bf16.msra.mxu0 %v3565
        %4010 = vmatprep.subr.bf16.mxu0 %v3571
        %4011 = vmatpush1.bf16.msra.mxu0 %v3570
        %4012 = vmatprep.subr.bf16.mxu0 %v3576
        %4013 = vmatpush1.bf16.msra.mxu0 %v3575
        %4014 = vmatprep.subr.bf16.mxu0 %v3581
        %4015 = vmatpush1.bf16.msra.mxu0 %v3580
        %4016 = vmatprep.subr.bf16.mxu0 %v3586
        %4017 = vmatpush1.bf16.msra.mxu0 %v3585
        %4018 = vmatprep.subr.bf16.mxu0 %v3591
        %4019 = vmatpush1.bf16.msra.mxu0 %v3590
        %4020 = vmatprep.subr.bf16.mxu0 %v3596
        %4021 = vmatpush1.bf16.msra.mxu0 %v3595
        %4022 = vmatprep.mubr.bf16.mxu0 %v2766
        %4023 = vmatmul.mubr.bf16.gmra.mrb[0].mxu0 %v2765
        %v4024 = vpop.f32.mrb[0].mxu0
        %v4025 = vadd.f32 0.0, %v4024
        %v4026 = vpop.f32.mrb[0].mxu0
        %v4027 = vadd.f32 0.0, %v4026
        %v4028 = vpop.f32.mrb[0].mxu0
        %v4029 = vadd.f32 0.0, %v4028
        %v4030 = vpop.f32.mrb[0].mxu0
        %v4031 = vadd.f32 0.0, %v4030
        %4032 = vdwg.mxu0
        %4033 = vmatprep.subr.bf16.mxu0 %v3601
        %4034 = vmatpush1.bf16.msra.mxu0 %v3600
        %4035 = vmatprep.subr.bf16.mxu0 %v3606
        %4036 = vmatpush1.bf16.msra.mxu0 %v3605
        %4037 = vmatprep.subr.bf16.mxu0 %v3611
        %4038 = vmatpush1.bf16.msra.mxu0 %v3610
        %4039 = vmatprep.subr.bf16.mxu0 %v3616
        %4040 = vmatpush1.bf16.msra.mxu0 %v3615
        %4041 = vmatprep.subr.bf16.mxu0 %v3621
        %4042 = vmatpush1.bf16.msra.mxu0 %v3620
        %4043 = vmatprep.subr.bf16.mxu0 %v3626
        %4044 = vmatpush1.bf16.msra.mxu0 %v3625
        %4045 = vmatprep.subr.bf16.mxu0 %v3631
        %4046 = vmatpush1.bf16.msra.mxu0 %v3630
        %4047 = vmatprep.subr.bf16.mxu0 %v3636
        %4048 = vmatpush1.bf16.msra.mxu0 %v3635
        %4049 = vmatprep.subr.bf16.mxu0 %v3641
        %4050 = vmatpush1.bf16.msra.mxu0 %v3640
        %4051 = vmatprep.subr.bf16.mxu0 %v3646
        %4052 = vmatpush1.bf16.msra.mxu0 %v3645
        %4053 = vmatprep.subr.bf16.mxu0 %v3651
        %4054 = vmatpush1.bf16.msra.mxu0 %v3650
        %4055 = vmatprep.subr.bf16.mxu0 %v3656
        %4056 = vmatpush1.bf16.msra.mxu0 %v3655
        %4057 = vmatprep.subr.bf16.mxu0 %v3661
        %4058 = vmatpush1.bf16.msra.mxu0 %v3660
        %4059 = vmatprep.subr.bf16.mxu0 %v3666
        %4060 = vmatpush1.bf16.msra.mxu0 %v3665
        %4061 = vmatprep.subr.bf16.mxu0 %v3671
        %4062 = vmatpush1.bf16.msra.mxu0 %v3670
        %4063 = vmatprep.subr.bf16.mxu0 %v3676
        %4064 = vmatpush1.bf16.msra.mxu0 %v3675
        %4065 = vmatprep.mubr.bf16.mxu0 %v2768
        %4066 = vmatmul.mubr.bf16.gmra.mrb[0].mxu0 %v2767
        %v4067 = vpop.f32.mrb[0].mxu0
        %v4068 = vadd.f32 %v4025, %v4067
        %v4069 = vpop.f32.mrb[0].mxu0
        %v4070 = vadd.f32 %v4027, %v4069
        %v4071 = vpop.f32.mrb[0].mxu0
        %v4072 = vadd.f32 %v4029, %v4071
        %v4073 = vpop.f32.mrb[0].mxu0
        %v4074 = vadd.f32 %v4031, %v4073
        %4075 = vdwg.mxu0
        %4076 = vmatprep.subr.bf16.mxu0 %v3681
        %4077 = vmatpush1.bf16.msra.mxu0 %v3680
        %4078 = vmatprep.subr.bf16.mxu0 %v3686
        %4079 = vmatpush1.bf16.msra.mxu0 %v3685
        %4080 = vmatprep.subr.bf16.mxu0 0
        %4081 = vmatpush1.bf16.msra.mxu0 0
        %4082 = vmatprep.subr.bf16.mxu0 0
        %4083 = vmatpush1.bf16.msra.mxu0 0
        %4084 = vmatprep.subr.bf16.mxu0 0
        %4085 = vmatpush1.bf16.msra.mxu0 0
        %4086 = vmatprep.subr.bf16.mxu0 0
        %4087 = vmatpush1.bf16.msra.mxu0 0
        %4088 = vmatprep.subr.bf16.mxu0 0
        %4089 = vmatpush1.bf16.msra.mxu0 0
        %4090 = vmatprep.subr.bf16.mxu0 0
        %4091 = vmatpush1.bf16.msra.mxu0 0
        %4092 = vmatprep.subr.bf16.mxu0 0
        %4093 = vmatpush1.bf16.msra.mxu0 0
        %4094 = vmatprep.subr.bf16.mxu0 0
        %4095 = vmatpush1.bf16.msra.mxu0 0
        %4096 = vmatprep.subr.bf16.mxu0 0
        %4097 = vmatpush1.bf16.msra.mxu0 0
        %4098 = vmatprep.subr.bf16.mxu0 0
        %4099 = vmatpush1.bf16.msra.mxu0 0
        %4100 = vmatprep.subr.bf16.mxu0 0
        %4101 = vmatpush1.bf16.msra.mxu0 0
        %4102 = vmatprep.subr.bf16.mxu0 0
        %4103 = vmatpush1.bf16.msra.mxu0 0
        %4104 = vmatprep.subr.bf16.mxu0 0
        %4105 = vmatpush1.bf16.msra.mxu0 0
        %4106 = vmatprep.subr.bf16.mxu0 0
        %4107 = vmatpush1.bf16.msra.mxu0 0
        %4108 = vmatprep.mubr.bf16.mxu0 0
        %4109 = vmatmul.mubr.bf16.gmra.mrb[0].mxu0 %v3859
        %v4110 = vpop.f32.mrb[0].mxu0
        %v4111 = vadd.f32 %v4068, %v4110
        %v4112 = vpop.f32.mrb[0].mxu0
        %v4113 = vadd.f32 %v4070, %v4112
        %v4114 = vpop.f32.mrb[0].mxu0
        %v4115 = vadd.f32 %v4072, %v4114
        %v4116 = vpop.f32.mrb[0].mxu0
        %v4117 = vadd.f32 %v4074, %v4116
        %4118 = vdwg.mxu0
        %4119 = vmatprep.subr.bf16.mxu0 0
        %4120 = vmatpush1.bf16.msra.mxu0 %v3522
        %4121 = vmatprep.subr.bf16.mxu0 0
        %4122 = vmatpush1.bf16.msra.mxu0 %v3527
        %4123 = vmatprep.subr.bf16.mxu0 0
        %4124 = vmatpush1.bf16.msra.mxu0 %v3532
        %4125 = vmatprep.subr.bf16.mxu0 0
        %4126 = vmatpush1.bf16.msra.mxu0 %v3537
        %4127 = vmatprep.subr.bf16.mxu0 0
        %4128 = vmatpush1.bf16.msra.mxu0 %v3542
        %4129 = vmatprep.subr.bf16.mxu0 0
        %4130 = vmatpush1.bf16.msra.mxu0 %v3547
        %4131 = vmatprep.subr.bf16.mxu0 0
        %4132 = vmatpush1.bf16.msra.mxu0 %v3552
        %4133 = vmatprep.subr.bf16.mxu0 0
        %4134 = vmatpush1.bf16.msra.mxu0 %v3557
        %4135 = vmatprep.subr.bf16.mxu0 0
        %4136 = vmatpush1.bf16.msra.mxu0 %v3562
        %4137 = vmatprep.subr.bf16.mxu0 0
        %4138 = vmatpush1.bf16.msra.mxu0 %v3567
        %4139 = vmatprep.subr.bf16.mxu0 0
        %4140 = vmatpush1.bf16.msra.mxu0 %v3572
        %4141 = vmatprep.subr.bf16.mxu0 0
        %4142 = vmatpush1.bf16.msra.mxu0 %v3577
        %4143 = vmatprep.subr.bf16.mxu0 0
        %4144 = vmatpush1.bf16.msra.mxu0 %v3582
        %4145 = vmatprep.subr.bf16.mxu0 0
        %4146 = vmatpush1.bf16.msra.mxu0 %v3587
        %4147 = vmatprep.subr.bf16.mxu0 0
        %4148 = vmatpush1.bf16.msra.mxu0 %v3592
        %4149 = vmatprep.subr.bf16.mxu0 0
        %4150 = vmatpush1.bf16.msra.mxu0 %v3597
        %4151 = vmatprep.mubr.bf16.mxu0 %v2766
        %4152 = vmatmul.mubr.bf16.gmra.mrb[0].mxu0 %v2765
        %v4153 = vpop.f32.mrb[0].mxu0
        %v4154 = vadd.f32 0.0, %v4153
        %v4155 = vpop.f32.mrb[0].mxu0
        %v4156 = vpop.f32.mrb[0].mxu0
        %v4157 = vadd.f32 0.0, %v4156
        %v4158 = vpop.f32.mrb[0].mxu0
        %4159 = vdwg.mxu0
        %4160 = vmatprep.subr.bf16.mxu0 0
        %4161 = vmatpush1.bf16.msra.mxu0 %v3602
        %4162 = vmatprep.subr.bf16.mxu0 0
        %4163 = vmatpush1.bf16.msra.mxu0 %v3607
        %4164 = vmatprep.subr.bf16.mxu0 0
        %4165 = vmatpush1.bf16.msra.mxu0 %v3612
        %4166 = vmatprep.subr.bf16.mxu0 0
        %4167 = vmatpush1.bf16.msra.mxu0 %v3617
        %4168 = vmatprep.subr.bf16.mxu0 0
        %4169 = vmatpush1.bf16.msra.mxu0 %v3622
        %4170 = vmatprep.subr.bf16.mxu0 0
        %4171 = vmatpush1.bf16.msra.mxu0 %v3627
        %4172 = vmatprep.subr.bf16.mxu0 0
        %4173 = vmatpush1.bf16.msra.mxu0 %v3632
        %4174 = vmatprep.subr.bf16.mxu0 0
        %4175 = vmatpush1.bf16.msra.mxu0 %v3637
        %4176 = vmatprep.subr.bf16.mxu0 0
        %4177 = vmatpush1.bf16.msra.mxu0 %v3642
        %4178 = vmatprep.subr.bf16.mxu0 0
        %4179 = vmatpush1.bf16.msra.mxu0 %v3647
        %4180 = vmatprep.subr.bf16.mxu0 0
        %4181 = vmatpush1.bf16.msra.mxu0 %v3652
        %4182 = vmatprep.subr.bf16.mxu0 0
        %4183 = vmatpush1.bf16.msra.mxu0 %v3657
        %4184 = vmatprep.subr.bf16.mxu0 0
        %4185 = vmatpush1.bf16.msra.mxu0 %v3662
        %4186 = vmatprep.subr.bf16.mxu0 0
        %4187 = vmatpush1.bf16.msra.mxu0 %v3667
        %4188 = vmatprep.subr.bf16.mxu0 0
        %4189 = vmatpush1.bf16.msra.mxu0 %v3672
        %4190 = vmatprep.subr.bf16.mxu0 0
        %4191 = vmatpush1.bf16.msra.mxu0 %v3677
        %4192 = vmatprep.mubr.bf16.mxu0 %v2768
        %4193 = vmatmul.mubr.bf16.gmra.mrb[0].mxu0 %v2767
        %v4194 = vpop.f32.mrb[0].mxu0
        %v4195 = vadd.f32 %v4154, %v4194
        %v4196 = vpop.f32.mrb[0].mxu0
        %v4197 = vpop.f32.mrb[0].mxu0
        %v4198 = vadd.f32 %v4157, %v4197
        %v4199 = vpop.f32.mrb[0].mxu0
        %4200 = vdwg.mxu0
        %4201 = vmatprep.subr.bf16.mxu0 0
        %4202 = vmatpush1.bf16.msra.mxu0 %v3682
        %4203 = vmatprep.subr.bf16.mxu0 0
        %4204 = vmatpush1.bf16.msra.mxu0 %v3687
        %4205 = vmatprep.subr.bf16.mxu0 0
        %4206 = vmatpush1.bf16.msra.mxu0 0
        %4207 = vmatprep.subr.bf16.mxu0 0
        %4208 = vmatpush1.bf16.msra.mxu0 0
        %4209 = vmatprep.subr.bf16.mxu0 0
        %4210 = vmatpush1.bf16.msra.mxu0 0
        %4211 = vmatprep.subr.bf16.mxu0 0
        %4212 = vmatpush1.bf16.msra.mxu0 0
        %4213 = vmatprep.subr.bf16.mxu0 0
        %4214 = vmatpush1.bf16.msra.mxu0 0
        %4215 = vmatprep.subr.bf16.mxu0 0
        %4216 = vmatpush1.bf16.msra.mxu0 0
        %4217 = vmatprep.subr.bf16.mxu0 0
        %4218 = vmatpush1.bf16.msra.mxu0 0
        %4219 = vmatprep.subr.bf16.mxu0 0
        %4220 = vmatpush1.bf16.msra.mxu0 0
        %4221 = vmatprep.subr.bf16.mxu0 0
        %4222 = vmatpush1.bf16.msra.mxu0 0
        %4223 = vmatprep.subr.bf16.mxu0 0
        %4224 = vmatpush1.bf16.msra.mxu0 0
        %4225 = vmatprep.subr.bf16.mxu0 0
        %4226 = vmatpush1.bf16.msra.mxu0 0
        %4227 = vmatprep.subr.bf16.mxu0 0
        %4228 = vmatpush1.bf16.msra.mxu0 0
        %4229 = vmatprep.subr.bf16.mxu0 0
        %4230 = vmatpush1.bf16.msra.mxu0 0
        %4231 = vmatprep.subr.bf16.mxu0 0
        %4232 = vmatpush1.bf16.msra.mxu0 0
        %4233 = vmatprep.mubr.bf16.mxu0 0
        %4234 = vmatmul.mubr.bf16.gmra.mrb[0].mxu0 %v3859
        %v4235 = vpop.f32.mrb[0].mxu0
        %v4236 = vadd.f32 %v4195, %v4235
        %v4237 = vpop.f32.mrb[0].mxu0
        %v4238 = vpop.f32.mrb[0].mxu0
        %v4239 = vadd.f32 %v4198, %v4238
        %v4240 = vpop.f32.mrb[0].mxu0
        %4241 = vdwg.mxu0
        %v4243 = vlaneseq
        %v4244 = vshrl.u32 %v4243, 7
        %v4245 = vsub.s32 0, %v4244
        %v4246 = vrot.slane %v2608, %v4245
        %v4247 = vlaneseq
        %v4248 = vshrl.u32 %v4247, 7
        %v4249 = vsub.s32 1, %v4248
        %v4250 = vrot.slane %v2608, %v4249
        %v4251 = vlaneseq
        %v4252 = vshrl.u32 %v4251, 7
        %v4253 = vsub.s32 2, %v4252
        %v4254 = vrot.slane %v2608, %v4253
        %v4255 = vlaneseq
        %v4256 = vshrl.u32 %v4255, 7
        %v4257 = vsub.s32 3, %v4256
        %v4258 = vrot.slane %v2608, %v4257
        %v4259 = vlaneseq
        %v4260 = vshrl.u32 %v4259, 7
        %v4261 = vsub.s32 4, %v4260
        %v4262 = vrot.slane %v2608, %v4261
        %v4268 = vadd.f32 %v4246, %v3982
        %v4269 = vadd.f32 %v4250, %v3984
        %v4270 = vadd.f32 %v4254, %v4111
        %v4271 = vadd.f32 %v4258, %v4113
        %v4272 = vadd.f32 %v4262, %v4236
        %v4273 = vadd.f32 %v4246, %v3986
        %v4274 = vadd.f32 %v4250, %v3988
        %v4275 = vadd.f32 %v4254, %v4115
        %v4276 = vadd.f32 %v4258, %v4117
        %v4277 = vadd.f32 %v4262, %v4239
        %s4278 = scalar_lea.vmem %s7, 8
        %v4279 = vld [vmem:[%s4278] sm:$0xf]
        %v4280 = vld [vmem:[%s4278 + $0x4] sm:$0x1]
        %v4283 = vunpack.c.l.b16 %v4279
        %v4284 = vunpack.c.l.b16 %v4280
        %v4285 = vpack.c.b16 %v4284, %v4283
        %v4287 = vsel %vm2616, %v4285, 0
        %4289 = vmatprep.subr.bf16.mxu0 %v2599
        %4290 = vmatpush1.bf16.msra.mxu0 %v2598
        %4291 = vmatprep.subr.bf16.mxu0 %v2627
        %4292 = vmatpush1.bf16.msra.mxu0 %v2624
        %4293 = vmatprep.subr.bf16.mxu0 0
        %4294 = vmatpush1.bf16.msra.mxu0 0
        %4295 = vmatprep.subr.bf16.mxu0 0
        %4296 = vmatpush1.bf16.msra.mxu0 0
        %4297 = vmatprep.subr.bf16.mxu0 0
        %4298 = vmatpush1.bf16.msra.mxu0 0
        %4299 = vmatprep.subr.bf16.mxu0 0
        %4300 = vmatpush1.bf16.msra.mxu0 0
        %4301 = vmatprep.subr.bf16.mxu0 0
        %4302 = vmatpush1.bf16.msra.mxu0 0
        %4303 = vmatprep.subr.bf16.mxu0 0
        %4304 = vmatpush1.bf16.msra.mxu0 0
        %4305 = vmatprep.subr.bf16.mxu0 0
        %4306 = vmatpush1.bf16.msra.mxu0 0
        %4307 = vmatprep.subr.bf16.mxu0 0
        %4308 = vmatpush1.bf16.msra.mxu0 0
        %4309 = vmatprep.subr.bf16.mxu0 0
        %4310 = vmatpush1.bf16.msra.mxu0 0
        %4311 = vmatprep.subr.bf16.mxu0 0
        %4312 = vmatpush1.bf16.msra.mxu0 0
        %4313 = vmatprep.subr.bf16.mxu0 0
        %4314 = vmatpush1.bf16.msra.mxu0 0
        %4315 = vmatprep.subr.bf16.mxu0 0
        %4316 = vmatpush1.bf16.msra.mxu0 0
        %4317 = vmatprep.subr.bf16.mxu0 0
        %4318 = vmatpush1.bf16.msra.mxu0 0
        %4319 = vmatprep.subr.bf16.mxu0 0
        %4320 = vmatpush1.bf16.msra.mxu0 0
        %4321 = vmatprep.mubr.bf16.mxu0 0
        %4322 = vmatmul.mubr.bf16.gmra.mrb[0].mxu0 %v4287
        %v4323 = vpop.f32.mrb[0].mxu0
        %v4324 = vadd.f32 0.0, %v4323
        %v4325 = vpop.f32.mrb[0].mxu0
        %v4326 = vadd.f32 0.0, %v4325
        %v4327 = vpop.f32.mrb[0].mxu0
        %v4328 = vadd.f32 0.0, %v4327
        %v4329 = vpop.f32.mrb[0].mxu0
        %v4330 = vadd.f32 0.0, %v4329
        %4331 = vdwg.mxu0
        %4332 = vmatprep.subr.bf16.mxu0 %v2601
        %4333 = vmatpush1.bf16.msra.mxu0 %v2600
        %4334 = vmatprep.subr.bf16.mxu0 %v2633
        %4335 = vmatpush1.bf16.msra.mxu0 %v2630
        %4336 = vmatprep.subr.bf16.mxu0 0
        %4337 = vmatpush1.bf16.msra.mxu0 0
        %4338 = vmatprep.subr.bf16.mxu0 0
        %4339 = vmatpush1.bf16.msra.mxu0 0
        %4340 = vmatprep.subr.bf16.mxu0 0
        %4341 = vmatpush1.bf16.msra.mxu0 0
        %4342 = vmatprep.subr.bf16.mxu0 0
        %4343 = vmatpush1.bf16.msra.mxu0 0
        %4344 = vmatprep.subr.bf16.mxu0 0
        %4345 = vmatpush1.bf16.msra.mxu0 0
        %4346 = vmatprep.subr.bf16.mxu0 0
        %4347 = vmatpush1.bf16.msra.mxu0 0
        %4348 = vmatprep.subr.bf16.mxu0 0
        %4349 = vmatpush1.bf16.msra.mxu0 0
        %4350 = vmatprep.subr.bf16.mxu0 0
        %4351 = vmatpush1.bf16.msra.mxu0 0
        %4352 = vmatprep.subr.bf16.mxu0 0
        %4353 = vmatpush1.bf16.msra.mxu0 0
        %4354 = vmatprep.subr.bf16.mxu0 0
        %4355 = vmatpush1.bf16.msra.mxu0 0
        %4356 = vmatprep.subr.bf16.mxu0 0
        %4357 = vmatpush1.bf16.msra.mxu0 0
        %4358 = vmatprep.subr.bf16.mxu0 0
        %4359 = vmatpush1.bf16.msra.mxu0 0
        %4360 = vmatprep.subr.bf16.mxu0 0
        %4361 = vmatpush1.bf16.msra.mxu0 0
        %4362 = vmatprep.subr.bf16.mxu0 0
        %4363 = vmatpush1.bf16.msra.mxu0 0
        %4364 = vmatprep.mubr.bf16.mxu0 0
        %4365 = vmatmul.mubr.bf16.gmra.mrb[0].mxu0 %v4287
        %v4366 = vpop.f32.mrb[0].mxu0
        %v4367 = vadd.f32 0.0, %v4366
        %v4368 = vpop.f32.mrb[0].mxu0
        %v4369 = vadd.f32 0.0, %v4368
        %v4370 = vpop.f32.mrb[0].mxu0
        %v4371 = vadd.f32 0.0, %v4370
        %v4372 = vpop.f32.mrb[0].mxu0
        %v4373 = vadd.f32 0.0, %v4372
        %4374 = vdwg.mxu0
        %4375 = vmatprep.subr.bf16.mxu0 0
        %4376 = vmatpush1.bf16.msra.mxu0 %v2602
        %4377 = vmatprep.subr.bf16.mxu0 0
        %4378 = vmatpush1.bf16.msra.mxu0 %v2636
        %4379 = vmatprep.subr.bf16.mxu0 0
        %4380 = vmatpush1.bf16.msra.mxu0 0
        %4381 = vmatprep.subr.bf16.mxu0 0
        %4382 = vmatpush1.bf16.msra.mxu0 0
        %4383 = vmatprep.subr.bf16.mxu0 0
        %4384 = vmatpush1.bf16.msra.mxu0 0
        %4385 = vmatprep.subr.bf16.mxu0 0
        %4386 = vmatpush1.bf16.msra.mxu0 0
        %4387 = vmatprep.subr.bf16.mxu0 0
        %4388 = vmatpush1.bf16.msra.mxu0 0
        %4389 = vmatprep.subr.bf16.mxu0 0
        %4390 = vmatpush1.bf16.msra.mxu0 0
        %4391 = vmatprep.subr.bf16.mxu0 0
        %4392 = vmatpush1.bf16.msra.mxu0 0
        %4393 = vmatprep.subr.bf16.mxu0 0
        %4394 = vmatpush1.bf16.msra.mxu0 0
        %4395 = vmatprep.subr.bf16.mxu0 0
        %4396 = vmatpush1.bf16.msra.mxu0 0
        %4397 = vmatprep.subr.bf16.mxu0 0
        %4398 = vmatpush1.bf16.msra.mxu0 0
        %4399 = vmatprep.subr.bf16.mxu0 0
        %4400 = vmatpush1.bf16.msra.mxu0 0
        %4401 = vmatprep.subr.bf16.mxu0 0
        %4402 = vmatpush1.bf16.msra.mxu0 0
        %4403 = vmatprep.subr.bf16.mxu0 0
        %4404 = vmatpush1.bf16.msra.mxu0 0
        %4405 = vmatprep.subr.bf16.mxu0 0
        %4406 = vmatpush1.bf16.msra.mxu0 0
        %4407 = vmatprep.mubr.bf16.mxu0 0
        %4408 = vmatmul.mubr.bf16.gmra.mrb[0].mxu0 %v4287
        %v4409 = vpop.f32.mrb[0].mxu0
        %v4410 = vadd.f32 0.0, %v4409
        %v4411 = vpop.f32.mrb[0].mxu0
        %v4412 = vpop.f32.mrb[0].mxu0
        %v4413 = vadd.f32 0.0, %v4412
        %v4414 = vpop.f32.mrb[0].mxu0
        %4415 = vdwg.mxu0
        %v4416 = vpack.c.bf16 %v4328, %v4324
        %v4417 = vpack.c.bf16 %v4330, %v4326
        %v4418 = vpack.c.bf16 %v4371, %v4367
        %v4419 = vpack.c.bf16 %v4373, %v4369
        %v4420 = vpack.c.bf16 %v4413, %v4410
        %s4421 = scalar_lea.vmem %s8, 1360
        %v4422 = vld [vmem:[%s4421] sm:$0xff]
        %v4423 = vld [vmem:[%s4421 + $0x8] sm:$0xff]
        %v4424 = vld [vmem:[%s4421 + $0x10] sm:$0xf]
        %v4425 = vld [vmem:[%s4421 + $0x14] sm:$0xff]
        %v4426 = vld [vmem:[%s4421 + $0x1c] sm:$0xff]
        %v4427 = vld [vmem:[%s4421 + $0x24] sm:$0xf]
        %v4428 = vld [vmem:[%s4421 + $0x28] sm:$0xff]
        %v4429 = vld [vmem:[%s4421 + $0x30] sm:$0xff]
        %v4430 = vld [vmem:[%s4421 + $0x38] sm:$0xf]
        %v4431 = vld [vmem:[%s4421 + $0x3c] sm:$0xff]
        %v4432 = vld [vmem:[%s4421 + $0x44] sm:$0xff]
        %v4433 = vld [vmem:[%s4421 + $0x4c] sm:$0xf]
        %v4434 = vld [vmem:[%s4421 + $0x50] sm:$0xff]
        %v4435 = vld [vmem:[%s4421 + $0x58] sm:$0xff]
        %v4436 = vld [vmem:[%s4421 + $0x60] sm:$0xf]
        %v4437 = vld [vmem:[%s4421 + $0x64] sm:$0xff]
        %v4438 = vld [vmem:[%s4421 + $0x6c] sm:$0xff]
        %v4439 = vld [vmem:[%s4421 + $0x74] sm:$0xf]
        %v4440 = vld [vmem:[%s4421 + $0x78] sm:$0xff]
        %v4441 = vld [vmem:[%s4421 + $0x80] sm:$0xff]
        %v4442 = vld [vmem:[%s4421 + $0x88] sm:$0xf]
        %v4443 = vld [vmem:[%s4421 + $0x8c] sm:$0xff]
        %v4444 = vld [vmem:[%s4421 + $0x94] sm:$0xff]
        %v4445 = vld [vmem:[%s4421 + $0x9c] sm:$0xf]
        %v4446 = vld [vmem:[%s4421 + $0xa0] sm:$0xff]
        %v4447 = vld [vmem:[%s4421 + $0xa8] sm:$0xff]
        %v4448 = vld [vmem:[%s4421 + $0xb0] sm:$0xf]
        %v4449 = vld [vmem:[%s4421 + $0xb4] sm:$0xff]
        %v4450 = vld [vmem:[%s4421 + $0xbc] sm:$0xff]
        %v4451 = vld [vmem:[%s4421 + $0xc4] sm:$0xf]
        %v4452 = vld [vmem:[%s4421 + $0xc8] sm:$0xff]
        %v4453 = vld [vmem:[%s4421 + $0xd0] sm:$0xff]
        %v4454 = vld [vmem:[%s4421 + $0xd8] sm:$0xf]
        %v4455 = vld [vmem:[%s4421 + $0xdc] sm:$0xff]
        %v4456 = vld [vmem:[%s4421 + $0xe4] sm:$0xff]
        %v4457 = vld [vmem:[%s4421 + $0xec] sm:$0xf]
        %v4458 = vld [vmem:[%s4421 + $0xf0] sm:$0xff]
        %v4459 = vld [vmem:[%s4421 + $0xf8] sm:$0xff]
        %v4460 = vld [vmem:[%s4421 + $0x100] sm:$0xf]
        %v4461 = vld [vmem:[%s4421 + $0x104] sm:$0xff]
        %v4462 = vld [vmem:[%s4421 + $0x10c] sm:$0xff]
        %v4463 = vld [vmem:[%s4421 + $0x114] sm:$0xf]
        %v4464 = vld [vmem:[%s4421 + $0x118] sm:$0xff]
        %v4465 = vld [vmem:[%s4421 + $0x120] sm:$0xff]
        %v4466 = vld [vmem:[%s4421 + $0x128] sm:$0xf]
        %v4467 = vld [vmem:[%s4421 + $0x12c] sm:$0xff]
        %v4468 = vld [vmem:[%s4421 + $0x134] sm:$0xff]
        %v4469 = vld [vmem:[%s4421 + $0x13c] sm:$0xf]
        %v4470 = vld [vmem:[%s4421 + $0x140] sm:$0xff]
        %v4471 = vld [vmem:[%s4421 + $0x148] sm:$0xff]
        %v4472 = vld [vmem:[%s4421 + $0x150] sm:$0xf]
        %v4473 = vld [vmem:[%s4421 + $0x154] sm:$0xff]
        %v4474 = vld [vmem:[%s4421 + $0x15c] sm:$0xff]
        %v4475 = vld [vmem:[%s4421 + $0x164] sm:$0xf]
        %v4476 = vld [vmem:[%s4421 + $0x168] sm:$0xff]
        %v4477 = vld [vmem:[%s4421 + $0x170] sm:$0xff]
        %v4478 = vld [vmem:[%s4421 + $0x178] sm:$0xf]
        %v4479 = vld [vmem:[%s4421 + $0x17c] sm:$0xff]
        %v4480 = vld [vmem:[%s4421 + $0x184] sm:$0xff]
        %v4481 = vld [vmem:[%s4421 + $0x18c] sm:$0xf]
        %v4482 = vld [vmem:[%s4421 + $0x190] sm:$0xff]
        %v4483 = vld [vmem:[%s4421 + $0x198] sm:$0xff]
        %v4484 = vld [vmem:[%s4421 + $0x1a0] sm:$0xf]
        %v4485 = vld [vmem:[%s4421 + $0x1a4] sm:$0xff]
        %v4486 = vld [vmem:[%s4421 + $0x1ac] sm:$0xff]
        %v4487 = vld [vmem:[%s4421 + $0x1b4] sm:$0xf]
        %v4488 = vld [vmem:[%s4421 + $0x1b8] sm:$0xff]
        %v4489 = vld [vmem:[%s4421 + $0x1c0] sm:$0xff]
        %v4490 = vld [vmem:[%s4421 + $0x1c8] sm:$0xf]
        %v4491 = vld [vmem:[%s4421 + $0x1cc] sm:$0xff]
        %v4492 = vld [vmem:[%s4421 + $0x1d4] sm:$0xff]
        %v4493 = vld [vmem:[%s4421 + $0x1dc] sm:$0xf]
        %v4494 = vld [vmem:[%s4421 + $0x1e0] sm:$0xff]
        %v4495 = vld [vmem:[%s4421 + $0x1e8] sm:$0xff]
        %v4496 = vld [vmem:[%s4421 + $0x1f0] sm:$0xf]
        %v4497 = vld [vmem:[%s4421 + $0x1f4] sm:$0xff]
        %v4498 = vld [vmem:[%s4421 + $0x1fc] sm:$0xff]
        %v4499 = vld [vmem:[%s4421 + $0x204] sm:$0xf]
        %v4500 = vld [vmem:[%s4421 + $0x208] sm:$0xff]
        %v4501 = vld [vmem:[%s4421 + $0x210] sm:$0xff]
        %v4502 = vld [vmem:[%s4421 + $0x218] sm:$0xf]
        %v4503 = vld [vmem:[%s4421 + $0x21c] sm:$0xff]
        %v4504 = vld [vmem:[%s4421 + $0x224] sm:$0xff]
        %v4505 = vld [vmem:[%s4421 + $0x22c] sm:$0xf]
        %v4506 = vld [vmem:[%s4421 + $0x230] sm:$0xff]
        %v4507 = vld [vmem:[%s4421 + $0x238] sm:$0xff]
        %v4508 = vld [vmem:[%s4421 + $0x240] sm:$0xf]
        %v4509 = vld [vmem:[%s4421 + $0x244] sm:$0xff]
        %v4510 = vld [vmem:[%s4421 + $0x24c] sm:$0xff]
        %v4511 = vld [vmem:[%s4421 + $0x254] sm:$0xf]
        %v4512 = vld [vmem:[%s4421 + $0x258] sm:$0xff]
        %v4513 = vld [vmem:[%s4421 + $0x260] sm:$0xff]
        %v4514 = vld [vmem:[%s4421 + $0x268] sm:$0xf]
        %v4515 = vld [vmem:[%s4421 + $0x26c] sm:$0xff]
        %v4516 = vld [vmem:[%s4421 + $0x274] sm:$0xff]
        %v4517 = vld [vmem:[%s4421 + $0x27c] sm:$0xf]
        %v4518 = vld [vmem:[%s4421 + $0x280] sm:$0xff]
        %v4519 = vld [vmem:[%s4421 + $0x288] sm:$0xff]
        %v4520 = vld [vmem:[%s4421 + $0x290] sm:$0xf]
        %v4521 = vld [vmem:[%s4421 + $0x294] sm:$0xff]
        %v4522 = vld [vmem:[%s4421 + $0x29c] sm:$0xff]
        %v4523 = vld [vmem:[%s4421 + $0x2a4] sm:$0xf]
        %v4524 = vld [vmem:[%s4421 + $0x2a8] sm:$0xff]
        %v4525 = vld [vmem:[%s4421 + $0x2b0] sm:$0xff]
        %v4526 = vld [vmem:[%s4421 + $0x2b8] sm:$0xf]
        %v4527 = vld [vmem:[%s4421 + $0x2bc] sm:$0xff]
        %v4528 = vld [vmem:[%s4421 + $0x2c4] sm:$0xff]
        %v4529 = vld [vmem:[%s4421 + $0x2cc] sm:$0xf]
        %v4530 = vld [vmem:[%s4421 + $0x2d0] sm:$0xff]
        %v4531 = vld [vmem:[%s4421 + $0x2d8] sm:$0xff]
        %v4532 = vld [vmem:[%s4421 + $0x2e0] sm:$0xf]
        %v4533 = vld [vmem:[%s4421 + $0x2e4] sm:$0xff]
        %v4534 = vld [vmem:[%s4421 + $0x2ec] sm:$0xff]
        %v4535 = vld [vmem:[%s4421 + $0x2f4] sm:$0xf]
        %v4536 = vld [vmem:[%s4421 + $0x2f8] sm:$0xff]
        %v4537 = vld [vmem:[%s4421 + $0x300] sm:$0xff]
        %v4538 = vld [vmem:[%s4421 + $0x308] sm:$0xf]
        %v4539 = vld [vmem:[%s4421 + $0x30c] sm:$0xff]
        %v4540 = vld [vmem:[%s4421 + $0x314] sm:$0xff]
        %v4541 = vld [vmem:[%s4421 + $0x31c] sm:$0xf]
        %v4542 = vld [vmem:[%s4421 + $0x320] sm:$0xff]
        %v4543 = vld [vmem:[%s4421 + $0x328] sm:$0xff]
        %v4544 = vld [vmem:[%s4421 + $0x330] sm:$0xf]
        %v4545 = vld [vmem:[%s4421 + $0x334] sm:$0xff]
        %v4546 = vld [vmem:[%s4421 + $0x33c] sm:$0xff]
        %v4547 = vld [vmem:[%s4421 + $0x344] sm:$0xf]
        %v4548 = vld [vmem:[%s4421 + $0x348] sm:$0xff]
        %v4549 = vld [vmem:[%s4421 + $0x350] sm:$0xff]
        %v4550 = vld [vmem:[%s4421 + $0x358] sm:$0xf]
        %v4551 = vld [vmem:[%s4421 + $0x35c] sm:$0xff]
        %v4552 = vld [vmem:[%s4421 + $0x364] sm:$0xff]
        %v4553 = vld [vmem:[%s4421 + $0x36c] sm:$0xf]
        %v4554 = vld [vmem:[%s4421 + $0x370] sm:$0xff]
        %v4555 = vld [vmem:[%s4421 + $0x378] sm:$0xff]
        %v4556 = vld [vmem:[%s4421 + $0x380] sm:$0xf]
        %v4557 = vld [vmem:[%s4421 + $0x384] sm:$0xff]
        %v4558 = vld [vmem:[%s4421 + $0x38c] sm:$0xff]
        %v4559 = vld [vmem:[%s4421 + $0x394] sm:$0xf]
        %v4560 = vld [vmem:[%s4421 + $0x398] sm:$0xff]
        %v4561 = vld [vmem:[%s4421 + $0x3a0] sm:$0xff]
        %v4562 = vld [vmem:[%s4421 + $0x3a8] sm:$0xf]
        %v4563 = vld [vmem:[%s4421 + $0x3ac] sm:$0xff]
        %v4564 = vld [vmem:[%s4421 + $0x3b4] sm:$0xff]
        %v4565 = vld [vmem:[%s4421 + $0x3bc] sm:$0xf]
        %v4566 = vld [vmem:[%s4421 + $0x3c0] sm:$0xff]
        %v4567 = vld [vmem:[%s4421 + $0x3c8] sm:$0xff]
        %v4568 = vld [vmem:[%s4421 + $0x3d0] sm:$0xf]
        %v4569 = vld [vmem:[%s4421 + $0x3d4] sm:$0xff]
        %v4570 = vld [vmem:[%s4421 + $0x3dc] sm:$0xff]
        %v4571 = vld [vmem:[%s4421 + $0x3e4] sm:$0xf]
        %v4572 = vld [vmem:[%s4421 + $0x3e8] sm:$0xff]
        %v4573 = vld [vmem:[%s4421 + $0x3f0] sm:$0xff]
        %v4574 = vld [vmem:[%s4421 + $0x3f8] sm:$0xf]
        %v4575 = vld [vmem:[%s4421 + $0x3fc] sm:$0xff]
        %v4576 = vld [vmem:[%s4421 + $0x404] sm:$0xff]
        %v4577 = vld [vmem:[%s4421 + $0x40c] sm:$0xf]
        %v4578 = vld [vmem:[%s4421 + $0x410] sm:$0xff]
        %v4579 = vld [vmem:[%s4421 + $0x418] sm:$0xff]
        %v4580 = vld [vmem:[%s4421 + $0x420] sm:$0xf]
        %v4581 = vld [vmem:[%s4421 + $0x424] sm:$0xff]
        %v4582 = vld [vmem:[%s4421 + $0x42c] sm:$0xff]
        %v4583 = vld [vmem:[%s4421 + $0x434] sm:$0xf]
        %v4584 = vld [vmem:[%s4421 + $0x438] sm:$0xff]
        %v4585 = vld [vmem:[%s4421 + $0x440] sm:$0xff]
        %v4586 = vld [vmem:[%s4421 + $0x448] sm:$0xf]
        %v4587 = vld [vmem:[%s4421 + $0x44c] sm:$0xff]
        %v4588 = vld [vmem:[%s4421 + $0x454] sm:$0xff]
        %v4589 = vld [vmem:[%s4421 + $0x45c] sm:$0xf]
        %v4590 = vld [vmem:[%s4421 + $0x460] sm:$0xff]
        %v4591 = vld [vmem:[%s4421 + $0x468] sm:$0xff]
        %v4592 = vld [vmem:[%s4421 + $0x470] sm:$0xf]
        %v4593 = vld [vmem:[%s4421 + $0x474] sm:$0xff]
        %v4594 = vld [vmem:[%s4421 + $0x47c] sm:$0xff]
        %v4595 = vld [vmem:[%s4421 + $0x484] sm:$0xf]
        %v4596 = vld [vmem:[%s4421 + $0x488] sm:$0xff]
        %v4597 = vld [vmem:[%s4421 + $0x490] sm:$0xff]
        %v4598 = vld [vmem:[%s4421 + $0x498] sm:$0xf]
        %v4599 = vld [vmem:[%s4421 + $0x49c] sm:$0xff]
        %v4600 = vld [vmem:[%s4421 + $0x4a4] sm:$0xff]
        %v4601 = vld [vmem:[%s4421 + $0x4ac] sm:$0xf]
        %v4602 = vld [vmem:[%s4421 + $0x4b0] sm:$0xff]
        %v4603 = vld [vmem:[%s4421 + $0x4b8] sm:$0xff]
        %v4604 = vld [vmem:[%s4421 + $0x4c0] sm:$0xf]
        %v4605 = vld [vmem:[%s4421 + $0x4c4] sm:$0xff]
        %v4606 = vld [vmem:[%s4421 + $0x4cc] sm:$0xff]
        %v4607 = vld [vmem:[%s4421 + $0x4d4] sm:$0xf]
        %v4608 = vld [vmem:[%s4421 + $0x4d8] sm:$0xff]
        %v4609 = vld [vmem:[%s4421 + $0x4e0] sm:$0xff]
        %v4610 = vld [vmem:[%s4421 + $0x4e8] sm:$0xf]
        %v4611 = vld [vmem:[%s4421 + $0x4ec] sm:$0xff]
        %v4612 = vld [vmem:[%s4421 + $0x4f4] sm:$0xff]
        %v4613 = vld [vmem:[%s4421 + $0x4fc] sm:$0xf]
        %v4614 = vld [vmem:[%s4421 + $0x500] sm:$0xff]
        %v4615 = vld [vmem:[%s4421 + $0x508] sm:$0xff]
        %v4616 = vld [vmem:[%s4421 + $0x510] sm:$0xf]
        %v4617 = vld [vmem:[%s4421 + $0x514] sm:$0xff]
        %v4618 = vld [vmem:[%s4421 + $0x51c] sm:$0xff]
        %v4619 = vld [vmem:[%s4421 + $0x524] sm:$0xf]
        %v4620 = vld [vmem:[%s4421 + $0x528] sm:$0xff]
        %v4621 = vld [vmem:[%s4421 + $0x530] sm:$0xff]
        %v4622 = vld [vmem:[%s4421 + $0x538] sm:$0xf]
        %v4623 = vld [vmem:[%s4421 + $0x53c] sm:$0xff]
        %v4624 = vld [vmem:[%s4421 + $0x544] sm:$0xff]
        %v4625 = vld [vmem:[%s4421 + $0x54c] sm:$0xf]
        %v4830 = vunpack.c.l.b16 %v4422
        %v4831 = vunpack.c.h.b16 %v4422
        %v4832 = vunpack.c.l.b16 %v4423
        %v4833 = vunpack.c.h.b16 %v4423
        %v4834 = vunpack.c.l.b16 %v4424
        %v4835 = vunpack.c.l.b16 %v4425
        %v4836 = vunpack.c.h.b16 %v4425
        %v4837 = vunpack.c.l.b16 %v4426
        %v4838 = vunpack.c.h.b16 %v4426
        %v4839 = vunpack.c.l.b16 %v4427
        %v4840 = vunpack.c.l.b16 %v4428
        %v4841 = vunpack.c.h.b16 %v4428
        %v4842 = vunpack.c.l.b16 %v4429
        %v4843 = vunpack.c.h.b16 %v4429
        %v4844 = vunpack.c.l.b16 %v4430
        %v4845 = vunpack.c.l.b16 %v4431
        %v4846 = vunpack.c.h.b16 %v4431
        %v4847 = vunpack.c.l.b16 %v4432
        %v4848 = vunpack.c.h.b16 %v4432
        %v4849 = vunpack.c.l.b16 %v4433
        %v4850 = vunpack.c.l.b16 %v4434
        %v4851 = vunpack.c.h.b16 %v4434
        %v4852 = vunpack.c.l.b16 %v4435
        %v4853 = vunpack.c.h.b16 %v4435
        %v4854 = vunpack.c.l.b16 %v4436
        %v4855 = vunpack.c.l.b16 %v4437
        %v4856 = vunpack.c.h.b16 %v4437
        %v4857 = vunpack.c.l.b16 %v4438
        %v4858 = vunpack.c.h.b16 %v4438
        %v4859 = vunpack.c.l.b16 %v4439
        %v4860 = vunpack.c.l.b16 %v4440
        %v4861 = vunpack.c.h.b16 %v4440
        %v4862 = vunpack.c.l.b16 %v4441
        %v4863 = vunpack.c.h.b16 %v4441
        %v4864 = vunpack.c.l.b16 %v4442
        %v4865 = vunpack.c.l.b16 %v4443
        %v4866 = vunpack.c.h.b16 %v4443
        %v4867 = vunpack.c.l.b16 %v4444
        %v4868 = vunpack.c.h.b16 %v4444
        %v4869 = vunpack.c.l.b16 %v4445
        %v4870 = vunpack.c.l.b16 %v4446
        %v4871 = vunpack.c.h.b16 %v4446
        %v4872 = vunpack.c.l.b16 %v4447
        %v4873 = vunpack.c.h.b16 %v4447
        %v4874 = vunpack.c.l.b16 %v4448
        %v4875 = vunpack.c.l.b16 %v4449
        %v4876 = vunpack.c.h.b16 %v4449
        %v4877 = vunpack.c.l.b16 %v4450
        %v4878 = vunpack.c.h.b16 %v4450
        %v4879 = vunpack.c.l.b16 %v4451
        %v4880 = vunpack.c.l.b16 %v4452
        %v4881 = vunpack.c.h.b16 %v4452
        %v4882 = vunpack.c.l.b16 %v4453
        %v4883 = vunpack.c.h.b16 %v4453
        %v4884 = vunpack.c.l.b16 %v4454
        %v4885 = vunpack.c.l.b16 %v4455
        %v4886 = vunpack.c.h.b16 %v4455
        %v4887 = vunpack.c.l.b16 %v4456
        %v4888 = vunpack.c.h.b16 %v4456
        %v4889 = vunpack.c.l.b16 %v4457
        %v4890 = vunpack.c.l.b16 %v4458
        %v4891 = vunpack.c.h.b16 %v4458
        %v4892 = vunpack.c.l.b16 %v4459
        %v4893 = vunpack.c.h.b16 %v4459
        %v4894 = vunpack.c.l.b16 %v4460
        %v4895 = vunpack.c.l.b16 %v4461
        %v4896 = vunpack.c.h.b16 %v4461
        %v4897 = vunpack.c.l.b16 %v4462
        %v4898 = vunpack.c.h.b16 %v4462
        %v4899 = vunpack.c.l.b16 %v4463
        %v4900 = vunpack.c.l.b16 %v4464
        %v4901 = vunpack.c.h.b16 %v4464
        %v4902 = vunpack.c.l.b16 %v4465
        %v4903 = vunpack.c.h.b16 %v4465
        %v4904 = vunpack.c.l.b16 %v4466
        %v4905 = vunpack.c.l.b16 %v4467
        %v4906 = vunpack.c.h.b16 %v4467
        %v4907 = vunpack.c.l.b16 %v4468
        %v4908 = vunpack.c.h.b16 %v4468
        %v4909 = vunpack.c.l.b16 %v4469
        %v4910 = vunpack.c.l.b16 %v4470
        %v4911 = vunpack.c.h.b16 %v4470
        %v4912 = vunpack.c.l.b16 %v4471
        %v4913 = vunpack.c.h.b16 %v4471
        %v4914 = vunpack.c.l.b16 %v4472
        %v4915 = vunpack.c.l.b16 %v4473
        %v4916 = vunpack.c.h.b16 %v4473
        %v4917 = vunpack.c.l.b16 %v4474
        %v4918 = vunpack.c.h.b16 %v4474
        %v4919 = vunpack.c.l.b16 %v4475
        %v4920 = vunpack.c.l.b16 %v4476
        %v4921 = vunpack.c.h.b16 %v4476
        %v4922 = vunpack.c.l.b16 %v4477
        %v4923 = vunpack.c.h.b16 %v4477
        %v4924 = vunpack.c.l.b16 %v4478
        %v4925 = vunpack.c.l.b16 %v4479
        %v4926 = vunpack.c.h.b16 %v4479
        %v4927 = vunpack.c.l.b16 %v4480
        %v4928 = vunpack.c.h.b16 %v4480
        %v4929 = vunpack.c.l.b16 %v4481
        %v4930 = vunpack.c.l.b16 %v4482
        %v4931 = vunpack.c.h.b16 %v4482
        %v4932 = vunpack.c.l.b16 %v4483
        %v4933 = vunpack.c.h.b16 %v4483
        %v4934 = vunpack.c.l.b16 %v4484
        %v4935 = vunpack.c.l.b16 %v4485
        %v4936 = vunpack.c.h.b16 %v4485
        %v4937 = vunpack.c.l.b16 %v4486
        %v4938 = vunpack.c.h.b16 %v4486
        %v4939 = vunpack.c.l.b16 %v4487
        %v4940 = vunpack.c.l.b16 %v4488
        %v4941 = vunpack.c.h.b16 %v4488
        %v4942 = vunpack.c.l.b16 %v4489
        %v4943 = vunpack.c.h.b16 %v4489
        %v4944 = vunpack.c.l.b16 %v4490
        %v4945 = vunpack.c.l.b16 %v4491
        %v4946 = vunpack.c.h.b16 %v4491
        %v4947 = vunpack.c.l.b16 %v4492
        %v4948 = vunpack.c.h.b16 %v4492
        %v4949 = vunpack.c.l.b16 %v4493
        %v4950 = vunpack.c.l.b16 %v4494
        %v4951 = vunpack.c.h.b16 %v4494
        %v4952 = vunpack.c.l.b16 %v4495
        %v4953 = vunpack.c.h.b16 %v4495
        %v4954 = vunpack.c.l.b16 %v4496
        %v4955 = vunpack.c.l.b16 %v4497
        %v4956 = vunpack.c.h.b16 %v4497
        %v4957 = vunpack.c.l.b16 %v4498
        %v4958 = vunpack.c.h.b16 %v4498
        %v4959 = vunpack.c.l.b16 %v4499
        %v4960 = vunpack.c.l.b16 %v4500
        %v4961 = vunpack.c.h.b16 %v4500
        %v4962 = vunpack.c.l.b16 %v4501
        %v4963 = vunpack.c.h.b16 %v4501
        %v4964 = vunpack.c.l.b16 %v4502
        %v4965 = vunpack.c.l.b16 %v4503
        %v4966 = vunpack.c.h.b16 %v4503
        %v4967 = vunpack.c.l.b16 %v4504
        %v4968 = vunpack.c.h.b16 %v4504
        %v4969 = vunpack.c.l.b16 %v4505
        %v4970 = vunpack.c.l.b16 %v4506
        %v4971 = vunpack.c.h.b16 %v4506
        %v4972 = vunpack.c.l.b16 %v4507
        %v4973 = vunpack.c.h.b16 %v4507
        %v4974 = vunpack.c.l.b16 %v4508
        %v4975 = vunpack.c.l.b16 %v4509
        %v4976 = vunpack.c.h.b16 %v4509
        %v4977 = vunpack.c.l.b16 %v4510
        %v4978 = vunpack.c.h.b16 %v4510
        %v4979 = vunpack.c.l.b16 %v4511
        %v4980 = vunpack.c.l.b16 %v4512
        %v4981 = vunpack.c.h.b16 %v4512
        %v4982 = vunpack.c.l.b16 %v4513
        %v4983 = vunpack.c.h.b16 %v4513
        %v4984 = vunpack.c.l.b16 %v4514
        %v4985 = vunpack.c.l.b16 %v4515
        %v4986 = vunpack.c.h.b16 %v4515
        %v4987 = vunpack.c.l.b16 %v4516
        %v4988 = vunpack.c.h.b16 %v4516
        %v4989 = vunpack.c.l.b16 %v4517
        %v4990 = vunpack.c.l.b16 %v4518
        %v4991 = vunpack.c.h.b16 %v4518
        %v4992 = vunpack.c.l.b16 %v4519
        %v4993 = vunpack.c.h.b16 %v4519
        %v4994 = vunpack.c.l.b16 %v4520
        %v4995 = vunpack.c.l.b16 %v4521
        %v4996 = vunpack.c.h.b16 %v4521
        %v4997 = vunpack.c.l.b16 %v4522
        %v4998 = vunpack.c.h.b16 %v4522
        %v4999 = vunpack.c.l.b16 %v4523
        %v5000 = vunpack.c.l.b16 %v4524
        %v5001 = vunpack.c.h.b16 %v4524
        %v5002 = vunpack.c.l.b16 %v4525
        %v5003 = vunpack.c.h.b16 %v4525
        %v5004 = vunpack.c.l.b16 %v4526
        %v5005 = vunpack.c.l.b16 %v4527
        %v5006 = vunpack.c.h.b16 %v4527
        %v5007 = vunpack.c.l.b16 %v4528
        %v5008 = vunpack.c.h.b16 %v4528
        %v5009 = vunpack.c.l.b16 %v4529
        %v5010 = vunpack.c.l.b16 %v4530
        %v5011 = vunpack.c.h.b16 %v4530
        %v5012 = vunpack.c.l.b16 %v4531
        %v5013 = vunpack.c.h.b16 %v4531
        %v5014 = vunpack.c.l.b16 %v4532
        %v5015 = vunpack.c.l.b16 %v4533
        %v5016 = vunpack.c.h.b16 %v4533
        %v5017 = vunpack.c.l.b16 %v4534
        %v5018 = vunpack.c.h.b16 %v4534
        %v5019 = vunpack.c.l.b16 %v4535
        %v5020 = vunpack.c.l.b16 %v4536
        %v5021 = vunpack.c.h.b16 %v4536
        %v5022 = vunpack.c.l.b16 %v4537
        %v5023 = vunpack.c.h.b16 %v4537
        %v5024 = vunpack.c.l.b16 %v4538
        %v5025 = vunpack.c.l.b16 %v4539
        %v5026 = vunpack.c.h.b16 %v4539
        %v5027 = vunpack.c.l.b16 %v4540
        %v5028 = vunpack.c.h.b16 %v4540
        %v5029 = vunpack.c.l.b16 %v4541
        %v5030 = vunpack.c.l.b16 %v4542
        %v5031 = vunpack.c.h.b16 %v4542
        %v5032 = vunpack.c.l.b16 %v4543
        %v5033 = vunpack.c.h.b16 %v4543
        %v5034 = vunpack.c.l.b16 %v4544
        %v5035 = vunpack.c.l.b16 %v4545
        %v5036 = vunpack.c.h.b16 %v4545
        %v5037 = vunpack.c.l.b16 %v4546
        %v5038 = vunpack.c.h.b16 %v4546
        %v5039 = vunpack.c.l.b16 %v4547
        %v5040 = vunpack.c.l.b16 %v4548
        %v5041 = vunpack.c.h.b16 %v4548
        %v5042 = vunpack.c.l.b16 %v4549
        %v5043 = vunpack.c.h.b16 %v4549
        %v5044 = vunpack.c.l.b16 %v4550
        %v5045 = vunpack.c.l.b16 %v4551
        %v5046 = vunpack.c.h.b16 %v4551
        %v5047 = vunpack.c.l.b16 %v4552
        %v5048 = vunpack.c.h.b16 %v4552
        %v5049 = vunpack.c.l.b16 %v4553
        %v5050 = vunpack.c.l.b16 %v4554
        %v5051 = vunpack.c.h.b16 %v4554
        %v5052 = vunpack.c.l.b16 %v4555
        %v5053 = vunpack.c.h.b16 %v4555
        %v5054 = vunpack.c.l.b16 %v4556
        %v5055 = vunpack.c.l.b16 %v4557
        %v5056 = vunpack.c.h.b16 %v4557
        %v5057 = vunpack.c.l.b16 %v4558
        %v5058 = vunpack.c.h.b16 %v4558
        %v5059 = vunpack.c.l.b16 %v4559
        %v5060 = vunpack.c.l.b16 %v4560
        %v5061 = vunpack.c.h.b16 %v4560
        %v5062 = vunpack.c.l.b16 %v4561
        %v5063 = vunpack.c.h.b16 %v4561
        %v5064 = vunpack.c.l.b16 %v4562
        %v5065 = vunpack.c.l.b16 %v4563
        %v5066 = vunpack.c.h.b16 %v4563
        %v5067 = vunpack.c.l.b16 %v4564
        %v5068 = vunpack.c.h.b16 %v4564
        %v5069 = vunpack.c.l.b16 %v4565
        %v5070 = vunpack.c.l.b16 %v4566
        %v5071 = vunpack.c.h.b16 %v4566
        %v5072 = vunpack.c.l.b16 %v4567
        %v5073 = vunpack.c.h.b16 %v4567
        %v5074 = vunpack.c.l.b16 %v4568
        %v5075 = vunpack.c.l.b16 %v4569
        %v5076 = vunpack.c.h.b16 %v4569
        %v5077 = vunpack.c.l.b16 %v4570
        %v5078 = vunpack.c.h.b16 %v4570
        %v5079 = vunpack.c.l.b16 %v4571
        %v5080 = vunpack.c.l.b16 %v4572
        %v5081 = vunpack.c.h.b16 %v4572
        %v5082 = vunpack.c.l.b16 %v4573
        %v5083 = vunpack.c.h.b16 %v4573
        %v5084 = vunpack.c.l.b16 %v4574
        %v5085 = vunpack.c.l.b16 %v4575
        %v5086 = vunpack.c.h.b16 %v4575
        %v5087 = vunpack.c.l.b16 %v4576
        %v5088 = vunpack.c.h.b16 %v4576
        %v5089 = vunpack.c.l.b16 %v4577
        %v5090 = vunpack.c.l.b16 %v4578
        %v5091 = vunpack.c.h.b16 %v4578
        %v5092 = vunpack.c.l.b16 %v4579
        %v5093 = vunpack.c.h.b16 %v4579
        %v5094 = vunpack.c.l.b16 %v4580
        %v5095 = vunpack.c.l.b16 %v4581
        %v5096 = vunpack.c.h.b16 %v4581
        %v5097 = vunpack.c.l.b16 %v4582
        %v5098 = vunpack.c.h.b16 %v4582
        %v5099 = vunpack.c.l.b16 %v4583
        %v5100 = vunpack.c.l.b16 %v4584
        %v5101 = vunpack.c.h.b16 %v4584
        %v5102 = vunpack.c.l.b16 %v4585
        %v5103 = vunpack.c.h.b16 %v4585
        %v5104 = vunpack.c.l.b16 %v4586
        %v5105 = vunpack.c.l.b16 %v4587
        %v5106 = vunpack.c.h.b16 %v4587
        %v5107 = vunpack.c.l.b16 %v4588
        %v5108 = vunpack.c.h.b16 %v4588
        %v5109 = vunpack.c.l.b16 %v4589
        %v5110 = vunpack.c.l.b16 %v4590
        %v5111 = vunpack.c.h.b16 %v4590
        %v5112 = vunpack.c.l.b16 %v4591
        %v5113 = vunpack.c.h.b16 %v4591
        %v5114 = vunpack.c.l.b16 %v4592
        %v5115 = vunpack.c.l.b16 %v4593
        %v5116 = vunpack.c.h.b16 %v4593
        %v5117 = vunpack.c.l.b16 %v4594
        %v5118 = vunpack.c.h.b16 %v4594
        %v5119 = vunpack.c.l.b16 %v4595
        %v5120 = vunpack.c.l.b16 %v4596
        %v5121 = vunpack.c.h.b16 %v4596
        %v5122 = vunpack.c.l.b16 %v4597
        %v5123 = vunpack.c.h.b16 %v4597
        %v5124 = vunpack.c.l.b16 %v4598
        %v5125 = vunpack.c.l.b16 %v4599
        %v5126 = vunpack.c.h.b16 %v4599
        %v5127 = vunpack.c.l.b16 %v4600
        %v5128 = vunpack.c.h.b16 %v4600
        %v5129 = vunpack.c.l.b16 %v4601
        %v5130 = vunpack.c.l.b16 %v4602
        %v5131 = vunpack.c.h.b16 %v4602
        %v5132 = vunpack.c.l.b16 %v4603
        %v5133 = vunpack.c.h.b16 %v4603
        %v5134 = vunpack.c.l.b16 %v4604
        %v5135 = vunpack.c.l.b16 %v4605
        %v5136 = vunpack.c.h.b16 %v4605
        %v5137 = vunpack.c.l.b16 %v4606
        %v5138 = vunpack.c.h.b16 %v4606
        %v5139 = vunpack.c.l.b16 %v4607
        %v5140 = vunpack.c.l.b16 %v4608
        %v5141 = vunpack.c.h.b16 %v4608
        %v5142 = vunpack.c.l.b16 %v4609
        %v5143 = vunpack.c.h.b16 %v4609
        %v5144 = vunpack.c.l.b16 %v4610
        %v5145 = vunpack.c.l.b16 %v4611
        %v5146 = vunpack.c.h.b16 %v4611
        %v5147 = vunpack.c.l.b16 %v4612
        %v5148 = vunpack.c.h.b16 %v4612
        %v5149 = vunpack.c.l.b16 %v4613
        %v5150 = vunpack.c.l.b16 %v4614
        %v5151 = vunpack.c.h.b16 %v4614
        %v5152 = vunpack.c.l.b16 %v4615
        %v5153 = vunpack.c.h.b16 %v4615
        %v5154 = vunpack.c.l.b16 %v4616
        %v5155 = vunpack.c.l.b16 %v4617
        %v5156 = vunpack.c.h.b16 %v4617
        %v5157 = vunpack.c.l.b16 %v4618
        %v5158 = vunpack.c.h.b16 %v4618
        %v5159 = vunpack.c.l.b16 %v4619
        %v5160 = vunpack.c.l.b16 %v4620
        %v5161 = vunpack.c.h.b16 %v4620
        %v5162 = vunpack.c.l.b16 %v4621
        %v5163 = vunpack.c.h.b16 %v4621
        %v5164 = vunpack.c.l.b16 %v4622
        %v5165 = vunpack.c.l.b16 %v4623
        %v5166 = vunpack.c.h.b16 %v4623
        %v5167 = vunpack.c.l.b16 %v4624
        %v5168 = vunpack.c.h.b16 %v4624
        %v5169 = vunpack.c.l.b16 %v4625
        %v5170 = vpack.c.b16 %v4835, %v4830
        %v5171 = vpack.c.b16 %v4836, %v4831
        %v5172 = vpack.c.b16 %v4837, %v4832
        %v5173 = vpack.c.b16 %v4838, %v4833
        %v5174 = vpack.c.b16 %v4839, %v4834
        %v5175 = vpack.c.b16 %v4845, %v4840
        %v5176 = vpack.c.b16 %v4846, %v4841
        %v5177 = vpack.c.b16 %v4847, %v4842
        %v5178 = vpack.c.b16 %v4848, %v4843
        %v5179 = vpack.c.b16 %v4849, %v4844
        %v5180 = vpack.c.b16 %v4855, %v4850
        %v5181 = vpack.c.b16 %v4856, %v4851
        %v5182 = vpack.c.b16 %v4857, %v4852
        %v5183 = vpack.c.b16 %v4858, %v4853
        %v5184 = vpack.c.b16 %v4859, %v4854
        %v5185 = vpack.c.b16 %v4865, %v4860
        %v5186 = vpack.c.b16 %v4866, %v4861
        %v5187 = vpack.c.b16 %v4867, %v4862
        %v5188 = vpack.c.b16 %v4868, %v4863
        %v5189 = vpack.c.b16 %v4869, %v4864
        %v5190 = vpack.c.b16 %v4875, %v4870
        %v5191 = vpack.c.b16 %v4876, %v4871
        %v5192 = vpack.c.b16 %v4877, %v4872
        %v5193 = vpack.c.b16 %v4878, %v4873
        %v5194 = vpack.c.b16 %v4879, %v4874
        %v5195 = vpack.c.b16 %v4885, %v4880
        %v5196 = vpack.c.b16 %v4886, %v4881
        %v5197 = vpack.c.b16 %v4887, %v4882
        %v5198 = vpack.c.b16 %v4888, %v4883
        %v5199 = vpack.c.b16 %v4889, %v4884
        %v5200 = vpack.c.b16 %v4895, %v4890
        %v5201 = vpack.c.b16 %v4896, %v4891
        %v5202 = vpack.c.b16 %v4897, %v4892
        %v5203 = vpack.c.b16 %v4898, %v4893
        %v5204 = vpack.c.b16 %v4899, %v4894
        %v5205 = vpack.c.b16 %v4905, %v4900
        %v5206 = vpack.c.b16 %v4906, %v4901
        %v5207 = vpack.c.b16 %v4907, %v4902
        %v5208 = vpack.c.b16 %v4908, %v4903
        %v5209 = vpack.c.b16 %v4909, %v4904
        %v5210 = vpack.c.b16 %v4915, %v4910
        %v5211 = vpack.c.b16 %v4916, %v4911
        %v5212 = vpack.c.b16 %v4917, %v4912
        %v5213 = vpack.c.b16 %v4918, %v4913
        %v5214 = vpack.c.b16 %v4919, %v4914
        %v5215 = vpack.c.b16 %v4925, %v4920
        %v5216 = vpack.c.b16 %v4926, %v4921
        %v5217 = vpack.c.b16 %v4927, %v4922
        %v5218 = vpack.c.b16 %v4928, %v4923
        %v5219 = vpack.c.b16 %v4929, %v4924
        %v5220 = vpack.c.b16 %v4935, %v4930
        %v5221 = vpack.c.b16 %v4936, %v4931
        %v5222 = vpack.c.b16 %v4937, %v4932
        %v5223 = vpack.c.b16 %v4938, %v4933
        %v5224 = vpack.c.b16 %v4939, %v4934
        %v5225 = vpack.c.b16 %v4945, %v4940
        %v5226 = vpack.c.b16 %v4946, %v4941
        %v5227 = vpack.c.b16 %v4947, %v4942
        %v5228 = vpack.c.b16 %v4948, %v4943
        %v5229 = vpack.c.b16 %v4949, %v4944
        %v5230 = vpack.c.b16 %v4955, %v4950
        %v5231 = vpack.c.b16 %v4956, %v4951
        %v5232 = vpack.c.b16 %v4957, %v4952
        %v5233 = vpack.c.b16 %v4958, %v4953
        %v5234 = vpack.c.b16 %v4959, %v4954
        %v5235 = vpack.c.b16 %v4965, %v4960
        %v5236 = vpack.c.b16 %v4966, %v4961
        %v5237 = vpack.c.b16 %v4967, %v4962
        %v5238 = vpack.c.b16 %v4968, %v4963
        %v5239 = vpack.c.b16 %v4969, %v4964
        %v5240 = vpack.c.b16 %v4975, %v4970
        %v5241 = vpack.c.b16 %v4976, %v4971
        %v5242 = vpack.c.b16 %v4977, %v4972
        %v5243 = vpack.c.b16 %v4978, %v4973
        %v5244 = vpack.c.b16 %v4979, %v4974
        %v5245 = vpack.c.b16 %v4985, %v4980
        %v5246 = vpack.c.b16 %v4986, %v4981
        %v5247 = vpack.c.b16 %v4987, %v4982
        %v5248 = vpack.c.b16 %v4988, %v4983
        %v5249 = vpack.c.b16 %v4989, %v4984
        %v5250 = vpack.c.b16 %v4995, %v4990
        %v5251 = vpack.c.b16 %v4996, %v4991
        %v5252 = vpack.c.b16 %v4997, %v4992
        %v5253 = vpack.c.b16 %v4998, %v4993
        %v5254 = vpack.c.b16 %v4999, %v4994
        %v5255 = vpack.c.b16 %v5005, %v5000
        %v5256 = vpack.c.b16 %v5006, %v5001
        %v5257 = vpack.c.b16 %v5007, %v5002
        %v5258 = vpack.c.b16 %v5008, %v5003
        %v5259 = vpack.c.b16 %v5009, %v5004
        %v5260 = vpack.c.b16 %v5015, %v5010
        %v5261 = vpack.c.b16 %v5016, %v5011
        %v5262 = vpack.c.b16 %v5017, %v5012
        %v5263 = vpack.c.b16 %v5018, %v5013
        %v5264 = vpack.c.b16 %v5019, %v5014
        %v5265 = vpack.c.b16 %v5025, %v5020
        %v5266 = vpack.c.b16 %v5026, %v5021
        %v5267 = vpack.c.b16 %v5027, %v5022
        %v5268 = vpack.c.b16 %v5028, %v5023
        %v5269 = vpack.c.b16 %v5029, %v5024
        %v5270 = vpack.c.b16 %v5035, %v5030
        %v5271 = vpack.c.b16 %v5036, %v5031
        %v5272 = vpack.c.b16 %v5037, %v5032
        %v5273 = vpack.c.b16 %v5038, %v5033
        %v5274 = vpack.c.b16 %v5039, %v5034
        %v5275 = vpack.c.b16 %v5045, %v5040
        %v5276 = vpack.c.b16 %v5046, %v5041
        %v5277 = vpack.c.b16 %v5047, %v5042
        %v5278 = vpack.c.b16 %v5048, %v5043
        %v5279 = vpack.c.b16 %v5049, %v5044
        %v5280 = vpack.c.b16 %v5055, %v5050
        %v5281 = vpack.c.b16 %v5056, %v5051
        %v5282 = vpack.c.b16 %v5057, %v5052
        %v5283 = vpack.c.b16 %v5058, %v5053
        %v5284 = vpack.c.b16 %v5059, %v5054
        %v5285 = vpack.c.b16 %v5065, %v5060
        %v5286 = vpack.c.b16 %v5066, %v5061
        %v5287 = vpack.c.b16 %v5067, %v5062
        %v5288 = vpack.c.b16 %v5068, %v5063
        %v5289 = vpack.c.b16 %v5069, %v5064
        %v5290 = vpack.c.b16 %v5075, %v5070
        %v5291 = vpack.c.b16 %v5076, %v5071
        %v5292 = vpack.c.b16 %v5077, %v5072
        %v5293 = vpack.c.b16 %v5078, %v5073
        %v5294 = vpack.c.b16 %v5079, %v5074
        %v5295 = vpack.c.b16 %v5085, %v5080
        %v5296 = vpack.c.b16 %v5086, %v5081
        %v5297 = vpack.c.b16 %v5087, %v5082
        %v5298 = vpack.c.b16 %v5088, %v5083
        %v5299 = vpack.c.b16 %v5089, %v5084
        %v5300 = vpack.c.b16 %v5095, %v5090
        %v5301 = vpack.c.b16 %v5096, %v5091
        %v5302 = vpack.c.b16 %v5097, %v5092
        %v5303 = vpack.c.b16 %v5098, %v5093
        %v5304 = vpack.c.b16 %v5099, %v5094
        %v5305 = vpack.c.b16 %v5105, %v5100
        %v5306 = vpack.c.b16 %v5106, %v5101
        %v5307 = vpack.c.b16 %v5107, %v5102
        %v5308 = vpack.c.b16 %v5108, %v5103
        %v5309 = vpack.c.b16 %v5109, %v5104
        %v5310 = vpack.c.b16 %v5115, %v5110
        %v5311 = vpack.c.b16 %v5116, %v5111
        %v5312 = vpack.c.b16 %v5117, %v5112
        %v5313 = vpack.c.b16 %v5118, %v5113
        %v5314 = vpack.c.b16 %v5119, %v5114
        %v5315 = vpack.c.b16 %v5125, %v5120
        %v5316 = vpack.c.b16 %v5126, %v5121
        %v5317 = vpack.c.b16 %v5127, %v5122
        %v5318 = vpack.c.b16 %v5128, %v5123
        %v5319 = vpack.c.b16 %v5129, %v5124
        %v5320 = vpack.c.b16 %v5135, %v5130
        %v5321 = vpack.c.b16 %v5136, %v5131
        %v5322 = vpack.c.b16 %v5137, %v5132
        %v5323 = vpack.c.b16 %v5138, %v5133
        %v5324 = vpack.c.b16 %v5139, %v5134
        %v5325 = vpack.c.b16 %v5145, %v5140
        %v5326 = vpack.c.b16 %v5146, %v5141
        %v5327 = vpack.c.b16 %v5147, %v5142
        %v5328 = vpack.c.b16 %v5148, %v5143
        %v5329 = vpack.c.b16 %v5149, %v5144
        %v5330 = vpack.c.b16 %v5155, %v5150
        %v5331 = vpack.c.b16 %v5156, %v5151
        %v5332 = vpack.c.b16 %v5157, %v5152
        %v5333 = vpack.c.b16 %v5158, %v5153
        %v5334 = vpack.c.b16 %v5159, %v5154
        %v5335 = vpack.c.b16 %v5165, %v5160
        %v5336 = vpack.c.b16 %v5166, %v5161
        %v5337 = vpack.c.b16 %v5167, %v5162
        %v5338 = vpack.c.b16 %v5168, %v5163
        %v5339 = vpack.c.b16 %v5169, %v5164
        %v5511 = vsel %vm517, %v4420, 0
        %5513 = vmatprep.subr.bf16.mxu0 %v5171
        %5514 = vmatpush1.bf16.msra.mxu0 %v5170
        %5515 = vmatprep.subr.bf16.mxu0 %v5176
        %5516 = vmatpush1.bf16.msra.mxu0 %v5175
        %5517 = vmatprep.subr.bf16.mxu0 %v5181
        %5518 = vmatpush1.bf16.msra.mxu0 %v5180
        %5519 = vmatprep.subr.bf16.mxu0 %v5186
        %5520 = vmatpush1.bf16.msra.mxu0 %v5185
        %5521 = vmatprep.subr.bf16.mxu0 %v5191
        %5522 = vmatpush1.bf16.msra.mxu0 %v5190
        %5523 = vmatprep.subr.bf16.mxu0 %v5196
        %5524 = vmatpush1.bf16.msra.mxu0 %v5195
        %5525 = vmatprep.subr.bf16.mxu0 %v5201
        %5526 = vmatpush1.bf16.msra.mxu0 %v5200
        %5527 = vmatprep.subr.bf16.mxu0 %v5206
        %5528 = vmatpush1.bf16.msra.mxu0 %v5205
        %5529 = vmatprep.subr.bf16.mxu0 %v5211
        %5530 = vmatpush1.bf16.msra.mxu0 %v5210
        %5531 = vmatprep.subr.bf16.mxu0 %v5216
        %5532 = vmatpush1.bf16.msra.mxu0 %v5215
        %5533 = vmatprep.subr.bf16.mxu0 %v5221
        %5534 = vmatpush1.bf16.msra.mxu0 %v5220
        %5535 = vmatprep.subr.bf16.mxu0 %v5226
        %5536 = vmatpush1.bf16.msra.mxu0 %v5225
        %5537 = vmatprep.subr.bf16.mxu0 %v5231
        %5538 = vmatpush1.bf16.msra.mxu0 %v5230
        %5539 = vmatprep.subr.bf16.mxu0 %v5236
        %5540 = vmatpush1.bf16.msra.mxu0 %v5235
        %5541 = vmatprep.subr.bf16.mxu0 %v5241
        %5542 = vmatpush1.bf16.msra.mxu0 %v5240
        %5543 = vmatprep.subr.bf16.mxu0 %v5246
        %5544 = vmatpush1.bf16.msra.mxu0 %v5245
        %5545 = vmatprep.mubr.bf16.mxu0 %v4417
        %5546 = vmatmul.mubr.bf16.gmra.mrb[0].mxu0 %v4416
        %v5547 = vpop.f32.mrb[0].mxu0
        %v5548 = vadd.f32 0.0, %v5547
        %v5549 = vpop.f32.mrb[0].mxu0
        %v5550 = vadd.f32 0.0, %v5549
        %v5551 = vpop.f32.mrb[0].mxu0
        %v5552 = vadd.f32 0.0, %v5551
        %v5553 = vpop.f32.mrb[0].mxu0
        %v5554 = vadd.f32 0.0, %v5553
        %5555 = vdwg.mxu0
        %5556 = vmatprep.subr.bf16.mxu0 %v5251
        %5557 = vmatpush1.bf16.msra.mxu0 %v5250
        %5558 = vmatprep.subr.bf16.mxu0 %v5256
        %5559 = vmatpush1.bf16.msra.mxu0 %v5255
        %5560 = vmatprep.subr.bf16.mxu0 %v5261
        %5561 = vmatpush1.bf16.msra.mxu0 %v5260
        %5562 = vmatprep.subr.bf16.mxu0 %v5266
        %5563 = vmatpush1.bf16.msra.mxu0 %v5265
        %5564 = vmatprep.subr.bf16.mxu0 %v5271
        %5565 = vmatpush1.bf16.msra.mxu0 %v5270
        %5566 = vmatprep.subr.bf16.mxu0 %v5276
        %5567 = vmatpush1.bf16.msra.mxu0 %v5275
        %5568 = vmatprep.subr.bf16.mxu0 %v5281
        %5569 = vmatpush1.bf16.msra.mxu0 %v5280
        %5570 = vmatprep.subr.bf16.mxu0 %v5286
        %5571 = vmatpush1.bf16.msra.mxu0 %v5285
        %5572 = vmatprep.subr.bf16.mxu0 %v5291
        %5573 = vmatpush1.bf16.msra.mxu0 %v5290
        %5574 = vmatprep.subr.bf16.mxu0 %v5296
        %5575 = vmatpush1.bf16.msra.mxu0 %v5295
        %5576 = vmatprep.subr.bf16.mxu0 %v5301
        %5577 = vmatpush1.bf16.msra.mxu0 %v5300
        %5578 = vmatprep.subr.bf16.mxu0 %v5306
        %5579 = vmatpush1.bf16.msra.mxu0 %v5305
        %5580 = vmatprep.subr.bf16.mxu0 %v5311
        %5581 = vmatpush1.bf16.msra.mxu0 %v5310
        %5582 = vmatprep.subr.bf16.mxu0 %v5316
        %5583 = vmatpush1.bf16.msra.mxu0 %v5315
        %5584 = vmatprep.subr.bf16.mxu0 %v5321
        %5585 = vmatpush1.bf16.msra.mxu0 %v5320
        %5586 = vmatprep.subr.bf16.mxu0 %v5326
        %5587 = vmatpush1.bf16.msra.mxu0 %v5325
        %5588 = vmatprep.mubr.bf16.mxu0 %v4419
        %5589 = vmatmul.mubr.bf16.gmra.mrb[0].mxu0 %v4418
        %v5590 = vpop.f32.mrb[0].mxu0
        %v5591 = vadd.f32 %v5548, %v5590
        %v5592 = vpop.f32.mrb[0].mxu0
        %v5593 = vadd.f32 %v5550, %v5592
        %v5594 = vpop.f32.mrb[0].mxu0
        %v5595 = vadd.f32 %v5552, %v5594
        %v5596 = vpop.f32.mrb[0].mxu0
        %v5597 = vadd.f32 %v5554, %v5596
        %5598 = vdwg.mxu0
        %5599 = vmatprep.subr.bf16.mxu0 %v5331
        %5600 = vmatpush1.bf16.msra.mxu0 %v5330
        %5601 = vmatprep.subr.bf16.mxu0 %v5336
        %5602 = vmatpush1.bf16.msra.mxu0 %v5335
        %5603 = vmatprep.subr.bf16.mxu0 0
        %5604 = vmatpush1.bf16.msra.mxu0 0
        %5605 = vmatprep.subr.bf16.mxu0 0
        %5606 = vmatpush1.bf16.msra.mxu0 0
        %5607 = vmatprep.subr.bf16.mxu0 0
        %5608 = vmatpush1.bf16.msra.mxu0 0
        %5609 = vmatprep.subr.bf16.mxu0 0
        %5610 = vmatpush1.bf16.msra.mxu0 0
        %5611 = vmatprep.subr.bf16.mxu0 0
        %5612 = vmatpush1.bf16.msra.mxu0 0
        %5613 = vmatprep.subr.bf16.mxu0 0
        %5614 = vmatpush1.bf16.msra.mxu0 0
        %5615 = vmatprep.subr.bf16.mxu0 0
        %5616 = vmatpush1.bf16.msra.mxu0 0
        %5617 = vmatprep.subr.bf16.mxu0 0
        %5618 = vmatpush1.bf16.msra.mxu0 0
        %5619 = vmatprep.subr.bf16.mxu0 0
        %5620 = vmatpush1.bf16.msra.mxu0 0
        %5621 = vmatprep.subr.bf16.mxu0 0
        %5622 = vmatpush1.bf16.msra.mxu0 0
        %5623 = vmatprep.subr.bf16.mxu0 0
        %5624 = vmatpush1.bf16.msra.mxu0 0
        %5625 = vmatprep.subr.bf16.mxu0 0
        %5626 = vmatpush1.bf16.msra.mxu0 0
        %5627 = vmatprep.subr.bf16.mxu0 0
        %5628 = vmatpush1.bf16.msra.mxu0 0
        %5629 = vmatprep.subr.bf16.mxu0 0
        %5630 = vmatpush1.bf16.msra.mxu0 0
        %5631 = vmatprep.mubr.bf16.mxu0 0
        %5632 = vmatmul.mubr.bf16.gmra.mrb[0].mxu0 %v5511
        %v5633 = vpop.f32.mrb[0].mxu0
        %v5634 = vadd.f32 %v5591, %v5633
        %v5635 = vpop.f32.mrb[0].mxu0
        %v5636 = vadd.f32 %v5593, %v5635
        %v5637 = vpop.f32.mrb[0].mxu0
        %v5638 = vadd.f32 %v5595, %v5637
        %v5639 = vpop.f32.mrb[0].mxu0
        %v5640 = vadd.f32 %v5597, %v5639
        %5641 = vdwg.mxu0
        %5642 = vmatprep.subr.bf16.mxu0 %v5173
        %5643 = vmatpush1.bf16.msra.mxu0 %v5172
        %5644 = vmatprep.subr.bf16.mxu0 %v5178
        %5645 = vmatpush1.bf16.msra.mxu0 %v5177
        %5646 = vmatprep.subr.bf16.mxu0 %v5183
        %5647 = vmatpush1.bf16.msra.mxu0 %v5182
        %5648 = vmatprep.subr.bf16.mxu0 %v5188
        %5649 = vmatpush1.bf16.msra.mxu0 %v5187
        %5650 = vmatprep.subr.bf16.mxu0 %v5193
        %5651 = vmatpush1.bf16.msra.mxu0 %v5192
        %5652 = vmatprep.subr.bf16.mxu0 %v5198
        %5653 = vmatpush1.bf16.msra.mxu0 %v5197
        %5654 = vmatprep.subr.bf16.mxu0 %v5203
        %5655 = vmatpush1.bf16.msra.mxu0 %v5202
        %5656 = vmatprep.subr.bf16.mxu0 %v5208
        %5657 = vmatpush1.bf16.msra.mxu0 %v5207
        %5658 = vmatprep.subr.bf16.mxu0 %v5213
        %5659 = vmatpush1.bf16.msra.mxu0 %v5212
        %5660 = vmatprep.subr.bf16.mxu0 %v5218
        %5661 = vmatpush1.bf16.msra.mxu0 %v5217
        %5662 = vmatprep.subr.bf16.mxu0 %v5223
        %5663 = vmatpush1.bf16.msra.mxu0 %v5222
        %5664 = vmatprep.subr.bf16.mxu0 %v5228
        %5665 = vmatpush1.bf16.msra.mxu0 %v5227
        %5666 = vmatprep.subr.bf16.mxu0 %v5233
        %5667 = vmatpush1.bf16.msra.mxu0 %v5232
        %5668 = vmatprep.subr.bf16.mxu0 %v5238
        %5669 = vmatpush1.bf16.msra.mxu0 %v5237
        %5670 = vmatprep.subr.bf16.mxu0 %v5243
        %5671 = vmatpush1.bf16.msra.mxu0 %v5242
        %5672 = vmatprep.subr.bf16.mxu0 %v5248
        %5673 = vmatpush1.bf16.msra.mxu0 %v5247
        %5674 = vmatprep.mubr.bf16.mxu0 %v4417
        %5675 = vmatmul.mubr.bf16.gmra.mrb[0].mxu0 %v4416
        %v5676 = vpop.f32.mrb[0].mxu0
        %v5677 = vadd.f32 0.0, %v5676
        %v5678 = vpop.f32.mrb[0].mxu0
        %v5679 = vadd.f32 0.0, %v5678
        %v5680 = vpop.f32.mrb[0].mxu0
        %v5681 = vadd.f32 0.0, %v5680
        %v5682 = vpop.f32.mrb[0].mxu0
        %v5683 = vadd.f32 0.0, %v5682
        %5684 = vdwg.mxu0
        %5685 = vmatprep.subr.bf16.mxu0 %v5253
        %5686 = vmatpush1.bf16.msra.mxu0 %v5252
        %5687 = vmatprep.subr.bf16.mxu0 %v5258
        %5688 = vmatpush1.bf16.msra.mxu0 %v5257
        %5689 = vmatprep.subr.bf16.mxu0 %v5263
        %5690 = vmatpush1.bf16.msra.mxu0 %v5262
        %5691 = vmatprep.subr.bf16.mxu0 %v5268
        %5692 = vmatpush1.bf16.msra.mxu0 %v5267
        %5693 = vmatprep.subr.bf16.mxu0 %v5273
        %5694 = vmatpush1.bf16.msra.mxu0 %v5272
        %5695 = vmatprep.subr.bf16.mxu0 %v5278
        %5696 = vmatpush1.bf16.msra.mxu0 %v5277
        %5697 = vmatprep.subr.bf16.mxu0 %v5283
        %5698 = vmatpush1.bf16.msra.mxu0 %v5282
        %5699 = vmatprep.subr.bf16.mxu0 %v5288
        %5700 = vmatpush1.bf16.msra.mxu0 %v5287
        %5701 = vmatprep.subr.bf16.mxu0 %v5293
        %5702 = vmatpush1.bf16.msra.mxu0 %v5292
        %5703 = vmatprep.subr.bf16.mxu0 %v5298
        %5704 = vmatpush1.bf16.msra.mxu0 %v5297
        %5705 = vmatprep.subr.bf16.mxu0 %v5303
        %5706 = vmatpush1.bf16.msra.mxu0 %v5302
        %5707 = vmatprep.subr.bf16.mxu0 %v5308
        %5708 = vmatpush1.bf16.msra.mxu0 %v5307
        %5709 = vmatprep.subr.bf16.mxu0 %v5313
        %5710 = vmatpush1.bf16.msra.mxu0 %v5312
        %5711 = vmatprep.subr.bf16.mxu0 %v5318
        %5712 = vmatpush1.bf16.msra.mxu0 %v5317
        %5713 = vmatprep.subr.bf16.mxu0 %v5323
        %5714 = vmatpush1.bf16.msra.mxu0 %v5322
        %5715 = vmatprep.subr.bf16.mxu0 %v5328
        %5716 = vmatpush1.bf16.msra.mxu0 %v5327
        %5717 = vmatprep.mubr.bf16.mxu0 %v4419
        %5718 = vmatmul.mubr.bf16.gmra.mrb[0].mxu0 %v4418
        %v5719 = vpop.f32.mrb[0].mxu0
        %v5720 = vadd.f32 %v5677, %v5719
        %v5721 = vpop.f32.mrb[0].mxu0
        %v5722 = vadd.f32 %v5679, %v5721
        %v5723 = vpop.f32.mrb[0].mxu0
        %v5724 = vadd.f32 %v5681, %v5723
        %v5725 = vpop.f32.mrb[0].mxu0
        %v5726 = vadd.f32 %v5683, %v5725
        %5727 = vdwg.mxu0
        %5728 = vmatprep.subr.bf16.mxu0 %v5333
        %5729 = vmatpush1.bf16.msra.mxu0 %v5332
        %5730 = vmatprep.subr.bf16.mxu0 %v5338
        %5731 = vmatpush1.bf16.msra.mxu0 %v5337
        %5732 = vmatprep.subr.bf16.mxu0 0
        %5733 = vmatpush1.bf16.msra.mxu0 0
        %5734 = vmatprep.subr.bf16.mxu0 0
        %5735 = vmatpush1.bf16.msra.mxu0 0
        %5736 = vmatprep.subr.bf16.mxu0 0
        %5737 = vmatpush1.bf16.msra.mxu0 0
        %5738 = vmatprep.subr.bf16.mxu0 0
        %5739 = vmatpush1.bf16.msra.mxu0 0
        %5740 = vmatprep.subr.bf16.mxu0 0
        %5741 = vmatpush1.bf16.msra.mxu0 0
        %5742 = vmatprep.subr.bf16.mxu0 0
        %5743 = vmatpush1.bf16.msra.mxu0 0
        %5744 = vmatprep.subr.bf16.mxu0 0
        %5745 = vmatpush1.bf16.msra.mxu0 0
        %5746 = vmatprep.subr.bf16.mxu0 0
        %5747 = vmatpush1.bf16.msra.mxu0 0
        %5748 = vmatprep.subr.bf16.mxu0 0
        %5749 = vmatpush1.bf16.msra.mxu0 0
        %5750 = vmatprep.subr.bf16.mxu0 0
        %5751 = vmatpush1.bf16.msra.mxu0 0
        %5752 = vmatprep.subr.bf16.mxu0 0
        %5753 = vmatpush1.bf16.msra.mxu0 0
        %5754 = vmatprep.subr.bf16.mxu0 0
        %5755 = vmatpush1.bf16.msra.mxu0 0
        %5756 = vmatprep.subr.bf16.mxu0 0
        %5757 = vmatpush1.bf16.msra.mxu0 0
        %5758 = vmatprep.subr.bf16.mxu0 0
        %5759 = vmatpush1.bf16.msra.mxu0 0
        %5760 = vmatprep.mubr.bf16.mxu0 0
        %5761 = vmatmul.mubr.bf16.gmra.mrb[0].mxu0 %v5511
        %v5762 = vpop.f32.mrb[0].mxu0
        %v5763 = vadd.f32 %v5720, %v5762
        %v5764 = vpop.f32.mrb[0].mxu0
        %v5765 = vadd.f32 %v5722, %v5764
        %v5766 = vpop.f32.mrb[0].mxu0
        %v5767 = vadd.f32 %v5724, %v5766
        %v5768 = vpop.f32.mrb[0].mxu0
        %v5769 = vadd.f32 %v5726, %v5768
        %5770 = vdwg.mxu0
        %5771 = vmatprep.subr.bf16.mxu0 0
        %5772 = vmatpush1.bf16.msra.mxu0 %v5174
        %5773 = vmatprep.subr.bf16.mxu0 0
        %5774 = vmatpush1.bf16.msra.mxu0 %v5179
        %5775 = vmatprep.subr.bf16.mxu0 0
        %5776 = vmatpush1.bf16.msra.mxu0 %v5184
        %5777 = vmatprep.subr.bf16.mxu0 0
        %5778 = vmatpush1.bf16.msra.mxu0 %v5189
        %5779 = vmatprep.subr.bf16.mxu0 0
        %5780 = vmatpush1.bf16.msra.mxu0 %v5194
        %5781 = vmatprep.subr.bf16.mxu0 0
        %5782 = vmatpush1.bf16.msra.mxu0 %v5199
        %5783 = vmatprep.subr.bf16.mxu0 0
        %5784 = vmatpush1.bf16.msra.mxu0 %v5204
        %5785 = vmatprep.subr.bf16.mxu0 0
        %5786 = vmatpush1.bf16.msra.mxu0 %v5209
        %5787 = vmatprep.subr.bf16.mxu0 0
        %5788 = vmatpush1.bf16.msra.mxu0 %v5214
        %5789 = vmatprep.subr.bf16.mxu0 0
        %5790 = vmatpush1.bf16.msra.mxu0 %v5219
        %5791 = vmatprep.subr.bf16.mxu0 0
        %5792 = vmatpush1.bf16.msra.mxu0 %v5224
        %5793 = vmatprep.subr.bf16.mxu0 0
        %5794 = vmatpush1.bf16.msra.mxu0 %v5229
        %5795 = vmatprep.subr.bf16.mxu0 0
        %5796 = vmatpush1.bf16.msra.mxu0 %v5234
        %5797 = vmatprep.subr.bf16.mxu0 0
        %5798 = vmatpush1.bf16.msra.mxu0 %v5239
        %5799 = vmatprep.subr.bf16.mxu0 0
        %5800 = vmatpush1.bf16.msra.mxu0 %v5244
        %5801 = vmatprep.subr.bf16.mxu0 0
        %5802 = vmatpush1.bf16.msra.mxu0 %v5249
        %5803 = vmatprep.mubr.bf16.mxu0 %v4417
        %5804 = vmatmul.mubr.bf16.gmra.mrb[0].mxu0 %v4416
        %v5805 = vpop.f32.mrb[0].mxu0
        %v5806 = vadd.f32 0.0, %v5805
        %v5807 = vpop.f32.mrb[0].mxu0
        %v5808 = vpop.f32.mrb[0].mxu0
        %v5809 = vadd.f32 0.0, %v5808
        %v5810 = vpop.f32.mrb[0].mxu0
        %5811 = vdwg.mxu0
        %5812 = vmatprep.subr.bf16.mxu0 0
        %5813 = vmatpush1.bf16.msra.mxu0 %v5254
        %5814 = vmatprep.subr.bf16.mxu0 0
        %5815 = vmatpush1.bf16.msra.mxu0 %v5259
        %5816 = vmatprep.subr.bf16.mxu0 0
        %5817 = vmatpush1.bf16.msra.mxu0 %v5264
        %5818 = vmatprep.subr.bf16.mxu0 0
        %5819 = vmatpush1.bf16.msra.mxu0 %v5269
        %5820 = vmatprep.subr.bf16.mxu0 0
        %5821 = vmatpush1.bf16.msra.mxu0 %v5274
        %5822 = vmatprep.subr.bf16.mxu0 0
        %5823 = vmatpush1.bf16.msra.mxu0 %v5279
        %5824 = vmatprep.subr.bf16.mxu0 0
        %5825 = vmatpush1.bf16.msra.mxu0 %v5284
        %5826 = vmatprep.subr.bf16.mxu0 0
        %5827 = vmatpush1.bf16.msra.mxu0 %v5289
        %5828 = vmatprep.subr.bf16.mxu0 0
        %5829 = vmatpush1.bf16.msra.mxu0 %v5294
        %5830 = vmatprep.subr.bf16.mxu0 0
        %5831 = vmatpush1.bf16.msra.mxu0 %v5299
        %5832 = vmatprep.subr.bf16.mxu0 0
        %5833 = vmatpush1.bf16.msra.mxu0 %v5304
        %5834 = vmatprep.subr.bf16.mxu0 0
        %5835 = vmatpush1.bf16.msra.mxu0 %v5309
        %5836 = vmatprep.subr.bf16.mxu0 0
        %5837 = vmatpush1.bf16.msra.mxu0 %v5314
        %5838 = vmatprep.subr.bf16.mxu0 0
        %5839 = vmatpush1.bf16.msra.mxu0 %v5319
        %5840 = vmatprep.subr.bf16.mxu0 0
        %5841 = vmatpush1.bf16.msra.mxu0 %v5324
        %5842 = vmatprep.subr.bf16.mxu0 0
        %5843 = vmatpush1.bf16.msra.mxu0 %v5329
        %5844 = vmatprep.mubr.bf16.mxu0 %v4419
        %5845 = vmatmul.mubr.bf16.gmra.mrb[0].mxu0 %v4418
        %v5846 = vpop.f32.mrb[0].mxu0
        %v5847 = vadd.f32 %v5806, %v5846
        %v5848 = vpop.f32.mrb[0].mxu0
        %v5849 = vpop.f32.mrb[0].mxu0
        %v5850 = vadd.f32 %v5809, %v5849
        %v5851 = vpop.f32.mrb[0].mxu0
        %5852 = vdwg.mxu0
        %5853 = vmatprep.subr.bf16.mxu0 0
        %5854 = vmatpush1.bf16.msra.mxu0 %v5334
        %5855 = vmatprep.subr.bf16.mxu0 0
        %5856 = vmatpush1.bf16.msra.mxu0 %v5339
        %5857 = vmatprep.subr.bf16.mxu0 0
        %5858 = vmatpush1.bf16.msra.mxu0 0
        %5859 = vmatprep.subr.bf16.mxu0 0
        %5860 = vmatpush1.bf16.msra.mxu0 0
        %5861 = vmatprep.subr.bf16.mxu0 0
        %5862 = vmatpush1.bf16.msra.mxu0 0
        %5863 = vmatprep.subr.bf16.mxu0 0
        %5864 = vmatpush1.bf16.msra.mxu0 0
        %5865 = vmatprep.subr.bf16.mxu0 0
        %5866 = vmatpush1.bf16.msra.mxu0 0
        %5867 = vmatprep.subr.bf16.mxu0 0
        %5868 = vmatpush1.bf16.msra.mxu0 0
        %5869 = vmatprep.subr.bf16.mxu0 0
        %5870 = vmatpush1.bf16.msra.mxu0 0
        %5871 = vmatprep.subr.bf16.mxu0 0
        %5872 = vmatpush1.bf16.msra.mxu0 0
        %5873 = vmatprep.subr.bf16.mxu0 0
        %5874 = vmatpush1.bf16.msra.mxu0 0
        %5875 = vmatprep.subr.bf16.mxu0 0
        %5876 = vmatpush1.bf16.msra.mxu0 0
        %5877 = vmatprep.subr.bf16.mxu0 0
        %5878 = vmatpush1.bf16.msra.mxu0 0
        %5879 = vmatprep.subr.bf16.mxu0 0
        %5880 = vmatpush1.bf16.msra.mxu0 0
        %5881 = vmatprep.subr.bf16.mxu0 0
        %5882 = vmatpush1.bf16.msra.mxu0 0
        %5883 = vmatprep.subr.bf16.mxu0 0
        %5884 = vmatpush1.bf16.msra.mxu0 0
        %5885 = vmatprep.mubr.bf16.mxu0 0
        %5886 = vmatmul.mubr.bf16.gmra.mrb[0].mxu0 %v5511
        %v5887 = vpop.f32.mrb[0].mxu0
        %v5888 = vadd.f32 %v5847, %v5887
        %v5889 = vpop.f32.mrb[0].mxu0
        %v5890 = vpop.f32.mrb[0].mxu0
        %v5891 = vadd.f32 %v5850, %v5890
        %v5892 = vpop.f32.mrb[0].mxu0
        %5893 = vdwg.mxu0
        %v5894 = vadd.f32 %v4268, %v5634
        %v5895 = vadd.f32 %v4269, %v5636
        %v5896 = vadd.f32 %v4270, %v5763
        %v5897 = vadd.f32 %v4271, %v5765
        %v5898 = vadd.f32 %v4272, %v5888
        %v5899 = vadd.f32 %v4273, %v5638
        %v5900 = vadd.f32 %v4274, %v5640
        %v5901 = vadd.f32 %v4275, %v5767
        %v5902 = vadd.f32 %v4276, %v5769
        %v5903 = vadd.f32 %v4277, %v5891
        %s5904 = scalar_lea.vmem %s7, 16
        %v5905 = vld [vmem:[%s5904] sm:$0xf]
        %v5906 = vld [vmem:[%s5904 + $0x4] sm:$0x1]
        %v5909 = vunpack.c.l.b16 %v5905
        %v5910 = vunpack.c.l.b16 %v5906
        %v5911 = vpack.c.b16 %v5910, %v5909
        %v5913 = vsel %vm2616, %v5911, 0
        %5915 = vmatprep.subr.bf16.mxu0 %v2599
        %5916 = vmatpush1.bf16.msra.mxu0 %v2598
        %5917 = vmatprep.subr.bf16.mxu0 %v2627
        %5918 = vmatpush1.bf16.msra.mxu0 %v2624
        %5919 = vmatprep.subr.bf16.mxu0 0
        %5920 = vmatpush1.bf16.msra.mxu0 0
        %5921 = vmatprep.subr.bf16.mxu0 0
        %5922 = vmatpush1.bf16.msra.mxu0 0
        %5923 = vmatprep.subr.bf16.mxu0 0
        %5924 = vmatpush1.bf16.msra.mxu0 0
        %5925 = vmatprep.subr.bf16.mxu0 0
        %5926 = vmatpush1.bf16.msra.mxu0 0
        %5927 = vmatprep.subr.bf16.mxu0 0
        %5928 = vmatpush1.bf16.msra.mxu0 0
        %5929 = vmatprep.subr.bf16.mxu0 0
        %5930 = vmatpush1.bf16.msra.mxu0 0
        %5931 = vmatprep.subr.bf16.mxu0 0
        %5932 = vmatpush1.bf16.msra.mxu0 0
        %5933 = vmatprep.subr.bf16.mxu0 0
        %5934 = vmatpush1.bf16.msra.mxu0 0
        %5935 = vmatprep.subr.bf16.mxu0 0
        %5936 = vmatpush1.bf16.msra.mxu0 0
        %5937 = vmatprep.subr.bf16.mxu0 0
        %5938 = vmatpush1.bf16.msra.mxu0 0
        %5939 = vmatprep.subr.bf16.mxu0 0
        %5940 = vmatpush1.bf16.msra.mxu0 0
        %5941 = vmatprep.subr.bf16.mxu0 0
        %5942 = vmatpush1.bf16.msra.mxu0 0
        %5943 = vmatprep.subr.bf16.mxu0 0
        %5944 = vmatpush1.bf16.msra.mxu0 0
        %5945 = vmatprep.subr.bf16.mxu0 0
        %5946 = vmatpush1.bf16.msra.mxu0 0
        %5947 = vmatprep.mubr.bf16.mxu0 0
        %5948 = vmatmul.mubr.bf16.gmra.mrb[0].mxu0 %v5913
        %v5949 = vpop.f32.mrb[0].mxu0
        %v5950 = vadd.f32 0.0, %v5949
        %v5951 = vpop.f32.mrb[0].mxu0
        %v5952 = vadd.f32 0.0, %v5951
        %v5953 = vpop.f32.mrb[0].mxu0
        %v5954 = vadd.f32 0.0, %v5953
        %v5955 = vpop.f32.mrb[0].mxu0
        %v5956 = vadd.f32 0.0, %v5955
        %5957 = vdwg.mxu0
        %5958 = vmatprep.subr.bf16.mxu0 %v2601
        %5959 = vmatpush1.bf16.msra.mxu0 %v2600
        %5960 = vmatprep.subr.bf16.mxu0 %v2633
        %5961 = vmatpush1.bf16.msra.mxu0 %v2630
        %5962 = vmatprep.subr.bf16.mxu0 0
        %5963 = vmatpush1.bf16.msra.mxu0 0
        %5964 = vmatprep.subr.bf16.mxu0 0
        %5965 = vmatpush1.bf16.msra.mxu0 0
        %5966 = vmatprep.subr.bf16.mxu0 0
        %5967 = vmatpush1.bf16.msra.mxu0 0
        %5968 = vmatprep.subr.bf16.mxu0 0
        %5969 = vmatpush1.bf16.msra.mxu0 0
        %5970 = vmatprep.subr.bf16.mxu0 0
        %5971 = vmatpush1.bf16.msra.mxu0 0
        %5972 = vmatprep.subr.bf16.mxu0 0
        %5973 = vmatpush1.bf16.msra.mxu0 0
        %5974 = vmatprep.subr.bf16.mxu0 0
        %5975 = vmatpush1.bf16.msra.mxu0 0
        %5976 = vmatprep.subr.bf16.mxu0 0
        %5977 = vmatpush1.bf16.msra.mxu0 0
        %5978 = vmatprep.subr.bf16.mxu0 0
        %5979 = vmatpush1.bf16.msra.mxu0 0
        %5980 = vmatprep.subr.bf16.mxu0 0
        %5981 = vmatpush1.bf16.msra.mxu0 0
        %5982 = vmatprep.subr.bf16.mxu0 0
        %5983 = vmatpush1.bf16.msra.mxu0 0
        %5984 = vmatprep.subr.bf16.mxu0 0
        %5985 = vmatpush1.bf16.msra.mxu0 0
        %5986 = vmatprep.subr.bf16.mxu0 0
        %5987 = vmatpush1.bf16.msra.mxu0 0
        %5988 = vmatprep.subr.bf16.mxu0 0
        %5989 = vmatpush1.bf16.msra.mxu0 0
        %5990 = vmatprep.mubr.bf16.mxu0 0
        %5991 = vmatmul.mubr.bf16.gmra.mrb[0].mxu0 %v5913
        %v5992 = vpop.f32.mrb[0].mxu0
        %v5993 = vadd.f32 0.0, %v5992
        %v5994 = vpop.f32.mrb[0].mxu0
        %v5995 = vadd.f32 0.0, %v5994
        %v5996 = vpop.f32.mrb[0].mxu0
        %v5997 = vadd.f32 0.0, %v5996
        %v5998 = vpop.f32.mrb[0].mxu0
        %v5999 = vadd.f32 0.0, %v5998
        %6000 = vdwg.mxu0
        %6001 = vmatprep.subr.bf16.mxu0 0
        %6002 = vmatpush1.bf16.msra.mxu0 %v2602
        %6003 = vmatprep.subr.bf16.mxu0 0
        %6004 = vmatpush1.bf16.msra.mxu0 %v2636
        %6005 = vmatprep.subr.bf16.mxu0 0
        %6006 = vmatpush1.bf16.msra.mxu0 0
        %6007 = vmatprep.subr.bf16.mxu0 0
        %6008 = vmatpush1.bf16.msra.mxu0 0
        %6009 = vmatprep.subr.bf16.mxu0 0
        %6010 = vmatpush1.bf16.msra.mxu0 0
        %6011 = vmatprep.subr.bf16.mxu0 0
        %6012 = vmatpush1.bf16.msra.mxu0 0
        %6013 = vmatprep.subr.bf16.mxu0 0
        %6014 = vmatpush1.bf16.msra.mxu0 0
        %6015 = vmatprep.subr.bf16.mxu0 0
        %6016 = vmatpush1.bf16.msra.mxu0 0
        %6017 = vmatprep.subr.bf16.mxu0 0
        %6018 = vmatpush1.bf16.msra.mxu0 0
        %6019 = vmatprep.subr.bf16.mxu0 0
        %6020 = vmatpush1.bf16.msra.mxu0 0
        %6021 = vmatprep.subr.bf16.mxu0 0
        %6022 = vmatpush1.bf16.msra.mxu0 0
        %6023 = vmatprep.subr.bf16.mxu0 0
        %6024 = vmatpush1.bf16.msra.mxu0 0
        %6025 = vmatprep.subr.bf16.mxu0 0
        %6026 = vmatpush1.bf16.msra.mxu0 0
        %6027 = vmatprep.subr.bf16.mxu0 0
        %6028 = vmatpush1.bf16.msra.mxu0 0
        %6029 = vmatprep.subr.bf16.mxu0 0
        %6030 = vmatpush1.bf16.msra.mxu0 0
        %6031 = vmatprep.subr.bf16.mxu0 0
        %6032 = vmatpush1.bf16.msra.mxu0 0
        %6033 = vmatprep.mubr.bf16.mxu0 0
        %6034 = vmatmul.mubr.bf16.gmra.mrb[0].mxu0 %v5913
        %v6035 = vpop.f32.mrb[0].mxu0
        %v6036 = vadd.f32 0.0, %v6035
        %v6037 = vpop.f32.mrb[0].mxu0
        %v6038 = vpop.f32.mrb[0].mxu0
        %v6039 = vadd.f32 0.0, %v6038
        %v6040 = vpop.f32.mrb[0].mxu0
        %6041 = vdwg.mxu0
        %v6042 = vpack.c.bf16 %v5954, %v5950
        %v6043 = vpack.c.bf16 %v5956, %v5952
        %v6044 = vpack.c.bf16 %v5997, %v5993
        %v6045 = vpack.c.bf16 %v5999, %v5995
        %v6046 = vpack.c.bf16 %v6039, %v6036
        %s6047 = scalar_lea.vmem %s8, 2720
        %v6048 = vld [vmem:[%s6047] sm:$0xff]
        %v6049 = vld [vmem:[%s6047 + $0x8] sm:$0xff]
        %v6050 = vld [vmem:[%s6047 + $0x10] sm:$0xf]
        %v6051 = vld [vmem:[%s6047 + $0x14] sm:$0xff]
        %v6052 = vld [vmem:[%s6047 + $0x1c] sm:$0xff]
        %v6053 = vld [vmem:[%s6047 + $0x24] sm:$0xf]
        %v6054 = vld [vmem:[%s6047 + $0x28] sm:$0xff]
        %v6055 = vld [vmem:[%s6047 + $0x30] sm:$0xff]
        %v6056 = vld [vmem:[%s6047 + $0x38] sm:$0xf]
        %v6057 = vld [vmem:[%s6047 + $0x3c] sm:$0xff]
        %v6058 = vld [vmem:[%s6047 + $0x44] sm:$0xff]
        %v6059 = vld [vmem:[%s6047 + $0x4c] sm:$0xf]
        %v6060 = vld [vmem:[%s6047 + $0x50] sm:$0xff]
        %v6061 = vld [vmem:[%s6047 + $0x58] sm:$0xff]
        %v6062 = vld [vmem:[%s6047 + $0x60] sm:$0xf]
        %v6063 = vld [vmem:[%s6047 + $0x64] sm:$0xff]
        %v6064 = vld [vmem:[%s6047 + $0x6c] sm:$0xff]
        %v6065 = vld [vmem:[%s6047 + $0x74] sm:$0xf]
        %v6066 = vld [vmem:[%s6047 + $0x78] sm:$0xff]
        %v6067 = vld [vmem:[%s6047 + $0x80] sm:$0xff]
        %v6068 = vld [vmem:[%s6047 + $0x88] sm:$0xf]
        %v6069 = vld [vmem:[%s6047 + $0x8c] sm:$0xff]
        %v6070 = vld [vmem:[%s6047 + $0x94] sm:$0xff]
        %v6071 = vld [vmem:[%s6047 + $0x9c] sm:$0xf]
        %v6072 = vld [vmem:[%s6047 + $0xa0] sm:$0xff]
        %v6073 = vld [vmem:[%s6047 + $0xa8] sm:$0xff]
        %v6074 = vld [vmem:[%s6047 + $0xb0] sm:$0xf]
        %v6075 = vld [vmem:[%s6047 + $0xb4] sm:$0xff]
        %v6076 = vld [vmem:[%s6047 + $0xbc] sm:$0xff]
        %v6077 = vld [vmem:[%s6047 + $0xc4] sm:$0xf]
        %v6078 = vld [vmem:[%s6047 + $0xc8] sm:$0xff]
        %v6079 = vld [vmem:[%s6047 + $0xd0] sm:$0xff]
        %v6080 = vld [vmem:[%s6047 + $0xd8] sm:$0xf]
        %v6081 = vld [vmem:[%s6047 + $0xdc] sm:$0xff]
        %v6082 = vld [vmem:[%s6047 + $0xe4] sm:$0xff]
        %v6083 = vld [vmem:[%s6047 + $0xec] sm:$0xf]
        %v6084 = vld [vmem:[%s6047 + $0xf0] sm:$0xff]
        %v6085 = vld [vmem:[%s6047 + $0xf8] sm:$0xff]
        %v6086 = vld [vmem:[%s6047 + $0x100] sm:$0xf]
        %v6087 = vld [vmem:[%s6047 + $0x104] sm:$0xff]
        %v6088 = vld [vmem:[%s6047 + $0x10c] sm:$0xff]
        %v6089 = vld [vmem:[%s6047 + $0x114] sm:$0xf]
        %v6090 = vld [vmem:[%s6047 + $0x118] sm:$0xff]
        %v6091 = vld [vmem:[%s6047 + $0x120] sm:$0xff]
        %v6092 = vld [vmem:[%s6047 + $0x128] sm:$0xf]
        %v6093 = vld [vmem:[%s6047 + $0x12c] sm:$0xff]
        %v6094 = vld [vmem:[%s6047 + $0x134] sm:$0xff]
        %v6095 = vld [vmem:[%s6047 + $0x13c] sm:$0xf]
        %v6096 = vld [vmem:[%s6047 + $0x140] sm:$0xff]
        %v6097 = vld [vmem:[%s6047 + $0x148] sm:$0xff]
        %v6098 = vld [vmem:[%s6047 + $0x150] sm:$0xf]
        %v6099 = vld [vmem:[%s6047 + $0x154] sm:$0xff]
        %v6100 = vld [vmem:[%s6047 + $0x15c] sm:$0xff]
        %v6101 = vld [vmem:[%s6047 + $0x164] sm:$0xf]
        %v6102 = vld [vmem:[%s6047 + $0x168] sm:$0xff]
        %v6103 = vld [vmem:[%s6047 + $0x170] sm:$0xff]
        %v6104 = vld [vmem:[%s6047 + $0x178] sm:$0xf]
        %v6105 = vld [vmem:[%s6047 + $0x17c] sm:$0xff]
        %v6106 = vld [vmem:[%s6047 + $0x184] sm:$0xff]
        %v6107 = vld [vmem:[%s6047 + $0x18c] sm:$0xf]
        %v6108 = vld [vmem:[%s6047 + $0x190] sm:$0xff]
        %v6109 = vld [vmem:[%s6047 + $0x198] sm:$0xff]
        %v6110 = vld [vmem:[%s6047 + $0x1a0] sm:$0xf]
        %v6111 = vld [vmem:[%s6047 + $0x1a4] sm:$0xff]
        %v6112 = vld [vmem:[%s6047 + $0x1ac] sm:$0xff]
        %v6113 = vld [vmem:[%s6047 + $0x1b4] sm:$0xf]
        %v6114 = vld [vmem:[%s6047 + $0x1b8] sm:$0xff]
        %v6115 = vld [vmem:[%s6047 + $0x1c0] sm:$0xff]
        %v6116 = vld [vmem:[%s6047 + $0x1c8] sm:$0xf]
        %v6117 = vld [vmem:[%s6047 + $0x1cc] sm:$0xff]
        %v6118 = vld [vmem:[%s6047 + $0x1d4] sm:$0xff]
        %v6119 = vld [vmem:[%s6047 + $0x1dc] sm:$0xf]
        %v6120 = vld [vmem:[%s6047 + $0x1e0] sm:$0xff]
        %v6121 = vld [vmem:[%s6047 + $0x1e8] sm:$0xff]
        %v6122 = vld [vmem:[%s6047 + $0x1f0] sm:$0xf]
        %v6123 = vld [vmem:[%s6047 + $0x1f4] sm:$0xff]
        %v6124 = vld [vmem:[%s6047 + $0x1fc] sm:$0xff]
        %v6125 = vld [vmem:[%s6047 + $0x204] sm:$0xf]
        %v6126 = vld [vmem:[%s6047 + $0x208] sm:$0xff]
        %v6127 = vld [vmem:[%s6047 + $0x210] sm:$0xff]
        %v6128 = vld [vmem:[%s6047 + $0x218] sm:$0xf]
        %v6129 = vld [vmem:[%s6047 + $0x21c] sm:$0xff]
        %v6130 = vld [vmem:[%s6047 + $0x224] sm:$0xff]
        %v6131 = vld [vmem:[%s6047 + $0x22c] sm:$0xf]
        %v6132 = vld [vmem:[%s6047 + $0x230] sm:$0xff]
        %v6133 = vld [vmem:[%s6047 + $0x238] sm:$0xff]
        %v6134 = vld [vmem:[%s6047 + $0x240] sm:$0xf]
        %v6135 = vld [vmem:[%s6047 + $0x244] sm:$0xff]
        %v6136 = vld [vmem:[%s6047 + $0x24c] sm:$0xff]
        %v6137 = vld [vmem:[%s6047 + $0x254] sm:$0xf]
        %v6138 = vld [vmem:[%s6047 + $0x258] sm:$0xff]
        %v6139 = vld [vmem:[%s6047 + $0x260] sm:$0xff]
        %v6140 = vld [vmem:[%s6047 + $0x268] sm:$0xf]
        %v6141 = vld [vmem:[%s6047 + $0x26c] sm:$0xff]
        %v6142 = vld [vmem:[%s6047 + $0x274] sm:$0xff]
        %v6143 = vld [vmem:[%s6047 + $0x27c] sm:$0xf]
        %v6144 = vld [vmem:[%s6047 + $0x280] sm:$0xff]
        %v6145 = vld [vmem:[%s6047 + $0x288] sm:$0xff]
        %v6146 = vld [vmem:[%s6047 + $0x290] sm:$0xf]
        %v6147 = vld [vmem:[%s6047 + $0x294] sm:$0xff]
        %v6148 = vld [vmem:[%s6047 + $0x29c] sm:$0xff]
        %v6149 = vld [vmem:[%s6047 + $0x2a4] sm:$0xf]
        %v6150 = vld [vmem:[%s6047 + $0x2a8] sm:$0xff]
        %v6151 = vld [vmem:[%s6047 + $0x2b0] sm:$0xff]
        %v6152 = vld [vmem:[%s6047 + $0x2b8] sm:$0xf]
        %v6153 = vld [vmem:[%s6047 + $0x2bc] sm:$0xff]
        %v6154 = vld [vmem:[%s6047 + $0x2c4] sm:$0xff]
        %v6155 = vld [vmem:[%s6047 + $0x2cc] sm:$0xf]
        %v6156 = vld [vmem:[%s6047 + $0x2d0] sm:$0xff]
        %v6157 = vld [vmem:[%s6047 + $0x2d8] sm:$0xff]
        %v6158 = vld [vmem:[%s6047 + $0x2e0] sm:$0xf]
        %v6159 = vld [vmem:[%s6047 + $0x2e4] sm:$0xff]
        %v6160 = vld [vmem:[%s6047 + $0x2ec] sm:$0xff]
        %v6161 = vld [vmem:[%s6047 + $0x2f4] sm:$0xf]
        %v6162 = vld [vmem:[%s6047 + $0x2f8] sm:$0xff]
        %v6163 = vld [vmem:[%s6047 + $0x300] sm:$0xff]
        %v6164 = vld [vmem:[%s6047 + $0x308] sm:$0xf]
        %v6165 = vld [vmem:[%s6047 + $0x30c] sm:$0xff]
        %v6166 = vld [vmem:[%s6047 + $0x314] sm:$0xff]
        %v6167 = vld [vmem:[%s6047 + $0x31c] sm:$0xf]
        %v6168 = vld [vmem:[%s6047 + $0x320] sm:$0xff]
        %v6169 = vld [vmem:[%s6047 + $0x328] sm:$0xff]
        %v6170 = vld [vmem:[%s6047 + $0x330] sm:$0xf]
        %v6171 = vld [vmem:[%s6047 + $0x334] sm:$0xff]
        %v6172 = vld [vmem:[%s6047 + $0x33c] sm:$0xff]
        %v6173 = vld [vmem:[%s6047 + $0x344] sm:$0xf]
        %v6174 = vld [vmem:[%s6047 + $0x348] sm:$0xff]
        %v6175 = vld [vmem:[%s6047 + $0x350] sm:$0xff]
        %v6176 = vld [vmem:[%s6047 + $0x358] sm:$0xf]
        %v6177 = vld [vmem:[%s6047 + $0x35c] sm:$0xff]
        %v6178 = vld [vmem:[%s6047 + $0x364] sm:$0xff]
        %v6179 = vld [vmem:[%s6047 + $0x36c] sm:$0xf]
        %v6180 = vld [vmem:[%s6047 + $0x370] sm:$0xff]
        %v6181 = vld [vmem:[%s6047 + $0x378] sm:$0xff]
        %v6182 = vld [vmem:[%s6047 + $0x380] sm:$0xf]
        %v6183 = vld [vmem:[%s6047 + $0x384] sm:$0xff]
        %v6184 = vld [vmem:[%s6047 + $0x38c] sm:$0xff]
        %v6185 = vld [vmem:[%s6047 + $0x394] sm:$0xf]
        %v6186 = vld [vmem:[%s6047 + $0x398] sm:$0xff]
        %v6187 = vld [vmem:[%s6047 + $0x3a0] sm:$0xff]
        %v6188 = vld [vmem:[%s6047 + $0x3a8] sm:$0xf]
        %v6189 = vld [vmem:[%s6047 + $0x3ac] sm:$0xff]
        %v6190 = vld [vmem:[%s6047 + $0x3b4] sm:$0xff]
        %v6191 = vld [vmem:[%s6047 + $0x3bc] sm:$0xf]
        %v6192 = vld [vmem:[%s6047 + $0x3c0] sm:$0xff]
        %v6193 = vld [vmem:[%s6047 + $0x3c8] sm:$0xff]
        %v6194 = vld [vmem:[%s6047 + $0x3d0] sm:$0xf]
        %v6195 = vld [vmem:[%s6047 + $0x3d4] sm:$0xff]
        %v6196 = vld [vmem:[%s6047 + $0x3dc] sm:$0xff]
        %v6197 = vld [vmem:[%s6047 + $0x3e4] sm:$0xf]
        %v6198 = vld [vmem:[%s6047 + $0x3e8] sm:$0xff]
        %v6199 = vld [vmem:[%s6047 + $0x3f0] sm:$0xff]
        %v6200 = vld [vmem:[%s6047 + $0x3f8] sm:$0xf]
        %v6201 = vld [vmem:[%s6047 + $0x3fc] sm:$0xff]
        %v6202 = vld [vmem:[%s6047 + $0x404] sm:$0xff]
        %v6203 = vld [vmem:[%s6047 + $0x40c] sm:$0xf]
        %v6204 = vld [vmem:[%s6047 + $0x410] sm:$0xff]
        %v6205 = vld [vmem:[%s6047 + $0x418] sm:$0xff]
        %v6206 = vld [vmem:[%s6047 + $0x420] sm:$0xf]
        %v6207 = vld [vmem:[%s6047 + $0x424] sm:$0xff]
        %v6208 = vld [vmem:[%s6047 + $0x42c] sm:$0xff]
        %v6209 = vld [vmem:[%s6047 + $0x434] sm:$0xf]
        %v6210 = vld [vmem:[%s6047 + $0x438] sm:$0xff]
        %v6211 = vld [vmem:[%s6047 + $0x440] sm:$0xff]
        %v6212 = vld [vmem:[%s6047 + $0x448] sm:$0xf]
        %v6213 = vld [vmem:[%s6047 + $0x44c] sm:$0xff]
        %v6214 = vld [vmem:[%s6047 + $0x454] sm:$0xff]
        %v6215 = vld [vmem:[%s6047 + $0x45c] sm:$0xf]
        %v6216 = vld [vmem:[%s6047 + $0x460] sm:$0xff]
        %v6217 = vld [vmem:[%s6047 + $0x468] sm:$0xff]
        %v6218 = vld [vmem:[%s6047 + $0x470] sm:$0xf]
        %v6219 = vld [vmem:[%s6047 + $0x474] sm:$0xff]
        %v6220 = vld [vmem:[%s6047 + $0x47c] sm:$0xff]
        %v6221 = vld [vmem:[%s6047 + $0x484] sm:$0xf]
        %v6222 = vld [vmem:[%s6047 + $0x488] sm:$0xff]
        %v6223 = vld [vmem:[%s6047 + $0x490] sm:$0xff]
        %v6224 = vld [vmem:[%s6047 + $0x498] sm:$0xf]
        %v6225 = vld [vmem:[%s6047 + $0x49c] sm:$0xff]
        %v6226 = vld [vmem:[%s6047 + $0x4a4] sm:$0xff]
        %v6227 = vld [vmem:[%s6047 + $0x4ac] sm:$0xf]
        %v6228 = vld [vmem:[%s6047 + $0x4b0] sm:$0xff]
        %v6229 = vld [vmem:[%s6047 + $0x4b8] sm:$0xff]
        %v6230 = vld [vmem:[%s6047 + $0x4c0] sm:$0xf]
        %v6231 = vld [vmem:[%s6047 + $0x4c4] sm:$0xff]
        %v6232 = vld [vmem:[%s6047 + $0x4cc] sm:$0xff]
        %v6233 = vld [vmem:[%s6047 + $0x4d4] sm:$0xf]
        %v6234 = vld [vmem:[%s6047 + $0x4d8] sm:$0xff]
        %v6235 = vld [vmem:[%s6047 + $0x4e0] sm:$0xff]
        %v6236 = vld [vmem:[%s6047 + $0x4e8] sm:$0xf]
        %v6237 = vld [vmem:[%s6047 + $0x4ec] sm:$0xff]
        %v6238 = vld [vmem:[%s6047 + $0x4f4] sm:$0xff]
        %v6239 = vld [vmem:[%s6047 + $0x4fc] sm:$0xf]
        %v6240 = vld [vmem:[%s6047 + $0x500] sm:$0xff]
        %v6241 = vld [vmem:[%s6047 + $0x508] sm:$0xff]
        %v6242 = vld [vmem:[%s6047 + $0x510] sm:$0xf]
        %v6243 = vld [vmem:[%s6047 + $0x514] sm:$0xff]
        %v6244 = vld [vmem:[%s6047 + $0x51c] sm:$0xff]
        %v6245 = vld [vmem:[%s6047 + $0x524] sm:$0xf]
        %v6246 = vld [vmem:[%s6047 + $0x528] sm:$0xff]
        %v6247 = vld [vmem:[%s6047 + $0x530] sm:$0xff]
        %v6248 = vld [vmem:[%s6047 + $0x538] sm:$0xf]
        %v6249 = vld [vmem:[%s6047 + $0x53c] sm:$0xff]
        %v6250 = vld [vmem:[%s6047 + $0x544] sm:$0xff]
        %v6251 = vld [vmem:[%s6047 + $0x54c] sm:$0xf]
        %v6456 = vunpack.c.l.b16 %v6048
        %v6457 = vunpack.c.h.b16 %v6048
        %v6458 = vunpack.c.l.b16 %v6049
        %v6459 = vunpack.c.h.b16 %v6049
        %v6460 = vunpack.c.l.b16 %v6050
        %v6461 = vunpack.c.l.b16 %v6051
        %v6462 = vunpack.c.h.b16 %v6051
        %v6463 = vunpack.c.l.b16 %v6052
        %v6464 = vunpack.c.h.b16 %v6052
        %v6465 = vunpack.c.l.b16 %v6053
        %v6466 = vunpack.c.l.b16 %v6054
        %v6467 = vunpack.c.h.b16 %v6054
        %v6468 = vunpack.c.l.b16 %v6055
        %v6469 = vunpack.c.h.b16 %v6055
        %v6470 = vunpack.c.l.b16 %v6056
        %v6471 = vunpack.c.l.b16 %v6057
        %v6472 = vunpack.c.h.b16 %v6057
        %v6473 = vunpack.c.l.b16 %v6058
        %v6474 = vunpack.c.h.b16 %v6058
        %v6475 = vunpack.c.l.b16 %v6059
        %v6476 = vunpack.c.l.b16 %v6060
        %v6477 = vunpack.c.h.b16 %v6060
        %v6478 = vunpack.c.l.b16 %v6061
        %v6479 = vunpack.c.h.b16 %v6061
        %v6480 = vunpack.c.l.b16 %v6062
        %v6481 = vunpack.c.l.b16 %v6063
        %v6482 = vunpack.c.h.b16 %v6063
        %v6483 = vunpack.c.l.b16 %v6064
        %v6484 = vunpack.c.h.b16 %v6064
        %v6485 = vunpack.c.l.b16 %v6065
        %v6486 = vunpack.c.l.b16 %v6066
        %v6487 = vunpack.c.h.b16 %v6066
        %v6488 = vunpack.c.l.b16 %v6067
        %v6489 = vunpack.c.h.b16 %v6067
        %v6490 = vunpack.c.l.b16 %v6068
        %v6491 = vunpack.c.l.b16 %v6069
        %v6492 = vunpack.c.h.b16 %v6069
        %v6493 = vunpack.c.l.b16 %v6070
        %v6494 = vunpack.c.h.b16 %v6070
        %v6495 = vunpack.c.l.b16 %v6071
        %v6496 = vunpack.c.l.b16 %v6072
        %v6497 = vunpack.c.h.b16 %v6072
        %v6498 = vunpack.c.l.b16 %v6073
        %v6499 = vunpack.c.h.b16 %v6073
        %v6500 = vunpack.c.l.b16 %v6074
        %v6501 = vunpack.c.l.b16 %v6075
        %v6502 = vunpack.c.h.b16 %v6075
        %v6503 = vunpack.c.l.b16 %v6076
        %v6504 = vunpack.c.h.b16 %v6076
        %v6505 = vunpack.c.l.b16 %v6077
        %v6506 = vunpack.c.l.b16 %v6078
        %v6507 = vunpack.c.h.b16 %v6078
        %v6508 = vunpack.c.l.b16 %v6079
        %v6509 = vunpack.c.h.b16 %v6079
        %v6510 = vunpack.c.l.b16 %v6080
        %v6511 = vunpack.c.l.b16 %v6081
        %v6512 = vunpack.c.h.b16 %v6081
        %v6513 = vunpack.c.l.b16 %v6082
        %v6514 = vunpack.c.h.b16 %v6082
        %v6515 = vunpack.c.l.b16 %v6083
        %v6516 = vunpack.c.l.b16 %v6084
        %v6517 = vunpack.c.h.b16 %v6084
        %v6518 = vunpack.c.l.b16 %v6085
        %v6519 = vunpack.c.h.b16 %v6085
        %v6520 = vunpack.c.l.b16 %v6086
        %v6521 = vunpack.c.l.b16 %v6087
        %v6522 = vunpack.c.h.b16 %v6087
        %v6523 = vunpack.c.l.b16 %v6088
        %v6524 = vunpack.c.h.b16 %v6088
        %v6525 = vunpack.c.l.b16 %v6089
        %v6526 = vunpack.c.l.b16 %v6090
        %v6527 = vunpack.c.h.b16 %v6090
        %v6528 = vunpack.c.l.b16 %v6091
        %v6529 = vunpack.c.h.b16 %v6091
        %v6530 = vunpack.c.l.b16 %v6092
        %v6531 = vunpack.c.l.b16 %v6093
        %v6532 = vunpack.c.h.b16 %v6093
        %v6533 = vunpack.c.l.b16 %v6094
        %v6534 = vunpack.c.h.b16 %v6094
        %v6535 = vunpack.c.l.b16 %v6095
        %v6536 = vunpack.c.l.b16 %v6096
        %v6537 = vunpack.c.h.b16 %v6096
        %v6538 = vunpack.c.l.b16 %v6097
        %v6539 = vunpack.c.h.b16 %v6097
        %v6540 = vunpack.c.l.b16 %v6098
        %v6541 = vunpack.c.l.b16 %v6099
        %v6542 = vunpack.c.h.b16 %v6099
        %v6543 = vunpack.c.l.b16 %v6100
        %v6544 = vunpack.c.h.b16 %v6100
        %v6545 = vunpack.c.l.b16 %v6101
        %v6546 = vunpack.c.l.b16 %v6102
        %v6547 = vunpack.c.h.b16 %v6102
        %v6548 = vunpack.c.l.b16 %v6103
        %v6549 = vunpack.c.h.b16 %v6103
        %v6550 = vunpack.c.l.b16 %v6104
        %v6551 = vunpack.c.l.b16 %v6105
        %v6552 = vunpack.c.h.b16 %v6105
        %v6553 = vunpack.c.l.b16 %v6106
        %v6554 = vunpack.c.h.b16 %v6106
        %v6555 = vunpack.c.l.b16 %v6107
        %v6556 = vunpack.c.l.b16 %v6108
        %v6557 = vunpack.c.h.b16 %v6108
        %v6558 = vunpack.c.l.b16 %v6109
        %v6559 = vunpack.c.h.b16 %v6109
        %v6560 = vunpack.c.l.b16 %v6110
        %v6561 = vunpack.c.l.b16 %v6111
        %v6562 = vunpack.c.h.b16 %v6111
        %v6563 = vunpack.c.l.b16 %v6112
        %v6564 = vunpack.c.h.b16 %v6112
        %v6565 = vunpack.c.l.b16 %v6113
        %v6566 = vunpack.c.l.b16 %v6114
        %v6567 = vunpack.c.h.b16 %v6114
        %v6568 = vunpack.c.l.b16 %v6115
        %v6569 = vunpack.c.h.b16 %v6115
        %v6570 = vunpack.c.l.b16 %v6116
        %v6571 = vunpack.c.l.b16 %v6117
        %v6572 = vunpack.c.h.b16 %v6117
        %v6573 = vunpack.c.l.b16 %v6118
        %v6574 = vunpack.c.h.b16 %v6118
        %v6575 = vunpack.c.l.b16 %v6119
        %v6576 = vunpack.c.l.b16 %v6120
        %v6577 = vunpack.c.h.b16 %v6120
        %v6578 = vunpack.c.l.b16 %v6121
        %v6579 = vunpack.c.h.b16 %v6121
        %v6580 = vunpack.c.l.b16 %v6122
        %v6581 = vunpack.c.l.b16 %v6123
        %v6582 = vunpack.c.h.b16 %v6123
        %v6583 = vunpack.c.l.b16 %v6124
        %v6584 = vunpack.c.h.b16 %v6124
        %v6585 = vunpack.c.l.b16 %v6125
        %v6586 = vunpack.c.l.b16 %v6126
        %v6587 = vunpack.c.h.b16 %v6126
        %v6588 = vunpack.c.l.b16 %v6127
        %v6589 = vunpack.c.h.b16 %v6127
        %v6590 = vunpack.c.l.b16 %v6128
        %v6591 = vunpack.c.l.b16 %v6129
        %v6592 = vunpack.c.h.b16 %v6129
        %v6593 = vunpack.c.l.b16 %v6130
        %v6594 = vunpack.c.h.b16 %v6130
        %v6595 = vunpack.c.l.b16 %v6131
        %v6596 = vunpack.c.l.b16 %v6132
        %v6597 = vunpack.c.h.b16 %v6132
        %v6598 = vunpack.c.l.b16 %v6133
        %v6599 = vunpack.c.h.b16 %v6133
        %v6600 = vunpack.c.l.b16 %v6134
        %v6601 = vunpack.c.l.b16 %v6135
        %v6602 = vunpack.c.h.b16 %v6135
        %v6603 = vunpack.c.l.b16 %v6136
        %v6604 = vunpack.c.h.b16 %v6136
        %v6605 = vunpack.c.l.b16 %v6137
        %v6606 = vunpack.c.l.b16 %v6138
        %v6607 = vunpack.c.h.b16 %v6138
        %v6608 = vunpack.c.l.b16 %v6139
        %v6609 = vunpack.c.h.b16 %v6139
        %v6610 = vunpack.c.l.b16 %v6140
        %v6611 = vunpack.c.l.b16 %v6141
        %v6612 = vunpack.c.h.b16 %v6141
        %v6613 = vunpack.c.l.b16 %v6142
        %v6614 = vunpack.c.h.b16 %v6142
        %v6615 = vunpack.c.l.b16 %v6143
        %v6616 = vunpack.c.l.b16 %v6144
        %v6617 = vunpack.c.h.b16 %v6144
        %v6618 = vunpack.c.l.b16 %v6145
        %v6619 = vunpack.c.h.b16 %v6145
        %v6620 = vunpack.c.l.b16 %v6146
        %v6621 = vunpack.c.l.b16 %v6147
        %v6622 = vunpack.c.h.b16 %v6147
        %v6623 = vunpack.c.l.b16 %v6148
        %v6624 = vunpack.c.h.b16 %v6148
        %v6625 = vunpack.c.l.b16 %v6149
        %v6626 = vunpack.c.l.b16 %v6150
        %v6627 = vunpack.c.h.b16 %v6150
        %v6628 = vunpack.c.l.b16 %v6151
        %v6629 = vunpack.c.h.b16 %v6151
        %v6630 = vunpack.c.l.b16 %v6152
        %v6631 = vunpack.c.l.b16 %v6153
        %v6632 = vunpack.c.h.b16 %v6153
        %v6633 = vunpack.c.l.b16 %v6154
        %v6634 = vunpack.c.h.b16 %v6154
        %v6635 = vunpack.c.l.b16 %v6155
        %v6636 = vunpack.c.l.b16 %v6156
        %v6637 = vunpack.c.h.b16 %v6156
        %v6638 = vunpack.c.l.b16 %v6157
        %v6639 = vunpack.c.h.b16 %v6157
        %v6640 = vunpack.c.l.b16 %v6158
        %v6641 = vunpack.c.l.b16 %v6159
        %v6642 = vunpack.c.h.b16 %v6159
        %v6643 = vunpack.c.l.b16 %v6160
        %v6644 = vunpack.c.h.b16 %v6160
        %v6645 = vunpack.c.l.b16 %v6161
        %v6646 = vunpack.c.l.b16 %v6162
        %v6647 = vunpack.c.h.b16 %v6162
        %v6648 = vunpack.c.l.b16 %v6163
        %v6649 = vunpack.c.h.b16 %v6163
        %v6650 = vunpack.c.l.b16 %v6164
        %v6651 = vunpack.c.l.b16 %v6165
        %v6652 = vunpack.c.h.b16 %v6165
        %v6653 = vunpack.c.l.b16 %v6166
        %v6654 = vunpack.c.h.b16 %v6166
        %v6655 = vunpack.c.l.b16 %v6167
        %v6656 = vunpack.c.l.b16 %v6168
        %v6657 = vunpack.c.h.b16 %v6168
        %v6658 = vunpack.c.l.b16 %v6169
        %v6659 = vunpack.c.h.b16 %v6169
        %v6660 = vunpack.c.l.b16 %v6170
        %v6661 = vunpack.c.l.b16 %v6171
        %v6662 = vunpack.c.h.b16 %v6171
        %v6663 = vunpack.c.l.b16 %v6172
        %v6664 = vunpack.c.h.b16 %v6172
        %v6665 = vunpack.c.l.b16 %v6173
        %v6666 = vunpack.c.l.b16 %v6174
        %v6667 = vunpack.c.h.b16 %v6174
        %v6668 = vunpack.c.l.b16 %v6175
        %v6669 = vunpack.c.h.b16 %v6175
        %v6670 = vunpack.c.l.b16 %v6176
        %v6671 = vunpack.c.l.b16 %v6177
        %v6672 = vunpack.c.h.b16 %v6177
        %v6673 = vunpack.c.l.b16 %v6178
        %v6674 = vunpack.c.h.b16 %v6178
        %v6675 = vunpack.c.l.b16 %v6179
        %v6676 = vunpack.c.l.b16 %v6180
        %v6677 = vunpack.c.h.b16 %v6180
        %v6678 = vunpack.c.l.b16 %v6181
        %v6679 = vunpack.c.h.b16 %v6181
        %v6680 = vunpack.c.l.b16 %v6182
        %v6681 = vunpack.c.l.b16 %v6183
        %v6682 = vunpack.c.h.b16 %v6183
        %v6683 = vunpack.c.l.b16 %v6184
        %v6684 = vunpack.c.h.b16 %v6184
        %v6685 = vunpack.c.l.b16 %v6185
        %v6686 = vunpack.c.l.b16 %v6186
        %v6687 = vunpack.c.h.b16 %v6186
        %v6688 = vunpack.c.l.b16 %v6187
        %v6689 = vunpack.c.h.b16 %v6187
        %v6690 = vunpack.c.l.b16 %v6188
        %v6691 = vunpack.c.l.b16 %v6189
        %v6692 = vunpack.c.h.b16 %v6189
        %v6693 = vunpack.c.l.b16 %v6190
        %v6694 = vunpack.c.h.b16 %v6190
        %v6695 = vunpack.c.l.b16 %v6191
        %v6696 = vunpack.c.l.b16 %v6192
        %v6697 = vunpack.c.h.b16 %v6192
        %v6698 = vunpack.c.l.b16 %v6193
        %v6699 = vunpack.c.h.b16 %v6193
        %v6700 = vunpack.c.l.b16 %v6194
        %v6701 = vunpack.c.l.b16 %v6195
        %v6702 = vunpack.c.h.b16 %v6195
        %v6703 = vunpack.c.l.b16 %v6196
        %v6704 = vunpack.c.h.b16 %v6196
        %v6705 = vunpack.c.l.b16 %v6197
        %v6706 = vunpack.c.l.b16 %v6198
        %v6707 = vunpack.c.h.b16 %v6198
        %v6708 = vunpack.c.l.b16 %v6199
        %v6709 = vunpack.c.h.b16 %v6199
        %v6710 = vunpack.c.l.b16 %v6200
        %v6711 = vunpack.c.l.b16 %v6201
        %v6712 = vunpack.c.h.b16 %v6201
        %v6713 = vunpack.c.l.b16 %v6202
        %v6714 = vunpack.c.h.b16 %v6202
        %v6715 = vunpack.c.l.b16 %v6203
        %v6716 = vunpack.c.l.b16 %v6204
        %v6717 = vunpack.c.h.b16 %v6204
        %v6718 = vunpack.c.l.b16 %v6205
        %v6719 = vunpack.c.h.b16 %v6205
        %v6720 = vunpack.c.l.b16 %v6206
        %v6721 = vunpack.c.l.b16 %v6207
        %v6722 = vunpack.c.h.b16 %v6207
        %v6723 = vunpack.c.l.b16 %v6208
        %v6724 = vunpack.c.h.b16 %v6208
        %v6725 = vunpack.c.l.b16 %v6209
        %v6726 = vunpack.c.l.b16 %v6210
        %v6727 = vunpack.c.h.b16 %v6210
        %v6728 = vunpack.c.l.b16 %v6211
        %v6729 = vunpack.c.h.b16 %v6211
        %v6730 = vunpack.c.l.b16 %v6212
        %v6731 = vunpack.c.l.b16 %v6213
        %v6732 = vunpack.c.h.b16 %v6213
        %v6733 = vunpack.c.l.b16 %v6214
        %v6734 = vunpack.c.h.b16 %v6214
        %v6735 = vunpack.c.l.b16 %v6215
        %v6736 = vunpack.c.l.b16 %v6216
        %v6737 = vunpack.c.h.b16 %v6216
        %v6738 = vunpack.c.l.b16 %v6217
        %v6739 = vunpack.c.h.b16 %v6217
        %v6740 = vunpack.c.l.b16 %v6218
        %v6741 = vunpack.c.l.b16 %v6219
        %v6742 = vunpack.c.h.b16 %v6219
        %v6743 = vunpack.c.l.b16 %v6220
        %v6744 = vunpack.c.h.b16 %v6220
        %v6745 = vunpack.c.l.b16 %v6221
        %v6746 = vunpack.c.l.b16 %v6222
        %v6747 = vunpack.c.h.b16 %v6222
        %v6748 = vunpack.c.l.b16 %v6223
        %v6749 = vunpack.c.h.b16 %v6223
        %v6750 = vunpack.c.l.b16 %v6224
        %v6751 = vunpack.c.l.b16 %v6225
        %v6752 = vunpack.c.h.b16 %v6225
        %v6753 = vunpack.c.l.b16 %v6226
        %v6754 = vunpack.c.h.b16 %v6226
        %v6755 = vunpack.c.l.b16 %v6227
        %v6756 = vunpack.c.l.b16 %v6228
        %v6757 = vunpack.c.h.b16 %v6228
        %v6758 = vunpack.c.l.b16 %v6229
        %v6759 = vunpack.c.h.b16 %v6229
        %v6760 = vunpack.c.l.b16 %v6230
        %v6761 = vunpack.c.l.b16 %v6231
        %v6762 = vunpack.c.h.b16 %v6231
        %v6763 = vunpack.c.l.b16 %v6232
        %v6764 = vunpack.c.h.b16 %v6232
        %v6765 = vunpack.c.l.b16 %v6233
        %v6766 = vunpack.c.l.b16 %v6234
        %v6767 = vunpack.c.h.b16 %v6234
        %v6768 = vunpack.c.l.b16 %v6235
        %v6769 = vunpack.c.h.b16 %v6235
        %v6770 = vunpack.c.l.b16 %v6236
        %v6771 = vunpack.c.l.b16 %v6237
        %v6772 = vunpack.c.h.b16 %v6237
        %v6773 = vunpack.c.l.b16 %v6238
        %v6774 = vunpack.c.h.b16 %v6238
        %v6775 = vunpack.c.l.b16 %v6239
        %v6776 = vunpack.c.l.b16 %v6240
        %v6777 = vunpack.c.h.b16 %v6240
        %v6778 = vunpack.c.l.b16 %v6241
        %v6779 = vunpack.c.h.b16 %v6241
        %v6780 = vunpack.c.l.b16 %v6242
        %v6781 = vunpack.c.l.b16 %v6243
        %v6782 = vunpack.c.h.b16 %v6243
        %v6783 = vunpack.c.l.b16 %v6244
        %v6784 = vunpack.c.h.b16 %v6244
        %v6785 = vunpack.c.l.b16 %v6245
        %v6786 = vunpack.c.l.b16 %v6246
        %v6787 = vunpack.c.h.b16 %v6246
        %v6788 = vunpack.c.l.b16 %v6247
        %v6789 = vunpack.c.h.b16 %v6247
        %v6790 = vunpack.c.l.b16 %v6248
        %v6791 = vunpack.c.l.b16 %v6249
        %v6792 = vunpack.c.h.b16 %v6249
        %v6793 = vunpack.c.l.b16 %v6250
        %v6794 = vunpack.c.h.b16 %v6250
        %v6795 = vunpack.c.l.b16 %v6251
        %v6796 = vpack.c.b16 %v6461, %v6456
        %v6797 = vpack.c.b16 %v6462, %v6457
        %v6798 = vpack.c.b16 %v6463, %v6458
        %v6799 = vpack.c.b16 %v6464, %v6459
        %v6800 = vpack.c.b16 %v6465, %v6460
        %v6801 = vpack.c.b16 %v6471, %v6466
        %v6802 = vpack.c.b16 %v6472, %v6467
        %v6803 = vpack.c.b16 %v6473, %v6468
        %v6804 = vpack.c.b16 %v6474, %v6469
        %v6805 = vpack.c.b16 %v6475, %v6470
        %v6806 = vpack.c.b16 %v6481, %v6476
        %v6807 = vpack.c.b16 %v6482, %v6477
        %v6808 = vpack.c.b16 %v6483, %v6478
        %v6809 = vpack.c.b16 %v6484, %v6479
        %v6810 = vpack.c.b16 %v6485, %v6480
        %v6811 = vpack.c.b16 %v6491, %v6486
        %v6812 = vpack.c.b16 %v6492, %v6487
        %v6813 = vpack.c.b16 %v6493, %v6488
        %v6814 = vpack.c.b16 %v6494, %v6489
        %v6815 = vpack.c.b16 %v6495, %v6490
        %v6816 = vpack.c.b16 %v6501, %v6496
        %v6817 = vpack.c.b16 %v6502, %v6497
        %v6818 = vpack.c.b16 %v6503, %v6498
        %v6819 = vpack.c.b16 %v6504, %v6499
        %v6820 = vpack.c.b16 %v6505, %v6500
        %v6821 = vpack.c.b16 %v6511, %v6506
        %v6822 = vpack.c.b16 %v6512, %v6507
        %v6823 = vpack.c.b16 %v6513, %v6508
        %v6824 = vpack.c.b16 %v6514, %v6509
        %v6825 = vpack.c.b16 %v6515, %v6510
        %v6826 = vpack.c.b16 %v6521, %v6516
        %v6827 = vpack.c.b16 %v6522, %v6517
        %v6828 = vpack.c.b16 %v6523, %v6518
        %v6829 = vpack.c.b16 %v6524, %v6519
        %v6830 = vpack.c.b16 %v6525, %v6520
        %v6831 = vpack.c.b16 %v6531, %v6526
        %v6832 = vpack.c.b16 %v6532, %v6527
        %v6833 = vpack.c.b16 %v6533, %v6528
        %v6834 = vpack.c.b16 %v6534, %v6529
        %v6835 = vpack.c.b16 %v6535, %v6530
        %v6836 = vpack.c.b16 %v6541, %v6536
        %v6837 = vpack.c.b16 %v6542, %v6537
        %v6838 = vpack.c.b16 %v6543, %v6538
        %v6839 = vpack.c.b16 %v6544, %v6539
        %v6840 = vpack.c.b16 %v6545, %v6540
        %v6841 = vpack.c.b16 %v6551, %v6546
        %v6842 = vpack.c.b16 %v6552, %v6547
        %v6843 = vpack.c.b16 %v6553, %v6548
        %v6844 = vpack.c.b16 %v6554, %v6549
        %v6845 = vpack.c.b16 %v6555, %v6550
        %v6846 = vpack.c.b16 %v6561, %v6556
        %v6847 = vpack.c.b16 %v6562, %v6557
        %v6848 = vpack.c.b16 %v6563, %v6558
        %v6849 = vpack.c.b16 %v6564, %v6559
        %v6850 = vpack.c.b16 %v6565, %v6560
        %v6851 = vpack.c.b16 %v6571, %v6566
        %v6852 = vpack.c.b16 %v6572, %v6567
        %v6853 = vpack.c.b16 %v6573, %v6568
        %v6854 = vpack.c.b16 %v6574, %v6569
        %v6855 = vpack.c.b16 %v6575, %v6570
        %v6856 = vpack.c.b16 %v6581, %v6576
        %v6857 = vpack.c.b16 %v6582, %v6577
        %v6858 = vpack.c.b16 %v6583, %v6578
        %v6859 = vpack.c.b16 %v6584, %v6579
        %v6860 = vpack.c.b16 %v6585, %v6580
        %v6861 = vpack.c.b16 %v6591, %v6586
        %v6862 = vpack.c.b16 %v6592, %v6587
        %v6863 = vpack.c.b16 %v6593, %v6588
        %v6864 = vpack.c.b16 %v6594, %v6589
        %v6865 = vpack.c.b16 %v6595, %v6590
        %v6866 = vpack.c.b16 %v6601, %v6596
        %v6867 = vpack.c.b16 %v6602, %v6597
        %v6868 = vpack.c.b16 %v6603, %v6598
        %v6869 = vpack.c.b16 %v6604, %v6599
        %v6870 = vpack.c.b16 %v6605, %v6600
        %v6871 = vpack.c.b16 %v6611, %v6606
        %v6872 = vpack.c.b16 %v6612, %v6607
        %v6873 = vpack.c.b16 %v6613, %v6608
        %v6874 = vpack.c.b16 %v6614, %v6609
        %v6875 = vpack.c.b16 %v6615, %v6610
        %v6876 = vpack.c.b16 %v6621, %v6616
        %v6877 = vpack.c.b16 %v6622, %v6617
        %v6878 = vpack.c.b16 %v6623, %v6618
        %v6879 = vpack.c.b16 %v6624, %v6619
        %v6880 = vpack.c.b16 %v6625, %v6620
        %v6881 = vpack.c.b16 %v6631, %v6626
        %v6882 = vpack.c.b16 %v6632, %v6627
        %v6883 = vpack.c.b16 %v6633, %v6628
        %v6884 = vpack.c.b16 %v6634, %v6629
        %v6885 = vpack.c.b16 %v6635, %v6630
        %v6886 = vpack.c.b16 %v6641, %v6636
        %v6887 = vpack.c.b16 %v6642, %v6637
        %v6888 = vpack.c.b16 %v6643, %v6638
        %v6889 = vpack.c.b16 %v6644, %v6639
        %v6890 = vpack.c.b16 %v6645, %v6640
        %v6891 = vpack.c.b16 %v6651, %v6646
        %v6892 = vpack.c.b16 %v6652, %v6647
        %v6893 = vpack.c.b16 %v6653, %v6648
        %v6894 = vpack.c.b16 %v6654, %v6649
        %v6895 = vpack.c.b16 %v6655, %v6650
        %v6896 = vpack.c.b16 %v6661, %v6656
        %v6897 = vpack.c.b16 %v6662, %v6657
        %v6898 = vpack.c.b16 %v6663, %v6658
        %v6899 = vpack.c.b16 %v6664, %v6659
        %v6900 = vpack.c.b16 %v6665, %v6660
        %v6901 = vpack.c.b16 %v6671, %v6666
        %v6902 = vpack.c.b16 %v6672, %v6667
        %v6903 = vpack.c.b16 %v6673, %v6668
        %v6904 = vpack.c.b16 %v6674, %v6669
        %v6905 = vpack.c.b16 %v6675, %v6670
        %v6906 = vpack.c.b16 %v6681, %v6676
        %v6907 = vpack.c.b16 %v6682, %v6677
        %v6908 = vpack.c.b16 %v6683, %v6678
        %v6909 = vpack.c.b16 %v6684, %v6679
        %v6910 = vpack.c.b16 %v6685, %v6680
        %v6911 = vpack.c.b16 %v6691, %v6686
        %v6912 = vpack.c.b16 %v6692, %v6687
        %v6913 = vpack.c.b16 %v6693, %v6688
        %v6914 = vpack.c.b16 %v6694, %v6689
        %v6915 = vpack.c.b16 %v6695, %v6690
        %v6916 = vpack.c.b16 %v6701, %v6696
        %v6917 = vpack.c.b16 %v6702, %v6697
        %v6918 = vpack.c.b16 %v6703, %v6698
        %v6919 = vpack.c.b16 %v6704, %v6699
        %v6920 = vpack.c.b16 %v6705, %v6700
        %v6921 = vpack.c.b16 %v6711, %v6706
        %v6922 = vpack.c.b16 %v6712, %v6707
        %v6923 = vpack.c.b16 %v6713, %v6708
        %v6924 = vpack.c.b16 %v6714, %v6709
        %v6925 = vpack.c.b16 %v6715, %v6710
        %v6926 = vpack.c.b16 %v6721, %v6716
        %v6927 = vpack.c.b16 %v6722, %v6717
        %v6928 = vpack.c.b16 %v6723, %v6718
        %v6929 = vpack.c.b16 %v6724, %v6719
        %v6930 = vpack.c.b16 %v6725, %v6720
        %v6931 = vpack.c.b16 %v6731, %v6726
        %v6932 = vpack.c.b16 %v6732, %v6727
        %v6933 = vpack.c.b16 %v6733, %v6728
        %v6934 = vpack.c.b16 %v6734, %v6729
        %v6935 = vpack.c.b16 %v6735, %v6730
        %v6936 = vpack.c.b16 %v6741, %v6736
        %v6937 = vpack.c.b16 %v6742, %v6737
        %v6938 = vpack.c.b16 %v6743, %v6738
        %v6939 = vpack.c.b16 %v6744, %v6739
        %v6940 = vpack.c.b16 %v6745, %v6740
        %v6941 = vpack.c.b16 %v6751, %v6746
        %v6942 = vpack.c.b16 %v6752, %v6747
        %v6943 = vpack.c.b16 %v6753, %v6748
        %v6944 = vpack.c.b16 %v6754, %v6749
        %v6945 = vpack.c.b16 %v6755, %v6750
        %v6946 = vpack.c.b16 %v6761, %v6756
        %v6947 = vpack.c.b16 %v6762, %v6757
        %v6948 = vpack.c.b16 %v6763, %v6758
        %v6949 = vpack.c.b16 %v6764, %v6759
        %v6950 = vpack.c.b16 %v6765, %v6760
        %v6951 = vpack.c.b16 %v6771, %v6766
        %v6952 = vpack.c.b16 %v6772, %v6767
        %v6953 = vpack.c.b16 %v6773, %v6768
        %v6954 = vpack.c.b16 %v6774, %v6769
        %v6955 = vpack.c.b16 %v6775, %v6770
        %v6956 = vpack.c.b16 %v6781, %v6776
        %v6957 = vpack.c.b16 %v6782, %v6777
        %v6958 = vpack.c.b16 %v6783, %v6778
        %v6959 = vpack.c.b16 %v6784, %v6779
        %v6960 = vpack.c.b16 %v6785, %v6780
        %v6961 = vpack.c.b16 %v6791, %v6786
        %v6962 = vpack.c.b16 %v6792, %v6787
        %v6963 = vpack.c.b16 %v6793, %v6788
        %v6964 = vpack.c.b16 %v6794, %v6789
        %v6965 = vpack.c.b16 %v6795, %v6790
        %v7137 = vsel %vm517, %v6046, 0
        %7139 = vmatprep.subr.bf16.mxu0 %v6797
        %7140 = vmatpush1.bf16.msra.mxu0 %v6796
        %7141 = vmatprep.subr.bf16.mxu0 %v6802
        %7142 = vmatpush1.bf16.msra.mxu0 %v6801
        %7143 = vmatprep.subr.bf16.mxu0 %v6807
        %7144 = vmatpush1.bf16.msra.mxu0 %v6806
        %7145 = vmatprep.subr.bf16.mxu0 %v6812
        %7146 = vmatpush1.bf16.msra.mxu0 %v6811
        %7147 = vmatprep.subr.bf16.mxu0 %v6817
        %7148 = vmatpush1.bf16.msra.mxu0 %v6816
        %7149 = vmatprep.subr.bf16.mxu0 %v6822
        %7150 = vmatpush1.bf16.msra.mxu0 %v6821
        %7151 = vmatprep.subr.bf16.mxu0 %v6827
        %7152 = vmatpush1.bf16.msra.mxu0 %v6826
        %7153 = vmatprep.subr.bf16.mxu0 %v6832
        %7154 = vmatpush1.bf16.msra.mxu0 %v6831
        %7155 = vmatprep.subr.bf16.mxu0 %v6837
        %7156 = vmatpush1.bf16.msra.mxu0 %v6836
        %7157 = vmatprep.subr.bf16.mxu0 %v6842
        %7158 = vmatpush1.bf16.msra.mxu0 %v6841
        %7159 = vmatprep.subr.bf16.mxu0 %v6847
        %7160 = vmatpush1.bf16.msra.mxu0 %v6846
        %7161 = vmatprep.subr.bf16.mxu0 %v6852
        %7162 = vmatpush1.bf16.msra.mxu0 %v6851
        %7163 = vmatprep.subr.bf16.mxu0 %v6857
        %7164 = vmatpush1.bf16.msra.mxu0 %v6856
        %7165 = vmatprep.subr.bf16.mxu0 %v6862
        %7166 = vmatpush1.bf16.msra.mxu0 %v6861
        %7167 = vmatprep.subr.bf16.mxu0 %v6867
        %7168 = vmatpush1.bf16.msra.mxu0 %v6866
        %7169 = vmatprep.subr.bf16.mxu0 %v6872
        %7170 = vmatpush1.bf16.msra.mxu0 %v6871
        %7171 = vmatprep.mubr.bf16.mxu0 %v6043
        %7172 = vmatmul.mubr.bf16.gmra.mrb[0].mxu0 %v6042
        %v7173 = vpop.f32.mrb[0].mxu0
        %v7174 = vadd.f32 0.0, %v7173
        %v7175 = vpop.f32.mrb[0].mxu0
        %v7176 = vadd.f32 0.0, %v7175
        %v7177 = vpop.f32.mrb[0].mxu0
        %v7178 = vadd.f32 0.0, %v7177
        %v7179 = vpop.f32.mrb[0].mxu0
        %v7180 = vadd.f32 0.0, %v7179
        %7181 = vdwg.mxu0
        %7182 = vmatprep.subr.bf16.mxu0 %v6877
        %7183 = vmatpush1.bf16.msra.mxu0 %v6876
        %7184 = vmatprep.subr.bf16.mxu0 %v6882
        %7185 = vmatpush1.bf16.msra.mxu0 %v6881
        %7186 = vmatprep.subr.bf16.mxu0 %v6887
        %7187 = vmatpush1.bf16.msra.mxu0 %v6886
        %7188 = vmatprep.subr.bf16.mxu0 %v6892
        %7189 = vmatpush1.bf16.msra.mxu0 %v6891
        %7190 = vmatprep.subr.bf16.mxu0 %v6897
        %7191 = vmatpush1.bf16.msra.mxu0 %v6896
        %7192 = vmatprep.subr.bf16.mxu0 %v6902
        %7193 = vmatpush1.bf16.msra.mxu0 %v6901
        %7194 = vmatprep.subr.bf16.mxu0 %v6907
        %7195 = vmatpush1.bf16.msra.mxu0 %v6906
        %7196 = vmatprep.subr.bf16.mxu0 %v6912
        %7197 = vmatpush1.bf16.msra.mxu0 %v6911
        %7198 = vmatprep.subr.bf16.mxu0 %v6917
        %7199 = vmatpush1.bf16.msra.mxu0 %v6916
        %7200 = vmatprep.subr.bf16.mxu0 %v6922
        %7201 = vmatpush1.bf16.msra.mxu0 %v6921
        %7202 = vmatprep.subr.bf16.mxu0 %v6927
        %7203 = vmatpush1.bf16.msra.mxu0 %v6926
        %7204 = vmatprep.subr.bf16.mxu0 %v6932
        %7205 = vmatpush1.bf16.msra.mxu0 %v6931
        %7206 = vmatprep.subr.bf16.mxu0 %v6937
        %7207 = vmatpush1.bf16.msra.mxu0 %v6936
        %7208 = vmatprep.subr.bf16.mxu0 %v6942
        %7209 = vmatpush1.bf16.msra.mxu0 %v6941
        %7210 = vmatprep.subr.bf16.mxu0 %v6947
        %7211 = vmatpush1.bf16.msra.mxu0 %v6946
        %7212 = vmatprep.subr.bf16.mxu0 %v6952
        %7213 = vmatpush1.bf16.msra.mxu0 %v6951
        %7214 = vmatprep.mubr.bf16.mxu0 %v6045
        %7215 = vmatmul.mubr.bf16.gmra.mrb[0].mxu0 %v6044
        %v7216 = vpop.f32.mrb[0].mxu0
        %v7217 = vadd.f32 %v7174, %v7216
        %v7218 = vpop.f32.mrb[0].mxu0
        %v7219 = vadd.f32 %v7176, %v7218
        %v7220 = vpop.f32.mrb[0].mxu0
        %v7221 = vadd.f32 %v7178, %v7220
        %v7222 = vpop.f32.mrb[0].mxu0
        %v7223 = vadd.f32 %v7180, %v7222
        %7224 = vdwg.mxu0
        %7225 = vmatprep.subr.bf16.mxu0 %v6957
        %7226 = vmatpush1.bf16.msra.mxu0 %v6956
        %7227 = vmatprep.subr.bf16.mxu0 %v6962
        %7228 = vmatpush1.bf16.msra.mxu0 %v6961
        %7229 = vmatprep.subr.bf16.mxu0 0
        %7230 = vmatpush1.bf16.msra.mxu0 0
        %7231 = vmatprep.subr.bf16.mxu0 0
        %7232 = vmatpush1.bf16.msra.mxu0 0
        %7233 = vmatprep.subr.bf16.mxu0 0
        %7234 = vmatpush1.bf16.msra.mxu0 0
        %7235 = vmatprep.subr.bf16.mxu0 0
        %7236 = vmatpush1.bf16.msra.mxu0 0
        %7237 = vmatprep.subr.bf16.mxu0 0
        %7238 = vmatpush1.bf16.msra.mxu0 0
        %7239 = vmatprep.subr.bf16.mxu0 0
        %7240 = vmatpush1.bf16.msra.mxu0 0
        %7241 = vmatprep.subr.bf16.mxu0 0
        %7242 = vmatpush1.bf16.msra.mxu0 0
        %7243 = vmatprep.subr.bf16.mxu0 0
        %7244 = vmatpush1.bf16.msra.mxu0 0
        %7245 = vmatprep.subr.bf16.mxu0 0
        %7246 = vmatpush1.bf16.msra.mxu0 0
        %7247 = vmatprep.subr.bf16.mxu0 0
        %7248 = vmatpush1.bf16.msra.mxu0 0
        %7249 = vmatprep.subr.bf16.mxu0 0
        %7250 = vmatpush1.bf16.msra.mxu0 0
        %7251 = vmatprep.subr.bf16.mxu0 0
        %7252 = vmatpush1.bf16.msra.mxu0 0
        %7253 = vmatprep.subr.bf16.mxu0 0
        %7254 = vmatpush1.bf16.msra.mxu0 0
        %7255 = vmatprep.subr.bf16.mxu0 0
        %7256 = vmatpush1.bf16.msra.mxu0 0
        %7257 = vmatprep.mubr.bf16.mxu0 0
        %7258 = vmatmul.mubr.bf16.gmra.mrb[0].mxu0 %v7137
        %v7259 = vpop.f32.mrb[0].mxu0
        %v7260 = vadd.f32 %v7217, %v7259
        %v7261 = vpop.f32.mrb[0].mxu0
        %v7262 = vadd.f32 %v7219, %v7261
        %v7263 = vpop.f32.mrb[0].mxu0
        %v7264 = vadd.f32 %v7221, %v7263
        %v7265 = vpop.f32.mrb[0].mxu0
        %v7266 = vadd.f32 %v7223, %v7265
        %7267 = vdwg.mxu0
        %7268 = vmatprep.subr.bf16.mxu0 %v6799
        %7269 = vmatpush1.bf16.msra.mxu0 %v6798
        %7270 = vmatprep.subr.bf16.mxu0 %v6804
        %7271 = vmatpush1.bf16.msra.mxu0 %v6803
        %7272 = vmatprep.subr.bf16.mxu0 %v6809
        %7273 = vmatpush1.bf16.msra.mxu0 %v6808
        %7274 = vmatprep.subr.bf16.mxu0 %v6814
        %7275 = vmatpush1.bf16.msra.mxu0 %v6813
        %7276 = vmatprep.subr.bf16.mxu0 %v6819
        %7277 = vmatpush1.bf16.msra.mxu0 %v6818
        %7278 = vmatprep.subr.bf16.mxu0 %v6824
        %7279 = vmatpush1.bf16.msra.mxu0 %v6823
        %7280 = vmatprep.subr.bf16.mxu0 %v6829
        %7281 = vmatpush1.bf16.msra.mxu0 %v6828
        %7282 = vmatprep.subr.bf16.mxu0 %v6834
        %7283 = vmatpush1.bf16.msra.mxu0 %v6833
        %7284 = vmatprep.subr.bf16.mxu0 %v6839
        %7285 = vmatpush1.bf16.msra.mxu0 %v6838
        %7286 = vmatprep.subr.bf16.mxu0 %v6844
        %7287 = vmatpush1.bf16.msra.mxu0 %v6843
        %7288 = vmatprep.subr.bf16.mxu0 %v6849
        %7289 = vmatpush1.bf16.msra.mxu0 %v6848
        %7290 = vmatprep.subr.bf16.mxu0 %v6854
        %7291 = vmatpush1.bf16.msra.mxu0 %v6853
        %7292 = vmatprep.subr.bf16.mxu0 %v6859
        %7293 = vmatpush1.bf16.msra.mxu0 %v6858
        %7294 = vmatprep.subr.bf16.mxu0 %v6864
        %7295 = vmatpush1.bf16.msra.mxu0 %v6863
        %7296 = vmatprep.subr.bf16.mxu0 %v6869
        %7297 = vmatpush1.bf16.msra.mxu0 %v6868
        %7298 = vmatprep.subr.bf16.mxu0 %v6874
        %7299 = vmatpush1.bf16.msra.mxu0 %v6873
        %7300 = vmatprep.mubr.bf16.mxu0 %v6043
        %7301 = vmatmul.mubr.bf16.gmra.mrb[0].mxu0 %v6042
        %v7302 = vpop.f32.mrb[0].mxu0
        %v7303 = vadd.f32 0.0, %v7302
        %v7304 = vpop.f32.mrb[0].mxu0
        %v7305 = vadd.f32 0.0, %v7304
        %v7306 = vpop.f32.mrb[0].mxu0
        %v7307 = vadd.f32 0.0, %v7306
        %v7308 = vpop.f32.mrb[0].mxu0
        %v7309 = vadd.f32 0.0, %v7308
        %7310 = vdwg.mxu0
        %7311 = vmatprep.subr.bf16.mxu0 %v6879
        %7312 = vmatpush1.bf16.msra.mxu0 %v6878
        %7313 = vmatprep.subr.bf16.mxu0 %v6884
        %7314 = vmatpush1.bf16.msra.mxu0 %v6883
        %7315 = vmatprep.subr.bf16.mxu0 %v6889
        %7316 = vmatpush1.bf16.msra.mxu0 %v6888
        %7317 = vmatprep.subr.bf16.mxu0 %v6894
        %7318 = vmatpush1.bf16.msra.mxu0 %v6893
        %7319 = vmatprep.subr.bf16.mxu0 %v6899
        %7320 = vmatpush1.bf16.msra.mxu0 %v6898
        %7321 = vmatprep.subr.bf16.mxu0 %v6904
        %7322 = vmatpush1.bf16.msra.mxu0 %v6903
        %7323 = vmatprep.subr.bf16.mxu0 %v6909
        %7324 = vmatpush1.bf16.msra.mxu0 %v6908
        %7325 = vmatprep.subr.bf16.mxu0 %v6914
        %7326 = vmatpush1.bf16.msra.mxu0 %v6913
        %7327 = vmatprep.subr.bf16.mxu0 %v6919
        %7328 = vmatpush1.bf16.msra.mxu0 %v6918
        %7329 = vmatprep.subr.bf16.mxu0 %v6924
        %7330 = vmatpush1.bf16.msra.mxu0 %v6923
        %7331 = vmatprep.subr.bf16.mxu0 %v6929
        %7332 = vmatpush1.bf16.msra.mxu0 %v6928
        %7333 = vmatprep.subr.bf16.mxu0 %v6934
        %7334 = vmatpush1.bf16.msra.mxu0 %v6933
        %7335 = vmatprep.subr.bf16.mxu0 %v6939
        %7336 = vmatpush1.bf16.msra.mxu0 %v6938
        %7337 = vmatprep.subr.bf16.mxu0 %v6944
        %7338 = vmatpush1.bf16.msra.mxu0 %v6943
        %7339 = vmatprep.subr.bf16.mxu0 %v6949
        %7340 = vmatpush1.bf16.msra.mxu0 %v6948
        %7341 = vmatprep.subr.bf16.mxu0 %v6954
        %7342 = vmatpush1.bf16.msra.mxu0 %v6953
        %7343 = vmatprep.mubr.bf16.mxu0 %v6045
        %7344 = vmatmul.mubr.bf16.gmra.mrb[0].mxu0 %v6044
        %v7345 = vpop.f32.mrb[0].mxu0
        %v7346 = vadd.f32 %v7303, %v7345
        %v7347 = vpop.f32.mrb[0].mxu0
        %v7348 = vadd.f32 %v7305, %v7347
        %v7349 = vpop.f32.mrb[0].mxu0
        %v7350 = vadd.f32 %v7307, %v7349
        %v7351 = vpop.f32.mrb[0].mxu0
        %v7352 = vadd.f32 %v7309, %v7351
        %7353 = vdwg.mxu0
        %7354 = vmatprep.subr.bf16.mxu0 %v6959
        %7355 = vmatpush1.bf16.msra.mxu0 %v6958
        %7356 = vmatprep.subr.bf16.mxu0 %v6964
        %7357 = vmatpush1.bf16.msra.mxu0 %v6963
        %7358 = vmatprep.subr.bf16.mxu0 0
        %7359 = vmatpush1.bf16.msra.mxu0 0
        %7360 = vmatprep.subr.bf16.mxu0 0
        %7361 = vmatpush1.bf16.msra.mxu0 0
        %7362 = vmatprep.subr.bf16.mxu0 0
        %7363 = vmatpush1.bf16.msra.mxu0 0
        %7364 = vmatprep.subr.bf16.mxu0 0
        %7365 = vmatpush1.bf16.msra.mxu0 0
        %7366 = vmatprep.subr.bf16.mxu0 0
        %7367 = vmatpush1.bf16.msra.mxu0 0
        %7368 = vmatprep.subr.bf16.mxu0 0
        %7369 = vmatpush1.bf16.msra.mxu0 0
        %7370 = vmatprep.subr.bf16.mxu0 0
        %7371 = vmatpush1.bf16.msra.mxu0 0
        %7372 = vmatprep.subr.bf16.mxu0 0
        %7373 = vmatpush1.bf16.msra.mxu0 0
        %7374 = vmatprep.subr.bf16.mxu0 0
        %7375 = vmatpush1.bf16.msra.mxu0 0
        %7376 = vmatprep.subr.bf16.mxu0 0
        %7377 = vmatpush1.bf16.msra.mxu0 0
        %7378 = vmatprep.subr.bf16.mxu0 0
        %7379 = vmatpush1.bf16.msra.mxu0 0
        %7380 = vmatprep.subr.bf16.mxu0 0
        %7381 = vmatpush1.bf16.msra.mxu0 0
        %7382 = vmatprep.subr.bf16.mxu0 0
        %7383 = vmatpush1.bf16.msra.mxu0 0
        %7384 = vmatprep.subr.bf16.mxu0 0
        %7385 = vmatpush1.bf16.msra.mxu0 0
        %7386 = vmatprep.mubr.bf16.mxu0 0
        %7387 = vmatmul.mubr.bf16.gmra.mrb[0].mxu0 %v7137
        %v7388 = vpop.f32.mrb[0].mxu0
        %v7389 = vadd.f32 %v7346, %v7388
        %v7390 = vpop.f32.mrb[0].mxu0
        %v7391 = vadd.f32 %v7348, %v7390
        %v7392 = vpop.f32.mrb[0].mxu0
        %v7393 = vadd.f32 %v7350, %v7392
        %v7394 = vpop.f32.mrb[0].mxu0
        %v7395 = vadd.f32 %v7352, %v7394
        %7396 = vdwg.mxu0
        %7397 = vmatprep.subr.bf16.mxu0 0
        %7398 = vmatpush1.bf16.msra.mxu0 %v6800
        %7399 = vmatprep.subr.bf16.mxu0 0
        %7400 = vmatpush1.bf16.msra.mxu0 %v6805
        %7401 = vmatprep.subr.bf16.mxu0 0
        %7402 = vmatpush1.bf16.msra.mxu0 %v6810
        %7403 = vmatprep.subr.bf16.mxu0 0
        %7404 = vmatpush1.bf16.msra.mxu0 %v6815
        %7405 = vmatprep.subr.bf16.mxu0 0
        %7406 = vmatpush1.bf16.msra.mxu0 %v6820
        %7407 = vmatprep.subr.bf16.mxu0 0
        %7408 = vmatpush1.bf16.msra.mxu0 %v6825
        %7409 = vmatprep.subr.bf16.mxu0 0
        %7410 = vmatpush1.bf16.msra.mxu0 %v6830
        %7411 = vmatprep.subr.bf16.mxu0 0
        %7412 = vmatpush1.bf16.msra.mxu0 %v6835
        %7413 = vmatprep.subr.bf16.mxu0 0
        %7414 = vmatpush1.bf16.msra.mxu0 %v6840
        %7415 = vmatprep.subr.bf16.mxu0 0
        %7416 = vmatpush1.bf16.msra.mxu0 %v6845
        %7417 = vmatprep.subr.bf16.mxu0 0
        %7418 = vmatpush1.bf16.msra.mxu0 %v6850
        %7419 = vmatprep.subr.bf16.mxu0 0
        %7420 = vmatpush1.bf16.msra.mxu0 %v6855
        %7421 = vmatprep.subr.bf16.mxu0 0
        %7422 = vmatpush1.bf16.msra.mxu0 %v6860
        %7423 = vmatprep.subr.bf16.mxu0 0
        %7424 = vmatpush1.bf16.msra.mxu0 %v6865
        %7425 = vmatprep.subr.bf16.mxu0 0
        %7426 = vmatpush1.bf16.msra.mxu0 %v6870
        %7427 = vmatprep.subr.bf16.mxu0 0
        %7428 = vmatpush1.bf16.msra.mxu0 %v6875
        %7429 = vmatprep.mubr.bf16.mxu0 %v6043
        %7430 = vmatmul.mubr.bf16.gmra.mrb[0].mxu0 %v6042
        %v7431 = vpop.f32.mrb[0].mxu0
        %v7432 = vadd.f32 0.0, %v7431
        %v7433 = vpop.f32.mrb[0].mxu0
        %v7434 = vpop.f32.mrb[0].mxu0
        %v7435 = vadd.f32 0.0, %v7434
        %v7436 = vpop.f32.mrb[0].mxu0
        %7437 = vdwg.mxu0
        %7438 = vmatprep.subr.bf16.mxu0 0
        %7439 = vmatpush1.bf16.msra.mxu0 %v6880
        %7440 = vmatprep.subr.bf16.mxu0 0
        %7441 = vmatpush1.bf16.msra.mxu0 %v6885
        %7442 = vmatprep.subr.bf16.mxu0 0
        %7443 = vmatpush1.bf16.msra.mxu0 %v6890
        %7444 = vmatprep.subr.bf16.mxu0 0
        %7445 = vmatpush1.bf16.msra.mxu0 %v6895
        %7446 = vmatprep.subr.bf16.mxu0 0
        %7447 = vmatpush1.bf16.msra.mxu0 %v6900
        %7448 = vmatprep.subr.bf16.mxu0 0
        %7449 = vmatpush1.bf16.msra.mxu0 %v6905
        %7450 = vmatprep.subr.bf16.mxu0 0
        %7451 = vmatpush1.bf16.msra.mxu0 %v6910
        %7452 = vmatprep.subr.bf16.mxu0 0
        %7453 = vmatpush1.bf16.msra.mxu0 %v6915
        %7454 = vmatprep.subr.bf16.mxu0 0
        %7455 = vmatpush1.bf16.msra.mxu0 %v6920
        %7456 = vmatprep.subr.bf16.mxu0 0
        %7457 = vmatpush1.bf16.msra.mxu0 %v6925
        %7458 = vmatprep.subr.bf16.mxu0 0
        %7459 = vmatpush1.bf16.msra.mxu0 %v6930
        %7460 = vmatprep.subr.bf16.mxu0 0
        %7461 = vmatpush1.bf16.msra.mxu0 %v6935
        %7462 = vmatprep.subr.bf16.mxu0 0
        %7463 = vmatpush1.bf16.msra.mxu0 %v6940
        %7464 = vmatprep.subr.bf16.mxu0 0
        %7465 = vmatpush1.bf16.msra.mxu0 %v6945
        %7466 = vmatprep.subr.bf16.mxu0 0
        %7467 = vmatpush1.bf16.msra.mxu0 %v6950
        %7468 = vmatprep.subr.bf16.mxu0 0
        %7469 = vmatpush1.bf16.msra.mxu0 %v6955
        %7470 = vmatprep.mubr.bf16.mxu0 %v6045
        %7471 = vmatmul.mubr.bf16.gmra.mrb[0].mxu0 %v6044
        %v7472 = vpop.f32.mrb[0].mxu0
        %v7473 = vadd.f32 %v7432, %v7472
        %v7474 = vpop.f32.mrb[0].mxu0
        %v7475 = vpop.f32.mrb[0].mxu0
        %v7476 = vadd.f32 %v7435, %v7475
        %v7477 = vpop.f32.mrb[0].mxu0
        %7478 = vdwg.mxu0
        %7479 = vmatprep.subr.bf16.mxu0 0
        %7480 = vmatpush1.bf16.msra.mxu0 %v6960
        %7481 = vmatprep.subr.bf16.mxu0 0
        %7482 = vmatpush1.bf16.msra.mxu0 %v6965
        %7483 = vmatprep.subr.bf16.mxu0 0
        %7484 = vmatpush1.bf16.msra.mxu0 0
        %7485 = vmatprep.subr.bf16.mxu0 0
        %7486 = vmatpush1.bf16.msra.mxu0 0
        %7487 = vmatprep.subr.bf16.mxu0 0
        %7488 = vmatpush1.bf16.msra.mxu0 0
        %7489 = vmatprep.subr.bf16.mxu0 0
        %7490 = vmatpush1.bf16.msra.mxu0 0
        %7491 = vmatprep.subr.bf16.mxu0 0
        %7492 = vmatpush1.bf16.msra.mxu0 0
        %7493 = vmatprep.subr.bf16.mxu0 0
        %7494 = vmatpush1.bf16.msra.mxu0 0
        %7495 = vmatprep.subr.bf16.mxu0 0
        %7496 = vmatpush1.bf16.msra.mxu0 0
        %7497 = vmatprep.subr.bf16.mxu0 0
        %7498 = vmatpush1.bf16.msra.mxu0 0
        %7499 = vmatprep.subr.bf16.mxu0 0
        %7500 = vmatpush1.bf16.msra.mxu0 0
        %7501 = vmatprep.subr.bf16.mxu0 0
        %7502 = vmatpush1.bf16.msra.mxu0 0
        %7503 = vmatprep.subr.bf16.mxu0 0
        %7504 = vmatpush1.bf16.msra.mxu0 0
        %7505 = vmatprep.subr.bf16.mxu0 0
        %7506 = vmatpush1.bf16.msra.mxu0 0
        %7507 = vmatprep.subr.bf16.mxu0 0
        %7508 = vmatpush1.bf16.msra.mxu0 0
        %7509 = vmatprep.subr.bf16.mxu0 0
        %7510 = vmatpush1.bf16.msra.mxu0 0
        %7511 = vmatprep.mubr.bf16.mxu0 0
        %7512 = vmatmul.mubr.bf16.gmra.mrb[0].mxu0 %v7137
        %v7513 = vpop.f32.mrb[0].mxu0
        %v7514 = vadd.f32 %v7473, %v7513
        %v7515 = vpop.f32.mrb[0].mxu0
        %v7516 = vpop.f32.mrb[0].mxu0
        %v7517 = vadd.f32 %v7476, %v7516
        %v7518 = vpop.f32.mrb[0].mxu0
        %7519 = vdwg.mxu0
        %v7520 = vadd.f32 %v5894, %v7260
        %v7521 = vadd.f32 %v5895, %v7262
        %v7522 = vadd.f32 %v5896, %v7389
        %v7523 = vadd.f32 %v5897, %v7391
        %v7524 = vadd.f32 %v5898, %v7514
        %v7525 = vadd.f32 %v5899, %v7264
        %v7526 = vadd.f32 %v5900, %v7266
        %v7527 = vadd.f32 %v5901, %v7393
        %v7528 = vadd.f32 %v5902, %v7395
        %v7529 = vadd.f32 %v5903, %v7517
        %v7530 = vmax.f32 %v7520, 0.0
        %v7531 = vmax.f32 %v7521, 0.0
        %v7532 = vmax.f32 %v7522, 0.0
        %v7533 = vmax.f32 %v7523, 0.0
        %v7534 = vmax.f32 %v7524, 0.0
        %v7535 = vmax.f32 %v7525, 0.0
        %v7536 = vmax.f32 %v7526, 0.0
        %v7537 = vmax.f32 %v7527, 0.0
        %v7538 = vmax.f32 %v7528, 0.0
        %v7539 = vmax.f32 %v7529, 0.0
        %v7540 = vpack.c.bf16 %v7535, %v7530
        %v7541 = vpack.c.bf16 %v7536, %v7531
        %v7542 = vpack.c.bf16 %v7537, %v7532
        %v7543 = vpack.c.bf16 %v7538, %v7533
        %v7544 = vpack.c.bf16 %v7539, %v7534
        %v7545 = vld [vmem:[%s12] sm:$0x1]
        %v7546 = vld [vmem:[%s10] sm:$0x1]
        %vm7547 = vcmask 72704
        %v7549 = vsel %vm7547, %v7546, 0
        %vm7551 = vcmask 1043456
        %vm7552 = vcmask 1044480
        %v7553 = vsel %vm7551, 4294967295, 65535
        %v7554 = vsel %vm7552, %v7553, 0
        %v7556 = vand.u32 %v7540, %v7554
        %v7559 = vand.u32 %v7541, %v7554
        %v7562 = vand.u32 %v7542, %v7554
        %v7565 = vand.u32 %v7543, %v7554
        %v7568 = vand.u32 %v7544, %v7554
        %7570 = vmatprep.subr.bf16.mxu0 %v7559
        %7571 = vmatpush1.bf16.msra.mxu0 %v7556
        %7572 = vmatprep.subr.bf16.mxu0 0
        %7573 = vmatpush1.bf16.msra.mxu0 0
        %7574 = vmatprep.subr.bf16.mxu0 0
        %7575 = vmatpush1.bf16.msra.mxu0 0
        %7576 = vmatprep.subr.bf16.mxu0 0
        %7577 = vmatpush1.bf16.msra.mxu0 0
        %7578 = vmatprep.subr.bf16.mxu0 0
        %7579 = vmatpush1.bf16.msra.mxu0 0
        %7580 = vmatprep.subr.bf16.mxu0 0
        %7581 = vmatpush1.bf16.msra.mxu0 0
        %7582 = vmatprep.subr.bf16.mxu0 0
        %7583 = vmatpush1.bf16.msra.mxu0 0
        %7584 = vmatprep.subr.bf16.mxu0 0
        %7585 = vmatpush1.bf16.msra.mxu0 0
        %7586 = vmatprep.subr.bf16.mxu0 0
        %7587 = vmatpush1.bf16.msra.mxu0 0
        %7588 = vmatprep.subr.bf16.mxu0 0
        %7589 = vmatpush1.bf16.msra.mxu0 0
        %7590 = vmatprep.subr.bf16.mxu0 0
        %7591 = vmatpush1.bf16.msra.mxu0 0
        %7592 = vmatprep.subr.bf16.mxu0 0
        %7593 = vmatpush1.bf16.msra.mxu0 0
        %7594 = vmatprep.subr.bf16.mxu0 0
        %7595 = vmatpush1.bf16.msra.mxu0 0
        %7596 = vmatprep.subr.bf16.mxu0 0
        %7597 = vmatpush1.bf16.msra.mxu0 0
        %7598 = vmatprep.subr.bf16.mxu0 0
        %7599 = vmatpush1.bf16.msra.mxu0 0
        %7600 = vmatprep.subr.bf16.mxu0 0
        %7601 = vmatpush1.bf16.msra.mxu0 0
        %7602 = vmatprep.mubr.bf16.mxu0 0
        %7603 = vmatmul.mubr.bf16.gmra.mrb[0].mxu0 %v7549
        %v7604 = vpop.f32.mrb[0].mxu0
        %v7605 = vadd.f32 0.0, %v7604
        %v7606 = vpop.f32.mrb[0].mxu0
        %v7607 = vadd.f32 0.0, %v7606
        %v7608 = vpop.f32.mrb[0].mxu0
        %v7609 = vpop.f32.mrb[0].mxu0
        %7610 = vdwg.mxu0
        %7611 = vmatprep.subr.bf16.mxu0 %v7565
        %7612 = vmatpush1.bf16.msra.mxu0 %v7562
        %7613 = vmatprep.subr.bf16.mxu0 0
        %7614 = vmatpush1.bf16.msra.mxu0 0
        %7615 = vmatprep.subr.bf16.mxu0 0
        %7616 = vmatpush1.bf16.msra.mxu0 0
        %7617 = vmatprep.subr.bf16.mxu0 0
        %7618 = vmatpush1.bf16.msra.mxu0 0
        %7619 = vmatprep.subr.bf16.mxu0 0
        %7620 = vmatpush1.bf16.msra.mxu0 0
        %7621 = vmatprep.subr.bf16.mxu0 0
        %7622 = vmatpush1.bf16.msra.mxu0 0
        %7623 = vmatprep.subr.bf16.mxu0 0
        %7624 = vmatpush1.bf16.msra.mxu0 0
        %7625 = vmatprep.subr.bf16.mxu0 0
        %7626 = vmatpush1.bf16.msra.mxu0 0
        %7627 = vmatprep.subr.bf16.mxu0 0
        %7628 = vmatpush1.bf16.msra.mxu0 0
        %7629 = vmatprep.subr.bf16.mxu0 0
        %7630 = vmatpush1.bf16.msra.mxu0 0
        %7631 = vmatprep.subr.bf16.mxu0 0
        %7632 = vmatpush1.bf16.msra.mxu0 0
        %7633 = vmatprep.subr.bf16.mxu0 0
        %7634 = vmatpush1.bf16.msra.mxu0 0
        %7635 = vmatprep.subr.bf16.mxu0 0
        %7636 = vmatpush1.bf16.msra.mxu0 0
        %7637 = vmatprep.subr.bf16.mxu0 0
        %7638 = vmatpush1.bf16.msra.mxu0 0
        %7639 = vmatprep.subr.bf16.mxu0 0
        %7640 = vmatpush1.bf16.msra.mxu0 0
        %7641 = vmatprep.subr.bf16.mxu0 0
        %7642 = vmatpush1.bf16.msra.mxu0 0
        %7643 = vmatprep.mubr.bf16.mxu0 0
        %7644 = vmatmul.mubr.bf16.gmra.mrb[0].mxu0 %v7549
        %v7645 = vpop.f32.mrb[0].mxu0
        %v7646 = vadd.f32 0.0, %v7645
        %v7647 = vpop.f32.mrb[0].mxu0
        %v7648 = vadd.f32 0.0, %v7647
        %v7649 = vpop.f32.mrb[0].mxu0
        %v7650 = vpop.f32.mrb[0].mxu0
        %7651 = vdwg.mxu0
        %7652 = vmatprep.subr.bf16.mxu0 0
        %7653 = vmatpush1.bf16.msra.mxu0 %v7568
        %7654 = vmatprep.subr.bf16.mxu0 0
        %7655 = vmatpush1.bf16.msra.mxu0 0
        %7656 = vmatprep.subr.bf16.mxu0 0
        %7657 = vmatpush1.bf16.msra.mxu0 0
        %7658 = vmatprep.subr.bf16.mxu0 0
        %7659 = vmatpush1.bf16.msra.mxu0 0
        %7660 = vmatprep.subr.bf16.mxu0 0
        %7661 = vmatpush1.bf16.msra.mxu0 0
        %7662 = vmatprep.subr.bf16.mxu0 0
        %7663 = vmatpush1.bf16.msra.mxu0 0
        %7664 = vmatprep.subr.bf16.mxu0 0
        %7665 = vmatpush1.bf16.msra.mxu0 0
        %7666 = vmatprep.subr.bf16.mxu0 0
        %7667 = vmatpush1.bf16.msra.mxu0 0
        %7668 = vmatprep.subr.bf16.mxu0 0
        %7669 = vmatpush1.bf16.msra.mxu0 0
        %7670 = vmatprep.subr.bf16.mxu0 0
        %7671 = vmatpush1.bf16.msra.mxu0 0
        %7672 = vmatprep.subr.bf16.mxu0 0
        %7673 = vmatpush1.bf16.msra.mxu0 0
        %7674 = vmatprep.subr.bf16.mxu0 0
        %7675 = vmatpush1.bf16.msra.mxu0 0
        %7676 = vmatprep.subr.bf16.mxu0 0
        %7677 = vmatpush1.bf16.msra.mxu0 0
        %7678 = vmatprep.subr.bf16.mxu0 0
        %7679 = vmatpush1.bf16.msra.mxu0 0
        %7680 = vmatprep.subr.bf16.mxu0 0
        %7681 = vmatpush1.bf16.msra.mxu0 0
        %7682 = vmatprep.subr.bf16.mxu0 0
        %7683 = vmatpush1.bf16.msra.mxu0 0
        %7684 = vmatprep.mubr.bf16.mxu0 0
        %7685 = vmatmul.mubr.bf16.gmra.mrb[0].mxu0 %v7549
        %v7686 = vpop.f32.mrb[0].mxu0
        %v7687 = vadd.f32 0.0, %v7686
        %v7688 = vpop.f32.mrb[0].mxu0
        %v7689 = vpop.f32.mrb[0].mxu0
        %v7690 = vpop.f32.mrb[0].mxu0
        %7691 = vdwg.mxu0
        %v7692 = vpack.c.bf16 %v7605, %v7605
        %v7693 = vpack.c.bf16 %v7607, %v7607
        %v7694 = vpack.c.bf16 %v7646, %v7646
        %v7695 = vpack.c.bf16 %v7648, %v7648
        %v7696 = vpack.c.bf16 %v7687, %v7687
        %v7697 = vld [vmem:[%s11] sm:$0xf]
        %v7698 = vld [vmem:[%s11 + $0x4] sm:$0xf]
        %v7699 = vld [vmem:[%s11 + $0x8] sm:$0xf]
        %v7700 = vld [vmem:[%s11 + $0xc] sm:$0xf]
        %v7701 = vld [vmem:[%s11 + $0x10] sm:$0xf]
        %v7702 = vld [vmem:[%s11 + $0x14] sm:$0xf]
        %v7703 = vld [vmem:[%s11 + $0x18] sm:$0xf]
        %v7704 = vld [vmem:[%s11 + $0x1c] sm:$0xf]
        %v7705 = vld [vmem:[%s11 + $0x20] sm:$0xf]
        %v7706 = vld [vmem:[%s11 + $0x24] sm:$0xf]
        %v7707 = vld [vmem:[%s11 + $0x28] sm:$0xf]
        %v7708 = vld [vmem:[%s11 + $0x2c] sm:$0xf]
        %v7709 = vld [vmem:[%s11 + $0x30] sm:$0xf]
        %v7710 = vld [vmem:[%s11 + $0x34] sm:$0xf]
        %v7711 = vld [vmem:[%s11 + $0x38] sm:$0xf]
        %v7712 = vld [vmem:[%s11 + $0x3c] sm:$0xf]
        %v7713 = vld [vmem:[%s11 + $0x40] sm:$0xf]
        %v7714 = vld [vmem:[%s11 + $0x44] sm:$0xf]
        %v7715 = vld [vmem:[%s11 + $0x48] sm:$0xf]
        %v7716 = vld [vmem:[%s11 + $0x4c] sm:$0xf]
        %v7717 = vld [vmem:[%s11 + $0x50] sm:$0xf]
        %v7718 = vld [vmem:[%s11 + $0x54] sm:$0xf]
        %v7719 = vld [vmem:[%s11 + $0x58] sm:$0xf]
        %v7720 = vld [vmem:[%s11 + $0x5c] sm:$0xf]
        %v7721 = vld [vmem:[%s11 + $0x60] sm:$0xf]
        %v7722 = vld [vmem:[%s11 + $0x64] sm:$0xf]
        %v7723 = vld [vmem:[%s11 + $0x68] sm:$0xf]
        %v7724 = vld [vmem:[%s11 + $0x6c] sm:$0xf]
        %v7725 = vld [vmem:[%s11 + $0x70] sm:$0xf]
        %v7726 = vld [vmem:[%s11 + $0x74] sm:$0xf]
        %v7727 = vld [vmem:[%s11 + $0x78] sm:$0xf]
        %v7728 = vld [vmem:[%s11 + $0x7c] sm:$0xf]
        %v7729 = vld [vmem:[%s11 + $0x80] sm:$0xf]
        %v7730 = vld [vmem:[%s11 + $0x84] sm:$0xf]
        %v7731 = vld [vmem:[%s11 + $0x88] sm:$0xf]
        %v7732 = vld [vmem:[%s11 + $0x8c] sm:$0xf]
        %v7733 = vld [vmem:[%s11 + $0x90] sm:$0xf]
        %v7734 = vld [vmem:[%s11 + $0x94] sm:$0xf]
        %v7735 = vld [vmem:[%s11 + $0x98] sm:$0xf]
        %v7736 = vld [vmem:[%s11 + $0x9c] sm:$0xf]
        %v7737 = vld [vmem:[%s11 + $0xa0] sm:$0xf]
        %v7738 = vld [vmem:[%s11 + $0xa4] sm:$0xf]
        %v7739 = vld [vmem:[%s11 + $0xa8] sm:$0xf]
        %v7740 = vld [vmem:[%s11 + $0xac] sm:$0xf]
        %v7741 = vld [vmem:[%s11 + $0xb0] sm:$0xf]
        %v7742 = vld [vmem:[%s11 + $0xb4] sm:$0xf]
        %v7743 = vld [vmem:[%s11 + $0xb8] sm:$0xf]
        %v7744 = vld [vmem:[%s11 + $0xbc] sm:$0xf]
        %v7745 = vld [vmem:[%s11 + $0xc0] sm:$0xf]
        %v7746 = vld [vmem:[%s11 + $0xc4] sm:$0xf]
        %v7747 = vld [vmem:[%s11 + $0xc8] sm:$0xf]
        %v7748 = vld [vmem:[%s11 + $0xcc] sm:$0xf]
        %v7749 = vld [vmem:[%s11 + $0xd0] sm:$0xf]
        %v7750 = vld [vmem:[%s11 + $0xd4] sm:$0xf]
        %v7751 = vld [vmem:[%s11 + $0xd8] sm:$0xf]
        %v7752 = vld [vmem:[%s11 + $0xdc] sm:$0xf]
        %v7753 = vld [vmem:[%s11 + $0xe0] sm:$0xf]
        %v7754 = vld [vmem:[%s11 + $0xe4] sm:$0xf]
        %v7755 = vld [vmem:[%s11 + $0xe8] sm:$0xf]
        %v7756 = vld [vmem:[%s11 + $0xec] sm:$0xf]
        %v7757 = vld [vmem:[%s11 + $0xf0] sm:$0xf]
        %v7758 = vld [vmem:[%s11 + $0xf4] sm:$0xf]
        %v7759 = vld [vmem:[%s11 + $0xf8] sm:$0xf]
        %v7760 = vld [vmem:[%s11 + $0xfc] sm:$0xf]
        %v7761 = vld [vmem:[%s11 + $0x100] sm:$0xf]
        %v7762 = vld [vmem:[%s11 + $0x104] sm:$0xf]
        %v7763 = vld [vmem:[%s11 + $0x108] sm:$0xf]
        %v7764 = vld [vmem:[%s11 + $0x10c] sm:$0xf]
        %v7765 = vld [vmem:[%s11 + $0x110] sm:$0xf]
        %v7766 = vld [vmem:[%s11 + $0x114] sm:$0xf]
        %v7767 = vld [vmem:[%s11 + $0x118] sm:$0xf]
        %v7768 = vld [vmem:[%s11 + $0x11c] sm:$0xf]
        %v7841 = vunpack.c.l.b16 %v7697
        %v7842 = vunpack.c.l.b16 %v7698
        %v7843 = vunpack.c.l.b16 %v7699
        %v7844 = vunpack.c.l.b16 %v7700
        %v7845 = vunpack.c.l.b16 %v7701
        %v7846 = vunpack.c.l.b16 %v7702
        %v7847 = vunpack.c.l.b16 %v7703
        %v7848 = vunpack.c.l.b16 %v7704
        %v7849 = vunpack.c.l.b16 %v7705
        %v7850 = vunpack.c.l.b16 %v7706
        %v7851 = vunpack.c.l.b16 %v7707
        %v7852 = vunpack.c.l.b16 %v7708
        %v7853 = vunpack.c.l.b16 %v7709
        %v7854 = vunpack.c.l.b16 %v7710
        %v7855 = vunpack.c.l.b16 %v7711
        %v7856 = vunpack.c.l.b16 %v7712
        %v7857 = vunpack.c.l.b16 %v7713
        %v7858 = vunpack.c.l.b16 %v7714
        %v7859 = vunpack.c.l.b16 %v7715
        %v7860 = vunpack.c.l.b16 %v7716
        %v7861 = vunpack.c.l.b16 %v7717
        %v7862 = vunpack.c.l.b16 %v7718
        %v7863 = vunpack.c.l.b16 %v7719
        %v7864 = vunpack.c.l.b16 %v7720
        %v7865 = vunpack.c.l.b16 %v7721
        %v7866 = vunpack.c.l.b16 %v7722
        %v7867 = vunpack.c.l.b16 %v7723
        %v7868 = vunpack.c.l.b16 %v7724
        %v7869 = vunpack.c.l.b16 %v7725
        %v7870 = vunpack.c.l.b16 %v7726
        %v7871 = vunpack.c.l.b16 %v7727
        %v7872 = vunpack.c.l.b16 %v7728
        %v7873 = vunpack.c.l.b16 %v7729
        %v7874 = vunpack.c.l.b16 %v7730
        %v7875 = vunpack.c.l.b16 %v7731
        %v7876 = vunpack.c.l.b16 %v7732
        %v7877 = vunpack.c.l.b16 %v7733
        %v7878 = vunpack.c.l.b16 %v7734
        %v7879 = vunpack.c.l.b16 %v7735
        %v7880 = vunpack.c.l.b16 %v7736
        %v7881 = vunpack.c.l.b16 %v7737
        %v7882 = vunpack.c.l.b16 %v7738
        %v7883 = vunpack.c.l.b16 %v7739
        %v7884 = vunpack.c.l.b16 %v7740
        %v7885 = vunpack.c.l.b16 %v7741
        %v7886 = vunpack.c.l.b16 %v7742
        %v7887 = vunpack.c.l.b16 %v7743
        %v7888 = vunpack.c.l.b16 %v7744
        %v7889 = vunpack.c.l.b16 %v7745
        %v7890 = vunpack.c.l.b16 %v7746
        %v7891 = vunpack.c.l.b16 %v7747
        %v7892 = vunpack.c.l.b16 %v7748
        %v7893 = vunpack.c.l.b16 %v7749
        %v7894 = vunpack.c.l.b16 %v7750
        %v7895 = vunpack.c.l.b16 %v7751
        %v7896 = vunpack.c.l.b16 %v7752
        %v7897 = vunpack.c.l.b16 %v7753
        %v7898 = vunpack.c.l.b16 %v7754
        %v7899 = vunpack.c.l.b16 %v7755
        %v7900 = vunpack.c.l.b16 %v7756
        %v7901 = vunpack.c.l.b16 %v7757
        %v7902 = vunpack.c.l.b16 %v7758
        %v7903 = vunpack.c.l.b16 %v7759
        %v7904 = vunpack.c.l.b16 %v7760
        %v7905 = vunpack.c.l.b16 %v7761
        %v7906 = vunpack.c.l.b16 %v7762
        %v7907 = vunpack.c.l.b16 %v7763
        %v7908 = vunpack.c.l.b16 %v7764
        %v7909 = vunpack.c.l.b16 %v7765
        %v7910 = vunpack.c.l.b16 %v7766
        %v7911 = vunpack.c.l.b16 %v7767
        %v7912 = vunpack.c.l.b16 %v7768
        %v7913 = vpack.c.b16 %v7842, %v7841
        %v7914 = vpack.c.b16 %v7844, %v7843
        %v7915 = vpack.c.b16 %v7846, %v7845
        %v7916 = vpack.c.b16 %v7848, %v7847
        %v7917 = vpack.c.b16 %v7850, %v7849
        %v7918 = vpack.c.b16 %v7852, %v7851
        %v7919 = vpack.c.b16 %v7854, %v7853
        %v7920 = vpack.c.b16 %v7856, %v7855
        %v7921 = vpack.c.b16 %v7858, %v7857
        %v7922 = vpack.c.b16 %v7860, %v7859
        %v7923 = vpack.c.b16 %v7862, %v7861
        %v7924 = vpack.c.b16 %v7864, %v7863
        %v7925 = vpack.c.b16 %v7866, %v7865
        %v7926 = vpack.c.b16 %v7868, %v7867
        %v7927 = vpack.c.b16 %v7870, %v7869
        %v7928 = vpack.c.b16 %v7872, %v7871
        %v7929 = vpack.c.b16 %v7874, %v7873
        %v7930 = vpack.c.b16 %v7876, %v7875
        %v7931 = vpack.c.b16 %v7878, %v7877
        %v7932 = vpack.c.b16 %v7880, %v7879
        %v7933 = vpack.c.b16 %v7882, %v7881
        %v7934 = vpack.c.b16 %v7884, %v7883
        %v7935 = vpack.c.b16 %v7886, %v7885
        %v7936 = vpack.c.b16 %v7888, %v7887
        %v7937 = vpack.c.b16 %v7890, %v7889
        %v7938 = vpack.c.b16 %v7892, %v7891
        %v7939 = vpack.c.b16 %v7894, %v7893
        %v7940 = vpack.c.b16 %v7896, %v7895
        %v7941 = vpack.c.b16 %v7898, %v7897
        %v7942 = vpack.c.b16 %v7900, %v7899
        %v7943 = vpack.c.b16 %v7902, %v7901
        %v7944 = vpack.c.b16 %v7904, %v7903
        %v7945 = vpack.c.b16 %v7906, %v7905
        %v7946 = vpack.c.b16 %v7908, %v7907
        %v7947 = vpack.c.b16 %v7910, %v7909
        %v7948 = vpack.c.b16 %v7912, %v7911
        %vm7985 = vcmask 523264
        %v7987 = vsel %vm7985, %v7696, 0
        %7989 = vmatprep.subr.bf16.mxu0 0
        %7990 = vmatpush1.bf16.msra.mxu0 %v7913
        %7991 = vmatprep.subr.bf16.mxu0 0
        %7992 = vmatpush1.bf16.msra.mxu0 %v7914
        %7993 = vmatprep.subr.bf16.mxu0 0
        %7994 = vmatpush1.bf16.msra.mxu0 %v7915
        %7995 = vmatprep.subr.bf16.mxu0 0
        %7996 = vmatpush1.bf16.msra.mxu0 %v7916
        %7997 = vmatprep.subr.bf16.mxu0 0
        %7998 = vmatpush1.bf16.msra.mxu0 %v7917
        %7999 = vmatprep.subr.bf16.mxu0 0
        %8000 = vmatpush1.bf16.msra.mxu0 %v7918
        %8001 = vmatprep.subr.bf16.mxu0 0
        %8002 = vmatpush1.bf16.msra.mxu0 %v7919
        %8003 = vmatprep.subr.bf16.mxu0 0
        %8004 = vmatpush1.bf16.msra.mxu0 %v7920
        %8005 = vmatprep.subr.bf16.mxu0 0
        %8006 = vmatpush1.bf16.msra.mxu0 %v7921
        %8007 = vmatprep.subr.bf16.mxu0 0
        %8008 = vmatpush1.bf16.msra.mxu0 %v7922
        %8009 = vmatprep.subr.bf16.mxu0 0
        %8010 = vmatpush1.bf16.msra.mxu0 %v7923
        %8011 = vmatprep.subr.bf16.mxu0 0
        %8012 = vmatpush1.bf16.msra.mxu0 %v7924
        %8013 = vmatprep.subr.bf16.mxu0 0
        %8014 = vmatpush1.bf16.msra.mxu0 %v7925
        %8015 = vmatprep.subr.bf16.mxu0 0
        %8016 = vmatpush1.bf16.msra.mxu0 %v7926
        %8017 = vmatprep.subr.bf16.mxu0 0
        %8018 = vmatpush1.bf16.msra.mxu0 %v7927
        %8019 = vmatprep.subr.bf16.mxu0 0
        %8020 = vmatpush1.bf16.msra.mxu0 %v7928
        %8021 = vmatprep.mubr.bf16.mxu0 %v7693
        %8022 = vmatmul.mubr.bf16.gmra.mrb[0].mxu0 %v7692
        %v8023 = vpop.f32.mrb[0].mxu0
        %v8024 = vadd.f32 0.0, %v8023
        %v8025 = vpop.f32.mrb[0].mxu0
        %v8026 = vpop.f32.mrb[0].mxu0
        %v8027 = vpop.f32.mrb[0].mxu0
        %8028 = vdwg.mxu0
        %8029 = vmatprep.subr.bf16.mxu0 0
        %8030 = vmatpush1.bf16.msra.mxu0 %v7929
        %8031 = vmatprep.subr.bf16.mxu0 0
        %8032 = vmatpush1.bf16.msra.mxu0 %v7930
        %8033 = vmatprep.subr.bf16.mxu0 0
        %8034 = vmatpush1.bf16.msra.mxu0 %v7931
        %8035 = vmatprep.subr.bf16.mxu0 0
        %8036 = vmatpush1.bf16.msra.mxu0 %v7932
        %8037 = vmatprep.subr.bf16.mxu0 0
        %8038 = vmatpush1.bf16.msra.mxu0 %v7933
        %8039 = vmatprep.subr.bf16.mxu0 0
        %8040 = vmatpush1.bf16.msra.mxu0 %v7934
        %8041 = vmatprep.subr.bf16.mxu0 0
        %8042 = vmatpush1.bf16.msra.mxu0 %v7935
        %8043 = vmatprep.subr.bf16.mxu0 0
        %8044 = vmatpush1.bf16.msra.mxu0 %v7936
        %8045 = vmatprep.subr.bf16.mxu0 0
        %8046 = vmatpush1.bf16.msra.mxu0 %v7937
        %8047 = vmatprep.subr.bf16.mxu0 0
        %8048 = vmatpush1.bf16.msra.mxu0 %v7938
        %8049 = vmatprep.subr.bf16.mxu0 0
        %8050 = vmatpush1.bf16.msra.mxu0 %v7939
        %8051 = vmatprep.subr.bf16.mxu0 0
        %8052 = vmatpush1.bf16.msra.mxu0 %v7940
        %8053 = vmatprep.subr.bf16.mxu0 0
        %8054 = vmatpush1.bf16.msra.mxu0 %v7941
        %8055 = vmatprep.subr.bf16.mxu0 0
        %8056 = vmatpush1.bf16.msra.mxu0 %v7942
        %8057 = vmatprep.subr.bf16.mxu0 0
        %8058 = vmatpush1.bf16.msra.mxu0 %v7943
        %8059 = vmatprep.subr.bf16.mxu0 0
        %8060 = vmatpush1.bf16.msra.mxu0 %v7944
        %8061 = vmatprep.mubr.bf16.mxu0 %v7695
        %8062 = vmatmul.mubr.bf16.gmra.mrb[0].mxu0 %v7694
        %v8063 = vpop.f32.mrb[0].mxu0
        %v8064 = vadd.f32 %v8024, %v8063
        %v8065 = vpop.f32.mrb[0].mxu0
        %v8066 = vpop.f32.mrb[0].mxu0
        %v8067 = vpop.f32.mrb[0].mxu0
        %8068 = vdwg.mxu0
        %8069 = vmatprep.subr.bf16.mxu0 0
        %8070 = vmatpush1.bf16.msra.mxu0 %v7945
        %8071 = vmatprep.subr.bf16.mxu0 0
        %8072 = vmatpush1.bf16.msra.mxu0 %v7946
        %8073 = vmatprep.subr.bf16.mxu0 0
        %8074 = vmatpush1.bf16.msra.mxu0 %v7947
        %8075 = vmatprep.subr.bf16.mxu0 0
        %8076 = vmatpush1.bf16.msra.mxu0 %v7948
        %8077 = vmatprep.subr.bf16.mxu0 0
        %8078 = vmatpush1.bf16.msra.mxu0 0
        %8079 = vmatprep.subr.bf16.mxu0 0
        %8080 = vmatpush1.bf16.msra.mxu0 0
        %8081 = vmatprep.subr.bf16.mxu0 0
        %8082 = vmatpush1.bf16.msra.mxu0 0
        %8083 = vmatprep.subr.bf16.mxu0 0
        %8084 = vmatpush1.bf16.msra.mxu0 0
        %8085 = vmatprep.subr.bf16.mxu0 0
        %8086 = vmatpush1.bf16.msra.mxu0 0
        %8087 = vmatprep.subr.bf16.mxu0 0
        %8088 = vmatpush1.bf16.msra.mxu0 0
        %8089 = vmatprep.subr.bf16.mxu0 0
        %8090 = vmatpush1.bf16.msra.mxu0 0
        %8091 = vmatprep.subr.bf16.mxu0 0
        %8092 = vmatpush1.bf16.msra.mxu0 0
        %8093 = vmatprep.subr.bf16.mxu0 0
        %8094 = vmatpush1.bf16.msra.mxu0 0
        %8095 = vmatprep.subr.bf16.mxu0 0
        %8096 = vmatpush1.bf16.msra.mxu0 0
        %8097 = vmatprep.subr.bf16.mxu0 0
        %8098 = vmatpush1.bf16.msra.mxu0 0
        %8099 = vmatprep.subr.bf16.mxu0 0
        %8100 = vmatpush1.bf16.msra.mxu0 0
        %8101 = vmatprep.mubr.bf16.mxu0 0
        %8102 = vmatmul.mubr.bf16.gmra.mrb[0].mxu0 %v7987
        %v8103 = vpop.f32.mrb[0].mxu0
        %v8104 = vadd.f32 %v8064, %v8103
        %v8105 = vpop.f32.mrb[0].mxu0
        %v8106 = vpop.f32.mrb[0].mxu0
        %v8107 = vpop.f32.mrb[0].mxu0
        %8108 = vdwg.mxu0
        %v8109 = vadd.f32 %v7545, %v8104
        %s8110 = scalar_lea.vmem %s10, 1
        %v8111 = vld [vmem:[%s8110] sm:$0x1]
        %v8113 = vsel %vm7547, %v8111, 0
        %8115 = vmatprep.subr.bf16.mxu0 %v7559
        %8116 = vmatpush1.bf16.msra.mxu0 %v7556
        %8117 = vmatprep.subr.bf16.mxu0 0
        %8118 = vmatpush1.bf16.msra.mxu0 0
        %8119 = vmatprep.subr.bf16.mxu0 0
        %8120 = vmatpush1.bf16.msra.mxu0 0
        %8121 = vmatprep.subr.bf16.mxu0 0
        %8122 = vmatpush1.bf16.msra.mxu0 0
        %8123 = vmatprep.subr.bf16.mxu0 0
        %8124 = vmatpush1.bf16.msra.mxu0 0
        %8125 = vmatprep.subr.bf16.mxu0 0
        %8126 = vmatpush1.bf16.msra.mxu0 0
        %8127 = vmatprep.subr.bf16.mxu0 0
        %8128 = vmatpush1.bf16.msra.mxu0 0
        %8129 = vmatprep.subr.bf16.mxu0 0
        %8130 = vmatpush1.bf16.msra.mxu0 0
        %8131 = vmatprep.subr.bf16.mxu0 0
        %8132 = vmatpush1.bf16.msra.mxu0 0
        %8133 = vmatprep.subr.bf16.mxu0 0
        %8134 = vmatpush1.bf16.msra.mxu0 0
        %8135 = vmatprep.subr.bf16.mxu0 0
        %8136 = vmatpush1.bf16.msra.mxu0 0
        %8137 = vmatprep.subr.bf16.mxu0 0
        %8138 = vmatpush1.bf16.msra.mxu0 0
        %8139 = vmatprep.subr.bf16.mxu0 0
        %8140 = vmatpush1.bf16.msra.mxu0 0
        %8141 = vmatprep.subr.bf16.mxu0 0
        %8142 = vmatpush1.bf16.msra.mxu0 0
        %8143 = vmatprep.subr.bf16.mxu0 0
        %8144 = vmatpush1.bf16.msra.mxu0 0
        %8145 = vmatprep.subr.bf16.mxu0 0
        %8146 = vmatpush1.bf16.msra.mxu0 0
        %8147 = vmatprep.mubr.bf16.mxu0 0
        %8148 = vmatmul.mubr.bf16.gmra.mrb[0].mxu0 %v8113
        %v8149 = vpop.f32.mrb[0].mxu0
        %v8150 = vadd.f32 0.0, %v8149
        %v8151 = vpop.f32.mrb[0].mxu0
        %v8152 = vadd.f32 0.0, %v8151
        %v8153 = vpop.f32.mrb[0].mxu0
        %v8154 = vpop.f32.mrb[0].mxu0
        %8155 = vdwg.mxu0
        %8156 = vmatprep.subr.bf16.mxu0 %v7565
        %8157 = vmatpush1.bf16.msra.mxu0 %v7562
        %8158 = vmatprep.subr.bf16.mxu0 0
        %8159 = vmatpush1.bf16.msra.mxu0 0
        %8160 = vmatprep.subr.bf16.mxu0 0
        %8161 = vmatpush1.bf16.msra.mxu0 0
        %8162 = vmatprep.subr.bf16.mxu0 0
        %8163 = vmatpush1.bf16.msra.mxu0 0
        %8164 = vmatprep.subr.bf16.mxu0 0
        %8165 = vmatpush1.bf16.msra.mxu0 0
        %8166 = vmatprep.subr.bf16.mxu0 0
        %8167 = vmatpush1.bf16.msra.mxu0 0
        %8168 = vmatprep.subr.bf16.mxu0 0
        %8169 = vmatpush1.bf16.msra.mxu0 0
        %8170 = vmatprep.subr.bf16.mxu0 0
        %8171 = vmatpush1.bf16.msra.mxu0 0
        %8172 = vmatprep.subr.bf16.mxu0 0
        %8173 = vmatpush1.bf16.msra.mxu0 0
        %8174 = vmatprep.subr.bf16.mxu0 0
        %8175 = vmatpush1.bf16.msra.mxu0 0
        %8176 = vmatprep.subr.bf16.mxu0 0
        %8177 = vmatpush1.bf16.msra.mxu0 0
        %8178 = vmatprep.subr.bf16.mxu0 0
        %8179 = vmatpush1.bf16.msra.mxu0 0
        %8180 = vmatprep.subr.bf16.mxu0 0
        %8181 = vmatpush1.bf16.msra.mxu0 0
        %8182 = vmatprep.subr.bf16.mxu0 0
        %8183 = vmatpush1.bf16.msra.mxu0 0
        %8184 = vmatprep.subr.bf16.mxu0 0
        %8185 = vmatpush1.bf16.msra.mxu0 0
        %8186 = vmatprep.subr.bf16.mxu0 0
        %8187 = vmatpush1.bf16.msra.mxu0 0
        %8188 = vmatprep.mubr.bf16.mxu0 0
        %8189 = vmatmul.mubr.bf16.gmra.mrb[0].mxu0 %v8113
        %v8190 = vpop.f32.mrb[0].mxu0
        %v8191 = vadd.f32 0.0, %v8190
        %v8192 = vpop.f32.mrb[0].mxu0
        %v8193 = vadd.f32 0.0, %v8192
        %v8194 = vpop.f32.mrb[0].mxu0
        %v8195 = vpop.f32.mrb[0].mxu0
        %8196 = vdwg.mxu0
        %8197 = vmatprep.subr.bf16.mxu0 0
        %8198 = vmatpush1.bf16.msra.mxu0 %v7568
        %8199 = vmatprep.subr.bf16.mxu0 0
        %8200 = vmatpush1.bf16.msra.mxu0 0
        %8201 = vmatprep.subr.bf16.mxu0 0
        %8202 = vmatpush1.bf16.msra.mxu0 0
        %8203 = vmatprep.subr.bf16.mxu0 0
        %8204 = vmatpush1.bf16.msra.mxu0 0
        %8205 = vmatprep.subr.bf16.mxu0 0
        %8206 = vmatpush1.bf16.msra.mxu0 0
        %8207 = vmatprep.subr.bf16.mxu0 0
        %8208 = vmatpush1.bf16.msra.mxu0 0
        %8209 = vmatprep.subr.bf16.mxu0 0
        %8210 = vmatpush1.bf16.msra.mxu0 0
        %8211 = vmatprep.subr.bf16.mxu0 0
        %8212 = vmatpush1.bf16.msra.mxu0 0
        %8213 = vmatprep.subr.bf16.mxu0 0
        %8214 = vmatpush1.bf16.msra.mxu0 0
        %8215 = vmatprep.subr.bf16.mxu0 0
        %8216 = vmatpush1.bf16.msra.mxu0 0
        %8217 = vmatprep.subr.bf16.mxu0 0
        %8218 = vmatpush1.bf16.msra.mxu0 0
        %8219 = vmatprep.subr.bf16.mxu0 0
        %8220 = vmatpush1.bf16.msra.mxu0 0
        %8221 = vmatprep.subr.bf16.mxu0 0
        %8222 = vmatpush1.bf16.msra.mxu0 0
        %8223 = vmatprep.subr.bf16.mxu0 0
        %8224 = vmatpush1.bf16.msra.mxu0 0
        %8225 = vmatprep.subr.bf16.mxu0 0
        %8226 = vmatpush1.bf16.msra.mxu0 0
        %8227 = vmatprep.subr.bf16.mxu0 0
        %8228 = vmatpush1.bf16.msra.mxu0 0
        %8229 = vmatprep.mubr.bf16.mxu0 0
        %8230 = vmatmul.mubr.bf16.gmra.mrb[0].mxu0 %v8113
        %v8231 = vpop.f32.mrb[0].mxu0
        %v8232 = vadd.f32 0.0, %v8231
        %v8233 = vpop.f32.mrb[0].mxu0
        %v8234 = vpop.f32.mrb[0].mxu0
        %v8235 = vpop.f32.mrb[0].mxu0
        %8236 = vdwg.mxu0
        %v8237 = vpack.c.bf16 %v8150, %v8150
        %v8238 = vpack.c.bf16 %v8152, %v8152
        %v8239 = vpack.c.bf16 %v8191, %v8191
        %v8240 = vpack.c.bf16 %v8193, %v8193
        %v8241 = vpack.c.bf16 %v8232, %v8232
        %s8242 = scalar_lea.vmem %s11, 288
        %v8243 = vld [vmem:[%s8242] sm:$0xf]
        %v8244 = vld [vmem:[%s8242 + $0x4] sm:$0xf]
        %v8245 = vld [vmem:[%s8242 + $0x8] sm:$0xf]
        %v8246 = vld [vmem:[%s8242 + $0xc] sm:$0xf]
        %v8247 = vld [vmem:[%s8242 + $0x10] sm:$0xf]
        %v8248 = vld [vmem:[%s8242 + $0x14] sm:$0xf]
        %v8249 = vld [vmem:[%s8242 + $0x18] sm:$0xf]
        %v8250 = vld [vmem:[%s8242 + $0x1c] sm:$0xf]
        %v8251 = vld [vmem:[%s8242 + $0x20] sm:$0xf]
        %v8252 = vld [vmem:[%s8242 + $0x24] sm:$0xf]
        %v8253 = vld [vmem:[%s8242 + $0x28] sm:$0xf]
        %v8254 = vld [vmem:[%s8242 + $0x2c] sm:$0xf]
        %v8255 = vld [vmem:[%s8242 + $0x30] sm:$0xf]
        %v8256 = vld [vmem:[%s8242 + $0x34] sm:$0xf]
        %v8257 = vld [vmem:[%s8242 + $0x38] sm:$0xf]
        %v8258 = vld [vmem:[%s8242 + $0x3c] sm:$0xf]
        %v8259 = vld [vmem:[%s8242 + $0x40] sm:$0xf]
        %v8260 = vld [vmem:[%s8242 + $0x44] sm:$0xf]
        %v8261 = vld [vmem:[%s8242 + $0x48] sm:$0xf]
        %v8262 = vld [vmem:[%s8242 + $0x4c] sm:$0xf]
        %v8263 = vld [vmem:[%s8242 + $0x50] sm:$0xf]
        %v8264 = vld [vmem:[%s8242 + $0x54] sm:$0xf]
        %v8265 = vld [vmem:[%s8242 + $0x58] sm:$0xf]
        %v8266 = vld [vmem:[%s8242 + $0x5c] sm:$0xf]
        %v8267 = vld [vmem:[%s8242 + $0x60] sm:$0xf]
        %v8268 = vld [vmem:[%s8242 + $0x64] sm:$0xf]
        %v8269 = vld [vmem:[%s8242 + $0x68] sm:$0xf]
        %v8270 = vld [vmem:[%s8242 + $0x6c] sm:$0xf]
        %v8271 = vld [vmem:[%s8242 + $0x70] sm:$0xf]
        %v8272 = vld [vmem:[%s8242 + $0x74] sm:$0xf]
        %v8273 = vld [vmem:[%s8242 + $0x78] sm:$0xf]
        %v8274 = vld [vmem:[%s8242 + $0x7c] sm:$0xf]
        %v8275 = vld [vmem:[%s8242 + $0x80] sm:$0xf]
        %v8276 = vld [vmem:[%s8242 + $0x84] sm:$0xf]
        %v8277 = vld [vmem:[%s8242 + $0x88] sm:$0xf]
        %v8278 = vld [vmem:[%s8242 + $0x8c] sm:$0xf]
        %v8279 = vld [vmem:[%s8242 + $0x90] sm:$0xf]
        %v8280 = vld [vmem:[%s8242 + $0x94] sm:$0xf]
        %v8281 = vld [vmem:[%s8242 + $0x98] sm:$0xf]
        %v8282 = vld [vmem:[%s8242 + $0x9c] sm:$0xf]
        %v8283 = vld [vmem:[%s8242 + $0xa0] sm:$0xf]
        %v8284 = vld [vmem:[%s8242 + $0xa4] sm:$0xf]
        %v8285 = vld [vmem:[%s8242 + $0xa8] sm:$0xf]
        %v8286 = vld [vmem:[%s8242 + $0xac] sm:$0xf]
        %v8287 = vld [vmem:[%s8242 + $0xb0] sm:$0xf]
        %v8288 = vld [vmem:[%s8242 + $0xb4] sm:$0xf]
        %v8289 = vld [vmem:[%s8242 + $0xb8] sm:$0xf]
        %v8290 = vld [vmem:[%s8242 + $0xbc] sm:$0xf]
        %v8291 = vld [vmem:[%s8242 + $0xc0] sm:$0xf]
        %v8292 = vld [vmem:[%s8242 + $0xc4] sm:$0xf]
        %v8293 = vld [vmem:[%s8242 + $0xc8] sm:$0xf]
        %v8294 = vld [vmem:[%s8242 + $0xcc] sm:$0xf]
        %v8295 = vld [vmem:[%s8242 + $0xd0] sm:$0xf]
        %v8296 = vld [vmem:[%s8242 + $0xd4] sm:$0xf]
        %v8297 = vld [vmem:[%s8242 + $0xd8] sm:$0xf]
        %v8298 = vld [vmem:[%s8242 + $0xdc] sm:$0xf]
        %v8299 = vld [vmem:[%s8242 + $0xe0] sm:$0xf]
        %v8300 = vld [vmem:[%s8242 + $0xe4] sm:$0xf]
        %v8301 = vld [vmem:[%s8242 + $0xe8] sm:$0xf]
        %v8302 = vld [vmem:[%s8242 + $0xec] sm:$0xf]
        %v8303 = vld [vmem:[%s8242 + $0xf0] sm:$0xf]
        %v8304 = vld [vmem:[%s8242 + $0xf4] sm:$0xf]
        %v8305 = vld [vmem:[%s8242 + $0xf8] sm:$0xf]
        %v8306 = vld [vmem:[%s8242 + $0xfc] sm:$0xf]
        %v8307 = vld [vmem:[%s8242 + $0x100] sm:$0xf]
        %v8308 = vld [vmem:[%s8242 + $0x104] sm:$0xf]
        %v8309 = vld [vmem:[%s8242 + $0x108] sm:$0xf]
        %v8310 = vld [vmem:[%s8242 + $0x10c] sm:$0xf]
        %v8311 = vld [vmem:[%s8242 + $0x110] sm:$0xf]
        %v8312 = vld [vmem:[%s8242 + $0x114] sm:$0xf]
        %v8313 = vld [vmem:[%s8242 + $0x118] sm:$0xf]
        %v8314 = vld [vmem:[%s8242 + $0x11c] sm:$0xf]
        %v8387 = vunpack.c.l.b16 %v8243
        %v8388 = vunpack.c.l.b16 %v8244
        %v8389 = vunpack.c.l.b16 %v8245
        %v8390 = vunpack.c.l.b16 %v8246
        %v8391 = vunpack.c.l.b16 %v8247
        %v8392 = vunpack.c.l.b16 %v8248
        %v8393 = vunpack.c.l.b16 %v8249
        %v8394 = vunpack.c.l.b16 %v8250
        %v8395 = vunpack.c.l.b16 %v8251
        %v8396 = vunpack.c.l.b16 %v8252
        %v8397 = vunpack.c.l.b16 %v8253
        %v8398 = vunpack.c.l.b16 %v8254
        %v8399 = vunpack.c.l.b16 %v8255
        %v8400 = vunpack.c.l.b16 %v8256
        %v8401 = vunpack.c.l.b16 %v8257
        %v8402 = vunpack.c.l.b16 %v8258
        %v8403 = vunpack.c.l.b16 %v8259
        %v8404 = vunpack.c.l.b16 %v8260
        %v8405 = vunpack.c.l.b16 %v8261
        %v8406 = vunpack.c.l.b16 %v8262
        %v8407 = vunpack.c.l.b16 %v8263
        %v8408 = vunpack.c.l.b16 %v8264
        %v8409 = vunpack.c.l.b16 %v8265
        %v8410 = vunpack.c.l.b16 %v8266
        %v8411 = vunpack.c.l.b16 %v8267
        %v8412 = vunpack.c.l.b16 %v8268
        %v8413 = vunpack.c.l.b16 %v8269
        %v8414 = vunpack.c.l.b16 %v8270
        %v8415 = vunpack.c.l.b16 %v8271
        %v8416 = vunpack.c.l.b16 %v8272
        %v8417 = vunpack.c.l.b16 %v8273
        %v8418 = vunpack.c.l.b16 %v8274
        %v8419 = vunpack.c.l.b16 %v8275
        %v8420 = vunpack.c.l.b16 %v8276
        %v8421 = vunpack.c.l.b16 %v8277
        %v8422 = vunpack.c.l.b16 %v8278
        %v8423 = vunpack.c.l.b16 %v8279
        %v8424 = vunpack.c.l.b16 %v8280
        %v8425 = vunpack.c.l.b16 %v8281
        %v8426 = vunpack.c.l.b16 %v8282
        %v8427 = vunpack.c.l.b16 %v8283
        %v8428 = vunpack.c.l.b16 %v8284
        %v8429 = vunpack.c.l.b16 %v8285
        %v8430 = vunpack.c.l.b16 %v8286
        %v8431 = vunpack.c.l.b16 %v8287
        %v8432 = vunpack.c.l.b16 %v8288
        %v8433 = vunpack.c.l.b16 %v8289
        %v8434 = vunpack.c.l.b16 %v8290
        %v8435 = vunpack.c.l.b16 %v8291
        %v8436 = vunpack.c.l.b16 %v8292
        %v8437 = vunpack.c.l.b16 %v8293
        %v8438 = vunpack.c.l.b16 %v8294
        %v8439 = vunpack.c.l.b16 %v8295
        %v8440 = vunpack.c.l.b16 %v8296
        %v8441 = vunpack.c.l.b16 %v8297
        %v8442 = vunpack.c.l.b16 %v8298
        %v8443 = vunpack.c.l.b16 %v8299
        %v8444 = vunpack.c.l.b16 %v8300
        %v8445 = vunpack.c.l.b16 %v8301
        %v8446 = vunpack.c.l.b16 %v8302
        %v8447 = vunpack.c.l.b16 %v8303
        %v8448 = vunpack.c.l.b16 %v8304
        %v8449 = vunpack.c.l.b16 %v8305
        %v8450 = vunpack.c.l.b16 %v8306
        %v8451 = vunpack.c.l.b16 %v8307
        %v8452 = vunpack.c.l.b16 %v8308
        %v8453 = vunpack.c.l.b16 %v8309
        %v8454 = vunpack.c.l.b16 %v8310
        %v8455 = vunpack.c.l.b16 %v8311
        %v8456 = vunpack.c.l.b16 %v8312
        %v8457 = vunpack.c.l.b16 %v8313
        %v8458 = vunpack.c.l.b16 %v8314
        %v8459 = vpack.c.b16 %v8388, %v8387
        %v8460 = vpack.c.b16 %v8390, %v8389
        %v8461 = vpack.c.b16 %v8392, %v8391
        %v8462 = vpack.c.b16 %v8394, %v8393
        %v8463 = vpack.c.b16 %v8396, %v8395
        %v8464 = vpack.c.b16 %v8398, %v8397
        %v8465 = vpack.c.b16 %v8400, %v8399
        %v8466 = vpack.c.b16 %v8402, %v8401
        %v8467 = vpack.c.b16 %v8404, %v8403
        %v8468 = vpack.c.b16 %v8406, %v8405
        %v8469 = vpack.c.b16 %v8408, %v8407
        %v8470 = vpack.c.b16 %v8410, %v8409
        %v8471 = vpack.c.b16 %v8412, %v8411
        %v8472 = vpack.c.b16 %v8414, %v8413
        %v8473 = vpack.c.b16 %v8416, %v8415
        %v8474 = vpack.c.b16 %v8418, %v8417
        %v8475 = vpack.c.b16 %v8420, %v8419
        %v8476 = vpack.c.b16 %v8422, %v8421
        %v8477 = vpack.c.b16 %v8424, %v8423
        %v8478 = vpack.c.b16 %v8426, %v8425
        %v8479 = vpack.c.b16 %v8428, %v8427
        %v8480 = vpack.c.b16 %v8430, %v8429
        %v8481 = vpack.c.b16 %v8432, %v8431
        %v8482 = vpack.c.b16 %v8434, %v8433
        %v8483 = vpack.c.b16 %v8436, %v8435
        %v8484 = vpack.c.b16 %v8438, %v8437
        %v8485 = vpack.c.b16 %v8440, %v8439
        %v8486 = vpack.c.b16 %v8442, %v8441
        %v8487 = vpack.c.b16 %v8444, %v8443
        %v8488 = vpack.c.b16 %v8446, %v8445
        %v8489 = vpack.c.b16 %v8448, %v8447
        %v8490 = vpack.c.b16 %v8450, %v8449
        %v8491 = vpack.c.b16 %v8452, %v8451
        %v8492 = vpack.c.b16 %v8454, %v8453
        %v8493 = vpack.c.b16 %v8456, %v8455
        %v8494 = vpack.c.b16 %v8458, %v8457
        %v8532 = vsel %vm7985, %v8241, 0
        %8534 = vmatprep.subr.bf16.mxu0 0
        %8535 = vmatpush1.bf16.msra.mxu0 %v8459
        %8536 = vmatprep.subr.bf16.mxu0 0
        %8537 = vmatpush1.bf16.msra.mxu0 %v8460
        %8538 = vmatprep.subr.bf16.mxu0 0
        %8539 = vmatpush1.bf16.msra.mxu0 %v8461
        %8540 = vmatprep.subr.bf16.mxu0 0
        %8541 = vmatpush1.bf16.msra.mxu0 %v8462
        %8542 = vmatprep.subr.bf16.mxu0 0
        %8543 = vmatpush1.bf16.msra.mxu0 %v8463
        %8544 = vmatprep.subr.bf16.mxu0 0
        %8545 = vmatpush1.bf16.msra.mxu0 %v8464
        %8546 = vmatprep.subr.bf16.mxu0 0
        %8547 = vmatpush1.bf16.msra.mxu0 %v8465
        %8548 = vmatprep.subr.bf16.mxu0 0
        %8549 = vmatpush1.bf16.msra.mxu0 %v8466
        %8550 = vmatprep.subr.bf16.mxu0 0
        %8551 = vmatpush1.bf16.msra.mxu0 %v8467
        %8552 = vmatprep.subr.bf16.mxu0 0
        %8553 = vmatpush1.bf16.msra.mxu0 %v8468
        %8554 = vmatprep.subr.bf16.mxu0 0
        %8555 = vmatpush1.bf16.msra.mxu0 %v8469
        %8556 = vmatprep.subr.bf16.mxu0 0
        %8557 = vmatpush1.bf16.msra.mxu0 %v8470
        %8558 = vmatprep.subr.bf16.mxu0 0
        %8559 = vmatpush1.bf16.msra.mxu0 %v8471
        %8560 = vmatprep.subr.bf16.mxu0 0
        %8561 = vmatpush1.bf16.msra.mxu0 %v8472
        %8562 = vmatprep.subr.bf16.mxu0 0
        %8563 = vmatpush1.bf16.msra.mxu0 %v8473
        %8564 = vmatprep.subr.bf16.mxu0 0
        %8565 = vmatpush1.bf16.msra.mxu0 %v8474
        %8566 = vmatprep.mubr.bf16.mxu0 %v8238
        %8567 = vmatmul.mubr.bf16.gmra.mrb[0].mxu0 %v8237
        %v8568 = vpop.f32.mrb[0].mxu0
        %v8569 = vadd.f32 0.0, %v8568
        %v8570 = vpop.f32.mrb[0].mxu0
        %v8571 = vpop.f32.mrb[0].mxu0
        %v8572 = vpop.f32.mrb[0].mxu0
        %8573 = vdwg.mxu0
        %8574 = vmatprep.subr.bf16.mxu0 0
        %8575 = vmatpush1.bf16.msra.mxu0 %v8475
        %8576 = vmatprep.subr.bf16.mxu0 0
        %8577 = vmatpush1.bf16.msra.mxu0 %v8476
        %8578 = vmatprep.subr.bf16.mxu0 0
        %8579 = vmatpush1.bf16.msra.mxu0 %v8477
        %8580 = vmatprep.subr.bf16.mxu0 0
        %8581 = vmatpush1.bf16.msra.mxu0 %v8478
        %8582 = vmatprep.subr.bf16.mxu0 0
        %8583 = vmatpush1.bf16.msra.mxu0 %v8479
        %8584 = vmatprep.subr.bf16.mxu0 0
        %8585 = vmatpush1.bf16.msra.mxu0 %v8480
        %8586 = vmatprep.subr.bf16.mxu0 0
        %8587 = vmatpush1.bf16.msra.mxu0 %v8481
        %8588 = vmatprep.subr.bf16.mxu0 0
        %8589 = vmatpush1.bf16.msra.mxu0 %v8482
        %8590 = vmatprep.subr.bf16.mxu0 0
        %8591 = vmatpush1.bf16.msra.mxu0 %v8483
        %8592 = vmatprep.subr.bf16.mxu0 0
        %8593 = vmatpush1.bf16.msra.mxu0 %v8484
        %8594 = vmatprep.subr.bf16.mxu0 0
        %8595 = vmatpush1.bf16.msra.mxu0 %v8485
        %8596 = vmatprep.subr.bf16.mxu0 0
        %8597 = vmatpush1.bf16.msra.mxu0 %v8486
        %8598 = vmatprep.subr.bf16.mxu0 0
        %8599 = vmatpush1.bf16.msra.mxu0 %v8487
        %8600 = vmatprep.subr.bf16.mxu0 0
        %8601 = vmatpush1.bf16.msra.mxu0 %v8488
        %8602 = vmatprep.subr.bf16.mxu0 0
        %8603 = vmatpush1.bf16.msra.mxu0 %v8489
        %8604 = vmatprep.subr.bf16.mxu0 0
        %8605 = vmatpush1.bf16.msra.mxu0 %v8490
        %8606 = vmatprep.mubr.bf16.mxu0 %v8240
        %8607 = vmatmul.mubr.bf16.gmra.mrb[0].mxu0 %v8239
        %v8608 = vpop.f32.mrb[0].mxu0
        %v8609 = vadd.f32 %v8569, %v8608
        %v8610 = vpop.f32.mrb[0].mxu0
        %v8611 = vpop.f32.mrb[0].mxu0
        %v8612 = vpop.f32.mrb[0].mxu0
        %8613 = vdwg.mxu0
        %8614 = vmatprep.subr.bf16.mxu0 0
        %8615 = vmatpush1.bf16.msra.mxu0 %v8491
        %8616 = vmatprep.subr.bf16.mxu0 0
        %8617 = vmatpush1.bf16.msra.mxu0 %v8492
        %8618 = vmatprep.subr.bf16.mxu0 0
        %8619 = vmatpush1.bf16.msra.mxu0 %v8493
        %8620 = vmatprep.subr.bf16.mxu0 0
        %8621 = vmatpush1.bf16.msra.mxu0 %v8494
        %8622 = vmatprep.subr.bf16.mxu0 0
        %8623 = vmatpush1.bf16.msra.mxu0 0
        %8624 = vmatprep.subr.bf16.mxu0 0
        %8625 = vmatpush1.bf16.msra.mxu0 0
        %8626 = vmatprep.subr.bf16.mxu0 0
        %8627 = vmatpush1.bf16.msra.mxu0 0
        %8628 = vmatprep.subr.bf16.mxu0 0
        %8629 = vmatpush1.bf16.msra.mxu0 0
        %8630 = vmatprep.subr.bf16.mxu0 0
        %8631 = vmatpush1.bf16.msra.mxu0 0
        %8632 = vmatprep.subr.bf16.mxu0 0
        %8633 = vmatpush1.bf16.msra.mxu0 0
        %8634 = vmatprep.subr.bf16.mxu0 0
        %8635 = vmatpush1.bf16.msra.mxu0 0
        %8636 = vmatprep.subr.bf16.mxu0 0
        %8637 = vmatpush1.bf16.msra.mxu0 0
        %8638 = vmatprep.subr.bf16.mxu0 0
        %8639 = vmatpush1.bf16.msra.mxu0 0
        %8640 = vmatprep.subr.bf16.mxu0 0
        %8641 = vmatpush1.bf16.msra.mxu0 0
        %8642 = vmatprep.subr.bf16.mxu0 0
        %8643 = vmatpush1.bf16.msra.mxu0 0
        %8644 = vmatprep.subr.bf16.mxu0 0
        %8645 = vmatpush1.bf16.msra.mxu0 0
        %8646 = vmatprep.mubr.bf16.mxu0 0
        %8647 = vmatmul.mubr.bf16.gmra.mrb[0].mxu0 %v8532
        %v8648 = vpop.f32.mrb[0].mxu0
        %v8649 = vadd.f32 %v8609, %v8648
        %v8650 = vpop.f32.mrb[0].mxu0
        %v8651 = vpop.f32.mrb[0].mxu0
        %v8652 = vpop.f32.mrb[0].mxu0
        %8653 = vdwg.mxu0
        %v8654 = vadd.f32 %v8109, %v8649
        %s8655 = scalar_lea.vmem %s10, 2
        %v8656 = vld [vmem:[%s8655] sm:$0x1]
        %v8658 = vsel %vm7547, %v8656, 0
        %8660 = vmatprep.subr.bf16.mxu0 %v7559
        %8661 = vmatpush1.bf16.msra.mxu0 %v7556
        %8662 = vmatprep.subr.bf16.mxu0 0
        %8663 = vmatpush1.bf16.msra.mxu0 0
        %8664 = vmatprep.subr.bf16.mxu0 0
        %8665 = vmatpush1.bf16.msra.mxu0 0
        %8666 = vmatprep.subr.bf16.mxu0 0
        %8667 = vmatpush1.bf16.msra.mxu0 0
        %8668 = vmatprep.subr.bf16.mxu0 0
        %8669 = vmatpush1.bf16.msra.mxu0 0
        %8670 = vmatprep.subr.bf16.mxu0 0
        %8671 = vmatpush1.bf16.msra.mxu0 0
        %8672 = vmatprep.subr.bf16.mxu0 0
        %8673 = vmatpush1.bf16.msra.mxu0 0
        %8674 = vmatprep.subr.bf16.mxu0 0
        %8675 = vmatpush1.bf16.msra.mxu0 0
        %8676 = vmatprep.subr.bf16.mxu0 0
        %8677 = vmatpush1.bf16.msra.mxu0 0
        %8678 = vmatprep.subr.bf16.mxu0 0
        %8679 = vmatpush1.bf16.msra.mxu0 0
        %8680 = vmatprep.subr.bf16.mxu0 0
        %8681 = vmatpush1.bf16.msra.mxu0 0
        %8682 = vmatprep.subr.bf16.mxu0 0
        %8683 = vmatpush1.bf16.msra.mxu0 0
        %8684 = vmatprep.subr.bf16.mxu0 0
        %8685 = vmatpush1.bf16.msra.mxu0 0
        %8686 = vmatprep.subr.bf16.mxu0 0
        %8687 = vmatpush1.bf16.msra.mxu0 0
        %8688 = vmatprep.subr.bf16.mxu0 0
        %8689 = vmatpush1.bf16.msra.mxu0 0
        %8690 = vmatprep.subr.bf16.mxu0 0
        %8691 = vmatpush1.bf16.msra.mxu0 0
        %8692 = vmatprep.mubr.bf16.mxu0 0
        %8693 = vmatmul.mubr.bf16.gmra.mrb[0].mxu0 %v8658
        %v8694 = vpop.f32.mrb[0].mxu0
        %v8695 = vadd.f32 0.0, %v8694
        %v8696 = vpop.f32.mrb[0].mxu0
        %v8697 = vadd.f32 0.0, %v8696
        %v8698 = vpop.f32.mrb[0].mxu0
        %v8699 = vpop.f32.mrb[0].mxu0
        %8700 = vdwg.mxu0
        %8701 = vmatprep.subr.bf16.mxu0 %v7565
        %8702 = vmatpush1.bf16.msra.mxu0 %v7562
        %8703 = vmatprep.subr.bf16.mxu0 0
        %8704 = vmatpush1.bf16.msra.mxu0 0
        %8705 = vmatprep.subr.bf16.mxu0 0
        %8706 = vmatpush1.bf16.msra.mxu0 0
        %8707 = vmatprep.subr.bf16.mxu0 0
        %8708 = vmatpush1.bf16.msra.mxu0 0
        %8709 = vmatprep.subr.bf16.mxu0 0
        %8710 = vmatpush1.bf16.msra.mxu0 0
        %8711 = vmatprep.subr.bf16.mxu0 0
        %8712 = vmatpush1.bf16.msra.mxu0 0
        %8713 = vmatprep.subr.bf16.mxu0 0
        %8714 = vmatpush1.bf16.msra.mxu0 0
        %8715 = vmatprep.subr.bf16.mxu0 0
        %8716 = vmatpush1.bf16.msra.mxu0 0
        %8717 = vmatprep.subr.bf16.mxu0 0
        %8718 = vmatpush1.bf16.msra.mxu0 0
        %8719 = vmatprep.subr.bf16.mxu0 0
        %8720 = vmatpush1.bf16.msra.mxu0 0
        %8721 = vmatprep.subr.bf16.mxu0 0
        %8722 = vmatpush1.bf16.msra.mxu0 0
        %8723 = vmatprep.subr.bf16.mxu0 0
        %8724 = vmatpush1.bf16.msra.mxu0 0
        %8725 = vmatprep.subr.bf16.mxu0 0
        %8726 = vmatpush1.bf16.msra.mxu0 0
        %8727 = vmatprep.subr.bf16.mxu0 0
        %8728 = vmatpush1.bf16.msra.mxu0 0
        %8729 = vmatprep.subr.bf16.mxu0 0
        %8730 = vmatpush1.bf16.msra.mxu0 0
        %8731 = vmatprep.subr.bf16.mxu0 0
        %8732 = vmatpush1.bf16.msra.mxu0 0
        %8733 = vmatprep.mubr.bf16.mxu0 0
        %8734 = vmatmul.mubr.bf16.gmra.mrb[0].mxu0 %v8658
        %v8735 = vpop.f32.mrb[0].mxu0
        %v8736 = vadd.f32 0.0, %v8735
        %v8737 = vpop.f32.mrb[0].mxu0
        %v8738 = vadd.f32 0.0, %v8737
        %v8739 = vpop.f32.mrb[0].mxu0
        %v8740 = vpop.f32.mrb[0].mxu0
        %8741 = vdwg.mxu0
        %8742 = vmatprep.subr.bf16.mxu0 0
        %8743 = vmatpush1.bf16.msra.mxu0 %v7568
        %8744 = vmatprep.subr.bf16.mxu0 0
        %8745 = vmatpush1.bf16.msra.mxu0 0
        %8746 = vmatprep.subr.bf16.mxu0 0
        %8747 = vmatpush1.bf16.msra.mxu0 0
        %8748 = vmatprep.subr.bf16.mxu0 0
        %8749 = vmatpush1.bf16.msra.mxu0 0
        %8750 = vmatprep.subr.bf16.mxu0 0
        %8751 = vmatpush1.bf16.msra.mxu0 0
        %8752 = vmatprep.subr.bf16.mxu0 0
        %8753 = vmatpush1.bf16.msra.mxu0 0
        %8754 = vmatprep.subr.bf16.mxu0 0
        %8755 = vmatpush1.bf16.msra.mxu0 0
        %8756 = vmatprep.subr.bf16.mxu0 0
        %8757 = vmatpush1.bf16.msra.mxu0 0
        %8758 = vmatprep.subr.bf16.mxu0 0
        %8759 = vmatpush1.bf16.msra.mxu0 0
        %8760 = vmatprep.subr.bf16.mxu0 0
        %8761 = vmatpush1.bf16.msra.mxu0 0
        %8762 = vmatprep.subr.bf16.mxu0 0
        %8763 = vmatpush1.bf16.msra.mxu0 0
        %8764 = vmatprep.subr.bf16.mxu0 0
        %8765 = vmatpush1.bf16.msra.mxu0 0
        %8766 = vmatprep.subr.bf16.mxu0 0
        %8767 = vmatpush1.bf16.msra.mxu0 0
        %8768 = vmatprep.subr.bf16.mxu0 0
        %8769 = vmatpush1.bf16.msra.mxu0 0
        %8770 = vmatprep.subr.bf16.mxu0 0
        %8771 = vmatpush1.bf16.msra.mxu0 0
        %8772 = vmatprep.subr.bf16.mxu0 0
        %8773 = vmatpush1.bf16.msra.mxu0 0
        %8774 = vmatprep.mubr.bf16.mxu0 0
        %8775 = vmatmul.mubr.bf16.gmra.mrb[0].mxu0 %v8658
        %v8776 = vpop.f32.mrb[0].mxu0
        %v8777 = vadd.f32 0.0, %v8776
        %v8778 = vpop.f32.mrb[0].mxu0
        %v8779 = vpop.f32.mrb[0].mxu0
        %v8780 = vpop.f32.mrb[0].mxu0
        %8781 = vdwg.mxu0
        %v8782 = vpack.c.bf16 %v8695, %v8695
        %v8783 = vpack.c.bf16 %v8697, %v8697
        %v8784 = vpack.c.bf16 %v8736, %v8736
        %v8785 = vpack.c.bf16 %v8738, %v8738
        %v8786 = vpack.c.bf16 %v8777, %v8777
        %s8787 = scalar_lea.vmem %s11, 576
        %v8788 = vld [vmem:[%s8787] sm:$0xf]
        %v8789 = vld [vmem:[%s8787 + $0x4] sm:$0xf]
        %v8790 = vld [vmem:[%s8787 + $0x8] sm:$0xf]
        %v8791 = vld [vmem:[%s8787 + $0xc] sm:$0xf]
        %v8792 = vld [vmem:[%s8787 + $0x10] sm:$0xf]
        %v8793 = vld [vmem:[%s8787 + $0x14] sm:$0xf]
        %v8794 = vld [vmem:[%s8787 + $0x18] sm:$0xf]
        %v8795 = vld [vmem:[%s8787 + $0x1c] sm:$0xf]
        %v8796 = vld [vmem:[%s8787 + $0x20] sm:$0xf]
        %v8797 = vld [vmem:[%s8787 + $0x24] sm:$0xf]
        %v8798 = vld [vmem:[%s8787 + $0x28] sm:$0xf]
        %v8799 = vld [vmem:[%s8787 + $0x2c] sm:$0xf]
        %v8800 = vld [vmem:[%s8787 + $0x30] sm:$0xf]
        %v8801 = vld [vmem:[%s8787 + $0x34] sm:$0xf]
        %v8802 = vld [vmem:[%s8787 + $0x38] sm:$0xf]
        %v8803 = vld [vmem:[%s8787 + $0x3c] sm:$0xf]
        %v8804 = vld [vmem:[%s8787 + $0x40] sm:$0xf]
        %v8805 = vld [vmem:[%s8787 + $0x44] sm:$0xf]
        %v8806 = vld [vmem:[%s8787 + $0x48] sm:$0xf]
        %v8807 = vld [vmem:[%s8787 + $0x4c] sm:$0xf]
        %v8808 = vld [vmem:[%s8787 + $0x50] sm:$0xf]
        %v8809 = vld [vmem:[%s8787 + $0x54] sm:$0xf]
        %v8810 = vld [vmem:[%s8787 + $0x58] sm:$0xf]
        %v8811 = vld [vmem:[%s8787 + $0x5c] sm:$0xf]
        %v8812 = vld [vmem:[%s8787 + $0x60] sm:$0xf]
        %v8813 = vld [vmem:[%s8787 + $0x64] sm:$0xf]
        %v8814 = vld [vmem:[%s8787 + $0x68] sm:$0xf]
        %v8815 = vld [vmem:[%s8787 + $0x6c] sm:$0xf]
        %v8816 = vld [vmem:[%s8787 + $0x70] sm:$0xf]
        %v8817 = vld [vmem:[%s8787 + $0x74] sm:$0xf]
        %v8818 = vld [vmem:[%s8787 + $0x78] sm:$0xf]
        %v8819 = vld [vmem:[%s8787 + $0x7c] sm:$0xf]
        %v8820 = vld [vmem:[%s8787 + $0x80] sm:$0xf]
        %v8821 = vld [vmem:[%s8787 + $0x84] sm:$0xf]
        %v8822 = vld [vmem:[%s8787 + $0x88] sm:$0xf]
        %v8823 = vld [vmem:[%s8787 + $0x8c] sm:$0xf]
        %v8824 = vld [vmem:[%s8787 + $0x90] sm:$0xf]
        %v8825 = vld [vmem:[%s8787 + $0x94] sm:$0xf]
        %v8826 = vld [vmem:[%s8787 + $0x98] sm:$0xf]
        %v8827 = vld [vmem:[%s8787 + $0x9c] sm:$0xf]
        %v8828 = vld [vmem:[%s8787 + $0xa0] sm:$0xf]
        %v8829 = vld [vmem:[%s8787 + $0xa4] sm:$0xf]
        %v8830 = vld [vmem:[%s8787 + $0xa8] sm:$0xf]
        %v8831 = vld [vmem:[%s8787 + $0xac] sm:$0xf]
        %v8832 = vld [vmem:[%s8787 + $0xb0] sm:$0xf]
        %v8833 = vld [vmem:[%s8787 + $0xb4] sm:$0xf]
        %v8834 = vld [vmem:[%s8787 + $0xb8] sm:$0xf]
        %v8835 = vld [vmem:[%s8787 + $0xbc] sm:$0xf]
        %v8836 = vld [vmem:[%s8787 + $0xc0] sm:$0xf]
        %v8837 = vld [vmem:[%s8787 + $0xc4] sm:$0xf]
        %v8838 = vld [vmem:[%s8787 + $0xc8] sm:$0xf]
        %v8839 = vld [vmem:[%s8787 + $0xcc] sm:$0xf]
        %v8840 = vld [vmem:[%s8787 + $0xd0] sm:$0xf]
        %v8841 = vld [vmem:[%s8787 + $0xd4] sm:$0xf]
        %v8842 = vld [vmem:[%s8787 + $0xd8] sm:$0xf]
        %v8843 = vld [vmem:[%s8787 + $0xdc] sm:$0xf]
        %v8844 = vld [vmem:[%s8787 + $0xe0] sm:$0xf]
        %v8845 = vld [vmem:[%s8787 + $0xe4] sm:$0xf]
        %v8846 = vld [vmem:[%s8787 + $0xe8] sm:$0xf]
        %v8847 = vld [vmem:[%s8787 + $0xec] sm:$0xf]
        %v8848 = vld [vmem:[%s8787 + $0xf0] sm:$0xf]
        %v8849 = vld [vmem:[%s8787 + $0xf4] sm:$0xf]
        %v8850 = vld [vmem:[%s8787 + $0xf8] sm:$0xf]
        %v8851 = vld [vmem:[%s8787 + $0xfc] sm:$0xf]
        %v8852 = vld [vmem:[%s8787 + $0x100] sm:$0xf]
        %v8853 = vld [vmem:[%s8787 + $0x104] sm:$0xf]
        %v8854 = vld [vmem:[%s8787 + $0x108] sm:$0xf]
        %v8855 = vld [vmem:[%s8787 + $0x10c] sm:$0xf]
        %v8856 = vld [vmem:[%s8787 + $0x110] sm:$0xf]
        %v8857 = vld [vmem:[%s8787 + $0x114] sm:$0xf]
        %v8858 = vld [vmem:[%s8787 + $0x118] sm:$0xf]
        %v8859 = vld [vmem:[%s8787 + $0x11c] sm:$0xf]
        %v8932 = vunpack.c.l.b16 %v8788
        %v8933 = vunpack.c.l.b16 %v8789
        %v8934 = vunpack.c.l.b16 %v8790
        %v8935 = vunpack.c.l.b16 %v8791
        %v8936 = vunpack.c.l.b16 %v8792
        %v8937 = vunpack.c.l.b16 %v8793
        %v8938 = vunpack.c.l.b16 %v8794
        %v8939 = vunpack.c.l.b16 %v8795
        %v8940 = vunpack.c.l.b16 %v8796
        %v8941 = vunpack.c.l.b16 %v8797
        %v8942 = vunpack.c.l.b16 %v8798
        %v8943 = vunpack.c.l.b16 %v8799
        %v8944 = vunpack.c.l.b16 %v8800
        %v8945 = vunpack.c.l.b16 %v8801
        %v8946 = vunpack.c.l.b16 %v8802
        %v8947 = vunpack.c.l.b16 %v8803
        %v8948 = vunpack.c.l.b16 %v8804
        %v8949 = vunpack.c.l.b16 %v8805
        %v8950 = vunpack.c.l.b16 %v8806
        %v8951 = vunpack.c.l.b16 %v8807
        %v8952 = vunpack.c.l.b16 %v8808
        %v8953 = vunpack.c.l.b16 %v8809
        %v8954 = vunpack.c.l.b16 %v8810
        %v8955 = vunpack.c.l.b16 %v8811
        %v8956 = vunpack.c.l.b16 %v8812
        %v8957 = vunpack.c.l.b16 %v8813
        %v8958 = vunpack.c.l.b16 %v8814
        %v8959 = vunpack.c.l.b16 %v8815
        %v8960 = vunpack.c.l.b16 %v8816
        %v8961 = vunpack.c.l.b16 %v8817
        %v8962 = vunpack.c.l.b16 %v8818
        %v8963 = vunpack.c.l.b16 %v8819
        %v8964 = vunpack.c.l.b16 %v8820
        %v8965 = vunpack.c.l.b16 %v8821
        %v8966 = vunpack.c.l.b16 %v8822
        %v8967 = vunpack.c.l.b16 %v8823
        %v8968 = vunpack.c.l.b16 %v8824
        %v8969 = vunpack.c.l.b16 %v8825
        %v8970 = vunpack.c.l.b16 %v8826
        %v8971 = vunpack.c.l.b16 %v8827
        %v8972 = vunpack.c.l.b16 %v8828
        %v8973 = vunpack.c.l.b16 %v8829
        %v8974 = vunpack.c.l.b16 %v8830
        %v8975 = vunpack.c.l.b16 %v8831
        %v8976 = vunpack.c.l.b16 %v8832
        %v8977 = vunpack.c.l.b16 %v8833
        %v8978 = vunpack.c.l.b16 %v8834
        %v8979 = vunpack.c.l.b16 %v8835
        %v8980 = vunpack.c.l.b16 %v8836
        %v8981 = vunpack.c.l.b16 %v8837
        %v8982 = vunpack.c.l.b16 %v8838
        %v8983 = vunpack.c.l.b16 %v8839
        %v8984 = vunpack.c.l.b16 %v8840
        %v8985 = vunpack.c.l.b16 %v8841
        %v8986 = vunpack.c.l.b16 %v8842
        %v8987 = vunpack.c.l.b16 %v8843
        %v8988 = vunpack.c.l.b16 %v8844
        %v8989 = vunpack.c.l.b16 %v8845
        %v8990 = vunpack.c.l.b16 %v8846
        %v8991 = vunpack.c.l.b16 %v8847
        %v8992 = vunpack.c.l.b16 %v8848
        %v8993 = vunpack.c.l.b16 %v8849
        %v8994 = vunpack.c.l.b16 %v8850
        %v8995 = vunpack.c.l.b16 %v8851
        %v8996 = vunpack.c.l.b16 %v8852
        %v8997 = vunpack.c.l.b16 %v8853
        %v8998 = vunpack.c.l.b16 %v8854
        %v8999 = vunpack.c.l.b16 %v8855
        %v9000 = vunpack.c.l.b16 %v8856
        %v9001 = vunpack.c.l.b16 %v8857
        %v9002 = vunpack.c.l.b16 %v8858
        %v9003 = vunpack.c.l.b16 %v8859
        %v9004 = vpack.c.b16 %v8933, %v8932
        %v9005 = vpack.c.b16 %v8935, %v8934
        %v9006 = vpack.c.b16 %v8937, %v8936
        %v9007 = vpack.c.b16 %v8939, %v8938
        %v9008 = vpack.c.b16 %v8941, %v8940
        %v9009 = vpack.c.b16 %v8943, %v8942
        %v9010 = vpack.c.b16 %v8945, %v8944
        %v9011 = vpack.c.b16 %v8947, %v8946
        %v9012 = vpack.c.b16 %v8949, %v8948
        %v9013 = vpack.c.b16 %v8951, %v8950
        %v9014 = vpack.c.b16 %v8953, %v8952
        %v9015 = vpack.c.b16 %v8955, %v8954
        %v9016 = vpack.c.b16 %v8957, %v8956
        %v9017 = vpack.c.b16 %v8959, %v8958
        %v9018 = vpack.c.b16 %v8961, %v8960
        %v9019 = vpack.c.b16 %v8963, %v8962
        %v9020 = vpack.c.b16 %v8965, %v8964
        %v9021 = vpack.c.b16 %v8967, %v8966
        %v9022 = vpack.c.b16 %v8969, %v8968
        %v9023 = vpack.c.b16 %v8971, %v8970
        %v9024 = vpack.c.b16 %v8973, %v8972
        %v9025 = vpack.c.b16 %v8975, %v8974
        %v9026 = vpack.c.b16 %v8977, %v8976
        %v9027 = vpack.c.b16 %v8979, %v8978
        %v9028 = vpack.c.b16 %v8981, %v8980
        %v9029 = vpack.c.b16 %v8983, %v8982
        %v9030 = vpack.c.b16 %v8985, %v8984
        %v9031 = vpack.c.b16 %v8987, %v8986
        %v9032 = vpack.c.b16 %v8989, %v8988
        %v9033 = vpack.c.b16 %v8991, %v8990
        %v9034 = vpack.c.b16 %v8993, %v8992
        %v9035 = vpack.c.b16 %v8995, %v8994
        %v9036 = vpack.c.b16 %v8997, %v8996
        %v9037 = vpack.c.b16 %v8999, %v8998
        %v9038 = vpack.c.b16 %v9001, %v9000
        %v9039 = vpack.c.b16 %v9003, %v9002
        %v9077 = vsel %vm7985, %v8786, 0
        %9079 = vmatprep.subr.bf16.mxu0 0
        %9080 = vmatpush1.bf16.msra.mxu0 %v9004
        %9081 = vmatprep.subr.bf16.mxu0 0
        %9082 = vmatpush1.bf16.msra.mxu0 %v9005
        %9083 = vmatprep.subr.bf16.mxu0 0
        %9084 = vmatpush1.bf16.msra.mxu0 %v9006
        %9085 = vmatprep.subr.bf16.mxu0 0
        %9086 = vmatpush1.bf16.msra.mxu0 %v9007
        %9087 = vmatprep.subr.bf16.mxu0 0
        %9088 = vmatpush1.bf16.msra.mxu0 %v9008
        %9089 = vmatprep.subr.bf16.mxu0 0
        %9090 = vmatpush1.bf16.msra.mxu0 %v9009
        %9091 = vmatprep.subr.bf16.mxu0 0
        %9092 = vmatpush1.bf16.msra.mxu0 %v9010
        %9093 = vmatprep.subr.bf16.mxu0 0
        %9094 = vmatpush1.bf16.msra.mxu0 %v9011
        %9095 = vmatprep.subr.bf16.mxu0 0
        %9096 = vmatpush1.bf16.msra.mxu0 %v9012
        %9097 = vmatprep.subr.bf16.mxu0 0
        %9098 = vmatpush1.bf16.msra.mxu0 %v9013
        %9099 = vmatprep.subr.bf16.mxu0 0
        %9100 = vmatpush1.bf16.msra.mxu0 %v9014
        %9101 = vmatprep.subr.bf16.mxu0 0
        %9102 = vmatpush1.bf16.msra.mxu0 %v9015
        %9103 = vmatprep.subr.bf16.mxu0 0
        %9104 = vmatpush1.bf16.msra.mxu0 %v9016
        %9105 = vmatprep.subr.bf16.mxu0 0
        %9106 = vmatpush1.bf16.msra.mxu0 %v9017
        %9107 = vmatprep.subr.bf16.mxu0 0
        %9108 = vmatpush1.bf16.msra.mxu0 %v9018
        %9109 = vmatprep.subr.bf16.mxu0 0
        %9110 = vmatpush1.bf16.msra.mxu0 %v9019
        %9111 = vmatprep.mubr.bf16.mxu0 %v8783
        %9112 = vmatmul.mubr.bf16.gmra.mrb[0].mxu0 %v8782
        %v9113 = vpop.f32.mrb[0].mxu0
        %v9114 = vadd.f32 0.0, %v9113
        %v9115 = vpop.f32.mrb[0].mxu0
        %v9116 = vpop.f32.mrb[0].mxu0
        %v9117 = vpop.f32.mrb[0].mxu0
        %9118 = vdwg.mxu0
        %9119 = vmatprep.subr.bf16.mxu0 0
        %9120 = vmatpush1.bf16.msra.mxu0 %v9020
        %9121 = vmatprep.subr.bf16.mxu0 0
        %9122 = vmatpush1.bf16.msra.mxu0 %v9021
        %9123 = vmatprep.subr.bf16.mxu0 0
        %9124 = vmatpush1.bf16.msra.mxu0 %v9022
        %9125 = vmatprep.subr.bf16.mxu0 0
        %9126 = vmatpush1.bf16.msra.mxu0 %v9023
        %9127 = vmatprep.subr.bf16.mxu0 0
        %9128 = vmatpush1.bf16.msra.mxu0 %v9024
        %9129 = vmatprep.subr.bf16.mxu0 0
        %9130 = vmatpush1.bf16.msra.mxu0 %v9025
        %9131 = vmatprep.subr.bf16.mxu0 0
        %9132 = vmatpush1.bf16.msra.mxu0 %v9026
        %9133 = vmatprep.subr.bf16.mxu0 0
        %9134 = vmatpush1.bf16.msra.mxu0 %v9027
        %9135 = vmatprep.subr.bf16.mxu0 0
        %9136 = vmatpush1.bf16.msra.mxu0 %v9028
        %9137 = vmatprep.subr.bf16.mxu0 0
        %9138 = vmatpush1.bf16.msra.mxu0 %v9029
        %9139 = vmatprep.subr.bf16.mxu0 0
        %9140 = vmatpush1.bf16.msra.mxu0 %v9030
        %9141 = vmatprep.subr.bf16.mxu0 0
        %9142 = vmatpush1.bf16.msra.mxu0 %v9031
        %9143 = vmatprep.subr.bf16.mxu0 0
        %9144 = vmatpush1.bf16.msra.mxu0 %v9032
        %9145 = vmatprep.subr.bf16.mxu0 0
        %9146 = vmatpush1.bf16.msra.mxu0 %v9033
        %9147 = vmatprep.subr.bf16.mxu0 0
        %9148 = vmatpush1.bf16.msra.mxu0 %v9034
        %9149 = vmatprep.subr.bf16.mxu0 0
        %9150 = vmatpush1.bf16.msra.mxu0 %v9035
        %9151 = vmatprep.mubr.bf16.mxu0 %v8785
        %9152 = vmatmul.mubr.bf16.gmra.mrb[0].mxu0 %v8784
        %v9153 = vpop.f32.mrb[0].mxu0
        %v9154 = vadd.f32 %v9114, %v9153
        %v9155 = vpop.f32.mrb[0].mxu0
        %v9156 = vpop.f32.mrb[0].mxu0
        %v9157 = vpop.f32.mrb[0].mxu0
        %9158 = vdwg.mxu0
        %9159 = vmatprep.subr.bf16.mxu0 0
        %9160 = vmatpush1.bf16.msra.mxu0 %v9036
        %9161 = vmatprep.subr.bf16.mxu0 0
        %9162 = vmatpush1.bf16.msra.mxu0 %v9037
        %9163 = vmatprep.subr.bf16.mxu0 0
        %9164 = vmatpush1.bf16.msra.mxu0 %v9038
        %9165 = vmatprep.subr.bf16.mxu0 0
        %9166 = vmatpush1.bf16.msra.mxu0 %v9039
        %9167 = vmatprep.subr.bf16.mxu0 0
        %9168 = vmatpush1.bf16.msra.mxu0 0
        %9169 = vmatprep.subr.bf16.mxu0 0
        %9170 = vmatpush1.bf16.msra.mxu0 0
        %9171 = vmatprep.subr.bf16.mxu0 0
        %9172 = vmatpush1.bf16.msra.mxu0 0
        %9173 = vmatprep.subr.bf16.mxu0 0
        %9174 = vmatpush1.bf16.msra.mxu0 0
        %9175 = vmatprep.subr.bf16.mxu0 0
        %9176 = vmatpush1.bf16.msra.mxu0 0
        %9177 = vmatprep.subr.bf16.mxu0 0
        %9178 = vmatpush1.bf16.msra.mxu0 0
        %9179 = vmatprep.subr.bf16.mxu0 0
        %9180 = vmatpush1.bf16.msra.mxu0 0
        %9181 = vmatprep.subr.bf16.mxu0 0
        %9182 = vmatpush1.bf16.msra.mxu0 0
        %9183 = vmatprep.subr.bf16.mxu0 0
        %9184 = vmatpush1.bf16.msra.mxu0 0
        %9185 = vmatprep.subr.bf16.mxu0 0
        %9186 = vmatpush1.bf16.msra.mxu0 0
        %9187 = vmatprep.subr.bf16.mxu0 0
        %9188 = vmatpush1.bf16.msra.mxu0 0
        %9189 = vmatprep.subr.bf16.mxu0 0
        %9190 = vmatpush1.bf16.msra.mxu0 0
        %9191 = vmatprep.mubr.bf16.mxu0 0
        %9192 = vmatmul.mubr.bf16.gmra.mrb[0].mxu0 %v9077
        %v9193 = vpop.f32.mrb[0].mxu0
        %v9194 = vadd.f32 %v9154, %v9193
        %v9195 = vpop.f32.mrb[0].mxu0
        %v9196 = vpop.f32.mrb[0].mxu0
        %v9197 = vpop.f32.mrb[0].mxu0
        %9198 = vdwg.mxu0
        %v9199 = vadd.f32 %v8654, %v9194
        %s9200 = scalar_lea.vmem %s10, 3
        %v9201 = vld [vmem:[%s9200] sm:$0x1]
        %v9203 = vsel %vm7547, %v9201, 0
        %9205 = vmatprep.subr.bf16.mxu0 %v7559
        %9206 = vmatpush1.bf16.msra.mxu0 %v7556
        %9207 = vmatprep.subr.bf16.mxu0 0
        %9208 = vmatpush1.bf16.msra.mxu0 0
        %9209 = vmatprep.subr.bf16.mxu0 0
        %9210 = vmatpush1.bf16.msra.mxu0 0
        %9211 = vmatprep.subr.bf16.mxu0 0
        %9212 = vmatpush1.bf16.msra.mxu0 0
        %9213 = vmatprep.subr.bf16.mxu0 0
        %9214 = vmatpush1.bf16.msra.mxu0 0
        %9215 = vmatprep.subr.bf16.mxu0 0
        %9216 = vmatpush1.bf16.msra.mxu0 0
        %9217 = vmatprep.subr.bf16.mxu0 0
        %9218 = vmatpush1.bf16.msra.mxu0 0
        %9219 = vmatprep.subr.bf16.mxu0 0
        %9220 = vmatpush1.bf16.msra.mxu0 0
        %9221 = vmatprep.subr.bf16.mxu0 0
        %9222 = vmatpush1.bf16.msra.mxu0 0
        %9223 = vmatprep.subr.bf16.mxu0 0
        %9224 = vmatpush1.bf16.msra.mxu0 0
        %9225 = vmatprep.subr.bf16.mxu0 0
        %9226 = vmatpush1.bf16.msra.mxu0 0
        %9227 = vmatprep.subr.bf16.mxu0 0
        %9228 = vmatpush1.bf16.msra.mxu0 0
        %9229 = vmatprep.subr.bf16.mxu0 0
        %9230 = vmatpush1.bf16.msra.mxu0 0
        %9231 = vmatprep.subr.bf16.mxu0 0
        %9232 = vmatpush1.bf16.msra.mxu0 0
        %9233 = vmatprep.subr.bf16.mxu0 0
        %9234 = vmatpush1.bf16.msra.mxu0 0
        %9235 = vmatprep.subr.bf16.mxu0 0
        %9236 = vmatpush1.bf16.msra.mxu0 0
        %9237 = vmatprep.mubr.bf16.mxu0 0
        %9238 = vmatmul.mubr.bf16.gmra.mrb[0].mxu0 %v9203
        %v9239 = vpop.f32.mrb[0].mxu0
        %v9240 = vadd.f32 0.0, %v9239
        %v9241 = vpop.f32.mrb[0].mxu0
        %v9242 = vadd.f32 0.0, %v9241
        %v9243 = vpop.f32.mrb[0].mxu0
        %v9244 = vpop.f32.mrb[0].mxu0
        %9245 = vdwg.mxu0
        %9246 = vmatprep.subr.bf16.mxu0 %v7565
        %9247 = vmatpush1.bf16.msra.mxu0 %v7562
        %9248 = vmatprep.subr.bf16.mxu0 0
        %9249 = vmatpush1.bf16.msra.mxu0 0
        %9250 = vmatprep.subr.bf16.mxu0 0
        %9251 = vmatpush1.bf16.msra.mxu0 0
        %9252 = vmatprep.subr.bf16.mxu0 0
        %9253 = vmatpush1.bf16.msra.mxu0 0
        %9254 = vmatprep.subr.bf16.mxu0 0
        %9255 = vmatpush1.bf16.msra.mxu0 0
        %9256 = vmatprep.subr.bf16.mxu0 0
        %9257 = vmatpush1.bf16.msra.mxu0 0
        %9258 = vmatprep.subr.bf16.mxu0 0
        %9259 = vmatpush1.bf16.msra.mxu0 0
        %9260 = vmatprep.subr.bf16.mxu0 0
        %9261 = vmatpush1.bf16.msra.mxu0 0
        %9262 = vmatprep.subr.bf16.mxu0 0
        %9263 = vmatpush1.bf16.msra.mxu0 0
        %9264 = vmatprep.subr.bf16.mxu0 0
        %9265 = vmatpush1.bf16.msra.mxu0 0
        %9266 = vmatprep.subr.bf16.mxu0 0
        %9267 = vmatpush1.bf16.msra.mxu0 0
        %9268 = vmatprep.subr.bf16.mxu0 0
        %9269 = vmatpush1.bf16.msra.mxu0 0
        %9270 = vmatprep.subr.bf16.mxu0 0
        %9271 = vmatpush1.bf16.msra.mxu0 0
        %9272 = vmatprep.subr.bf16.mxu0 0
        %9273 = vmatpush1.bf16.msra.mxu0 0
        %9274 = vmatprep.subr.bf16.mxu0 0
        %9275 = vmatpush1.bf16.msra.mxu0 0
        %9276 = vmatprep.subr.bf16.mxu0 0
        %9277 = vmatpush1.bf16.msra.mxu0 0
        %9278 = vmatprep.mubr.bf16.mxu0 0
        %9279 = vmatmul.mubr.bf16.gmra.mrb[0].mxu0 %v9203
        %v9280 = vpop.f32.mrb[0].mxu0
        %v9281 = vadd.f32 0.0, %v9280
        %v9282 = vpop.f32.mrb[0].mxu0
        %v9283 = vadd.f32 0.0, %v9282
        %v9284 = vpop.f32.mrb[0].mxu0
        %v9285 = vpop.f32.mrb[0].mxu0
        %9286 = vdwg.mxu0
        %9287 = vmatprep.subr.bf16.mxu0 0
        %9288 = vmatpush1.bf16.msra.mxu0 %v7568
        %9289 = vmatprep.subr.bf16.mxu0 0
        %9290 = vmatpush1.bf16.msra.mxu0 0
        %9291 = vmatprep.subr.bf16.mxu0 0
        %9292 = vmatpush1.bf16.msra.mxu0 0
        %9293 = vmatprep.subr.bf16.mxu0 0
        %9294 = vmatpush1.bf16.msra.mxu0 0
        %9295 = vmatprep.subr.bf16.mxu0 0
        %9296 = vmatpush1.bf16.msra.mxu0 0
        %9297 = vmatprep.subr.bf16.mxu0 0
        %9298 = vmatpush1.bf16.msra.mxu0 0
        %9299 = vmatprep.subr.bf16.mxu0 0
        %9300 = vmatpush1.bf16.msra.mxu0 0
        %9301 = vmatprep.subr.bf16.mxu0 0
        %9302 = vmatpush1.bf16.msra.mxu0 0
        %9303 = vmatprep.subr.bf16.mxu0 0
        %9304 = vmatpush1.bf16.msra.mxu0 0
        %9305 = vmatprep.subr.bf16.mxu0 0
        %9306 = vmatpush1.bf16.msra.mxu0 0
        %9307 = vmatprep.subr.bf16.mxu0 0
        %9308 = vmatpush1.bf16.msra.mxu0 0
        %9309 = vmatprep.subr.bf16.mxu0 0
        %9310 = vmatpush1.bf16.msra.mxu0 0
        %9311 = vmatprep.subr.bf16.mxu0 0
        %9312 = vmatpush1.bf16.msra.mxu0 0
        %9313 = vmatprep.subr.bf16.mxu0 0
        %9314 = vmatpush1.bf16.msra.mxu0 0
        %9315 = vmatprep.subr.bf16.mxu0 0
        %9316 = vmatpush1.bf16.msra.mxu0 0
        %9317 = vmatprep.subr.bf16.mxu0 0
        %9318 = vmatpush1.bf16.msra.mxu0 0
        %9319 = vmatprep.mubr.bf16.mxu0 0
        %9320 = vmatmul.mubr.bf16.gmra.mrb[0].mxu0 %v9203
        %v9321 = vpop.f32.mrb[0].mxu0
        %v9322 = vadd.f32 0.0, %v9321
        %v9323 = vpop.f32.mrb[0].mxu0
        %v9324 = vpop.f32.mrb[0].mxu0
        %v9325 = vpop.f32.mrb[0].mxu0
        %9326 = vdwg.mxu0
        %v9327 = vpack.c.bf16 %v9240, %v9240
        %v9328 = vpack.c.bf16 %v9242, %v9242
        %v9329 = vpack.c.bf16 %v9281, %v9281
        %v9330 = vpack.c.bf16 %v9283, %v9283
        %v9331 = vpack.c.bf16 %v9322, %v9322
        %s9332 = scalar_lea.vmem %s11, 864
        %v9333 = vld [vmem:[%s9332] sm:$0xf]
        %v9334 = vld [vmem:[%s9332 + $0x4] sm:$0xf]
        %v9335 = vld [vmem:[%s9332 + $0x8] sm:$0xf]
        %v9336 = vld [vmem:[%s9332 + $0xc] sm:$0xf]
        %v9337 = vld [vmem:[%s9332 + $0x10] sm:$0xf]
        %v9338 = vld [vmem:[%s9332 + $0x14] sm:$0xf]
        %v9339 = vld [vmem:[%s9332 + $0x18] sm:$0xf]
        %v9340 = vld [vmem:[%s9332 + $0x1c] sm:$0xf]
        %v9341 = vld [vmem:[%s9332 + $0x20] sm:$0xf]
        %v9342 = vld [vmem:[%s9332 + $0x24] sm:$0xf]
        %v9343 = vld [vmem:[%s9332 + $0x28] sm:$0xf]
        %v9344 = vld [vmem:[%s9332 + $0x2c] sm:$0xf]
        %v9345 = vld [vmem:[%s9332 + $0x30] sm:$0xf]
        %v9346 = vld [vmem:[%s9332 + $0x34] sm:$0xf]
        %v9347 = vld [vmem:[%s9332 + $0x38] sm:$0xf]
        %v9348 = vld [vmem:[%s9332 + $0x3c] sm:$0xf]
        %v9349 = vld [vmem:[%s9332 + $0x40] sm:$0xf]
        %v9350 = vld [vmem:[%s9332 + $0x44] sm:$0xf]
        %v9351 = vld [vmem:[%s9332 + $0x48] sm:$0xf]
        %v9352 = vld [vmem:[%s9332 + $0x4c] sm:$0xf]
        %v9353 = vld [vmem:[%s9332 + $0x50] sm:$0xf]
        %v9354 = vld [vmem:[%s9332 + $0x54] sm:$0xf]
        %v9355 = vld [vmem:[%s9332 + $0x58] sm:$0xf]
        %v9356 = vld [vmem:[%s9332 + $0x5c] sm:$0xf]
        %v9357 = vld [vmem:[%s9332 + $0x60] sm:$0xf]
        %v9358 = vld [vmem:[%s9332 + $0x64] sm:$0xf]
        %v9359 = vld [vmem:[%s9332 + $0x68] sm:$0xf]
        %v9360 = vld [vmem:[%s9332 + $0x6c] sm:$0xf]
        %v9361 = vld [vmem:[%s9332 + $0x70] sm:$0xf]
        %v9362 = vld [vmem:[%s9332 + $0x74] sm:$0xf]
        %v9363 = vld [vmem:[%s9332 + $0x78] sm:$0xf]
        %v9364 = vld [vmem:[%s9332 + $0x7c] sm:$0xf]
        %v9365 = vld [vmem:[%s9332 + $0x80] sm:$0xf]
        %v9366 = vld [vmem:[%s9332 + $0x84] sm:$0xf]
        %v9367 = vld [vmem:[%s9332 + $0x88] sm:$0xf]
        %v9368 = vld [vmem:[%s9332 + $0x8c] sm:$0xf]
        %v9369 = vld [vmem:[%s9332 + $0x90] sm:$0xf]
        %v9370 = vld [vmem:[%s9332 + $0x94] sm:$0xf]
        %v9371 = vld [vmem:[%s9332 + $0x98] sm:$0xf]
        %v9372 = vld [vmem:[%s9332 + $0x9c] sm:$0xf]
        %v9373 = vld [vmem:[%s9332 + $0xa0] sm:$0xf]
        %v9374 = vld [vmem:[%s9332 + $0xa4] sm:$0xf]
        %v9375 = vld [vmem:[%s9332 + $0xa8] sm:$0xf]
        %v9376 = vld [vmem:[%s9332 + $0xac] sm:$0xf]
        %v9377 = vld [vmem:[%s9332 + $0xb0] sm:$0xf]
        %v9378 = vld [vmem:[%s9332 + $0xb4] sm:$0xf]
        %v9379 = vld [vmem:[%s9332 + $0xb8] sm:$0xf]
        %v9380 = vld [vmem:[%s9332 + $0xbc] sm:$0xf]
        %v9381 = vld [vmem:[%s9332 + $0xc0] sm:$0xf]
        %v9382 = vld [vmem:[%s9332 + $0xc4] sm:$0xf]
        %v9383 = vld [vmem:[%s9332 + $0xc8] sm:$0xf]
        %v9384 = vld [vmem:[%s9332 + $0xcc] sm:$0xf]
        %v9385 = vld [vmem:[%s9332 + $0xd0] sm:$0xf]
        %v9386 = vld [vmem:[%s9332 + $0xd4] sm:$0xf]
        %v9387 = vld [vmem:[%s9332 + $0xd8] sm:$0xf]
        %v9388 = vld [vmem:[%s9332 + $0xdc] sm:$0xf]
        %v9389 = vld [vmem:[%s9332 + $0xe0] sm:$0xf]
        %v9390 = vld [vmem:[%s9332 + $0xe4] sm:$0xf]
        %v9391 = vld [vmem:[%s9332 + $0xe8] sm:$0xf]
        %v9392 = vld [vmem:[%s9332 + $0xec] sm:$0xf]
        %v9393 = vld [vmem:[%s9332 + $0xf0] sm:$0xf]
        %v9394 = vld [vmem:[%s9332 + $0xf4] sm:$0xf]
        %v9395 = vld [vmem:[%s9332 + $0xf8] sm:$0xf]
        %v9396 = vld [vmem:[%s9332 + $0xfc] sm:$0xf]
        %v9397 = vld [vmem:[%s9332 + $0x100] sm:$0xf]
        %v9398 = vld [vmem:[%s9332 + $0x104] sm:$0xf]
        %v9399 = vld [vmem:[%s9332 + $0x108] sm:$0xf]
        %v9400 = vld [vmem:[%s9332 + $0x10c] sm:$0xf]
        %v9401 = vld [vmem:[%s9332 + $0x110] sm:$0xf]
        %v9402 = vld [vmem:[%s9332 + $0x114] sm:$0xf]
        %v9403 = vld [vmem:[%s9332 + $0x118] sm:$0xf]
        %v9404 = vld [vmem:[%s9332 + $0x11c] sm:$0xf]
        %v9477 = vunpack.c.l.b16 %v9333
        %v9478 = vunpack.c.l.b16 %v9334
        %v9479 = vunpack.c.l.b16 %v9335
        %v9480 = vunpack.c.l.b16 %v9336
        %v9481 = vunpack.c.l.b16 %v9337
        %v9482 = vunpack.c.l.b16 %v9338
        %v9483 = vunpack.c.l.b16 %v9339
        %v9484 = vunpack.c.l.b16 %v9340
        %v9485 = vunpack.c.l.b16 %v9341
        %v9486 = vunpack.c.l.b16 %v9342
        %v9487 = vunpack.c.l.b16 %v9343
        %v9488 = vunpack.c.l.b16 %v9344
        %v9489 = vunpack.c.l.b16 %v9345
        %v9490 = vunpack.c.l.b16 %v9346
        %v9491 = vunpack.c.l.b16 %v9347
        %v9492 = vunpack.c.l.b16 %v9348
        %v9493 = vunpack.c.l.b16 %v9349
        %v9494 = vunpack.c.l.b16 %v9350
        %v9495 = vunpack.c.l.b16 %v9351
        %v9496 = vunpack.c.l.b16 %v9352
        %v9497 = vunpack.c.l.b16 %v9353
        %v9498 = vunpack.c.l.b16 %v9354
        %v9499 = vunpack.c.l.b16 %v9355
        %v9500 = vunpack.c.l.b16 %v9356
        %v9501 = vunpack.c.l.b16 %v9357
        %v9502 = vunpack.c.l.b16 %v9358
        %v9503 = vunpack.c.l.b16 %v9359
        %v9504 = vunpack.c.l.b16 %v9360
        %v9505 = vunpack.c.l.b16 %v9361
        %v9506 = vunpack.c.l.b16 %v9362
        %v9507 = vunpack.c.l.b16 %v9363
        %v9508 = vunpack.c.l.b16 %v9364
        %v9509 = vunpack.c.l.b16 %v9365
        %v9510 = vunpack.c.l.b16 %v9366
        %v9511 = vunpack.c.l.b16 %v9367
        %v9512 = vunpack.c.l.b16 %v9368
        %v9513 = vunpack.c.l.b16 %v9369
        %v9514 = vunpack.c.l.b16 %v9370
        %v9515 = vunpack.c.l.b16 %v9371
        %v9516 = vunpack.c.l.b16 %v9372
        %v9517 = vunpack.c.l.b16 %v9373
        %v9518 = vunpack.c.l.b16 %v9374
        %v9519 = vunpack.c.l.b16 %v9375
        %v9520 = vunpack.c.l.b16 %v9376
        %v9521 = vunpack.c.l.b16 %v9377
        %v9522 = vunpack.c.l.b16 %v9378
        %v9523 = vunpack.c.l.b16 %v9379
        %v9524 = vunpack.c.l.b16 %v9380
        %v9525 = vunpack.c.l.b16 %v9381
        %v9526 = vunpack.c.l.b16 %v9382
        %v9527 = vunpack.c.l.b16 %v9383
        %v9528 = vunpack.c.l.b16 %v9384
        %v9529 = vunpack.c.l.b16 %v9385
        %v9530 = vunpack.c.l.b16 %v9386
        %v9531 = vunpack.c.l.b16 %v9387
        %v9532 = vunpack.c.l.b16 %v9388
        %v9533 = vunpack.c.l.b16 %v9389
        %v9534 = vunpack.c.l.b16 %v9390
        %v9535 = vunpack.c.l.b16 %v9391
        %v9536 = vunpack.c.l.b16 %v9392
        %v9537 = vunpack.c.l.b16 %v9393
        %v9538 = vunpack.c.l.b16 %v9394
        %v9539 = vunpack.c.l.b16 %v9395
        %v9540 = vunpack.c.l.b16 %v9396
        %v9541 = vunpack.c.l.b16 %v9397
        %v9542 = vunpack.c.l.b16 %v9398
        %v9543 = vunpack.c.l.b16 %v9399
        %v9544 = vunpack.c.l.b16 %v9400
        %v9545 = vunpack.c.l.b16 %v9401
        %v9546 = vunpack.c.l.b16 %v9402
        %v9547 = vunpack.c.l.b16 %v9403
        %v9548 = vunpack.c.l.b16 %v9404
        %v9549 = vpack.c.b16 %v9478, %v9477
        %v9550 = vpack.c.b16 %v9480, %v9479
        %v9551 = vpack.c.b16 %v9482, %v9481
        %v9552 = vpack.c.b16 %v9484, %v9483
        %v9553 = vpack.c.b16 %v9486, %v9485
        %v9554 = vpack.c.b16 %v9488, %v9487
        %v9555 = vpack.c.b16 %v9490, %v9489
        %v9556 = vpack.c.b16 %v9492, %v9491
        %v9557 = vpack.c.b16 %v9494, %v9493
        %v9558 = vpack.c.b16 %v9496, %v9495
        %v9559 = vpack.c.b16 %v9498, %v9497
        %v9560 = vpack.c.b16 %v9500, %v9499
        %v9561 = vpack.c.b16 %v9502, %v9501
        %v9562 = vpack.c.b16 %v9504, %v9503
        %v9563 = vpack.c.b16 %v9506, %v9505
        %v9564 = vpack.c.b16 %v9508, %v9507
        %v9565 = vpack.c.b16 %v9510, %v9509
        %v9566 = vpack.c.b16 %v9512, %v9511
        %v9567 = vpack.c.b16 %v9514, %v9513
        %v9568 = vpack.c.b16 %v9516, %v9515
        %v9569 = vpack.c.b16 %v9518, %v9517
        %v9570 = vpack.c.b16 %v9520, %v9519
        %v9571 = vpack.c.b16 %v9522, %v9521
        %v9572 = vpack.c.b16 %v9524, %v9523
        %v9573 = vpack.c.b16 %v9526, %v9525
        %v9574 = vpack.c.b16 %v9528, %v9527
        %v9575 = vpack.c.b16 %v9530, %v9529
        %v9576 = vpack.c.b16 %v9532, %v9531
        %v9577 = vpack.c.b16 %v9534, %v9533
        %v9578 = vpack.c.b16 %v9536, %v9535
        %v9579 = vpack.c.b16 %v9538, %v9537
        %v9580 = vpack.c.b16 %v9540, %v9539
        %v9581 = vpack.c.b16 %v9542, %v9541
        %v9582 = vpack.c.b16 %v9544, %v9543
        %v9583 = vpack.c.b16 %v9546, %v9545
        %v9584 = vpack.c.b16 %v9548, %v9547
        %v9622 = vsel %vm7985, %v9331, 0
        %9624 = vmatprep.subr.bf16.mxu0 0
        %9625 = vmatpush1.bf16.msra.mxu0 %v9549
        %9626 = vmatprep.subr.bf16.mxu0 0
        %9627 = vmatpush1.bf16.msra.mxu0 %v9550
        %9628 = vmatprep.subr.bf16.mxu0 0
        %9629 = vmatpush1.bf16.msra.mxu0 %v9551
        %9630 = vmatprep.subr.bf16.mxu0 0
        %9631 = vmatpush1.bf16.msra.mxu0 %v9552
        %9632 = vmatprep.subr.bf16.mxu0 0
        %9633 = vmatpush1.bf16.msra.mxu0 %v9553
        %9634 = vmatprep.subr.bf16.mxu0 0
        %9635 = vmatpush1.bf16.msra.mxu0 %v9554
        %9636 = vmatprep.subr.bf16.mxu0 0
        %9637 = vmatpush1.bf16.msra.mxu0 %v9555
        %9638 = vmatprep.subr.bf16.mxu0 0
        %9639 = vmatpush1.bf16.msra.mxu0 %v9556
        %9640 = vmatprep.subr.bf16.mxu0 0
        %9641 = vmatpush1.bf16.msra.mxu0 %v9557
        %9642 = vmatprep.subr.bf16.mxu0 0
        %9643 = vmatpush1.bf16.msra.mxu0 %v9558
        %9644 = vmatprep.subr.bf16.mxu0 0
        %9645 = vmatpush1.bf16.msra.mxu0 %v9559
        %9646 = vmatprep.subr.bf16.mxu0 0
        %9647 = vmatpush1.bf16.msra.mxu0 %v9560
        %9648 = vmatprep.subr.bf16.mxu0 0
        %9649 = vmatpush1.bf16.msra.mxu0 %v9561
        %9650 = vmatprep.subr.bf16.mxu0 0
        %9651 = vmatpush1.bf16.msra.mxu0 %v9562
        %9652 = vmatprep.subr.bf16.mxu0 0
        %9653 = vmatpush1.bf16.msra.mxu0 %v9563
        %9654 = vmatprep.subr.bf16.mxu0 0
        %9655 = vmatpush1.bf16.msra.mxu0 %v9564
        %9656 = vmatprep.mubr.bf16.mxu0 %v9328
        %9657 = vmatmul.mubr.bf16.gmra.mrb[0].mxu0 %v9327
        %v9658 = vpop.f32.mrb[0].mxu0
        %v9659 = vadd.f32 0.0, %v9658
        %v9660 = vpop.f32.mrb[0].mxu0
        %v9661 = vpop.f32.mrb[0].mxu0
        %v9662 = vpop.f32.mrb[0].mxu0
        %9663 = vdwg.mxu0
        %9664 = vmatprep.subr.bf16.mxu0 0
        %9665 = vmatpush1.bf16.msra.mxu0 %v9565
        %9666 = vmatprep.subr.bf16.mxu0 0
        %9667 = vmatpush1.bf16.msra.mxu0 %v9566
        %9668 = vmatprep.subr.bf16.mxu0 0
        %9669 = vmatpush1.bf16.msra.mxu0 %v9567
        %9670 = vmatprep.subr.bf16.mxu0 0
        %9671 = vmatpush1.bf16.msra.mxu0 %v9568
        %9672 = vmatprep.subr.bf16.mxu0 0
        %9673 = vmatpush1.bf16.msra.mxu0 %v9569
        %9674 = vmatprep.subr.bf16.mxu0 0
        %9675 = vmatpush1.bf16.msra.mxu0 %v9570
        %9676 = vmatprep.subr.bf16.mxu0 0
        %9677 = vmatpush1.bf16.msra.mxu0 %v9571
        %9678 = vmatprep.subr.bf16.mxu0 0
        %9679 = vmatpush1.bf16.msra.mxu0 %v9572
        %9680 = vmatprep.subr.bf16.mxu0 0
        %9681 = vmatpush1.bf16.msra.mxu0 %v9573
        %9682 = vmatprep.subr.bf16.mxu0 0
        %9683 = vmatpush1.bf16.msra.mxu0 %v9574
        %9684 = vmatprep.subr.bf16.mxu0 0
        %9685 = vmatpush1.bf16.msra.mxu0 %v9575
        %9686 = vmatprep.subr.bf16.mxu0 0
        %9687 = vmatpush1.bf16.msra.mxu0 %v9576
        %9688 = vmatprep.subr.bf16.mxu0 0
        %9689 = vmatpush1.bf16.msra.mxu0 %v9577
        %9690 = vmatprep.subr.bf16.mxu0 0
        %9691 = vmatpush1.bf16.msra.mxu0 %v9578
        %9692 = vmatprep.subr.bf16.mxu0 0
        %9693 = vmatpush1.bf16.msra.mxu0 %v9579
        %9694 = vmatprep.subr.bf16.mxu0 0
        %9695 = vmatpush1.bf16.msra.mxu0 %v9580
        %9696 = vmatprep.mubr.bf16.mxu0 %v9330
        %9697 = vmatmul.mubr.bf16.gmra.mrb[0].mxu0 %v9329
        %v9698 = vpop.f32.mrb[0].mxu0
        %v9699 = vadd.f32 %v9659, %v9698
        %v9700 = vpop.f32.mrb[0].mxu0
        %v9701 = vpop.f32.mrb[0].mxu0
        %v9702 = vpop.f32.mrb[0].mxu0
        %9703 = vdwg.mxu0
        %9704 = vmatprep.subr.bf16.mxu0 0
        %9705 = vmatpush1.bf16.msra.mxu0 %v9581
        %9706 = vmatprep.subr.bf16.mxu0 0
        %9707 = vmatpush1.bf16.msra.mxu0 %v9582
        %9708 = vmatprep.subr.bf16.mxu0 0
        %9709 = vmatpush1.bf16.msra.mxu0 %v9583
        %9710 = vmatprep.subr.bf16.mxu0 0
        %9711 = vmatpush1.bf16.msra.mxu0 %v9584
        %9712 = vmatprep.subr.bf16.mxu0 0
        %9713 = vmatpush1.bf16.msra.mxu0 0
        %9714 = vmatprep.subr.bf16.mxu0 0
        %9715 = vmatpush1.bf16.msra.mxu0 0
        %9716 = vmatprep.subr.bf16.mxu0 0
        %9717 = vmatpush1.bf16.msra.mxu0 0
        %9718 = vmatprep.subr.bf16.mxu0 0
        %9719 = vmatpush1.bf16.msra.mxu0 0
        %9720 = vmatprep.subr.bf16.mxu0 0
        %9721 = vmatpush1.bf16.msra.mxu0 0
        %9722 = vmatprep.subr.bf16.mxu0 0
        %9723 = vmatpush1.bf16.msra.mxu0 0
        %9724 = vmatprep.subr.bf16.mxu0 0
        %9725 = vmatpush1.bf16.msra.mxu0 0
        %9726 = vmatprep.subr.bf16.mxu0 0
        %9727 = vmatpush1.bf16.msra.mxu0 0
        %9728 = vmatprep.subr.bf16.mxu0 0
        %9729 = vmatpush1.bf16.msra.mxu0 0
        %9730 = vmatprep.subr.bf16.mxu0 0
        %9731 = vmatpush1.bf16.msra.mxu0 0
        %9732 = vmatprep.subr.bf16.mxu0 0
        %9733 = vmatpush1.bf16.msra.mxu0 0
        %9734 = vmatprep.subr.bf16.mxu0 0
        %9735 = vmatpush1.bf16.msra.mxu0 0
        %9736 = vmatprep.mubr.bf16.mxu0 0
        %9737 = vmatmul.mubr.bf16.gmra.mrb[0].mxu0 %v9622
        %v9738 = vpop.f32.mrb[0].mxu0
        %v9739 = vadd.f32 %v9699, %v9738
        %v9740 = vpop.f32.mrb[0].mxu0
        %v9741 = vpop.f32.mrb[0].mxu0
        %v9742 = vpop.f32.mrb[0].mxu0
        %9743 = vdwg.mxu0
        %v9744 = vadd.f32 %v9199, %v9739
        %s9745 = scalar_lea.vmem %s10, 4
        %v9746 = vld [vmem:[%s9745] sm:$0x1]
        %v9748 = vsel %vm7547, %v9746, 0
        %9750 = vmatprep.subr.bf16.mxu0 %v7559
        %9751 = vmatpush1.bf16.msra.mxu0 %v7556
        %9752 = vmatprep.subr.bf16.mxu0 0
        %9753 = vmatpush1.bf16.msra.mxu0 0
        %9754 = vmatprep.subr.bf16.mxu0 0
        %9755 = vmatpush1.bf16.msra.mxu0 0
        %9756 = vmatprep.subr.bf16.mxu0 0
        %9757 = vmatpush1.bf16.msra.mxu0 0
        %9758 = vmatprep.subr.bf16.mxu0 0
        %9759 = vmatpush1.bf16.msra.mxu0 0
        %9760 = vmatprep.subr.bf16.mxu0 0
        %9761 = vmatpush1.bf16.msra.mxu0 0
        %9762 = vmatprep.subr.bf16.mxu0 0
        %9763 = vmatpush1.bf16.msra.mxu0 0
        %9764 = vmatprep.subr.bf16.mxu0 0
        %9765 = vmatpush1.bf16.msra.mxu0 0
        %9766 = vmatprep.subr.bf16.mxu0 0
        %9767 = vmatpush1.bf16.msra.mxu0 0
        %9768 = vmatprep.subr.bf16.mxu0 0
        %9769 = vmatpush1.bf16.msra.mxu0 0
        %9770 = vmatprep.subr.bf16.mxu0 0
        %9771 = vmatpush1.bf16.msra.mxu0 0
        %9772 = vmatprep.subr.bf16.mxu0 0
        %9773 = vmatpush1.bf16.msra.mxu0 0
        %9774 = vmatprep.subr.bf16.mxu0 0
        %9775 = vmatpush1.bf16.msra.mxu0 0
        %9776 = vmatprep.subr.bf16.mxu0 0
        %9777 = vmatpush1.bf16.msra.mxu0 0
        %9778 = vmatprep.subr.bf16.mxu0 0
        %9779 = vmatpush1.bf16.msra.mxu0 0
        %9780 = vmatprep.subr.bf16.mxu0 0
        %9781 = vmatpush1.bf16.msra.mxu0 0
        %9782 = vmatprep.mubr.bf16.mxu0 0
        %9783 = vmatmul.mubr.bf16.gmra.mrb[0].mxu0 %v9748
        %v9784 = vpop.f32.mrb[0].mxu0
        %v9785 = vadd.f32 0.0, %v9784
        %v9786 = vpop.f32.mrb[0].mxu0
        %v9787 = vadd.f32 0.0, %v9786
        %v9788 = vpop.f32.mrb[0].mxu0
        %v9789 = vpop.f32.mrb[0].mxu0
        %9790 = vdwg.mxu0
        %9791 = vmatprep.subr.bf16.mxu0 %v7565
        %9792 = vmatpush1.bf16.msra.mxu0 %v7562
        %9793 = vmatprep.subr.bf16.mxu0 0
        %9794 = vmatpush1.bf16.msra.mxu0 0
        %9795 = vmatprep.subr.bf16.mxu0 0
        %9796 = vmatpush1.bf16.msra.mxu0 0
        %9797 = vmatprep.subr.bf16.mxu0 0
        %9798 = vmatpush1.bf16.msra.mxu0 0
        %9799 = vmatprep.subr.bf16.mxu0 0
        %9800 = vmatpush1.bf16.msra.mxu0 0
        %9801 = vmatprep.subr.bf16.mxu0 0
        %9802 = vmatpush1.bf16.msra.mxu0 0
        %9803 = vmatprep.subr.bf16.mxu0 0
        %9804 = vmatpush1.bf16.msra.mxu0 0
        %9805 = vmatprep.subr.bf16.mxu0 0
        %9806 = vmatpush1.bf16.msra.mxu0 0
        %9807 = vmatprep.subr.bf16.mxu0 0
        %9808 = vmatpush1.bf16.msra.mxu0 0
        %9809 = vmatprep.subr.bf16.mxu0 0
        %9810 = vmatpush1.bf16.msra.mxu0 0
        %9811 = vmatprep.subr.bf16.mxu0 0
        %9812 = vmatpush1.bf16.msra.mxu0 0
        %9813 = vmatprep.subr.bf16.mxu0 0
        %9814 = vmatpush1.bf16.msra.mxu0 0
        %9815 = vmatprep.subr.bf16.mxu0 0
        %9816 = vmatpush1.bf16.msra.mxu0 0
        %9817 = vmatprep.subr.bf16.mxu0 0
        %9818 = vmatpush1.bf16.msra.mxu0 0
        %9819 = vmatprep.subr.bf16.mxu0 0
        %9820 = vmatpush1.bf16.msra.mxu0 0
        %9821 = vmatprep.subr.bf16.mxu0 0
        %9822 = vmatpush1.bf16.msra.mxu0 0
        %9823 = vmatprep.mubr.bf16.mxu0 0
        %9824 = vmatmul.mubr.bf16.gmra.mrb[0].mxu0 %v9748
        %v9825 = vpop.f32.mrb[0].mxu0
        %v9826 = vadd.f32 0.0, %v9825
        %v9827 = vpop.f32.mrb[0].mxu0
        %v9828 = vadd.f32 0.0, %v9827
        %v9829 = vpop.f32.mrb[0].mxu0
        %v9830 = vpop.f32.mrb[0].mxu0
        %9831 = vdwg.mxu0
        %9832 = vmatprep.subr.bf16.mxu0 0
        %9833 = vmatpush1.bf16.msra.mxu0 %v7568
        %9834 = vmatprep.subr.bf16.mxu0 0
        %9835 = vmatpush1.bf16.msra.mxu0 0
        %9836 = vmatprep.subr.bf16.mxu0 0
        %9837 = vmatpush1.bf16.msra.mxu0 0
        %9838 = vmatprep.subr.bf16.mxu0 0
        %9839 = vmatpush1.bf16.msra.mxu0 0
        %9840 = vmatprep.subr.bf16.mxu0 0
        %9841 = vmatpush1.bf16.msra.mxu0 0
        %9842 = vmatprep.subr.bf16.mxu0 0
        %9843 = vmatpush1.bf16.msra.mxu0 0
        %9844 = vmatprep.subr.bf16.mxu0 0
        %9845 = vmatpush1.bf16.msra.mxu0 0
        %9846 = vmatprep.subr.bf16.mxu0 0
        %9847 = vmatpush1.bf16.msra.mxu0 0
        %9848 = vmatprep.subr.bf16.mxu0 0
        %9849 = vmatpush1.bf16.msra.mxu0 0
        %9850 = vmatprep.subr.bf16.mxu0 0
        %9851 = vmatpush1.bf16.msra.mxu0 0
        %9852 = vmatprep.subr.bf16.mxu0 0
        %9853 = vmatpush1.bf16.msra.mxu0 0
        %9854 = vmatprep.subr.bf16.mxu0 0
        %9855 = vmatpush1.bf16.msra.mxu0 0
        %9856 = vmatprep.subr.bf16.mxu0 0
        %9857 = vmatpush1.bf16.msra.mxu0 0
        %9858 = vmatprep.subr.bf16.mxu0 0
        %9859 = vmatpush1.bf16.msra.mxu0 0
        %9860 = vmatprep.subr.bf16.mxu0 0
        %9861 = vmatpush1.bf16.msra.mxu0 0
        %9862 = vmatprep.subr.bf16.mxu0 0
        %9863 = vmatpush1.bf16.msra.mxu0 0
        %9864 = vmatprep.mubr.bf16.mxu0 0
        %9865 = vmatmul.mubr.bf16.gmra.mrb[0].mxu0 %v9748
        %v9866 = vpop.f32.mrb[0].mxu0
        %v9867 = vadd.f32 0.0, %v9866
        %v9868 = vpop.f32.mrb[0].mxu0
        %v9869 = vpop.f32.mrb[0].mxu0
        %v9870 = vpop.f32.mrb[0].mxu0
        %9871 = vdwg.mxu0
        %v9872 = vpack.c.bf16 %v9785, %v9785
        %v9873 = vpack.c.bf16 %v9787, %v9787
        %v9874 = vpack.c.bf16 %v9826, %v9826
        %v9875 = vpack.c.bf16 %v9828, %v9828
        %v9876 = vpack.c.bf16 %v9867, %v9867
        %s9877 = scalar_lea.vmem %s11, 1152
        %v9878 = vld [vmem:[%s9877] sm:$0xf]
        %v9879 = vld [vmem:[%s9877 + $0x4] sm:$0xf]
        %v9880 = vld [vmem:[%s9877 + $0x8] sm:$0xf]
        %v9881 = vld [vmem:[%s9877 + $0xc] sm:$0xf]
        %v9882 = vld [vmem:[%s9877 + $0x10] sm:$0xf]
        %v9883 = vld [vmem:[%s9877 + $0x14] sm:$0xf]
        %v9884 = vld [vmem:[%s9877 + $0x18] sm:$0xf]
        %v9885 = vld [vmem:[%s9877 + $0x1c] sm:$0xf]
        %v9886 = vld [vmem:[%s9877 + $0x20] sm:$0xf]
        %v9887 = vld [vmem:[%s9877 + $0x24] sm:$0xf]
        %v9888 = vld [vmem:[%s9877 + $0x28] sm:$0xf]
        %v9889 = vld [vmem:[%s9877 + $0x2c] sm:$0xf]
        %v9890 = vld [vmem:[%s9877 + $0x30] sm:$0xf]
        %v9891 = vld [vmem:[%s9877 + $0x34] sm:$0xf]
        %v9892 = vld [vmem:[%s9877 + $0x38] sm:$0xf]
        %v9893 = vld [vmem:[%s9877 + $0x3c] sm:$0xf]
        %v9894 = vld [vmem:[%s9877 + $0x40] sm:$0xf]
        %v9895 = vld [vmem:[%s9877 + $0x44] sm:$0xf]
        %v9896 = vld [vmem:[%s9877 + $0x48] sm:$0xf]
        %v9897 = vld [vmem:[%s9877 + $0x4c] sm:$0xf]
        %v9898 = vld [vmem:[%s9877 + $0x50] sm:$0xf]
        %v9899 = vld [vmem:[%s9877 + $0x54] sm:$0xf]
        %v9900 = vld [vmem:[%s9877 + $0x58] sm:$0xf]
        %v9901 = vld [vmem:[%s9877 + $0x5c] sm:$0xf]
        %v9902 = vld [vmem:[%s9877 + $0x60] sm:$0xf]
        %v9903 = vld [vmem:[%s9877 + $0x64] sm:$0xf]
        %v9904 = vld [vmem:[%s9877 + $0x68] sm:$0xf]
        %v9905 = vld [vmem:[%s9877 + $0x6c] sm:$0xf]
        %v9906 = vld [vmem:[%s9877 + $0x70] sm:$0xf]
        %v9907 = vld [vmem:[%s9877 + $0x74] sm:$0xf]
        %v9908 = vld [vmem:[%s9877 + $0x78] sm:$0xf]
        %v9909 = vld [vmem:[%s9877 + $0x7c] sm:$0xf]
        %v9910 = vld [vmem:[%s9877 + $0x80] sm:$0xf]
        %v9911 = vld [vmem:[%s9877 + $0x84] sm:$0xf]
        %v9912 = vld [vmem:[%s9877 + $0x88] sm:$0xf]
        %v9913 = vld [vmem:[%s9877 + $0x8c] sm:$0xf]
        %v9914 = vld [vmem:[%s9877 + $0x90] sm:$0xf]
        %v9915 = vld [vmem:[%s9877 + $0x94] sm:$0xf]
        %v9916 = vld [vmem:[%s9877 + $0x98] sm:$0xf]
        %v9917 = vld [vmem:[%s9877 + $0x9c] sm:$0xf]
        %v9918 = vld [vmem:[%s9877 + $0xa0] sm:$0xf]
        %v9919 = vld [vmem:[%s9877 + $0xa4] sm:$0xf]
        %v9920 = vld [vmem:[%s9877 + $0xa8] sm:$0xf]
        %v9921 = vld [vmem:[%s9877 + $0xac] sm:$0xf]
        %v9922 = vld [vmem:[%s9877 + $0xb0] sm:$0xf]
        %v9923 = vld [vmem:[%s9877 + $0xb4] sm:$0xf]
        %v9924 = vld [vmem:[%s9877 + $0xb8] sm:$0xf]
        %v9925 = vld [vmem:[%s9877 + $0xbc] sm:$0xf]
        %v9926 = vld [vmem:[%s9877 + $0xc0] sm:$0xf]
        %v9927 = vld [vmem:[%s9877 + $0xc4] sm:$0xf]
        %v9928 = vld [vmem:[%s9877 + $0xc8] sm:$0xf]
        %v9929 = vld [vmem:[%s9877 + $0xcc] sm:$0xf]
        %v9930 = vld [vmem:[%s9877 + $0xd0] sm:$0xf]
        %v9931 = vld [vmem:[%s9877 + $0xd4] sm:$0xf]
        %v9932 = vld [vmem:[%s9877 + $0xd8] sm:$0xf]
        %v9933 = vld [vmem:[%s9877 + $0xdc] sm:$0xf]
        %v9934 = vld [vmem:[%s9877 + $0xe0] sm:$0xf]
        %v9935 = vld [vmem:[%s9877 + $0xe4] sm:$0xf]
        %v9936 = vld [vmem:[%s9877 + $0xe8] sm:$0xf]
        %v9937 = vld [vmem:[%s9877 + $0xec] sm:$0xf]
        %v9938 = vld [vmem:[%s9877 + $0xf0] sm:$0xf]
        %v9939 = vld [vmem:[%s9877 + $0xf4] sm:$0xf]
        %v9940 = vld [vmem:[%s9877 + $0xf8] sm:$0xf]
        %v9941 = vld [vmem:[%s9877 + $0xfc] sm:$0xf]
        %v9942 = vld [vmem:[%s9877 + $0x100] sm:$0xf]
        %v9943 = vld [vmem:[%s9877 + $0x104] sm:$0xf]
        %v9944 = vld [vmem:[%s9877 + $0x108] sm:$0xf]
        %v9945 = vld [vmem:[%s9877 + $0x10c] sm:$0xf]
        %v9946 = vld [vmem:[%s9877 + $0x110] sm:$0xf]
        %v9947 = vld [vmem:[%s9877 + $0x114] sm:$0xf]
        %v9948 = vld [vmem:[%s9877 + $0x118] sm:$0xf]
        %v9949 = vld [vmem:[%s9877 + $0x11c] sm:$0xf]
        %v10022 = vunpack.c.l.b16 %v9878
        %v10023 = vunpack.c.l.b16 %v9879
        %v10024 = vunpack.c.l.b16 %v9880
        %v10025 = vunpack.c.l.b16 %v9881
        %v10026 = vunpack.c.l.b16 %v9882
        %v10027 = vunpack.c.l.b16 %v9883
        %v10028 = vunpack.c.l.b16 %v9884
        %v10029 = vunpack.c.l.b16 %v9885
        %v10030 = vunpack.c.l.b16 %v9886
        %v10031 = vunpack.c.l.b16 %v9887
        %v10032 = vunpack.c.l.b16 %v9888
        %v10033 = vunpack.c.l.b16 %v9889
        %v10034 = vunpack.c.l.b16 %v9890
        %v10035 = vunpack.c.l.b16 %v9891
        %v10036 = vunpack.c.l.b16 %v9892
        %v10037 = vunpack.c.l.b16 %v9893
        %v10038 = vunpack.c.l.b16 %v9894
        %v10039 = vunpack.c.l.b16 %v9895
        %v10040 = vunpack.c.l.b16 %v9896
        %v10041 = vunpack.c.l.b16 %v9897
        %v10042 = vunpack.c.l.b16 %v9898
        %v10043 = vunpack.c.l.b16 %v9899
        %v10044 = vunpack.c.l.b16 %v9900
        %v10045 = vunpack.c.l.b16 %v9901
        %v10046 = vunpack.c.l.b16 %v9902
        %v10047 = vunpack.c.l.b16 %v9903
        %v10048 = vunpack.c.l.b16 %v9904
        %v10049 = vunpack.c.l.b16 %v9905
        %v10050 = vunpack.c.l.b16 %v9906
        %v10051 = vunpack.c.l.b16 %v9907
        %v10052 = vunpack.c.l.b16 %v9908
        %v10053 = vunpack.c.l.b16 %v9909
        %v10054 = vunpack.c.l.b16 %v9910
        %v10055 = vunpack.c.l.b16 %v9911
        %v10056 = vunpack.c.l.b16 %v9912
        %v10057 = vunpack.c.l.b16 %v9913
        %v10058 = vunpack.c.l.b16 %v9914
        %v10059 = vunpack.c.l.b16 %v9915
        %v10060 = vunpack.c.l.b16 %v9916
        %v10061 = vunpack.c.l.b16 %v9917
        %v10062 = vunpack.c.l.b16 %v9918
        %v10063 = vunpack.c.l.b16 %v9919
        %v10064 = vunpack.c.l.b16 %v9920
        %v10065 = vunpack.c.l.b16 %v9921
        %v10066 = vunpack.c.l.b16 %v9922
        %v10067 = vunpack.c.l.b16 %v9923
        %v10068 = vunpack.c.l.b16 %v9924
        %v10069 = vunpack.c.l.b16 %v9925
        %v10070 = vunpack.c.l.b16 %v9926
        %v10071 = vunpack.c.l.b16 %v9927
        %v10072 = vunpack.c.l.b16 %v9928
        %v10073 = vunpack.c.l.b16 %v9929
        %v10074 = vunpack.c.l.b16 %v9930
        %v10075 = vunpack.c.l.b16 %v9931
        %v10076 = vunpack.c.l.b16 %v9932
        %v10077 = vunpack.c.l.b16 %v9933
        %v10078 = vunpack.c.l.b16 %v9934
        %v10079 = vunpack.c.l.b16 %v9935
        %v10080 = vunpack.c.l.b16 %v9936
        %v10081 = vunpack.c.l.b16 %v9937
        %v10082 = vunpack.c.l.b16 %v9938
        %v10083 = vunpack.c.l.b16 %v9939
        %v10084 = vunpack.c.l.b16 %v9940
        %v10085 = vunpack.c.l.b16 %v9941
        %v10086 = vunpack.c.l.b16 %v9942
        %v10087 = vunpack.c.l.b16 %v9943
        %v10088 = vunpack.c.l.b16 %v9944
        %v10089 = vunpack.c.l.b16 %v9945
        %v10090 = vunpack.c.l.b16 %v9946
        %v10091 = vunpack.c.l.b16 %v9947
        %v10092 = vunpack.c.l.b16 %v9948
        %v10093 = vunpack.c.l.b16 %v9949
        %v10094 = vpack.c.b16 %v10023, %v10022
        %v10095 = vpack.c.b16 %v10025, %v10024
        %v10096 = vpack.c.b16 %v10027, %v10026
        %v10097 = vpack.c.b16 %v10029, %v10028
        %v10098 = vpack.c.b16 %v10031, %v10030
        %v10099 = vpack.c.b16 %v10033, %v10032
        %v10100 = vpack.c.b16 %v10035, %v10034
        %v10101 = vpack.c.b16 %v10037, %v10036
        %v10102 = vpack.c.b16 %v10039, %v10038
        %v10103 = vpack.c.b16 %v10041, %v10040
        %v10104 = vpack.c.b16 %v10043, %v10042
        %v10105 = vpack.c.b16 %v10045, %v10044
        %v10106 = vpack.c.b16 %v10047, %v10046
        %v10107 = vpack.c.b16 %v10049, %v10048
        %v10108 = vpack.c.b16 %v10051, %v10050
        %v10109 = vpack.c.b16 %v10053, %v10052
        %v10110 = vpack.c.b16 %v10055, %v10054
        %v10111 = vpack.c.b16 %v10057, %v10056
        %v10112 = vpack.c.b16 %v10059, %v10058
        %v10113 = vpack.c.b16 %v10061, %v10060
        %v10114 = vpack.c.b16 %v10063, %v10062
        %v10115 = vpack.c.b16 %v10065, %v10064
        %v10116 = vpack.c.b16 %v10067, %v10066
        %v10117 = vpack.c.b16 %v10069, %v10068
        %v10118 = vpack.c.b16 %v10071, %v10070
        %v10119 = vpack.c.b16 %v10073, %v10072
        %v10120 = vpack.c.b16 %v10075, %v10074
        %v10121 = vpack.c.b16 %v10077, %v10076
        %v10122 = vpack.c.b16 %v10079, %v10078
        %v10123 = vpack.c.b16 %v10081, %v10080
        %v10124 = vpack.c.b16 %v10083, %v10082
        %v10125 = vpack.c.b16 %v10085, %v10084
        %v10126 = vpack.c.b16 %v10087, %v10086
        %v10127 = vpack.c.b16 %v10089, %v10088
        %v10128 = vpack.c.b16 %v10091, %v10090
        %v10129 = vpack.c.b16 %v10093, %v10092
        %v10167 = vsel %vm7985, %v9876, 0
        %10169 = vmatprep.subr.bf16.mxu0 0
        %10170 = vmatpush1.bf16.msra.mxu0 %v10094
        %10171 = vmatprep.subr.bf16.mxu0 0
        %10172 = vmatpush1.bf16.msra.mxu0 %v10095
        %10173 = vmatprep.subr.bf16.mxu0 0
        %10174 = vmatpush1.bf16.msra.mxu0 %v10096
        %10175 = vmatprep.subr.bf16.mxu0 0
        %10176 = vmatpush1.bf16.msra.mxu0 %v10097
        %10177 = vmatprep.subr.bf16.mxu0 0
        %10178 = vmatpush1.bf16.msra.mxu0 %v10098
        %10179 = vmatprep.subr.bf16.mxu0 0
        %10180 = vmatpush1.bf16.msra.mxu0 %v10099
        %10181 = vmatprep.subr.bf16.mxu0 0
        %10182 = vmatpush1.bf16.msra.mxu0 %v10100
        %10183 = vmatprep.subr.bf16.mxu0 0
        %10184 = vmatpush1.bf16.msra.mxu0 %v10101
        %10185 = vmatprep.subr.bf16.mxu0 0
        %10186 = vmatpush1.bf16.msra.mxu0 %v10102
        %10187 = vmatprep.subr.bf16.mxu0 0
        %10188 = vmatpush1.bf16.msra.mxu0 %v10103
        %10189 = vmatprep.subr.bf16.mxu0 0
        %10190 = vmatpush1.bf16.msra.mxu0 %v10104
        %10191 = vmatprep.subr.bf16.mxu0 0
        %10192 = vmatpush1.bf16.msra.mxu0 %v10105
        %10193 = vmatprep.subr.bf16.mxu0 0
        %10194 = vmatpush1.bf16.msra.mxu0 %v10106
        %10195 = vmatprep.subr.bf16.mxu0 0
        %10196 = vmatpush1.bf16.msra.mxu0 %v10107
        %10197 = vmatprep.subr.bf16.mxu0 0
        %10198 = vmatpush1.bf16.msra.mxu0 %v10108
        %10199 = vmatprep.subr.bf16.mxu0 0
        %10200 = vmatpush1.bf16.msra.mxu0 %v10109
        %10201 = vmatprep.mubr.bf16.mxu0 %v9873
        %10202 = vmatmul.mubr.bf16.gmra.mrb[0].mxu0 %v9872
        %v10203 = vpop.f32.mrb[0].mxu0
        %v10204 = vadd.f32 0.0, %v10203
        %v10205 = vpop.f32.mrb[0].mxu0
        %v10206 = vpop.f32.mrb[0].mxu0
        %v10207 = vpop.f32.mrb[0].mxu0
        %10208 = vdwg.mxu0
        %10209 = vmatprep.subr.bf16.mxu0 0
        %10210 = vmatpush1.bf16.msra.mxu0 %v10110
        %10211 = vmatprep.subr.bf16.mxu0 0
        %10212 = vmatpush1.bf16.msra.mxu0 %v10111
        %10213 = vmatprep.subr.bf16.mxu0 0
        %10214 = vmatpush1.bf16.msra.mxu0 %v10112
        %10215 = vmatprep.subr.bf16.mxu0 0
        %10216 = vmatpush1.bf16.msra.mxu0 %v10113
        %10217 = vmatprep.subr.bf16.mxu0 0
        %10218 = vmatpush1.bf16.msra.mxu0 %v10114
        %10219 = vmatprep.subr.bf16.mxu0 0
        %10220 = vmatpush1.bf16.msra.mxu0 %v10115
        %10221 = vmatprep.subr.bf16.mxu0 0
        %10222 = vmatpush1.bf16.msra.mxu0 %v10116
        %10223 = vmatprep.subr.bf16.mxu0 0
        %10224 = vmatpush1.bf16.msra.mxu0 %v10117
        %10225 = vmatprep.subr.bf16.mxu0 0
        %10226 = vmatpush1.bf16.msra.mxu0 %v10118
        %10227 = vmatprep.subr.bf16.mxu0 0
        %10228 = vmatpush1.bf16.msra.mxu0 %v10119
        %10229 = vmatprep.subr.bf16.mxu0 0
        %10230 = vmatpush1.bf16.msra.mxu0 %v10120
        %10231 = vmatprep.subr.bf16.mxu0 0
        %10232 = vmatpush1.bf16.msra.mxu0 %v10121
        %10233 = vmatprep.subr.bf16.mxu0 0
        %10234 = vmatpush1.bf16.msra.mxu0 %v10122
        %10235 = vmatprep.subr.bf16.mxu0 0
        %10236 = vmatpush1.bf16.msra.mxu0 %v10123
        %10237 = vmatprep.subr.bf16.mxu0 0
        %10238 = vmatpush1.bf16.msra.mxu0 %v10124
        %10239 = vmatprep.subr.bf16.mxu0 0
        %10240 = vmatpush1.bf16.msra.mxu0 %v10125
        %10241 = vmatprep.mubr.bf16.mxu0 %v9875
        %10242 = vmatmul.mubr.bf16.gmra.mrb[0].mxu0 %v9874
        %v10243 = vpop.f32.mrb[0].mxu0
        %v10244 = vadd.f32 %v10204, %v10243
        %v10245 = vpop.f32.mrb[0].mxu0
        %v10246 = vpop.f32.mrb[0].mxu0
        %v10247 = vpop.f32.mrb[0].mxu0
        %10248 = vdwg.mxu0
        %10249 = vmatprep.subr.bf16.mxu0 0
        %10250 = vmatpush1.bf16.msra.mxu0 %v10126
        %10251 = vmatprep.subr.bf16.mxu0 0
        %10252 = vmatpush1.bf16.msra.mxu0 %v10127
        %10253 = vmatprep.subr.bf16.mxu0 0
        %10254 = vmatpush1.bf16.msra.mxu0 %v10128
        %10255 = vmatprep.subr.bf16.mxu0 0
        %10256 = vmatpush1.bf16.msra.mxu0 %v10129
        %10257 = vmatprep.subr.bf16.mxu0 0
        %10258 = vmatpush1.bf16.msra.mxu0 0
        %10259 = vmatprep.subr.bf16.mxu0 0
        %10260 = vmatpush1.bf16.msra.mxu0 0
        %10261 = vmatprep.subr.bf16.mxu0 0
        %10262 = vmatpush1.bf16.msra.mxu0 0
        %10263 = vmatprep.subr.bf16.mxu0 0
        %10264 = vmatpush1.bf16.msra.mxu0 0
        %10265 = vmatprep.subr.bf16.mxu0 0
        %10266 = vmatpush1.bf16.msra.mxu0 0
        %10267 = vmatprep.subr.bf16.mxu0 0
        %10268 = vmatpush1.bf16.msra.mxu0 0
        %10269 = vmatprep.subr.bf16.mxu0 0
        %10270 = vmatpush1.bf16.msra.mxu0 0
        %10271 = vmatprep.subr.bf16.mxu0 0
        %10272 = vmatpush1.bf16.msra.mxu0 0
        %10273 = vmatprep.subr.bf16.mxu0 0
        %10274 = vmatpush1.bf16.msra.mxu0 0
        %10275 = vmatprep.subr.bf16.mxu0 0
        %10276 = vmatpush1.bf16.msra.mxu0 0
        %10277 = vmatprep.subr.bf16.mxu0 0
        %10278 = vmatpush1.bf16.msra.mxu0 0
        %10279 = vmatprep.subr.bf16.mxu0 0
        %10280 = vmatpush1.bf16.msra.mxu0 0
        %10281 = vmatprep.mubr.bf16.mxu0 0
        %10282 = vmatmul.mubr.bf16.gmra.mrb[0].mxu0 %v10167
        %v10283 = vpop.f32.mrb[0].mxu0
        %v10284 = vadd.f32 %v10244, %v10283
        %v10285 = vpop.f32.mrb[0].mxu0
        %v10286 = vpop.f32.mrb[0].mxu0
        %v10287 = vpop.f32.mrb[0].mxu0
        %10288 = vdwg.mxu0
        %v10289 = vadd.f32 %v9744, %v10284
        %s10290 = scalar_lea.vmem %s10, 5
        %v10291 = vld [vmem:[%s10290] sm:$0x1]
        %v10293 = vsel %vm7547, %v10291, 0
        %10295 = vmatprep.subr.bf16.mxu0 %v7559
        %10296 = vmatpush1.bf16.msra.mxu0 %v7556
        %10297 = vmatprep.subr.bf16.mxu0 0
        %10298 = vmatpush1.bf16.msra.mxu0 0
        %10299 = vmatprep.subr.bf16.mxu0 0
        %10300 = vmatpush1.bf16.msra.mxu0 0
        %10301 = vmatprep.subr.bf16.mxu0 0
        %10302 = vmatpush1.bf16.msra.mxu0 0
        %10303 = vmatprep.subr.bf16.mxu0 0
        %10304 = vmatpush1.bf16.msra.mxu0 0
        %10305 = vmatprep.subr.bf16.mxu0 0
        %10306 = vmatpush1.bf16.msra.mxu0 0
        %10307 = vmatprep.subr.bf16.mxu0 0
        %10308 = vmatpush1.bf16.msra.mxu0 0
        %10309 = vmatprep.subr.bf16.mxu0 0
        %10310 = vmatpush1.bf16.msra.mxu0 0
        %10311 = vmatprep.subr.bf16.mxu0 0
        %10312 = vmatpush1.bf16.msra.mxu0 0
        %10313 = vmatprep.subr.bf16.mxu0 0
        %10314 = vmatpush1.bf16.msra.mxu0 0
        %10315 = vmatprep.subr.bf16.mxu0 0
        %10316 = vmatpush1.bf16.msra.mxu0 0
        %10317 = vmatprep.subr.bf16.mxu0 0
        %10318 = vmatpush1.bf16.msra.mxu0 0
        %10319 = vmatprep.subr.bf16.mxu0 0
        %10320 = vmatpush1.bf16.msra.mxu0 0
        %10321 = vmatprep.subr.bf16.mxu0 0
        %10322 = vmatpush1.bf16.msra.mxu0 0
        %10323 = vmatprep.subr.bf16.mxu0 0
        %10324 = vmatpush1.bf16.msra.mxu0 0
        %10325 = vmatprep.subr.bf16.mxu0 0
        %10326 = vmatpush1.bf16.msra.mxu0 0
        %10327 = vmatprep.mubr.bf16.mxu0 0
        %10328 = vmatmul.mubr.bf16.gmra.mrb[0].mxu0 %v10293
        %v10329 = vpop.f32.mrb[0].mxu0
        %v10330 = vadd.f32 0.0, %v10329
        %v10331 = vpop.f32.mrb[0].mxu0
        %v10332 = vadd.f32 0.0, %v10331
        %v10333 = vpop.f32.mrb[0].mxu0
        %v10334 = vpop.f32.mrb[0].mxu0
        %10335 = vdwg.mxu0
        %10336 = vmatprep.subr.bf16.mxu0 %v7565
        %10337 = vmatpush1.bf16.msra.mxu0 %v7562
        %10338 = vmatprep.subr.bf16.mxu0 0
        %10339 = vmatpush1.bf16.msra.mxu0 0
        %10340 = vmatprep.subr.bf16.mxu0 0
        %10341 = vmatpush1.bf16.msra.mxu0 0
        %10342 = vmatprep.subr.bf16.mxu0 0
        %10343 = vmatpush1.bf16.msra.mxu0 0
        %10344 = vmatprep.subr.bf16.mxu0 0
        %10345 = vmatpush1.bf16.msra.mxu0 0
        %10346 = vmatprep.subr.bf16.mxu0 0
        %10347 = vmatpush1.bf16.msra.mxu0 0
        %10348 = vmatprep.subr.bf16.mxu0 0
        %10349 = vmatpush1.bf16.msra.mxu0 0
        %10350 = vmatprep.subr.bf16.mxu0 0
        %10351 = vmatpush1.bf16.msra.mxu0 0
        %10352 = vmatprep.subr.bf16.mxu0 0
        %10353 = vmatpush1.bf16.msra.mxu0 0
        %10354 = vmatprep.subr.bf16.mxu0 0
        %10355 = vmatpush1.bf16.msra.mxu0 0
        %10356 = vmatprep.subr.bf16.mxu0 0
        %10357 = vmatpush1.bf16.msra.mxu0 0
        %10358 = vmatprep.subr.bf16.mxu0 0
        %10359 = vmatpush1.bf16.msra.mxu0 0
        %10360 = vmatprep.subr.bf16.mxu0 0
        %10361 = vmatpush1.bf16.msra.mxu0 0
        %10362 = vmatprep.subr.bf16.mxu0 0
        %10363 = vmatpush1.bf16.msra.mxu0 0
        %10364 = vmatprep.subr.bf16.mxu0 0
        %10365 = vmatpush1.bf16.msra.mxu0 0
        %10366 = vmatprep.subr.bf16.mxu0 0
        %10367 = vmatpush1.bf16.msra.mxu0 0
        %10368 = vmatprep.mubr.bf16.mxu0 0
        %10369 = vmatmul.mubr.bf16.gmra.mrb[0].mxu0 %v10293
        %v10370 = vpop.f32.mrb[0].mxu0
        %v10371 = vadd.f32 0.0, %v10370
        %v10372 = vpop.f32.mrb[0].mxu0
        %v10373 = vadd.f32 0.0, %v10372
        %v10374 = vpop.f32.mrb[0].mxu0
        %v10375 = vpop.f32.mrb[0].mxu0
        %10376 = vdwg.mxu0
        %10377 = vmatprep.subr.bf16.mxu0 0
        %10378 = vmatpush1.bf16.msra.mxu0 %v7568
        %10379 = vmatprep.subr.bf16.mxu0 0
        %10380 = vmatpush1.bf16.msra.mxu0 0
        %10381 = vmatprep.subr.bf16.mxu0 0
        %10382 = vmatpush1.bf16.msra.mxu0 0
        %10383 = vmatprep.subr.bf16.mxu0 0
        %10384 = vmatpush1.bf16.msra.mxu0 0
        %10385 = vmatprep.subr.bf16.mxu0 0
        %10386 = vmatpush1.bf16.msra.mxu0 0
        %10387 = vmatprep.subr.bf16.mxu0 0
        %10388 = vmatpush1.bf16.msra.mxu0 0
        %10389 = vmatprep.subr.bf16.mxu0 0
        %10390 = vmatpush1.bf16.msra.mxu0 0
        %10391 = vmatprep.subr.bf16.mxu0 0
        %10392 = vmatpush1.bf16.msra.mxu0 0
        %10393 = vmatprep.subr.bf16.mxu0 0
        %10394 = vmatpush1.bf16.msra.mxu0 0
        %10395 = vmatprep.subr.bf16.mxu0 0
        %10396 = vmatpush1.bf16.msra.mxu0 0
        %10397 = vmatprep.subr.bf16.mxu0 0
        %10398 = vmatpush1.bf16.msra.mxu0 0
        %10399 = vmatprep.subr.bf16.mxu0 0
        %10400 = vmatpush1.bf16.msra.mxu0 0
        %10401 = vmatprep.subr.bf16.mxu0 0
        %10402 = vmatpush1.bf16.msra.mxu0 0
        %10403 = vmatprep.subr.bf16.mxu0 0
        %10404 = vmatpush1.bf16.msra.mxu0 0
        %10405 = vmatprep.subr.bf16.mxu0 0
        %10406 = vmatpush1.bf16.msra.mxu0 0
        %10407 = vmatprep.subr.bf16.mxu0 0
        %10408 = vmatpush1.bf16.msra.mxu0 0
        %10409 = vmatprep.mubr.bf16.mxu0 0
        %10410 = vmatmul.mubr.bf16.gmra.mrb[0].mxu0 %v10293
        %v10411 = vpop.f32.mrb[0].mxu0
        %v10412 = vadd.f32 0.0, %v10411
        %v10413 = vpop.f32.mrb[0].mxu0
        %v10414 = vpop.f32.mrb[0].mxu0
        %v10415 = vpop.f32.mrb[0].mxu0
        %10416 = vdwg.mxu0
        %v10417 = vpack.c.bf16 %v10330, %v10330
        %v10418 = vpack.c.bf16 %v10332, %v10332
        %v10419 = vpack.c.bf16 %v10371, %v10371
        %v10420 = vpack.c.bf16 %v10373, %v10373
        %v10421 = vpack.c.bf16 %v10412, %v10412
        %s10422 = scalar_lea.vmem %s11, 1440
        %v10423 = vld [vmem:[%s10422] sm:$0xf]
        %v10424 = vld [vmem:[%s10422 + $0x4] sm:$0xf]
        %v10425 = vld [vmem:[%s10422 + $0x8] sm:$0xf]
        %v10426 = vld [vmem:[%s10422 + $0xc] sm:$0xf]
        %v10427 = vld [vmem:[%s10422 + $0x10] sm:$0xf]
        %v10428 = vld [vmem:[%s10422 + $0x14] sm:$0xf]
        %v10429 = vld [vmem:[%s10422 + $0x18] sm:$0xf]
        %v10430 = vld [vmem:[%s10422 + $0x1c] sm:$0xf]
        %v10431 = vld [vmem:[%s10422 + $0x20] sm:$0xf]
        %v10432 = vld [vmem:[%s10422 + $0x24] sm:$0xf]
        %v10433 = vld [vmem:[%s10422 + $0x28] sm:$0xf]
        %v10434 = vld [vmem:[%s10422 + $0x2c] sm:$0xf]
        %v10435 = vld [vmem:[%s10422 + $0x30] sm:$0xf]
        %v10436 = vld [vmem:[%s10422 + $0x34] sm:$0xf]
        %v10437 = vld [vmem:[%s10422 + $0x38] sm:$0xf]
        %v10438 = vld [vmem:[%s10422 + $0x3c] sm:$0xf]
        %v10439 = vld [vmem:[%s10422 + $0x40] sm:$0xf]
        %v10440 = vld [vmem:[%s10422 + $0x44] sm:$0xf]
        %v10441 = vld [vmem:[%s10422 + $0x48] sm:$0xf]
        %v10442 = vld [vmem:[%s10422 + $0x4c] sm:$0xf]
        %v10443 = vld [vmem:[%s10422 + $0x50] sm:$0xf]
        %v10444 = vld [vmem:[%s10422 + $0x54] sm:$0xf]
        %v10445 = vld [vmem:[%s10422 + $0x58] sm:$0xf]
        %v10446 = vld [vmem:[%s10422 + $0x5c] sm:$0xf]
        %v10447 = vld [vmem:[%s10422 + $0x60] sm:$0xf]
        %v10448 = vld [vmem:[%s10422 + $0x64] sm:$0xf]
        %v10449 = vld [vmem:[%s10422 + $0x68] sm:$0xf]
        %v10450 = vld [vmem:[%s10422 + $0x6c] sm:$0xf]
        %v10451 = vld [vmem:[%s10422 + $0x70] sm:$0xf]
        %v10452 = vld [vmem:[%s10422 + $0x74] sm:$0xf]
        %v10453 = vld [vmem:[%s10422 + $0x78] sm:$0xf]
        %v10454 = vld [vmem:[%s10422 + $0x7c] sm:$0xf]
        %v10455 = vld [vmem:[%s10422 + $0x80] sm:$0xf]
        %v10456 = vld [vmem:[%s10422 + $0x84] sm:$0xf]
        %v10457 = vld [vmem:[%s10422 + $0x88] sm:$0xf]
        %v10458 = vld [vmem:[%s10422 + $0x8c] sm:$0xf]
        %v10459 = vld [vmem:[%s10422 + $0x90] sm:$0xf]
        %v10460 = vld [vmem:[%s10422 + $0x94] sm:$0xf]
        %v10461 = vld [vmem:[%s10422 + $0x98] sm:$0xf]
        %v10462 = vld [vmem:[%s10422 + $0x9c] sm:$0xf]
        %v10463 = vld [vmem:[%s10422 + $0xa0] sm:$0xf]
        %v10464 = vld [vmem:[%s10422 + $0xa4] sm:$0xf]
        %v10465 = vld [vmem:[%s10422 + $0xa8] sm:$0xf]
        %v10466 = vld [vmem:[%s10422 + $0xac] sm:$0xf]
        %v10467 = vld [vmem:[%s10422 + $0xb0] sm:$0xf]
        %v10468 = vld [vmem:[%s10422 + $0xb4] sm:$0xf]
        %v10469 = vld [vmem:[%s10422 + $0xb8] sm:$0xf]
        %v10470 = vld [vmem:[%s10422 + $0xbc] sm:$0xf]
        %v10471 = vld [vmem:[%s10422 + $0xc0] sm:$0xf]
        %v10472 = vld [vmem:[%s10422 + $0xc4] sm:$0xf]
        %v10473 = vld [vmem:[%s10422 + $0xc8] sm:$0xf]
        %v10474 = vld [vmem:[%s10422 + $0xcc] sm:$0xf]
        %v10475 = vld [vmem:[%s10422 + $0xd0] sm:$0xf]
        %v10476 = vld [vmem:[%s10422 + $0xd4] sm:$0xf]
        %v10477 = vld [vmem:[%s10422 + $0xd8] sm:$0xf]
        %v10478 = vld [vmem:[%s10422 + $0xdc] sm:$0xf]
        %v10479 = vld [vmem:[%s10422 + $0xe0] sm:$0xf]
        %v10480 = vld [vmem:[%s10422 + $0xe4] sm:$0xf]
        %v10481 = vld [vmem:[%s10422 + $0xe8] sm:$0xf]
        %v10482 = vld [vmem:[%s10422 + $0xec] sm:$0xf]
        %v10483 = vld [vmem:[%s10422 + $0xf0] sm:$0xf]
        %v10484 = vld [vmem:[%s10422 + $0xf4] sm:$0xf]
        %v10485 = vld [vmem:[%s10422 + $0xf8] sm:$0xf]
        %v10486 = vld [vmem:[%s10422 + $0xfc] sm:$0xf]
        %v10487 = vld [vmem:[%s10422 + $0x100] sm:$0xf]
        %v10488 = vld [vmem:[%s10422 + $0x104] sm:$0xf]
        %v10489 = vld [vmem:[%s10422 + $0x108] sm:$0xf]
        %v10490 = vld [vmem:[%s10422 + $0x10c] sm:$0xf]
        %v10491 = vld [vmem:[%s10422 + $0x110] sm:$0xf]
        %v10492 = vld [vmem:[%s10422 + $0x114] sm:$0xf]
        %v10493 = vld [vmem:[%s10422 + $0x118] sm:$0xf]
        %v10494 = vld [vmem:[%s10422 + $0x11c] sm:$0xf]
        %v10567 = vunpack.c.l.b16 %v10423
        %v10568 = vunpack.c.l.b16 %v10424
        %v10569 = vunpack.c.l.b16 %v10425
        %v10570 = vunpack.c.l.b16 %v10426
        %v10571 = vunpack.c.l.b16 %v10427
        %v10572 = vunpack.c.l.b16 %v10428
        %v10573 = vunpack.c.l.b16 %v10429
        %v10574 = vunpack.c.l.b16 %v10430
        %v10575 = vunpack.c.l.b16 %v10431
        %v10576 = vunpack.c.l.b16 %v10432
        %v10577 = vunpack.c.l.b16 %v10433
        %v10578 = vunpack.c.l.b16 %v10434
        %v10579 = vunpack.c.l.b16 %v10435
        %v10580 = vunpack.c.l.b16 %v10436
        %v10581 = vunpack.c.l.b16 %v10437
        %v10582 = vunpack.c.l.b16 %v10438
        %v10583 = vunpack.c.l.b16 %v10439
        %v10584 = vunpack.c.l.b16 %v10440
        %v10585 = vunpack.c.l.b16 %v10441
        %v10586 = vunpack.c.l.b16 %v10442
        %v10587 = vunpack.c.l.b16 %v10443
        %v10588 = vunpack.c.l.b16 %v10444
        %v10589 = vunpack.c.l.b16 %v10445
        %v10590 = vunpack.c.l.b16 %v10446
        %v10591 = vunpack.c.l.b16 %v10447
        %v10592 = vunpack.c.l.b16 %v10448
        %v10593 = vunpack.c.l.b16 %v10449
        %v10594 = vunpack.c.l.b16 %v10450
        %v10595 = vunpack.c.l.b16 %v10451
        %v10596 = vunpack.c.l.b16 %v10452
        %v10597 = vunpack.c.l.b16 %v10453
        %v10598 = vunpack.c.l.b16 %v10454
        %v10599 = vunpack.c.l.b16 %v10455
        %v10600 = vunpack.c.l.b16 %v10456
        %v10601 = vunpack.c.l.b16 %v10457
        %v10602 = vunpack.c.l.b16 %v10458
        %v10603 = vunpack.c.l.b16 %v10459
        %v10604 = vunpack.c.l.b16 %v10460
        %v10605 = vunpack.c.l.b16 %v10461
        %v10606 = vunpack.c.l.b16 %v10462
        %v10607 = vunpack.c.l.b16 %v10463
        %v10608 = vunpack.c.l.b16 %v10464
        %v10609 = vunpack.c.l.b16 %v10465
        %v10610 = vunpack.c.l.b16 %v10466
        %v10611 = vunpack.c.l.b16 %v10467
        %v10612 = vunpack.c.l.b16 %v10468
        %v10613 = vunpack.c.l.b16 %v10469
        %v10614 = vunpack.c.l.b16 %v10470
        %v10615 = vunpack.c.l.b16 %v10471
        %v10616 = vunpack.c.l.b16 %v10472
        %v10617 = vunpack.c.l.b16 %v10473
        %v10618 = vunpack.c.l.b16 %v10474
        %v10619 = vunpack.c.l.b16 %v10475
        %v10620 = vunpack.c.l.b16 %v10476
        %v10621 = vunpack.c.l.b16 %v10477
        %v10622 = vunpack.c.l.b16 %v10478
        %v10623 = vunpack.c.l.b16 %v10479
        %v10624 = vunpack.c.l.b16 %v10480
        %v10625 = vunpack.c.l.b16 %v10481
        %v10626 = vunpack.c.l.b16 %v10482
        %v10627 = vunpack.c.l.b16 %v10483
        %v10628 = vunpack.c.l.b16 %v10484
        %v10629 = vunpack.c.l.b16 %v10485
        %v10630 = vunpack.c.l.b16 %v10486
        %v10631 = vunpack.c.l.b16 %v10487
        %v10632 = vunpack.c.l.b16 %v10488
        %v10633 = vunpack.c.l.b16 %v10489
        %v10634 = vunpack.c.l.b16 %v10490
        %v10635 = vunpack.c.l.b16 %v10491
        %v10636 = vunpack.c.l.b16 %v10492
        %v10637 = vunpack.c.l.b16 %v10493
        %v10638 = vunpack.c.l.b16 %v10494
        %v10639 = vpack.c.b16 %v10568, %v10567
        %v10640 = vpack.c.b16 %v10570, %v10569
        %v10641 = vpack.c.b16 %v10572, %v10571
        %v10642 = vpack.c.b16 %v10574, %v10573
        %v10643 = vpack.c.b16 %v10576, %v10575
        %v10644 = vpack.c.b16 %v10578, %v10577
        %v10645 = vpack.c.b16 %v10580, %v10579
        %v10646 = vpack.c.b16 %v10582, %v10581
        %v10647 = vpack.c.b16 %v10584, %v10583
        %v10648 = vpack.c.b16 %v10586, %v10585
        %v10649 = vpack.c.b16 %v10588, %v10587
        %v10650 = vpack.c.b16 %v10590, %v10589
        %v10651 = vpack.c.b16 %v10592, %v10591
        %v10652 = vpack.c.b16 %v10594, %v10593
        %v10653 = vpack.c.b16 %v10596, %v10595
        %v10654 = vpack.c.b16 %v10598, %v10597
        %v10655 = vpack.c.b16 %v10600, %v10599
        %v10656 = vpack.c.b16 %v10602, %v10601
        %v10657 = vpack.c.b16 %v10604, %v10603
        %v10658 = vpack.c.b16 %v10606, %v10605
        %v10659 = vpack.c.b16 %v10608, %v10607
        %v10660 = vpack.c.b16 %v10610, %v10609
        %v10661 = vpack.c.b16 %v10612, %v10611
        %v10662 = vpack.c.b16 %v10614, %v10613
        %v10663 = vpack.c.b16 %v10616, %v10615
        %v10664 = vpack.c.b16 %v10618, %v10617
        %v10665 = vpack.c.b16 %v10620, %v10619
        %v10666 = vpack.c.b16 %v10622, %v10621
        %v10667 = vpack.c.b16 %v10624, %v10623
        %v10668 = vpack.c.b16 %v10626, %v10625
        %v10669 = vpack.c.b16 %v10628, %v10627
        %v10670 = vpack.c.b16 %v10630, %v10629
        %v10671 = vpack.c.b16 %v10632, %v10631
        %v10672 = vpack.c.b16 %v10634, %v10633
        %v10673 = vpack.c.b16 %v10636, %v10635
        %v10674 = vpack.c.b16 %v10638, %v10637
        %v10712 = vsel %vm7985, %v10421, 0
        %10714 = vmatprep.subr.bf16.mxu0 0
        %10715 = vmatpush1.bf16.msra.mxu0 %v10639
        %10716 = vmatprep.subr.bf16.mxu0 0
        %10717 = vmatpush1.bf16.msra.mxu0 %v10640
        %10718 = vmatprep.subr.bf16.mxu0 0
        %10719 = vmatpush1.bf16.msra.mxu0 %v10641
        %10720 = vmatprep.subr.bf16.mxu0 0
        %10721 = vmatpush1.bf16.msra.mxu0 %v10642
        %10722 = vmatprep.subr.bf16.mxu0 0
        %10723 = vmatpush1.bf16.msra.mxu0 %v10643
        %10724 = vmatprep.subr.bf16.mxu0 0
        %10725 = vmatpush1.bf16.msra.mxu0 %v10644
        %10726 = vmatprep.subr.bf16.mxu0 0
        %10727 = vmatpush1.bf16.msra.mxu0 %v10645
        %10728 = vmatprep.subr.bf16.mxu0 0
        %10729 = vmatpush1.bf16.msra.mxu0 %v10646
        %10730 = vmatprep.subr.bf16.mxu0 0
        %10731 = vmatpush1.bf16.msra.mxu0 %v10647
        %10732 = vmatprep.subr.bf16.mxu0 0
        %10733 = vmatpush1.bf16.msra.mxu0 %v10648
        %10734 = vmatprep.subr.bf16.mxu0 0
        %10735 = vmatpush1.bf16.msra.mxu0 %v10649
        %10736 = vmatprep.subr.bf16.mxu0 0
        %10737 = vmatpush1.bf16.msra.mxu0 %v10650
        %10738 = vmatprep.subr.bf16.mxu0 0
        %10739 = vmatpush1.bf16.msra.mxu0 %v10651
        %10740 = vmatprep.subr.bf16.mxu0 0
        %10741 = vmatpush1.bf16.msra.mxu0 %v10652
        %10742 = vmatprep.subr.bf16.mxu0 0
        %10743 = vmatpush1.bf16.msra.mxu0 %v10653
        %10744 = vmatprep.subr.bf16.mxu0 0
        %10745 = vmatpush1.bf16.msra.mxu0 %v10654
        %10746 = vmatprep.mubr.bf16.mxu0 %v10418
        %10747 = vmatmul.mubr.bf16.gmra.mrb[0].mxu0 %v10417
        %v10748 = vpop.f32.mrb[0].mxu0
        %v10749 = vadd.f32 0.0, %v10748
        %v10750 = vpop.f32.mrb[0].mxu0
        %v10751 = vpop.f32.mrb[0].mxu0
        %v10752 = vpop.f32.mrb[0].mxu0
        %10753 = vdwg.mxu0
        %10754 = vmatprep.subr.bf16.mxu0 0
        %10755 = vmatpush1.bf16.msra.mxu0 %v10655
        %10756 = vmatprep.subr.bf16.mxu0 0
        %10757 = vmatpush1.bf16.msra.mxu0 %v10656
        %10758 = vmatprep.subr.bf16.mxu0 0
        %10759 = vmatpush1.bf16.msra.mxu0 %v10657
        %10760 = vmatprep.subr.bf16.mxu0 0
        %10761 = vmatpush1.bf16.msra.mxu0 %v10658
        %10762 = vmatprep.subr.bf16.mxu0 0
        %10763 = vmatpush1.bf16.msra.mxu0 %v10659
        %10764 = vmatprep.subr.bf16.mxu0 0
        %10765 = vmatpush1.bf16.msra.mxu0 %v10660
        %10766 = vmatprep.subr.bf16.mxu0 0
        %10767 = vmatpush1.bf16.msra.mxu0 %v10661
        %10768 = vmatprep.subr.bf16.mxu0 0
        %10769 = vmatpush1.bf16.msra.mxu0 %v10662
        %10770 = vmatprep.subr.bf16.mxu0 0
        %10771 = vmatpush1.bf16.msra.mxu0 %v10663
        %10772 = vmatprep.subr.bf16.mxu0 0
        %10773 = vmatpush1.bf16.msra.mxu0 %v10664
        %10774 = vmatprep.subr.bf16.mxu0 0
        %10775 = vmatpush1.bf16.msra.mxu0 %v10665
        %10776 = vmatprep.subr.bf16.mxu0 0
        %10777 = vmatpush1.bf16.msra.mxu0 %v10666
        %10778 = vmatprep.subr.bf16.mxu0 0
        %10779 = vmatpush1.bf16.msra.mxu0 %v10667
        %10780 = vmatprep.subr.bf16.mxu0 0
        %10781 = vmatpush1.bf16.msra.mxu0 %v10668
        %10782 = vmatprep.subr.bf16.mxu0 0
        %10783 = vmatpush1.bf16.msra.mxu0 %v10669
        %10784 = vmatprep.subr.bf16.mxu0 0
        %10785 = vmatpush1.bf16.msra.mxu0 %v10670
        %10786 = vmatprep.mubr.bf16.mxu0 %v10420
        %10787 = vmatmul.mubr.bf16.gmra.mrb[0].mxu0 %v10419
        %v10788 = vpop.f32.mrb[0].mxu0
        %v10789 = vadd.f32 %v10749, %v10788
        %v10790 = vpop.f32.mrb[0].mxu0
        %v10791 = vpop.f32.mrb[0].mxu0
        %v10792 = vpop.f32.mrb[0].mxu0
        %10793 = vdwg.mxu0
        %10794 = vmatprep.subr.bf16.mxu0 0
        %10795 = vmatpush1.bf16.msra.mxu0 %v10671
        %10796 = vmatprep.subr.bf16.mxu0 0
        %10797 = vmatpush1.bf16.msra.mxu0 %v10672
        %10798 = vmatprep.subr.bf16.mxu0 0
        %10799 = vmatpush1.bf16.msra.mxu0 %v10673
        %10800 = vmatprep.subr.bf16.mxu0 0
        %10801 = vmatpush1.bf16.msra.mxu0 %v10674
        %10802 = vmatprep.subr.bf16.mxu0 0
        %10803 = vmatpush1.bf16.msra.mxu0 0
        %10804 = vmatprep.subr.bf16.mxu0 0
        %10805 = vmatpush1.bf16.msra.mxu0 0
        %10806 = vmatprep.subr.bf16.mxu0 0
        %10807 = vmatpush1.bf16.msra.mxu0 0
        %10808 = vmatprep.subr.bf16.mxu0 0
        %10809 = vmatpush1.bf16.msra.mxu0 0
        %10810 = vmatprep.subr.bf16.mxu0 0
        %10811 = vmatpush1.bf16.msra.mxu0 0
        %10812 = vmatprep.subr.bf16.mxu0 0
        %10813 = vmatpush1.bf16.msra.mxu0 0
        %10814 = vmatprep.subr.bf16.mxu0 0
        %10815 = vmatpush1.bf16.msra.mxu0 0
        %10816 = vmatprep.subr.bf16.mxu0 0
        %10817 = vmatpush1.bf16.msra.mxu0 0
        %10818 = vmatprep.subr.bf16.mxu0 0
        %10819 = vmatpush1.bf16.msra.mxu0 0
        %10820 = vmatprep.subr.bf16.mxu0 0
        %10821 = vmatpush1.bf16.msra.mxu0 0
        %10822 = vmatprep.subr.bf16.mxu0 0
        %10823 = vmatpush1.bf16.msra.mxu0 0
        %10824 = vmatprep.subr.bf16.mxu0 0
        %10825 = vmatpush1.bf16.msra.mxu0 0
        %10826 = vmatprep.mubr.bf16.mxu0 0
        %10827 = vmatmul.mubr.bf16.gmra.mrb[0].mxu0 %v10712
        %v10828 = vpop.f32.mrb[0].mxu0
        %v10829 = vadd.f32 %v10789, %v10828
        %v10830 = vpop.f32.mrb[0].mxu0
        %v10831 = vpop.f32.mrb[0].mxu0
        %v10832 = vpop.f32.mrb[0].mxu0
        %10833 = vdwg.mxu0
        %v10834 = vadd.f32 %v10289, %v10829
        %s10835 = scalar_lea.vmem %s10, 6
        %v10836 = vld [vmem:[%s10835] sm:$0x1]
        %v10838 = vsel %vm7547, %v10836, 0
        %10840 = vmatprep.subr.bf16.mxu0 %v7559
        %10841 = vmatpush1.bf16.msra.mxu0 %v7556
        %10842 = vmatprep.subr.bf16.mxu0 0
        %10843 = vmatpush1.bf16.msra.mxu0 0
        %10844 = vmatprep.subr.bf16.mxu0 0
        %10845 = vmatpush1.bf16.msra.mxu0 0
        %10846 = vmatprep.subr.bf16.mxu0 0
        %10847 = vmatpush1.bf16.msra.mxu0 0
        %10848 = vmatprep.subr.bf16.mxu0 0
        %10849 = vmatpush1.bf16.msra.mxu0 0
        %10850 = vmatprep.subr.bf16.mxu0 0
        %10851 = vmatpush1.bf16.msra.mxu0 0
        %10852 = vmatprep.subr.bf16.mxu0 0
        %10853 = vmatpush1.bf16.msra.mxu0 0
        %10854 = vmatprep.subr.bf16.mxu0 0
        %10855 = vmatpush1.bf16.msra.mxu0 0
        %10856 = vmatprep.subr.bf16.mxu0 0
        %10857 = vmatpush1.bf16.msra.mxu0 0
        %10858 = vmatprep.subr.bf16.mxu0 0
        %10859 = vmatpush1.bf16.msra.mxu0 0
        %10860 = vmatprep.subr.bf16.mxu0 0
        %10861 = vmatpush1.bf16.msra.mxu0 0
        %10862 = vmatprep.subr.bf16.mxu0 0
        %10863 = vmatpush1.bf16.msra.mxu0 0
        %10864 = vmatprep.subr.bf16.mxu0 0
        %10865 = vmatpush1.bf16.msra.mxu0 0
        %10866 = vmatprep.subr.bf16.mxu0 0
        %10867 = vmatpush1.bf16.msra.mxu0 0
        %10868 = vmatprep.subr.bf16.mxu0 0
        %10869 = vmatpush1.bf16.msra.mxu0 0
        %10870 = vmatprep.subr.bf16.mxu0 0
        %10871 = vmatpush1.bf16.msra.mxu0 0
        %10872 = vmatprep.mubr.bf16.mxu0 0
        %10873 = vmatmul.mubr.bf16.gmra.mrb[0].mxu0 %v10838
        %v10874 = vpop.f32.mrb[0].mxu0
        %v10875 = vadd.f32 0.0, %v10874
        %v10876 = vpop.f32.mrb[0].mxu0
        %v10877 = vadd.f32 0.0, %v10876
        %v10878 = vpop.f32.mrb[0].mxu0
        %v10879 = vpop.f32.mrb[0].mxu0
        %10880 = vdwg.mxu0
        %10881 = vmatprep.subr.bf16.mxu0 %v7565
        %10882 = vmatpush1.bf16.msra.mxu0 %v7562
        %10883 = vmatprep.subr.bf16.mxu0 0
        %10884 = vmatpush1.bf16.msra.mxu0 0
        %10885 = vmatprep.subr.bf16.mxu0 0
        %10886 = vmatpush1.bf16.msra.mxu0 0
        %10887 = vmatprep.subr.bf16.mxu0 0
        %10888 = vmatpush1.bf16.msra.mxu0 0
        %10889 = vmatprep.subr.bf16.mxu0 0
        %10890 = vmatpush1.bf16.msra.mxu0 0
        %10891 = vmatprep.subr.bf16.mxu0 0
        %10892 = vmatpush1.bf16.msra.mxu0 0
        %10893 = vmatprep.subr.bf16.mxu0 0
        %10894 = vmatpush1.bf16.msra.mxu0 0
        %10895 = vmatprep.subr.bf16.mxu0 0
        %10896 = vmatpush1.bf16.msra.mxu0 0
        %10897 = vmatprep.subr.bf16.mxu0 0
        %10898 = vmatpush1.bf16.msra.mxu0 0
        %10899 = vmatprep.subr.bf16.mxu0 0
        %10900 = vmatpush1.bf16.msra.mxu0 0
        %10901 = vmatprep.subr.bf16.mxu0 0
        %10902 = vmatpush1.bf16.msra.mxu0 0
        %10903 = vmatprep.subr.bf16.mxu0 0
        %10904 = vmatpush1.bf16.msra.mxu0 0
        %10905 = vmatprep.subr.bf16.mxu0 0
        %10906 = vmatpush1.bf16.msra.mxu0 0
        %10907 = vmatprep.subr.bf16.mxu0 0
        %10908 = vmatpush1.bf16.msra.mxu0 0
        %10909 = vmatprep.subr.bf16.mxu0 0
        %10910 = vmatpush1.bf16.msra.mxu0 0
        %10911 = vmatprep.subr.bf16.mxu0 0
        %10912 = vmatpush1.bf16.msra.mxu0 0
        %10913 = vmatprep.mubr.bf16.mxu0 0
        %10914 = vmatmul.mubr.bf16.gmra.mrb[0].mxu0 %v10838
        %v10915 = vpop.f32.mrb[0].mxu0
        %v10916 = vadd.f32 0.0, %v10915
        %v10917 = vpop.f32.mrb[0].mxu0
        %v10918 = vadd.f32 0.0, %v10917
        %v10919 = vpop.f32.mrb[0].mxu0
        %v10920 = vpop.f32.mrb[0].mxu0
        %10921 = vdwg.mxu0
        %10922 = vmatprep.subr.bf16.mxu0 0
        %10923 = vmatpush1.bf16.msra.mxu0 %v7568
        %10924 = vmatprep.subr.bf16.mxu0 0
        %10925 = vmatpush1.bf16.msra.mxu0 0
        %10926 = vmatprep.subr.bf16.mxu0 0
        %10927 = vmatpush1.bf16.msra.mxu0 0
        %10928 = vmatprep.subr.bf16.mxu0 0
        %10929 = vmatpush1.bf16.msra.mxu0 0
        %10930 = vmatprep.subr.bf16.mxu0 0
        %10931 = vmatpush1.bf16.msra.mxu0 0
        %10932 = vmatprep.subr.bf16.mxu0 0
        %10933 = vmatpush1.bf16.msra.mxu0 0
        %10934 = vmatprep.subr.bf16.mxu0 0
        %10935 = vmatpush1.bf16.msra.mxu0 0
        %10936 = vmatprep.subr.bf16.mxu0 0
        %10937 = vmatpush1.bf16.msra.mxu0 0
        %10938 = vmatprep.subr.bf16.mxu0 0
        %10939 = vmatpush1.bf16.msra.mxu0 0
        %10940 = vmatprep.subr.bf16.mxu0 0
        %10941 = vmatpush1.bf16.msra.mxu0 0
        %10942 = vmatprep.subr.bf16.mxu0 0
        %10943 = vmatpush1.bf16.msra.mxu0 0
        %10944 = vmatprep.subr.bf16.mxu0 0
        %10945 = vmatpush1.bf16.msra.mxu0 0
        %10946 = vmatprep.subr.bf16.mxu0 0
        %10947 = vmatpush1.bf16.msra.mxu0 0
        %10948 = vmatprep.subr.bf16.mxu0 0
        %10949 = vmatpush1.bf16.msra.mxu0 0
        %10950 = vmatprep.subr.bf16.mxu0 0
        %10951 = vmatpush1.bf16.msra.mxu0 0
        %10952 = vmatprep.subr.bf16.mxu0 0
        %10953 = vmatpush1.bf16.msra.mxu0 0
        %10954 = vmatprep.mubr.bf16.mxu0 0
        %10955 = vmatmul.mubr.bf16.gmra.mrb[0].mxu0 %v10838
        %v10956 = vpop.f32.mrb[0].mxu0
        %v10957 = vadd.f32 0.0, %v10956
        %v10958 = vpop.f32.mrb[0].mxu0
        %v10959 = vpop.f32.mrb[0].mxu0
        %v10960 = vpop.f32.mrb[0].mxu0
        %10961 = vdwg.mxu0
        %v10962 = vpack.c.bf16 %v10875, %v10875
        %v10963 = vpack.c.bf16 %v10877, %v10877
        %v10964 = vpack.c.bf16 %v10916, %v10916
        %v10965 = vpack.c.bf16 %v10918, %v10918
        %v10966 = vpack.c.bf16 %v10957, %v10957
        %s10967 = scalar_lea.vmem %s11, 1728
        %v10968 = vld [vmem:[%s10967] sm:$0xf]
        %v10969 = vld [vmem:[%s10967 + $0x4] sm:$0xf]
        %v10970 = vld [vmem:[%s10967 + $0x8] sm:$0xf]
        %v10971 = vld [vmem:[%s10967 + $0xc] sm:$0xf]
        %v10972 = vld [vmem:[%s10967 + $0x10] sm:$0xf]
        %v10973 = vld [vmem:[%s10967 + $0x14] sm:$0xf]
        %v10974 = vld [vmem:[%s10967 + $0x18] sm:$0xf]
        %v10975 = vld [vmem:[%s10967 + $0x1c] sm:$0xf]
        %v10976 = vld [vmem:[%s10967 + $0x20] sm:$0xf]
        %v10977 = vld [vmem:[%s10967 + $0x24] sm:$0xf]
        %v10978 = vld [vmem:[%s10967 + $0x28] sm:$0xf]
        %v10979 = vld [vmem:[%s10967 + $0x2c] sm:$0xf]
        %v10980 = vld [vmem:[%s10967 + $0x30] sm:$0xf]
        %v10981 = vld [vmem:[%s10967 + $0x34] sm:$0xf]
        %v10982 = vld [vmem:[%s10967 + $0x38] sm:$0xf]
        %v10983 = vld [vmem:[%s10967 + $0x3c] sm:$0xf]
        %v10984 = vld [vmem:[%s10967 + $0x40] sm:$0xf]
        %v10985 = vld [vmem:[%s10967 + $0x44] sm:$0xf]
        %v10986 = vld [vmem:[%s10967 + $0x48] sm:$0xf]
        %v10987 = vld [vmem:[%s10967 + $0x4c] sm:$0xf]
        %v10988 = vld [vmem:[%s10967 + $0x50] sm:$0xf]
        %v10989 = vld [vmem:[%s10967 + $0x54] sm:$0xf]
        %v10990 = vld [vmem:[%s10967 + $0x58] sm:$0xf]
        %v10991 = vld [vmem:[%s10967 + $0x5c] sm:$0xf]
        %v10992 = vld [vmem:[%s10967 + $0x60] sm:$0xf]
        %v10993 = vld [vmem:[%s10967 + $0x64] sm:$0xf]
        %v10994 = vld [vmem:[%s10967 + $0x68] sm:$0xf]
        %v10995 = vld [vmem:[%s10967 + $0x6c] sm:$0xf]
        %v10996 = vld [vmem:[%s10967 + $0x70] sm:$0xf]
        %v10997 = vld [vmem:[%s10967 + $0x74] sm:$0xf]
        %v10998 = vld [vmem:[%s10967 + $0x78] sm:$0xf]
        %v10999 = vld [vmem:[%s10967 + $0x7c] sm:$0xf]
        %v11000 = vld [vmem:[%s10967 + $0x80] sm:$0xf]
        %v11001 = vld [vmem:[%s10967 + $0x84] sm:$0xf]
        %v11002 = vld [vmem:[%s10967 + $0x88] sm:$0xf]
        %v11003 = vld [vmem:[%s10967 + $0x8c] sm:$0xf]
        %v11004 = vld [vmem:[%s10967 + $0x90] sm:$0xf]
        %v11005 = vld [vmem:[%s10967 + $0x94] sm:$0xf]
        %v11006 = vld [vmem:[%s10967 + $0x98] sm:$0xf]
        %v11007 = vld [vmem:[%s10967 + $0x9c] sm:$0xf]
        %v11008 = vld [vmem:[%s10967 + $0xa0] sm:$0xf]
        %v11009 = vld [vmem:[%s10967 + $0xa4] sm:$0xf]
        %v11010 = vld [vmem:[%s10967 + $0xa8] sm:$0xf]
        %v11011 = vld [vmem:[%s10967 + $0xac] sm:$0xf]
        %v11012 = vld [vmem:[%s10967 + $0xb0] sm:$0xf]
        %v11013 = vld [vmem:[%s10967 + $0xb4] sm:$0xf]
        %v11014 = vld [vmem:[%s10967 + $0xb8] sm:$0xf]
        %v11015 = vld [vmem:[%s10967 + $0xbc] sm:$0xf]
        %v11016 = vld [vmem:[%s10967 + $0xc0] sm:$0xf]
        %v11017 = vld [vmem:[%s10967 + $0xc4] sm:$0xf]
        %v11018 = vld [vmem:[%s10967 + $0xc8] sm:$0xf]
        %v11019 = vld [vmem:[%s10967 + $0xcc] sm:$0xf]
        %v11020 = vld [vmem:[%s10967 + $0xd0] sm:$0xf]
        %v11021 = vld [vmem:[%s10967 + $0xd4] sm:$0xf]
        %v11022 = vld [vmem:[%s10967 + $0xd8] sm:$0xf]
        %v11023 = vld [vmem:[%s10967 + $0xdc] sm:$0xf]
        %v11024 = vld [vmem:[%s10967 + $0xe0] sm:$0xf]
        %v11025 = vld [vmem:[%s10967 + $0xe4] sm:$0xf]
        %v11026 = vld [vmem:[%s10967 + $0xe8] sm:$0xf]
        %v11027 = vld [vmem:[%s10967 + $0xec] sm:$0xf]
        %v11028 = vld [vmem:[%s10967 + $0xf0] sm:$0xf]
        %v11029 = vld [vmem:[%s10967 + $0xf4] sm:$0xf]
        %v11030 = vld [vmem:[%s10967 + $0xf8] sm:$0xf]
        %v11031 = vld [vmem:[%s10967 + $0xfc] sm:$0xf]
        %v11032 = vld [vmem:[%s10967 + $0x100] sm:$0xf]
        %v11033 = vld [vmem:[%s10967 + $0x104] sm:$0xf]
        %v11034 = vld [vmem:[%s10967 + $0x108] sm:$0xf]
        %v11035 = vld [vmem:[%s10967 + $0x10c] sm:$0xf]
        %v11036 = vld [vmem:[%s10967 + $0x110] sm:$0xf]
        %v11037 = vld [vmem:[%s10967 + $0x114] sm:$0xf]
        %v11038 = vld [vmem:[%s10967 + $0x118] sm:$0xf]
        %v11039 = vld [vmem:[%s10967 + $0x11c] sm:$0xf]
        %v11112 = vunpack.c.l.b16 %v10968
        %v11113 = vunpack.c.l.b16 %v10969
        %v11114 = vunpack.c.l.b16 %v10970
        %v11115 = vunpack.c.l.b16 %v10971
        %v11116 = vunpack.c.l.b16 %v10972
        %v11117 = vunpack.c.l.b16 %v10973
        %v11118 = vunpack.c.l.b16 %v10974
        %v11119 = vunpack.c.l.b16 %v10975
        %v11120 = vunpack.c.l.b16 %v10976
        %v11121 = vunpack.c.l.b16 %v10977
        %v11122 = vunpack.c.l.b16 %v10978
        %v11123 = vunpack.c.l.b16 %v10979
        %v11124 = vunpack.c.l.b16 %v10980
        %v11125 = vunpack.c.l.b16 %v10981
        %v11126 = vunpack.c.l.b16 %v10982
        %v11127 = vunpack.c.l.b16 %v10983
        %v11128 = vunpack.c.l.b16 %v10984
        %v11129 = vunpack.c.l.b16 %v10985
        %v11130 = vunpack.c.l.b16 %v10986
        %v11131 = vunpack.c.l.b16 %v10987
        %v11132 = vunpack.c.l.b16 %v10988
        %v11133 = vunpack.c.l.b16 %v10989
        %v11134 = vunpack.c.l.b16 %v10990
        %v11135 = vunpack.c.l.b16 %v10991
        %v11136 = vunpack.c.l.b16 %v10992
        %v11137 = vunpack.c.l.b16 %v10993
        %v11138 = vunpack.c.l.b16 %v10994
        %v11139 = vunpack.c.l.b16 %v10995
        %v11140 = vunpack.c.l.b16 %v10996
        %v11141 = vunpack.c.l.b16 %v10997
        %v11142 = vunpack.c.l.b16 %v10998
        %v11143 = vunpack.c.l.b16 %v10999
        %v11144 = vunpack.c.l.b16 %v11000
        %v11145 = vunpack.c.l.b16 %v11001
        %v11146 = vunpack.c.l.b16 %v11002
        %v11147 = vunpack.c.l.b16 %v11003
        %v11148 = vunpack.c.l.b16 %v11004
        %v11149 = vunpack.c.l.b16 %v11005
        %v11150 = vunpack.c.l.b16 %v11006
        %v11151 = vunpack.c.l.b16 %v11007
        %v11152 = vunpack.c.l.b16 %v11008
        %v11153 = vunpack.c.l.b16 %v11009
        %v11154 = vunpack.c.l.b16 %v11010
        %v11155 = vunpack.c.l.b16 %v11011
        %v11156 = vunpack.c.l.b16 %v11012
        %v11157 = vunpack.c.l.b16 %v11013
        %v11158 = vunpack.c.l.b16 %v11014
        %v11159 = vunpack.c.l.b16 %v11015
        %v11160 = vunpack.c.l.b16 %v11016
        %v11161 = vunpack.c.l.b16 %v11017
        %v11162 = vunpack.c.l.b16 %v11018
        %v11163 = vunpack.c.l.b16 %v11019
        %v11164 = vunpack.c.l.b16 %v11020
        %v11165 = vunpack.c.l.b16 %v11021
        %v11166 = vunpack.c.l.b16 %v11022
        %v11167 = vunpack.c.l.b16 %v11023
        %v11168 = vunpack.c.l.b16 %v11024
        %v11169 = vunpack.c.l.b16 %v11025
        %v11170 = vunpack.c.l.b16 %v11026
        %v11171 = vunpack.c.l.b16 %v11027
        %v11172 = vunpack.c.l.b16 %v11028
        %v11173 = vunpack.c.l.b16 %v11029
        %v11174 = vunpack.c.l.b16 %v11030
        %v11175 = vunpack.c.l.b16 %v11031
        %v11176 = vunpack.c.l.b16 %v11032
        %v11177 = vunpack.c.l.b16 %v11033
        %v11178 = vunpack.c.l.b16 %v11034
        %v11179 = vunpack.c.l.b16 %v11035
        %v11180 = vunpack.c.l.b16 %v11036
        %v11181 = vunpack.c.l.b16 %v11037
        %v11182 = vunpack.c.l.b16 %v11038
        %v11183 = vunpack.c.l.b16 %v11039
        %v11184 = vpack.c.b16 %v11113, %v11112
        %v11185 = vpack.c.b16 %v11115, %v11114
        %v11186 = vpack.c.b16 %v11117, %v11116
        %v11187 = vpack.c.b16 %v11119, %v11118
        %v11188 = vpack.c.b16 %v11121, %v11120
        %v11189 = vpack.c.b16 %v11123, %v11122
        %v11190 = vpack.c.b16 %v11125, %v11124
        %v11191 = vpack.c.b16 %v11127, %v11126
        %v11192 = vpack.c.b16 %v11129, %v11128
        %v11193 = vpack.c.b16 %v11131, %v11130
        %v11194 = vpack.c.b16 %v11133, %v11132
        %v11195 = vpack.c.b16 %v11135, %v11134
        %v11196 = vpack.c.b16 %v11137, %v11136
        %v11197 = vpack.c.b16 %v11139, %v11138
        %v11198 = vpack.c.b16 %v11141, %v11140
        %v11199 = vpack.c.b16 %v11143, %v11142
        %v11200 = vpack.c.b16 %v11145, %v11144
        %v11201 = vpack.c.b16 %v11147, %v11146
        %v11202 = vpack.c.b16 %v11149, %v11148
        %v11203 = vpack.c.b16 %v11151, %v11150
        %v11204 = vpack.c.b16 %v11153, %v11152
        %v11205 = vpack.c.b16 %v11155, %v11154
        %v11206 = vpack.c.b16 %v11157, %v11156
        %v11207 = vpack.c.b16 %v11159, %v11158
        %v11208 = vpack.c.b16 %v11161, %v11160
        %v11209 = vpack.c.b16 %v11163, %v11162
        %v11210 = vpack.c.b16 %v11165, %v11164
        %v11211 = vpack.c.b16 %v11167, %v11166
        %v11212 = vpack.c.b16 %v11169, %v11168
        %v11213 = vpack.c.b16 %v11171, %v11170
        %v11214 = vpack.c.b16 %v11173, %v11172
        %v11215 = vpack.c.b16 %v11175, %v11174
        %v11216 = vpack.c.b16 %v11177, %v11176
        %v11217 = vpack.c.b16 %v11179, %v11178
        %v11218 = vpack.c.b16 %v11181, %v11180
        %v11219 = vpack.c.b16 %v11183, %v11182
        %v11257 = vsel %vm7985, %v10966, 0
        %11259 = vmatprep.subr.bf16.mxu0 0
        %11260 = vmatpush1.bf16.msra.mxu0 %v11184
        %11261 = vmatprep.subr.bf16.mxu0 0
        %11262 = vmatpush1.bf16.msra.mxu0 %v11185
        %11263 = vmatprep.subr.bf16.mxu0 0
        %11264 = vmatpush1.bf16.msra.mxu0 %v11186
        %11265 = vmatprep.subr.bf16.mxu0 0
        %11266 = vmatpush1.bf16.msra.mxu0 %v11187
        %11267 = vmatprep.subr.bf16.mxu0 0
        %11268 = vmatpush1.bf16.msra.mxu0 %v11188
        %11269 = vmatprep.subr.bf16.mxu0 0
        %11270 = vmatpush1.bf16.msra.mxu0 %v11189
        %11271 = vmatprep.subr.bf16.mxu0 0
        %11272 = vmatpush1.bf16.msra.mxu0 %v11190
        %11273 = vmatprep.subr.bf16.mxu0 0
        %11274 = vmatpush1.bf16.msra.mxu0 %v11191
        %11275 = vmatprep.subr.bf16.mxu0 0
        %11276 = vmatpush1.bf16.msra.mxu0 %v11192
        %11277 = vmatprep.subr.bf16.mxu0 0
        %11278 = vmatpush1.bf16.msra.mxu0 %v11193
        %11279 = vmatprep.subr.bf16.mxu0 0
        %11280 = vmatpush1.bf16.msra.mxu0 %v11194
        %11281 = vmatprep.subr.bf16.mxu0 0
        %11282 = vmatpush1.bf16.msra.mxu0 %v11195
        %11283 = vmatprep.subr.bf16.mxu0 0
        %11284 = vmatpush1.bf16.msra.mxu0 %v11196
        %11285 = vmatprep.subr.bf16.mxu0 0
        %11286 = vmatpush1.bf16.msra.mxu0 %v11197
        %11287 = vmatprep.subr.bf16.mxu0 0
        %11288 = vmatpush1.bf16.msra.mxu0 %v11198
        %11289 = vmatprep.subr.bf16.mxu0 0
        %11290 = vmatpush1.bf16.msra.mxu0 %v11199
        %11291 = vmatprep.mubr.bf16.mxu0 %v10963
        %11292 = vmatmul.mubr.bf16.gmra.mrb[0].mxu0 %v10962
        %v11293 = vpop.f32.mrb[0].mxu0
        %v11294 = vadd.f32 0.0, %v11293
        %v11295 = vpop.f32.mrb[0].mxu0
        %v11296 = vpop.f32.mrb[0].mxu0
        %v11297 = vpop.f32.mrb[0].mxu0
        %11298 = vdwg.mxu0
        %11299 = vmatprep.subr.bf16.mxu0 0
        %11300 = vmatpush1.bf16.msra.mxu0 %v11200
        %11301 = vmatprep.subr.bf16.mxu0 0
        %11302 = vmatpush1.bf16.msra.mxu0 %v11201
        %11303 = vmatprep.subr.bf16.mxu0 0
        %11304 = vmatpush1.bf16.msra.mxu0 %v11202
        %11305 = vmatprep.subr.bf16.mxu0 0
        %11306 = vmatpush1.bf16.msra.mxu0 %v11203
        %11307 = vmatprep.subr.bf16.mxu0 0
        %11308 = vmatpush1.bf16.msra.mxu0 %v11204
        %11309 = vmatprep.subr.bf16.mxu0 0
        %11310 = vmatpush1.bf16.msra.mxu0 %v11205
        %11311 = vmatprep.subr.bf16.mxu0 0
        %11312 = vmatpush1.bf16.msra.mxu0 %v11206
        %11313 = vmatprep.subr.bf16.mxu0 0
        %11314 = vmatpush1.bf16.msra.mxu0 %v11207
        %11315 = vmatprep.subr.bf16.mxu0 0
        %11316 = vmatpush1.bf16.msra.mxu0 %v11208
        %11317 = vmatprep.subr.bf16.mxu0 0
        %11318 = vmatpush1.bf16.msra.mxu0 %v11209
        %11319 = vmatprep.subr.bf16.mxu0 0
        %11320 = vmatpush1.bf16.msra.mxu0 %v11210
        %11321 = vmatprep.subr.bf16.mxu0 0
        %11322 = vmatpush1.bf16.msra.mxu0 %v11211
        %11323 = vmatprep.subr.bf16.mxu0 0
        %11324 = vmatpush1.bf16.msra.mxu0 %v11212
        %11325 = vmatprep.subr.bf16.mxu0 0
        %11326 = vmatpush1.bf16.msra.mxu0 %v11213
        %11327 = vmatprep.subr.bf16.mxu0 0
        %11328 = vmatpush1.bf16.msra.mxu0 %v11214
        %11329 = vmatprep.subr.bf16.mxu0 0
        %11330 = vmatpush1.bf16.msra.mxu0 %v11215
        %11331 = vmatprep.mubr.bf16.mxu0 %v10965
        %11332 = vmatmul.mubr.bf16.gmra.mrb[0].mxu0 %v10964
        %v11333 = vpop.f32.mrb[0].mxu0
        %v11334 = vadd.f32 %v11294, %v11333
        %v11335 = vpop.f32.mrb[0].mxu0
        %v11336 = vpop.f32.mrb[0].mxu0
        %v11337 = vpop.f32.mrb[0].mxu0
        %11338 = vdwg.mxu0
        %11339 = vmatprep.subr.bf16.mxu0 0
        %11340 = vmatpush1.bf16.msra.mxu0 %v11216
        %11341 = vmatprep.subr.bf16.mxu0 0
        %11342 = vmatpush1.bf16.msra.mxu0 %v11217
        %11343 = vmatprep.subr.bf16.mxu0 0
        %11344 = vmatpush1.bf16.msra.mxu0 %v11218
        %11345 = vmatprep.subr.bf16.mxu0 0
        %11346 = vmatpush1.bf16.msra.mxu0 %v11219
        %11347 = vmatprep.subr.bf16.mxu0 0
        %11348 = vmatpush1.bf16.msra.mxu0 0
        %11349 = vmatprep.subr.bf16.mxu0 0
        %11350 = vmatpush1.bf16.msra.mxu0 0
        %11351 = vmatprep.subr.bf16.mxu0 0
        %11352 = vmatpush1.bf16.msra.mxu0 0
        %11353 = vmatprep.subr.bf16.mxu0 0
        %11354 = vmatpush1.bf16.msra.mxu0 0
        %11355 = vmatprep.subr.bf16.mxu0 0
        %11356 = vmatpush1.bf16.msra.mxu0 0
        %11357 = vmatprep.subr.bf16.mxu0 0
        %11358 = vmatpush1.bf16.msra.mxu0 0
        %11359 = vmatprep.subr.bf16.mxu0 0
        %11360 = vmatpush1.bf16.msra.mxu0 0
        %11361 = vmatprep.subr.bf16.mxu0 0
        %11362 = vmatpush1.bf16.msra.mxu0 0
        %11363 = vmatprep.subr.bf16.mxu0 0
        %11364 = vmatpush1.bf16.msra.mxu0 0
        %11365 = vmatprep.subr.bf16.mxu0 0
        %11366 = vmatpush1.bf16.msra.mxu0 0
        %11367 = vmatprep.subr.bf16.mxu0 0
        %11368 = vmatpush1.bf16.msra.mxu0 0
        %11369 = vmatprep.subr.bf16.mxu0 0
        %11370 = vmatpush1.bf16.msra.mxu0 0
        %11371 = vmatprep.mubr.bf16.mxu0 0
        %11372 = vmatmul.mubr.bf16.gmra.mrb[0].mxu0 %v11257
        %v11373 = vpop.f32.mrb[0].mxu0
        %v11374 = vadd.f32 %v11334, %v11373
        %v11375 = vpop.f32.mrb[0].mxu0
        %v11376 = vpop.f32.mrb[0].mxu0
        %v11377 = vpop.f32.mrb[0].mxu0
        %11378 = vdwg.mxu0
        %v11379 = vadd.f32 %v10834, %v11374
        %s11380 = scalar_lea.vmem %s10, 7
        %v11381 = vld [vmem:[%s11380] sm:$0x1]
        %v11383 = vsel %vm7547, %v11381, 0
        %11385 = vmatprep.subr.bf16.mxu0 %v7559
        %11386 = vmatpush1.bf16.msra.mxu0 %v7556
        %11387 = vmatprep.subr.bf16.mxu0 0
        %11388 = vmatpush1.bf16.msra.mxu0 0
        %11389 = vmatprep.subr.bf16.mxu0 0
        %11390 = vmatpush1.bf16.msra.mxu0 0
        %11391 = vmatprep.subr.bf16.mxu0 0
        %11392 = vmatpush1.bf16.msra.mxu0 0
        %11393 = vmatprep.subr.bf16.mxu0 0
        %11394 = vmatpush1.bf16.msra.mxu0 0
        %11395 = vmatprep.subr.bf16.mxu0 0
        %11396 = vmatpush1.bf16.msra.mxu0 0
        %11397 = vmatprep.subr.bf16.mxu0 0
        %11398 = vmatpush1.bf16.msra.mxu0 0
        %11399 = vmatprep.subr.bf16.mxu0 0
        %11400 = vmatpush1.bf16.msra.mxu0 0
        %11401 = vmatprep.subr.bf16.mxu0 0
        %11402 = vmatpush1.bf16.msra.mxu0 0
        %11403 = vmatprep.subr.bf16.mxu0 0
        %11404 = vmatpush1.bf16.msra.mxu0 0
        %11405 = vmatprep.subr.bf16.mxu0 0
        %11406 = vmatpush1.bf16.msra.mxu0 0
        %11407 = vmatprep.subr.bf16.mxu0 0
        %11408 = vmatpush1.bf16.msra.mxu0 0
        %11409 = vmatprep.subr.bf16.mxu0 0
        %11410 = vmatpush1.bf16.msra.mxu0 0
        %11411 = vmatprep.subr.bf16.mxu0 0
        %11412 = vmatpush1.bf16.msra.mxu0 0
        %11413 = vmatprep.subr.bf16.mxu0 0
        %11414 = vmatpush1.bf16.msra.mxu0 0
        %11415 = vmatprep.subr.bf16.mxu0 0
        %11416 = vmatpush1.bf16.msra.mxu0 0
        %11417 = vmatprep.mubr.bf16.mxu0 0
        %11418 = vmatmul.mubr.bf16.gmra.mrb[0].mxu0 %v11383
        %v11419 = vpop.f32.mrb[0].mxu0
        %v11420 = vadd.f32 0.0, %v11419
        %v11421 = vpop.f32.mrb[0].mxu0
        %v11422 = vadd.f32 0.0, %v11421
        %v11423 = vpop.f32.mrb[0].mxu0
        %v11424 = vpop.f32.mrb[0].mxu0
        %11425 = vdwg.mxu0
        %11426 = vmatprep.subr.bf16.mxu0 %v7565
        %11427 = vmatpush1.bf16.msra.mxu0 %v7562
        %11428 = vmatprep.subr.bf16.mxu0 0
        %11429 = vmatpush1.bf16.msra.mxu0 0
        %11430 = vmatprep.subr.bf16.mxu0 0
        %11431 = vmatpush1.bf16.msra.mxu0 0
        %11432 = vmatprep.subr.bf16.mxu0 0
        %11433 = vmatpush1.bf16.msra.mxu0 0
        %11434 = vmatprep.subr.bf16.mxu0 0
        %11435 = vmatpush1.bf16.msra.mxu0 0
        %11436 = vmatprep.subr.bf16.mxu0 0
        %11437 = vmatpush1.bf16.msra.mxu0 0
        %11438 = vmatprep.subr.bf16.mxu0 0
        %11439 = vmatpush1.bf16.msra.mxu0 0
        %11440 = vmatprep.subr.bf16.mxu0 0
        %11441 = vmatpush1.bf16.msra.mxu0 0
        %11442 = vmatprep.subr.bf16.mxu0 0
        %11443 = vmatpush1.bf16.msra.mxu0 0
        %11444 = vmatprep.subr.bf16.mxu0 0
        %11445 = vmatpush1.bf16.msra.mxu0 0
        %11446 = vmatprep.subr.bf16.mxu0 0
        %11447 = vmatpush1.bf16.msra.mxu0 0
        %11448 = vmatprep.subr.bf16.mxu0 0
        %11449 = vmatpush1.bf16.msra.mxu0 0
        %11450 = vmatprep.subr.bf16.mxu0 0
        %11451 = vmatpush1.bf16.msra.mxu0 0
        %11452 = vmatprep.subr.bf16.mxu0 0
        %11453 = vmatpush1.bf16.msra.mxu0 0
        %11454 = vmatprep.subr.bf16.mxu0 0
        %11455 = vmatpush1.bf16.msra.mxu0 0
        %11456 = vmatprep.subr.bf16.mxu0 0
        %11457 = vmatpush1.bf16.msra.mxu0 0
        %11458 = vmatprep.mubr.bf16.mxu0 0
        %11459 = vmatmul.mubr.bf16.gmra.mrb[0].mxu0 %v11383
        %v11460 = vpop.f32.mrb[0].mxu0
        %v11461 = vadd.f32 0.0, %v11460
        %v11462 = vpop.f32.mrb[0].mxu0
        %v11463 = vadd.f32 0.0, %v11462
        %v11464 = vpop.f32.mrb[0].mxu0
        %v11465 = vpop.f32.mrb[0].mxu0
        %11466 = vdwg.mxu0
        %11467 = vmatprep.subr.bf16.mxu0 0
        %11468 = vmatpush1.bf16.msra.mxu0 %v7568
        %11469 = vmatprep.subr.bf16.mxu0 0
        %11470 = vmatpush1.bf16.msra.mxu0 0
        %11471 = vmatprep.subr.bf16.mxu0 0
        %11472 = vmatpush1.bf16.msra.mxu0 0
        %11473 = vmatprep.subr.bf16.mxu0 0
        %11474 = vmatpush1.bf16.msra.mxu0 0
        %11475 = vmatprep.subr.bf16.mxu0 0
        %11476 = vmatpush1.bf16.msra.mxu0 0
        %11477 = vmatprep.subr.bf16.mxu0 0
        %11478 = vmatpush1.bf16.msra.mxu0 0
        %11479 = vmatprep.subr.bf16.mxu0 0
        %11480 = vmatpush1.bf16.msra.mxu0 0
        %11481 = vmatprep.subr.bf16.mxu0 0
        %11482 = vmatpush1.bf16.msra.mxu0 0
        %11483 = vmatprep.subr.bf16.mxu0 0
        %11484 = vmatpush1.bf16.msra.mxu0 0
        %11485 = vmatprep.subr.bf16.mxu0 0
        %11486 = vmatpush1.bf16.msra.mxu0 0
        %11487 = vmatprep.subr.bf16.mxu0 0
        %11488 = vmatpush1.bf16.msra.mxu0 0
        %11489 = vmatprep.subr.bf16.mxu0 0
        %11490 = vmatpush1.bf16.msra.mxu0 0
        %11491 = vmatprep.subr.bf16.mxu0 0
        %11492 = vmatpush1.bf16.msra.mxu0 0
        %11493 = vmatprep.subr.bf16.mxu0 0
        %11494 = vmatpush1.bf16.msra.mxu0 0
        %11495 = vmatprep.subr.bf16.mxu0 0
        %11496 = vmatpush1.bf16.msra.mxu0 0
        %11497 = vmatprep.subr.bf16.mxu0 0
        %11498 = vmatpush1.bf16.msra.mxu0 0
        %11499 = vmatprep.mubr.bf16.mxu0 0
        %11500 = vmatmul.mubr.bf16.gmra.mrb[0].mxu0 %v11383
        %v11501 = vpop.f32.mrb[0].mxu0
        %v11502 = vadd.f32 0.0, %v11501
        %v11503 = vpop.f32.mrb[0].mxu0
        %v11504 = vpop.f32.mrb[0].mxu0
        %v11505 = vpop.f32.mrb[0].mxu0
        %11506 = vdwg.mxu0
        %v11507 = vpack.c.bf16 %v11420, %v11420
        %v11508 = vpack.c.bf16 %v11422, %v11422
        %v11509 = vpack.c.bf16 %v11461, %v11461
        %v11510 = vpack.c.bf16 %v11463, %v11463
        %v11511 = vpack.c.bf16 %v11502, %v11502
        %s11512 = scalar_lea.vmem %s11, 2016
        %v11513 = vld [vmem:[%s11512] sm:$0xf]
        %v11514 = vld [vmem:[%s11512 + $0x4] sm:$0xf]
        %v11515 = vld [vmem:[%s11512 + $0x8] sm:$0xf]
        %v11516 = vld [vmem:[%s11512 + $0xc] sm:$0xf]
        %v11517 = vld [vmem:[%s11512 + $0x10] sm:$0xf]
        %v11518 = vld [vmem:[%s11512 + $0x14] sm:$0xf]
        %v11519 = vld [vmem:[%s11512 + $0x18] sm:$0xf]
        %v11520 = vld [vmem:[%s11512 + $0x1c] sm:$0xf]
        %v11521 = vld [vmem:[%s11512 + $0x20] sm:$0xf]
        %v11522 = vld [vmem:[%s11512 + $0x24] sm:$0xf]
        %v11523 = vld [vmem:[%s11512 + $0x28] sm:$0xf]
        %v11524 = vld [vmem:[%s11512 + $0x2c] sm:$0xf]
        %v11525 = vld [vmem:[%s11512 + $0x30] sm:$0xf]
        %v11526 = vld [vmem:[%s11512 + $0x34] sm:$0xf]
        %v11527 = vld [vmem:[%s11512 + $0x38] sm:$0xf]
        %v11528 = vld [vmem:[%s11512 + $0x3c] sm:$0xf]
        %v11529 = vld [vmem:[%s11512 + $0x40] sm:$0xf]
        %v11530 = vld [vmem:[%s11512 + $0x44] sm:$0xf]
        %v11531 = vld [vmem:[%s11512 + $0x48] sm:$0xf]
        %v11532 = vld [vmem:[%s11512 + $0x4c] sm:$0xf]
        %v11533 = vld [vmem:[%s11512 + $0x50] sm:$0xf]
        %v11534 = vld [vmem:[%s11512 + $0x54] sm:$0xf]
        %v11535 = vld [vmem:[%s11512 + $0x58] sm:$0xf]
        %v11536 = vld [vmem:[%s11512 + $0x5c] sm:$0xf]
        %v11537 = vld [vmem:[%s11512 + $0x60] sm:$0xf]
        %v11538 = vld [vmem:[%s11512 + $0x64] sm:$0xf]
        %v11539 = vld [vmem:[%s11512 + $0x68] sm:$0xf]
        %v11540 = vld [vmem:[%s11512 + $0x6c] sm:$0xf]
        %v11541 = vld [vmem:[%s11512 + $0x70] sm:$0xf]
        %v11542 = vld [vmem:[%s11512 + $0x74] sm:$0xf]
        %v11543 = vld [vmem:[%s11512 + $0x78] sm:$0xf]
        %v11544 = vld [vmem:[%s11512 + $0x7c] sm:$0xf]
        %v11545 = vld [vmem:[%s11512 + $0x80] sm:$0xf]
        %v11546 = vld [vmem:[%s11512 + $0x84] sm:$0xf]
        %v11547 = vld [vmem:[%s11512 + $0x88] sm:$0xf]
        %v11548 = vld [vmem:[%s11512 + $0x8c] sm:$0xf]
        %v11549 = vld [vmem:[%s11512 + $0x90] sm:$0xf]
        %v11550 = vld [vmem:[%s11512 + $0x94] sm:$0xf]
        %v11551 = vld [vmem:[%s11512 + $0x98] sm:$0xf]
        %v11552 = vld [vmem:[%s11512 + $0x9c] sm:$0xf]
        %v11553 = vld [vmem:[%s11512 + $0xa0] sm:$0xf]
        %v11554 = vld [vmem:[%s11512 + $0xa4] sm:$0xf]
        %v11555 = vld [vmem:[%s11512 + $0xa8] sm:$0xf]
        %v11556 = vld [vmem:[%s11512 + $0xac] sm:$0xf]
        %v11557 = vld [vmem:[%s11512 + $0xb0] sm:$0xf]
        %v11558 = vld [vmem:[%s11512 + $0xb4] sm:$0xf]
        %v11559 = vld [vmem:[%s11512 + $0xb8] sm:$0xf]
        %v11560 = vld [vmem:[%s11512 + $0xbc] sm:$0xf]
        %v11561 = vld [vmem:[%s11512 + $0xc0] sm:$0xf]
        %v11562 = vld [vmem:[%s11512 + $0xc4] sm:$0xf]
        %v11563 = vld [vmem:[%s11512 + $0xc8] sm:$0xf]
        %v11564 = vld [vmem:[%s11512 + $0xcc] sm:$0xf]
        %v11565 = vld [vmem:[%s11512 + $0xd0] sm:$0xf]
        %v11566 = vld [vmem:[%s11512 + $0xd4] sm:$0xf]
        %v11567 = vld [vmem:[%s11512 + $0xd8] sm:$0xf]
        %v11568 = vld [vmem:[%s11512 + $0xdc] sm:$0xf]
        %v11569 = vld [vmem:[%s11512 + $0xe0] sm:$0xf]
        %v11570 = vld [vmem:[%s11512 + $0xe4] sm:$0xf]
        %v11571 = vld [vmem:[%s11512 + $0xe8] sm:$0xf]
        %v11572 = vld [vmem:[%s11512 + $0xec] sm:$0xf]
        %v11573 = vld [vmem:[%s11512 + $0xf0] sm:$0xf]
        %v11574 = vld [vmem:[%s11512 + $0xf4] sm:$0xf]
        %v11575 = vld [vmem:[%s11512 + $0xf8] sm:$0xf]
        %v11576 = vld [vmem:[%s11512 + $0xfc] sm:$0xf]
        %v11577 = vld [vmem:[%s11512 + $0x100] sm:$0xf]
        %v11578 = vld [vmem:[%s11512 + $0x104] sm:$0xf]
        %v11579 = vld [vmem:[%s11512 + $0x108] sm:$0xf]
        %v11580 = vld [vmem:[%s11512 + $0x10c] sm:$0xf]
        %v11581 = vld [vmem:[%s11512 + $0x110] sm:$0xf]
        %v11582 = vld [vmem:[%s11512 + $0x114] sm:$0xf]
        %v11583 = vld [vmem:[%s11512 + $0x118] sm:$0xf]
        %v11584 = vld [vmem:[%s11512 + $0x11c] sm:$0xf]
        %v11657 = vunpack.c.l.b16 %v11513
        %v11658 = vunpack.c.l.b16 %v11514
        %v11659 = vunpack.c.l.b16 %v11515
        %v11660 = vunpack.c.l.b16 %v11516
        %v11661 = vunpack.c.l.b16 %v11517
        %v11662 = vunpack.c.l.b16 %v11518
        %v11663 = vunpack.c.l.b16 %v11519
        %v11664 = vunpack.c.l.b16 %v11520
        %v11665 = vunpack.c.l.b16 %v11521
        %v11666 = vunpack.c.l.b16 %v11522
        %v11667 = vunpack.c.l.b16 %v11523
        %v11668 = vunpack.c.l.b16 %v11524
        %v11669 = vunpack.c.l.b16 %v11525
        %v11670 = vunpack.c.l.b16 %v11526
        %v11671 = vunpack.c.l.b16 %v11527
        %v11672 = vunpack.c.l.b16 %v11528
        %v11673 = vunpack.c.l.b16 %v11529
        %v11674 = vunpack.c.l.b16 %v11530
        %v11675 = vunpack.c.l.b16 %v11531
        %v11676 = vunpack.c.l.b16 %v11532
        %v11677 = vunpack.c.l.b16 %v11533
        %v11678 = vunpack.c.l.b16 %v11534
        %v11679 = vunpack.c.l.b16 %v11535
        %v11680 = vunpack.c.l.b16 %v11536
        %v11681 = vunpack.c.l.b16 %v11537
        %v11682 = vunpack.c.l.b16 %v11538
        %v11683 = vunpack.c.l.b16 %v11539
        %v11684 = vunpack.c.l.b16 %v11540
        %v11685 = vunpack.c.l.b16 %v11541
        %v11686 = vunpack.c.l.b16 %v11542
        %v11687 = vunpack.c.l.b16 %v11543
        %v11688 = vunpack.c.l.b16 %v11544
        %v11689 = vunpack.c.l.b16 %v11545
        %v11690 = vunpack.c.l.b16 %v11546
        %v11691 = vunpack.c.l.b16 %v11547
        %v11692 = vunpack.c.l.b16 %v11548
        %v11693 = vunpack.c.l.b16 %v11549
        %v11694 = vunpack.c.l.b16 %v11550
        %v11695 = vunpack.c.l.b16 %v11551
        %v11696 = vunpack.c.l.b16 %v11552
        %v11697 = vunpack.c.l.b16 %v11553
        %v11698 = vunpack.c.l.b16 %v11554
        %v11699 = vunpack.c.l.b16 %v11555
        %v11700 = vunpack.c.l.b16 %v11556
        %v11701 = vunpack.c.l.b16 %v11557
        %v11702 = vunpack.c.l.b16 %v11558
        %v11703 = vunpack.c.l.b16 %v11559
        %v11704 = vunpack.c.l.b16 %v11560
        %v11705 = vunpack.c.l.b16 %v11561
        %v11706 = vunpack.c.l.b16 %v11562
        %v11707 = vunpack.c.l.b16 %v11563
        %v11708 = vunpack.c.l.b16 %v11564
        %v11709 = vunpack.c.l.b16 %v11565
        %v11710 = vunpack.c.l.b16 %v11566
        %v11711 = vunpack.c.l.b16 %v11567
        %v11712 = vunpack.c.l.b16 %v11568
        %v11713 = vunpack.c.l.b16 %v11569
        %v11714 = vunpack.c.l.b16 %v11570
        %v11715 = vunpack.c.l.b16 %v11571
        %v11716 = vunpack.c.l.b16 %v11572
        %v11717 = vunpack.c.l.b16 %v11573
        %v11718 = vunpack.c.l.b16 %v11574
        %v11719 = vunpack.c.l.b16 %v11575
        %v11720 = vunpack.c.l.b16 %v11576
        %v11721 = vunpack.c.l.b16 %v11577
        %v11722 = vunpack.c.l.b16 %v11578
        %v11723 = vunpack.c.l.b16 %v11579
        %v11724 = vunpack.c.l.b16 %v11580
        %v11725 = vunpack.c.l.b16 %v11581
        %v11726 = vunpack.c.l.b16 %v11582
        %v11727 = vunpack.c.l.b16 %v11583
        %v11728 = vunpack.c.l.b16 %v11584
        %v11729 = vpack.c.b16 %v11658, %v11657
        %v11730 = vpack.c.b16 %v11660, %v11659
        %v11731 = vpack.c.b16 %v11662, %v11661
        %v11732 = vpack.c.b16 %v11664, %v11663
        %v11733 = vpack.c.b16 %v11666, %v11665
        %v11734 = vpack.c.b16 %v11668, %v11667
        %v11735 = vpack.c.b16 %v11670, %v11669
        %v11736 = vpack.c.b16 %v11672, %v11671
        %v11737 = vpack.c.b16 %v11674, %v11673
        %v11738 = vpack.c.b16 %v11676, %v11675
        %v11739 = vpack.c.b16 %v11678, %v11677
        %v11740 = vpack.c.b16 %v11680, %v11679
        %v11741 = vpack.c.b16 %v11682, %v11681
        %v11742 = vpack.c.b16 %v11684, %v11683
        %v11743 = vpack.c.b16 %v11686, %v11685
        %v11744 = vpack.c.b16 %v11688, %v11687
        %v11745 = vpack.c.b16 %v11690, %v11689
        %v11746 = vpack.c.b16 %v11692, %v11691
        %v11747 = vpack.c.b16 %v11694, %v11693
        %v11748 = vpack.c.b16 %v11696, %v11695
        %v11749 = vpack.c.b16 %v11698, %v11697
        %v11750 = vpack.c.b16 %v11700, %v11699
        %v11751 = vpack.c.b16 %v11702, %v11701
        %v11752 = vpack.c.b16 %v11704, %v11703
        %v11753 = vpack.c.b16 %v11706, %v11705
        %v11754 = vpack.c.b16 %v11708, %v11707
        %v11755 = vpack.c.b16 %v11710, %v11709
        %v11756 = vpack.c.b16 %v11712, %v11711
        %v11757 = vpack.c.b16 %v11714, %v11713
        %v11758 = vpack.c.b16 %v11716, %v11715
        %v11759 = vpack.c.b16 %v11718, %v11717
        %v11760 = vpack.c.b16 %v11720, %v11719
        %v11761 = vpack.c.b16 %v11722, %v11721
        %v11762 = vpack.c.b16 %v11724, %v11723
        %v11763 = vpack.c.b16 %v11726, %v11725
        %v11764 = vpack.c.b16 %v11728, %v11727
        %v11802 = vsel %vm7985, %v11511, 0
        %11804 = vmatprep.subr.bf16.mxu0 0
        %11805 = vmatpush1.bf16.msra.mxu0 %v11729
        %11806 = vmatprep.subr.bf16.mxu0 0
        %11807 = vmatpush1.bf16.msra.mxu0 %v11730
        %11808 = vmatprep.subr.bf16.mxu0 0
        %11809 = vmatpush1.bf16.msra.mxu0 %v11731
        %11810 = vmatprep.subr.bf16.mxu0 0
        %11811 = vmatpush1.bf16.msra.mxu0 %v11732
        %11812 = vmatprep.subr.bf16.mxu0 0
        %11813 = vmatpush1.bf16.msra.mxu0 %v11733
        %11814 = vmatprep.subr.bf16.mxu0 0
        %11815 = vmatpush1.bf16.msra.mxu0 %v11734
        %11816 = vmatprep.subr.bf16.mxu0 0
        %11817 = vmatpush1.bf16.msra.mxu0 %v11735
        %11818 = vmatprep.subr.bf16.mxu0 0
        %11819 = vmatpush1.bf16.msra.mxu0 %v11736
        %11820 = vmatprep.subr.bf16.mxu0 0
        %11821 = vmatpush1.bf16.msra.mxu0 %v11737
        %11822 = vmatprep.subr.bf16.mxu0 0
        %11823 = vmatpush1.bf16.msra.mxu0 %v11738
        %11824 = vmatprep.subr.bf16.mxu0 0
        %11825 = vmatpush1.bf16.msra.mxu0 %v11739
        %11826 = vmatprep.subr.bf16.mxu0 0
        %11827 = vmatpush1.bf16.msra.mxu0 %v11740
        %11828 = vmatprep.subr.bf16.mxu0 0
        %11829 = vmatpush1.bf16.msra.mxu0 %v11741
        %11830 = vmatprep.subr.bf16.mxu0 0
        %11831 = vmatpush1.bf16.msra.mxu0 %v11742
        %11832 = vmatprep.subr.bf16.mxu0 0
        %11833 = vmatpush1.bf16.msra.mxu0 %v11743
        %11834 = vmatprep.subr.bf16.mxu0 0
        %11835 = vmatpush1.bf16.msra.mxu0 %v11744
        %11836 = vmatprep.mubr.bf16.mxu0 %v11508
        %11837 = vmatmul.mubr.bf16.gmra.mrb[0].mxu0 %v11507
        %v11838 = vpop.f32.mrb[0].mxu0
        %v11839 = vadd.f32 0.0, %v11838
        %v11840 = vpop.f32.mrb[0].mxu0
        %v11841 = vpop.f32.mrb[0].mxu0
        %v11842 = vpop.f32.mrb[0].mxu0
        %11843 = vdwg.mxu0
        %11844 = vmatprep.subr.bf16.mxu0 0
        %11845 = vmatpush1.bf16.msra.mxu0 %v11745
        %11846 = vmatprep.subr.bf16.mxu0 0
        %11847 = vmatpush1.bf16.msra.mxu0 %v11746
        %11848 = vmatprep.subr.bf16.mxu0 0
        %11849 = vmatpush1.bf16.msra.mxu0 %v11747
        %11850 = vmatprep.subr.bf16.mxu0 0
        %11851 = vmatpush1.bf16.msra.mxu0 %v11748
        %11852 = vmatprep.subr.bf16.mxu0 0
        %11853 = vmatpush1.bf16.msra.mxu0 %v11749
        %11854 = vmatprep.subr.bf16.mxu0 0
        %11855 = vmatpush1.bf16.msra.mxu0 %v11750
        %11856 = vmatprep.subr.bf16.mxu0 0
        %11857 = vmatpush1.bf16.msra.mxu0 %v11751
        %11858 = vmatprep.subr.bf16.mxu0 0
        %11859 = vmatpush1.bf16.msra.mxu0 %v11752
        %11860 = vmatprep.subr.bf16.mxu0 0
        %11861 = vmatpush1.bf16.msra.mxu0 %v11753
        %11862 = vmatprep.subr.bf16.mxu0 0
        %11863 = vmatpush1.bf16.msra.mxu0 %v11754
        %11864 = vmatprep.subr.bf16.mxu0 0
        %11865 = vmatpush1.bf16.msra.mxu0 %v11755
        %11866 = vmatprep.subr.bf16.mxu0 0
        %11867 = vmatpush1.bf16.msra.mxu0 %v11756
        %11868 = vmatprep.subr.bf16.mxu0 0
        %11869 = vmatpush1.bf16.msra.mxu0 %v11757
        %11870 = vmatprep.subr.bf16.mxu0 0
        %11871 = vmatpush1.bf16.msra.mxu0 %v11758
        %11872 = vmatprep.subr.bf16.mxu0 0
        %11873 = vmatpush1.bf16.msra.mxu0 %v11759
        %11874 = vmatprep.subr.bf16.mxu0 0
        %11875 = vmatpush1.bf16.msra.mxu0 %v11760
        %11876 = vmatprep.mubr.bf16.mxu0 %v11510
        %11877 = vmatmul.mubr.bf16.gmra.mrb[0].mxu0 %v11509
        %v11878 = vpop.f32.mrb[0].mxu0
        %v11879 = vadd.f32 %v11839, %v11878
        %v11880 = vpop.f32.mrb[0].mxu0
        %v11881 = vpop.f32.mrb[0].mxu0
        %v11882 = vpop.f32.mrb[0].mxu0
        %11883 = vdwg.mxu0
        %11884 = vmatprep.subr.bf16.mxu0 0
        %11885 = vmatpush1.bf16.msra.mxu0 %v11761
        %11886 = vmatprep.subr.bf16.mxu0 0
        %11887 = vmatpush1.bf16.msra.mxu0 %v11762
        %11888 = vmatprep.subr.bf16.mxu0 0
        %11889 = vmatpush1.bf16.msra.mxu0 %v11763
        %11890 = vmatprep.subr.bf16.mxu0 0
        %11891 = vmatpush1.bf16.msra.mxu0 %v11764
        %11892 = vmatprep.subr.bf16.mxu0 0
        %11893 = vmatpush1.bf16.msra.mxu0 0
        %11894 = vmatprep.subr.bf16.mxu0 0
        %11895 = vmatpush1.bf16.msra.mxu0 0
        %11896 = vmatprep.subr.bf16.mxu0 0
        %11897 = vmatpush1.bf16.msra.mxu0 0
        %11898 = vmatprep.subr.bf16.mxu0 0
        %11899 = vmatpush1.bf16.msra.mxu0 0
        %11900 = vmatprep.subr.bf16.mxu0 0
        %11901 = vmatpush1.bf16.msra.mxu0 0
        %11902 = vmatprep.subr.bf16.mxu0 0
        %11903 = vmatpush1.bf16.msra.mxu0 0
        %11904 = vmatprep.subr.bf16.mxu0 0
        %11905 = vmatpush1.bf16.msra.mxu0 0
        %11906 = vmatprep.subr.bf16.mxu0 0
        %11907 = vmatpush1.bf16.msra.mxu0 0
        %11908 = vmatprep.subr.bf16.mxu0 0
        %11909 = vmatpush1.bf16.msra.mxu0 0
        %11910 = vmatprep.subr.bf16.mxu0 0
        %11911 = vmatpush1.bf16.msra.mxu0 0
        %11912 = vmatprep.subr.bf16.mxu0 0
        %11913 = vmatpush1.bf16.msra.mxu0 0
        %11914 = vmatprep.subr.bf16.mxu0 0
        %11915 = vmatpush1.bf16.msra.mxu0 0
        %11916 = vmatprep.mubr.bf16.mxu0 0
        %11917 = vmatmul.mubr.bf16.gmra.mrb[0].mxu0 %v11802
        %v11918 = vpop.f32.mrb[0].mxu0
        %v11919 = vadd.f32 %v11879, %v11918
        %v11920 = vpop.f32.mrb[0].mxu0
        %v11921 = vpop.f32.mrb[0].mxu0
        %v11922 = vpop.f32.mrb[0].mxu0
        %11923 = vdwg.mxu0
        %v11924 = vadd.f32 %v11379, %v11919
        %s11925 = scalar_lea.vmem %s10, 8
        %v11926 = vld [vmem:[%s11925] sm:$0x1]
        %v11928 = vsel %vm7547, %v11926, 0
        %11930 = vmatprep.subr.bf16.mxu0 %v7559
        %11931 = vmatpush1.bf16.msra.mxu0 %v7556
        %11932 = vmatprep.subr.bf16.mxu0 0
        %11933 = vmatpush1.bf16.msra.mxu0 0
        %11934 = vmatprep.subr.bf16.mxu0 0
        %11935 = vmatpush1.bf16.msra.mxu0 0
        %11936 = vmatprep.subr.bf16.mxu0 0
        %11937 = vmatpush1.bf16.msra.mxu0 0
        %11938 = vmatprep.subr.bf16.mxu0 0
        %11939 = vmatpush1.bf16.msra.mxu0 0
        %11940 = vmatprep.subr.bf16.mxu0 0
        %11941 = vmatpush1.bf16.msra.mxu0 0
        %11942 = vmatprep.subr.bf16.mxu0 0
        %11943 = vmatpush1.bf16.msra.mxu0 0
        %11944 = vmatprep.subr.bf16.mxu0 0
        %11945 = vmatpush1.bf16.msra.mxu0 0
        %11946 = vmatprep.subr.bf16.mxu0 0
        %11947 = vmatpush1.bf16.msra.mxu0 0
        %11948 = vmatprep.subr.bf16.mxu0 0
        %11949 = vmatpush1.bf16.msra.mxu0 0
        %11950 = vmatprep.subr.bf16.mxu0 0
        %11951 = vmatpush1.bf16.msra.mxu0 0
        %11952 = vmatprep.subr.bf16.mxu0 0
        %11953 = vmatpush1.bf16.msra.mxu0 0
        %11954 = vmatprep.subr.bf16.mxu0 0
        %11955 = vmatpush1.bf16.msra.mxu0 0
        %11956 = vmatprep.subr.bf16.mxu0 0
        %11957 = vmatpush1.bf16.msra.mxu0 0
        %11958 = vmatprep.subr.bf16.mxu0 0
        %11959 = vmatpush1.bf16.msra.mxu0 0
        %11960 = vmatprep.subr.bf16.mxu0 0
        %11961 = vmatpush1.bf16.msra.mxu0 0
        %11962 = vmatprep.mubr.bf16.mxu0 0
        %11963 = vmatmul.mubr.bf16.gmra.mrb[0].mxu0 %v11928
        %v11964 = vpop.f32.mrb[0].mxu0
        %v11965 = vadd.f32 0.0, %v11964
        %v11966 = vpop.f32.mrb[0].mxu0
        %v11967 = vadd.f32 0.0, %v11966
        %v11968 = vpop.f32.mrb[0].mxu0
        %v11969 = vpop.f32.mrb[0].mxu0
        %11970 = vdwg.mxu0
        %11971 = vmatprep.subr.bf16.mxu0 %v7565
        %11972 = vmatpush1.bf16.msra.mxu0 %v7562
        %11973 = vmatprep.subr.bf16.mxu0 0
        %11974 = vmatpush1.bf16.msra.mxu0 0
        %11975 = vmatprep.subr.bf16.mxu0 0
        %11976 = vmatpush1.bf16.msra.mxu0 0
        %11977 = vmatprep.subr.bf16.mxu0 0
        %11978 = vmatpush1.bf16.msra.mxu0 0
        %11979 = vmatprep.subr.bf16.mxu0 0
        %11980 = vmatpush1.bf16.msra.mxu0 0
        %11981 = vmatprep.subr.bf16.mxu0 0
        %11982 = vmatpush1.bf16.msra.mxu0 0
        %11983 = vmatprep.subr.bf16.mxu0 0
        %11984 = vmatpush1.bf16.msra.mxu0 0
        %11985 = vmatprep.subr.bf16.mxu0 0
        %11986 = vmatpush1.bf16.msra.mxu0 0
        %11987 = vmatprep.subr.bf16.mxu0 0
        %11988 = vmatpush1.bf16.msra.mxu0 0
        %11989 = vmatprep.subr.bf16.mxu0 0
        %11990 = vmatpush1.bf16.msra.mxu0 0
        %11991 = vmatprep.subr.bf16.mxu0 0
        %11992 = vmatpush1.bf16.msra.mxu0 0
        %11993 = vmatprep.subr.bf16.mxu0 0
        %11994 = vmatpush1.bf16.msra.mxu0 0
        %11995 = vmatprep.subr.bf16.mxu0 0
        %11996 = vmatpush1.bf16.msra.mxu0 0
        %11997 = vmatprep.subr.bf16.mxu0 0
        %11998 = vmatpush1.bf16.msra.mxu0 0
        %11999 = vmatprep.subr.bf16.mxu0 0
        %12000 = vmatpush1.bf16.msra.mxu0 0
        %12001 = vmatprep.subr.bf16.mxu0 0
        %12002 = vmatpush1.bf16.msra.mxu0 0
        %12003 = vmatprep.mubr.bf16.mxu0 0
        %12004 = vmatmul.mubr.bf16.gmra.mrb[0].mxu0 %v11928
        %v12005 = vpop.f32.mrb[0].mxu0
        %v12006 = vadd.f32 0.0, %v12005
        %v12007 = vpop.f32.mrb[0].mxu0
        %v12008 = vadd.f32 0.0, %v12007
        %v12009 = vpop.f32.mrb[0].mxu0
        %v12010 = vpop.f32.mrb[0].mxu0
        %12011 = vdwg.mxu0
        %12012 = vmatprep.subr.bf16.mxu0 0
        %12013 = vmatpush1.bf16.msra.mxu0 %v7568
        %12014 = vmatprep.subr.bf16.mxu0 0
        %12015 = vmatpush1.bf16.msra.mxu0 0
        %12016 = vmatprep.subr.bf16.mxu0 0
        %12017 = vmatpush1.bf16.msra.mxu0 0
        %12018 = vmatprep.subr.bf16.mxu0 0
        %12019 = vmatpush1.bf16.msra.mxu0 0
        %12020 = vmatprep.subr.bf16.mxu0 0
        %12021 = vmatpush1.bf16.msra.mxu0 0
        %12022 = vmatprep.subr.bf16.mxu0 0
        %12023 = vmatpush1.bf16.msra.mxu0 0
        %12024 = vmatprep.subr.bf16.mxu0 0
        %12025 = vmatpush1.bf16.msra.mxu0 0
        %12026 = vmatprep.subr.bf16.mxu0 0
        %12027 = vmatpush1.bf16.msra.mxu0 0
        %12028 = vmatprep.subr.bf16.mxu0 0
        %12029 = vmatpush1.bf16.msra.mxu0 0
        %12030 = vmatprep.subr.bf16.mxu0 0
        %12031 = vmatpush1.bf16.msra.mxu0 0
        %12032 = vmatprep.subr.bf16.mxu0 0
        %12033 = vmatpush1.bf16.msra.mxu0 0
        %12034 = vmatprep.subr.bf16.mxu0 0
        %12035 = vmatpush1.bf16.msra.mxu0 0
        %12036 = vmatprep.subr.bf16.mxu0 0
        %12037 = vmatpush1.bf16.msra.mxu0 0
        %12038 = vmatprep.subr.bf16.mxu0 0
        %12039 = vmatpush1.bf16.msra.mxu0 0
        %12040 = vmatprep.subr.bf16.mxu0 0
        %12041 = vmatpush1.bf16.msra.mxu0 0
        %12042 = vmatprep.subr.bf16.mxu0 0
        %12043 = vmatpush1.bf16.msra.mxu0 0
        %12044 = vmatprep.mubr.bf16.mxu0 0
        %12045 = vmatmul.mubr.bf16.gmra.mrb[0].mxu0 %v11928
        %v12046 = vpop.f32.mrb[0].mxu0
        %v12047 = vadd.f32 0.0, %v12046
        %v12048 = vpop.f32.mrb[0].mxu0
        %v12049 = vpop.f32.mrb[0].mxu0
        %v12050 = vpop.f32.mrb[0].mxu0
        %12051 = vdwg.mxu0
        %v12052 = vpack.c.bf16 %v11965, %v11965
        %v12053 = vpack.c.bf16 %v11967, %v11967
        %v12054 = vpack.c.bf16 %v12006, %v12006
        %v12055 = vpack.c.bf16 %v12008, %v12008
        %v12056 = vpack.c.bf16 %v12047, %v12047
        %s12057 = scalar_lea.vmem %s11, 2304
        %v12058 = vld [vmem:[%s12057] sm:$0xf]
        %v12059 = vld [vmem:[%s12057 + $0x4] sm:$0xf]
        %v12060 = vld [vmem:[%s12057 + $0x8] sm:$0xf]
        %v12061 = vld [vmem:[%s12057 + $0xc] sm:$0xf]
        %v12062 = vld [vmem:[%s12057 + $0x10] sm:$0xf]
        %v12063 = vld [vmem:[%s12057 + $0x14] sm:$0xf]
        %v12064 = vld [vmem:[%s12057 + $0x18] sm:$0xf]
        %v12065 = vld [vmem:[%s12057 + $0x1c] sm:$0xf]
        %v12066 = vld [vmem:[%s12057 + $0x20] sm:$0xf]
        %v12067 = vld [vmem:[%s12057 + $0x24] sm:$0xf]
        %v12068 = vld [vmem:[%s12057 + $0x28] sm:$0xf]
        %v12069 = vld [vmem:[%s12057 + $0x2c] sm:$0xf]
        %v12070 = vld [vmem:[%s12057 + $0x30] sm:$0xf]
        %v12071 = vld [vmem:[%s12057 + $0x34] sm:$0xf]
        %v12072 = vld [vmem:[%s12057 + $0x38] sm:$0xf]
        %v12073 = vld [vmem:[%s12057 + $0x3c] sm:$0xf]
        %v12074 = vld [vmem:[%s12057 + $0x40] sm:$0xf]
        %v12075 = vld [vmem:[%s12057 + $0x44] sm:$0xf]
        %v12076 = vld [vmem:[%s12057 + $0x48] sm:$0xf]
        %v12077 = vld [vmem:[%s12057 + $0x4c] sm:$0xf]
        %v12078 = vld [vmem:[%s12057 + $0x50] sm:$0xf]
        %v12079 = vld [vmem:[%s12057 + $0x54] sm:$0xf]
        %v12080 = vld [vmem:[%s12057 + $0x58] sm:$0xf]
        %v12081 = vld [vmem:[%s12057 + $0x5c] sm:$0xf]
        %v12082 = vld [vmem:[%s12057 + $0x60] sm:$0xf]
        %v12083 = vld [vmem:[%s12057 + $0x64] sm:$0xf]
        %v12084 = vld [vmem:[%s12057 + $0x68] sm:$0xf]
        %v12085 = vld [vmem:[%s12057 + $0x6c] sm:$0xf]
        %v12086 = vld [vmem:[%s12057 + $0x70] sm:$0xf]
        %v12087 = vld [vmem:[%s12057 + $0x74] sm:$0xf]
        %v12088 = vld [vmem:[%s12057 + $0x78] sm:$0xf]
        %v12089 = vld [vmem:[%s12057 + $0x7c] sm:$0xf]
        %v12090 = vld [vmem:[%s12057 + $0x80] sm:$0xf]
        %v12091 = vld [vmem:[%s12057 + $0x84] sm:$0xf]
        %v12092 = vld [vmem:[%s12057 + $0x88] sm:$0xf]
        %v12093 = vld [vmem:[%s12057 + $0x8c] sm:$0xf]
        %v12094 = vld [vmem:[%s12057 + $0x90] sm:$0xf]
        %v12095 = vld [vmem:[%s12057 + $0x94] sm:$0xf]
        %v12096 = vld [vmem:[%s12057 + $0x98] sm:$0xf]
        %v12097 = vld [vmem:[%s12057 + $0x9c] sm:$0xf]
        %v12098 = vld [vmem:[%s12057 + $0xa0] sm:$0xf]
        %v12099 = vld [vmem:[%s12057 + $0xa4] sm:$0xf]
        %v12100 = vld [vmem:[%s12057 + $0xa8] sm:$0xf]
        %v12101 = vld [vmem:[%s12057 + $0xac] sm:$0xf]
        %v12102 = vld [vmem:[%s12057 + $0xb0] sm:$0xf]
        %v12103 = vld [vmem:[%s12057 + $0xb4] sm:$0xf]
        %v12104 = vld [vmem:[%s12057 + $0xb8] sm:$0xf]
        %v12105 = vld [vmem:[%s12057 + $0xbc] sm:$0xf]
        %v12106 = vld [vmem:[%s12057 + $0xc0] sm:$0xf]
        %v12107 = vld [vmem:[%s12057 + $0xc4] sm:$0xf]
        %v12108 = vld [vmem:[%s12057 + $0xc8] sm:$0xf]
        %v12109 = vld [vmem:[%s12057 + $0xcc] sm:$0xf]
        %v12110 = vld [vmem:[%s12057 + $0xd0] sm:$0xf]
        %v12111 = vld [vmem:[%s12057 + $0xd4] sm:$0xf]
        %v12112 = vld [vmem:[%s12057 + $0xd8] sm:$0xf]
        %v12113 = vld [vmem:[%s12057 + $0xdc] sm:$0xf]
        %v12114 = vld [vmem:[%s12057 + $0xe0] sm:$0xf]
        %v12115 = vld [vmem:[%s12057 + $0xe4] sm:$0xf]
        %v12116 = vld [vmem:[%s12057 + $0xe8] sm:$0xf]
        %v12117 = vld [vmem:[%s12057 + $0xec] sm:$0xf]
        %v12118 = vld [vmem:[%s12057 + $0xf0] sm:$0xf]
        %v12119 = vld [vmem:[%s12057 + $0xf4] sm:$0xf]
        %v12120 = vld [vmem:[%s12057 + $0xf8] sm:$0xf]
        %v12121 = vld [vmem:[%s12057 + $0xfc] sm:$0xf]
        %v12122 = vld [vmem:[%s12057 + $0x100] sm:$0xf]
        %v12123 = vld [vmem:[%s12057 + $0x104] sm:$0xf]
        %v12124 = vld [vmem:[%s12057 + $0x108] sm:$0xf]
        %v12125 = vld [vmem:[%s12057 + $0x10c] sm:$0xf]
        %v12126 = vld [vmem:[%s12057 + $0x110] sm:$0xf]
        %v12127 = vld [vmem:[%s12057 + $0x114] sm:$0xf]
        %v12128 = vld [vmem:[%s12057 + $0x118] sm:$0xf]
        %v12129 = vld [vmem:[%s12057 + $0x11c] sm:$0xf]
        %v12202 = vunpack.c.l.b16 %v12058
        %v12203 = vunpack.c.l.b16 %v12059
        %v12204 = vunpack.c.l.b16 %v12060
        %v12205 = vunpack.c.l.b16 %v12061
        %v12206 = vunpack.c.l.b16 %v12062
        %v12207 = vunpack.c.l.b16 %v12063
        %v12208 = vunpack.c.l.b16 %v12064
        %v12209 = vunpack.c.l.b16 %v12065
        %v12210 = vunpack.c.l.b16 %v12066
        %v12211 = vunpack.c.l.b16 %v12067
        %v12212 = vunpack.c.l.b16 %v12068
        %v12213 = vunpack.c.l.b16 %v12069
        %v12214 = vunpack.c.l.b16 %v12070
        %v12215 = vunpack.c.l.b16 %v12071
        %v12216 = vunpack.c.l.b16 %v12072
        %v12217 = vunpack.c.l.b16 %v12073
        %v12218 = vunpack.c.l.b16 %v12074
        %v12219 = vunpack.c.l.b16 %v12075
        %v12220 = vunpack.c.l.b16 %v12076
        %v12221 = vunpack.c.l.b16 %v12077
        %v12222 = vunpack.c.l.b16 %v12078
        %v12223 = vunpack.c.l.b16 %v12079
        %v12224 = vunpack.c.l.b16 %v12080
        %v12225 = vunpack.c.l.b16 %v12081
        %v12226 = vunpack.c.l.b16 %v12082
        %v12227 = vunpack.c.l.b16 %v12083
        %v12228 = vunpack.c.l.b16 %v12084
        %v12229 = vunpack.c.l.b16 %v12085
        %v12230 = vunpack.c.l.b16 %v12086
        %v12231 = vunpack.c.l.b16 %v12087
        %v12232 = vunpack.c.l.b16 %v12088
        %v12233 = vunpack.c.l.b16 %v12089
        %v12234 = vunpack.c.l.b16 %v12090
        %v12235 = vunpack.c.l.b16 %v12091
        %v12236 = vunpack.c.l.b16 %v12092
        %v12237 = vunpack.c.l.b16 %v12093
        %v12238 = vunpack.c.l.b16 %v12094
        %v12239 = vunpack.c.l.b16 %v12095
        %v12240 = vunpack.c.l.b16 %v12096
        %v12241 = vunpack.c.l.b16 %v12097
        %v12242 = vunpack.c.l.b16 %v12098
        %v12243 = vunpack.c.l.b16 %v12099
        %v12244 = vunpack.c.l.b16 %v12100
        %v12245 = vunpack.c.l.b16 %v12101
        %v12246 = vunpack.c.l.b16 %v12102
        %v12247 = vunpack.c.l.b16 %v12103
        %v12248 = vunpack.c.l.b16 %v12104
        %v12249 = vunpack.c.l.b16 %v12105
        %v12250 = vunpack.c.l.b16 %v12106
        %v12251 = vunpack.c.l.b16 %v12107
        %v12252 = vunpack.c.l.b16 %v12108
        %v12253 = vunpack.c.l.b16 %v12109
        %v12254 = vunpack.c.l.b16 %v12110
        %v12255 = vunpack.c.l.b16 %v12111
        %v12256 = vunpack.c.l.b16 %v12112
        %v12257 = vunpack.c.l.b16 %v12113
        %v12258 = vunpack.c.l.b16 %v12114
        %v12259 = vunpack.c.l.b16 %v12115
        %v12260 = vunpack.c.l.b16 %v12116
        %v12261 = vunpack.c.l.b16 %v12117
        %v12262 = vunpack.c.l.b16 %v12118
        %v12263 = vunpack.c.l.b16 %v12119
        %v12264 = vunpack.c.l.b16 %v12120
        %v12265 = vunpack.c.l.b16 %v12121
        %v12266 = vunpack.c.l.b16 %v12122
        %v12267 = vunpack.c.l.b16 %v12123
        %v12268 = vunpack.c.l.b16 %v12124
        %v12269 = vunpack.c.l.b16 %v12125
        %v12270 = vunpack.c.l.b16 %v12126
        %v12271 = vunpack.c.l.b16 %v12127
        %v12272 = vunpack.c.l.b16 %v12128
        %v12273 = vunpack.c.l.b16 %v12129
        %v12274 = vpack.c.b16 %v12203, %v12202
        %v12275 = vpack.c.b16 %v12205, %v12204
        %v12276 = vpack.c.b16 %v12207, %v12206
        %v12277 = vpack.c.b16 %v12209, %v12208
        %v12278 = vpack.c.b16 %v12211, %v12210
        %v12279 = vpack.c.b16 %v12213, %v12212
        %v12280 = vpack.c.b16 %v12215, %v12214
        %v12281 = vpack.c.b16 %v12217, %v12216
        %v12282 = vpack.c.b16 %v12219, %v12218
        %v12283 = vpack.c.b16 %v12221, %v12220
        %v12284 = vpack.c.b16 %v12223, %v12222
        %v12285 = vpack.c.b16 %v12225, %v12224
        %v12286 = vpack.c.b16 %v12227, %v12226
        %v12287 = vpack.c.b16 %v12229, %v12228
        %v12288 = vpack.c.b16 %v12231, %v12230
        %v12289 = vpack.c.b16 %v12233, %v12232
        %v12290 = vpack.c.b16 %v12235, %v12234
        %v12291 = vpack.c.b16 %v12237, %v12236
        %v12292 = vpack.c.b16 %v12239, %v12238
        %v12293 = vpack.c.b16 %v12241, %v12240
        %v12294 = vpack.c.b16 %v12243, %v12242
        %v12295 = vpack.c.b16 %v12245, %v12244
        %v12296 = vpack.c.b16 %v12247, %v12246
        %v12297 = vpack.c.b16 %v12249, %v12248
        %v12298 = vpack.c.b16 %v12251, %v12250
        %v12299 = vpack.c.b16 %v12253, %v12252
        %v12300 = vpack.c.b16 %v12255, %v12254
        %v12301 = vpack.c.b16 %v12257, %v12256
        %v12302 = vpack.c.b16 %v12259, %v12258
        %v12303 = vpack.c.b16 %v12261, %v12260
        %v12304 = vpack.c.b16 %v12263, %v12262
        %v12305 = vpack.c.b16 %v12265, %v12264
        %v12306 = vpack.c.b16 %v12267, %v12266
        %v12307 = vpack.c.b16 %v12269, %v12268
        %v12308 = vpack.c.b16 %v12271, %v12270
        %v12309 = vpack.c.b16 %v12273, %v12272
        %v12347 = vsel %vm7985, %v12056, 0
        %12349 = vmatprep.subr.bf16.mxu0 0
        %12350 = vmatpush1.bf16.msra.mxu0 %v12274
        %12351 = vmatprep.subr.bf16.mxu0 0
        %12352 = vmatpush1.bf16.msra.mxu0 %v12275
        %12353 = vmatprep.subr.bf16.mxu0 0
        %12354 = vmatpush1.bf16.msra.mxu0 %v12276
        %12355 = vmatprep.subr.bf16.mxu0 0
        %12356 = vmatpush1.bf16.msra.mxu0 %v12277
        %12357 = vmatprep.subr.bf16.mxu0 0
        %12358 = vmatpush1.bf16.msra.mxu0 %v12278
        %12359 = vmatprep.subr.bf16.mxu0 0
        %12360 = vmatpush1.bf16.msra.mxu0 %v12279
        %12361 = vmatprep.subr.bf16.mxu0 0
        %12362 = vmatpush1.bf16.msra.mxu0 %v12280
        %12363 = vmatprep.subr.bf16.mxu0 0
        %12364 = vmatpush1.bf16.msra.mxu0 %v12281
        %12365 = vmatprep.subr.bf16.mxu0 0
        %12366 = vmatpush1.bf16.msra.mxu0 %v12282
        %12367 = vmatprep.subr.bf16.mxu0 0
        %12368 = vmatpush1.bf16.msra.mxu0 %v12283
        %12369 = vmatprep.subr.bf16.mxu0 0
        %12370 = vmatpush1.bf16.msra.mxu0 %v12284
        %12371 = vmatprep.subr.bf16.mxu0 0
        %12372 = vmatpush1.bf16.msra.mxu0 %v12285
        %12373 = vmatprep.subr.bf16.mxu0 0
        %12374 = vmatpush1.bf16.msra.mxu0 %v12286
        %12375 = vmatprep.subr.bf16.mxu0 0
        %12376 = vmatpush1.bf16.msra.mxu0 %v12287
        %12377 = vmatprep.subr.bf16.mxu0 0
        %12378 = vmatpush1.bf16.msra.mxu0 %v12288
        %12379 = vmatprep.subr.bf16.mxu0 0
        %12380 = vmatpush1.bf16.msra.mxu0 %v12289
        %12381 = vmatprep.mubr.bf16.mxu0 %v12053
        %12382 = vmatmul.mubr.bf16.gmra.mrb[0].mxu0 %v12052
        %v12383 = vpop.f32.mrb[0].mxu0
        %v12384 = vadd.f32 0.0, %v12383
        %v12385 = vpop.f32.mrb[0].mxu0
        %v12386 = vpop.f32.mrb[0].mxu0
        %v12387 = vpop.f32.mrb[0].mxu0
        %12388 = vdwg.mxu0
        %12389 = vmatprep.subr.bf16.mxu0 0
        %12390 = vmatpush1.bf16.msra.mxu0 %v12290
        %12391 = vmatprep.subr.bf16.mxu0 0
        %12392 = vmatpush1.bf16.msra.mxu0 %v12291
        %12393 = vmatprep.subr.bf16.mxu0 0
        %12394 = vmatpush1.bf16.msra.mxu0 %v12292
        %12395 = vmatprep.subr.bf16.mxu0 0
        %12396 = vmatpush1.bf16.msra.mxu0 %v12293
        %12397 = vmatprep.subr.bf16.mxu0 0
        %12398 = vmatpush1.bf16.msra.mxu0 %v12294
        %12399 = vmatprep.subr.bf16.mxu0 0
        %12400 = vmatpush1.bf16.msra.mxu0 %v12295
        %12401 = vmatprep.subr.bf16.mxu0 0
        %12402 = vmatpush1.bf16.msra.mxu0 %v12296
        %12403 = vmatprep.subr.bf16.mxu0 0
        %12404 = vmatpush1.bf16.msra.mxu0 %v12297
        %12405 = vmatprep.subr.bf16.mxu0 0
        %12406 = vmatpush1.bf16.msra.mxu0 %v12298
        %12407 = vmatprep.subr.bf16.mxu0 0
        %12408 = vmatpush1.bf16.msra.mxu0 %v12299
        %12409 = vmatprep.subr.bf16.mxu0 0
        %12410 = vmatpush1.bf16.msra.mxu0 %v12300
        %12411 = vmatprep.subr.bf16.mxu0 0
        %12412 = vmatpush1.bf16.msra.mxu0 %v12301
        %12413 = vmatprep.subr.bf16.mxu0 0
        %12414 = vmatpush1.bf16.msra.mxu0 %v12302
        %12415 = vmatprep.subr.bf16.mxu0 0
        %12416 = vmatpush1.bf16.msra.mxu0 %v12303
        %12417 = vmatprep.subr.bf16.mxu0 0
        %12418 = vmatpush1.bf16.msra.mxu0 %v12304
        %12419 = vmatprep.subr.bf16.mxu0 0
        %12420 = vmatpush1.bf16.msra.mxu0 %v12305
        %12421 = vmatprep.mubr.bf16.mxu0 %v12055
        %12422 = vmatmul.mubr.bf16.gmra.mrb[0].mxu0 %v12054
        %v12423 = vpop.f32.mrb[0].mxu0
        %v12424 = vadd.f32 %v12384, %v12423
        %v12425 = vpop.f32.mrb[0].mxu0
        %v12426 = vpop.f32.mrb[0].mxu0
        %v12427 = vpop.f32.mrb[0].mxu0
        %12428 = vdwg.mxu0
        %12429 = vmatprep.subr.bf16.mxu0 0
        %12430 = vmatpush1.bf16.msra.mxu0 %v12306
        %12431 = vmatprep.subr.bf16.mxu0 0
        %12432 = vmatpush1.bf16.msra.mxu0 %v12307
        %12433 = vmatprep.subr.bf16.mxu0 0
        %12434 = vmatpush1.bf16.msra.mxu0 %v12308
        %12435 = vmatprep.subr.bf16.mxu0 0
        %12436 = vmatpush1.bf16.msra.mxu0 %v12309
        %12437 = vmatprep.subr.bf16.mxu0 0
        %12438 = vmatpush1.bf16.msra.mxu0 0
        %12439 = vmatprep.subr.bf16.mxu0 0
        %12440 = vmatpush1.bf16.msra.mxu0 0
        %12441 = vmatprep.subr.bf16.mxu0 0
        %12442 = vmatpush1.bf16.msra.mxu0 0
        %12443 = vmatprep.subr.bf16.mxu0 0
        %12444 = vmatpush1.bf16.msra.mxu0 0
        %12445 = vmatprep.subr.bf16.mxu0 0
        %12446 = vmatpush1.bf16.msra.mxu0 0
        %12447 = vmatprep.subr.bf16.mxu0 0
        %12448 = vmatpush1.bf16.msra.mxu0 0
        %12449 = vmatprep.subr.bf16.mxu0 0
        %12450 = vmatpush1.bf16.msra.mxu0 0
        %12451 = vmatprep.subr.bf16.mxu0 0
        %12452 = vmatpush1.bf16.msra.mxu0 0
        %12453 = vmatprep.subr.bf16.mxu0 0
        %12454 = vmatpush1.bf16.msra.mxu0 0
        %12455 = vmatprep.subr.bf16.mxu0 0
        %12456 = vmatpush1.bf16.msra.mxu0 0
        %12457 = vmatprep.subr.bf16.mxu0 0
        %12458 = vmatpush1.bf16.msra.mxu0 0
        %12459 = vmatprep.subr.bf16.mxu0 0
        %12460 = vmatpush1.bf16.msra.mxu0 0
        %12461 = vmatprep.mubr.bf16.mxu0 0
        %12462 = vmatmul.mubr.bf16.gmra.mrb[0].mxu0 %v12347
        %v12463 = vpop.f32.mrb[0].mxu0
        %v12464 = vadd.f32 %v12424, %v12463
        %v12465 = vpop.f32.mrb[0].mxu0
        %v12466 = vpop.f32.mrb[0].mxu0
        %v12467 = vpop.f32.mrb[0].mxu0
        %12468 = vdwg.mxu0
        %v12469 = vadd.f32 %v11924, %v12464
        %v12470 = vmax.f32 %v12469, 0.0
        %v12471 = vpack.c.bf16 %v12470, %v12470
        %v12472 = vld [vmem:[%s13] sm:$0xf]
        %v12473 = vld [vmem:[%s13 + $0x4] sm:$0xf]
        %v12474 = vld [vmem:[%s13 + $0x8] sm:$0xf]
        %v12475 = vld [vmem:[%s13 + $0xc] sm:$0xf]
        %v12476 = vld [vmem:[%s13 + $0x10] sm:$0xf]
        %v12477 = vld [vmem:[%s13 + $0x14] sm:$0xf]
        %v12478 = vld [vmem:[%s13 + $0x18] sm:$0xf]
        %v12479 = vld [vmem:[%s13 + $0x1c] sm:$0xf]
        %v12480 = vld [vmem:[%s13 + $0x20] sm:$0xf]
        %v12481 = vld [vmem:[%s13 + $0x24] sm:$0xf]
        %v12482 = vld [vmem:[%s13 + $0x28] sm:$0xf]
        %v12483 = vld [vmem:[%s13 + $0x2c] sm:$0xf]
        %v12484 = vld [vmem:[%s13 + $0x30] sm:$0xf]
        %v12485 = vld [vmem:[%s13 + $0x34] sm:$0xf]
        %v12486 = vld [vmem:[%s13 + $0x38] sm:$0xf]
        %v12487 = vld [vmem:[%s13 + $0x3c] sm:$0xf]
        %v12488 = vld [vmem:[%s14] sm:$0x1]
        %v12505 = vunpack.c.l.b16 %v12472
        %v12506 = vunpack.c.l.b16 %v12473
        %v12507 = vunpack.c.l.b16 %v12474
        %v12508 = vunpack.c.l.b16 %v12475
        %v12509 = vunpack.c.l.b16 %v12476
        %v12510 = vunpack.c.l.b16 %v12477
        %v12511 = vunpack.c.l.b16 %v12478
        %v12512 = vunpack.c.l.b16 %v12479
        %v12513 = vunpack.c.l.b16 %v12480
        %v12514 = vunpack.c.l.b16 %v12481
        %v12515 = vunpack.c.l.b16 %v12482
        %v12516 = vunpack.c.l.b16 %v12483
        %v12517 = vunpack.c.l.b16 %v12484
        %v12518 = vunpack.c.l.b16 %v12485
        %v12519 = vunpack.c.l.b16 %v12486
        %v12520 = vunpack.c.l.b16 %v12487
        %v12521 = vpack.c.b16 %v12506, %v12505
        %v12522 = vpack.c.b16 %v12508, %v12507
        %v12523 = vpack.c.b16 %v12510, %v12509
        %v12524 = vpack.c.b16 %v12512, %v12511
        %v12525 = vpack.c.b16 %v12514, %v12513
        %v12526 = vpack.c.b16 %v12516, %v12515
        %v12527 = vpack.c.b16 %v12518, %v12517
        %v12528 = vpack.c.b16 %v12520, %v12519
        %12537 = vmatprep.subr.bf16.mxu0 0
        %12538 = vmatpush1.bf16.msra.mxu0 %v12521
        %12539 = vmatprep.subr.bf16.mxu0 0
        %12540 = vmatpush1.bf16.msra.mxu0 %v12522
        %12541 = vmatprep.subr.bf16.mxu0 0
        %12542 = vmatpush1.bf16.msra.mxu0 %v12523
        %12543 = vmatprep.subr.bf16.mxu0 0
        %12544 = vmatpush1.bf16.msra.mxu0 %v12524
        %12545 = vmatprep.subr.bf16.mxu0 0
        %12546 = vmatpush1.bf16.msra.mxu0 %v12525
        %12547 = vmatprep.subr.bf16.mxu0 0
        %12548 = vmatpush1.bf16.msra.mxu0 %v12526
        %12549 = vmatprep.subr.bf16.mxu0 0
        %12550 = vmatpush1.bf16.msra.mxu0 %v12527
        %12551 = vmatprep.subr.bf16.mxu0 0
        %12552 = vmatpush1.bf16.msra.mxu0 %v12528
        %12553 = vmatprep.subr.bf16.mxu0 0
        %12554 = vmatpush1.bf16.msra.mxu0 0
        %12555 = vmatprep.subr.bf16.mxu0 0
        %12556 = vmatpush1.bf16.msra.mxu0 0
        %12557 = vmatprep.subr.bf16.mxu0 0
        %12558 = vmatpush1.bf16.msra.mxu0 0
        %12559 = vmatprep.subr.bf16.mxu0 0
        %12560 = vmatpush1.bf16.msra.mxu0 0
        %12561 = vmatprep.subr.bf16.mxu0 0
        %12562 = vmatpush1.bf16.msra.mxu0 0
        %12563 = vmatprep.subr.bf16.mxu0 0
        %12564 = vmatpush1.bf16.msra.mxu0 0
        %12565 = vmatprep.subr.bf16.mxu0 0
        %12566 = vmatpush1.bf16.msra.mxu0 0
        %12567 = vmatprep.subr.bf16.mxu0 0
        %12568 = vmatpush1.bf16.msra.mxu0 0
        %12569 = vmatprep.mubr.bf16.mxu0 0
        %12570 = vmatmul.mubr.bf16.gmra.mrb[0].mxu0 %v12471
        %v12571 = vpop.f32.mrb[0].mxu0
        %v12572 = vadd.f32 %v12488, %v12571
        %v12573 = vpop.f32.mrb[0].mxu0
        %v12574 = vpop.f32.mrb[0].mxu0
        %v12575 = vpop.f32.mrb[0].mxu0
        %12576 = vdwg.mxu0
        %12577 = vst [vmem:[%s486] sm:$0x1] %v12572
        %s12578 = sand.u32 %s357, 1
        %s12579 = scalar_lea.sflag [#allocation3], %s12578
        %s12580 = sand.u32 %s357, 1
        %s12581 = scalar_lea.vmem [#allocation2], %s12580
        // Predicated region
        $region81: #{custom_cnn_forward.1} parent=79 // pred_check
          %p12582 = pneg %p367
        $region82: #{custom_cnn_forward.1} parent=79 // pred_check_branch
          %12584 = sbr.rel (%p12582) target = $region84
        $region83: #{custom_cnn_forward.1} parent=79 // pred_region
          %s12586 = ssub.s32 16, 16
          %12587 = vsyncadd %s12579, %s12586
          %s12588 = smul.addr %s29, 16
          %s12589 = scalar_lea.hbm %s15, %s12588
          %s12591 = sshll.u32 %s12581, 4
          %s12592 = int_to_ptr.vmem [resolvable:$true] %s12591
          %12594 = dma.vmem_to_hbm [thread:$0]  %s12592, 16, %s12589, %s12579
        $region84: #{custom_cnn_forward.1} parent=79 // pred_fallthru
          _
      $region80: #{custom_cnn_forward.1} parent=5 // pred_fallthru
        _
      %p12595 = scmp.le.s32.totalorder 2, %s24
      // Predicated region
      $region85: #{custom_cnn_forward.1} parent=5 // pred_check
        %p12596 = pneg %p12595
      $region86: #{custom_cnn_forward.1} parent=5 // pred_check_branch
        %12598 = sbr.rel (%p12596) target = $region88
      $region87: #{custom_cnn_forward.1} parent=5 // pred_region
        %s12599 = ssub.s32 %s24, 2
        // Predicated region
        $region89: #{custom_cnn_forward.1} parent=87 // pred_check
          %p12600 = pneg %p373
        $region90: #{custom_cnn_forward.1} parent=87 // pred_check_branch
          %12602 = sbr.rel (%p12600) target = $region92
        $region91: #{custom_cnn_forward.1} parent=87 // pred_region
          %s12603 = sand.u32 %s358, 1
          %s12604 = scalar_lea.sflag [#allocation3], %s12603
          %s12605 = sand.u32 %s358, 1
          %s12606 = scalar_lea.vmem [#allocation2], %s12605
          %12607 = dma.done %s12604, 16
        $region92: #{custom_cnn_forward.1} parent=87 // pred_fallthru
          _
      $region88: #{custom_cnn_forward.1} parent=5 // pred_fallthru
        _
    $region6: #{custom_cnn_forward.1} parent=1 // loop_footer
      %s28 = sadd.s32 1, %s24
    $region7: #{custom_cnn_forward.1} parent=1 // loop_footer_branch
      %23 = sbr.rel target = $region3
    $region8: #{custom_cnn_forward.1} parent=1 // loop_exit
      _
    %12608 = vsyncpa [#allocation3], 1
    %s12609 = scalar_lea.sflag [#allocation3], 1
    %12610 = vsyncpa %s12609, 1

</llo_original>
